<compile_context>
chip_gen: v6e
topology: v6e:2x2x1
jax: 0.10.0
libtpu: 0.0.40
codegen_flags: <defaults>
</compile_context>

<pallas_src>
import math

import jax
import jax.numpy as jnp
from jax import lax
from jax.experimental import pallas as pl
from jax.experimental.pallas import tpu as pltpu

COMPUTE_DTYPE = jnp.bfloat16
EXPANSION = 4
VMEM_LIMIT_BYTES = 32 * 1024 * 1024


# ---------------------------------------------------------------------------
# tiling helpers
# ---------------------------------------------------------------------------
def _pick_tile(dim, candidates=(256, 128, 64, 32, 16, 8)):
    """Largest candidate that evenly divides `dim`; else the full dim."""
    for t in candidates:
        if t <= dim and dim % t == 0:
            return t
    return dim


def _pick_th(ho, wo, target_rows=512):
    """Largest divisor of `ho` whose row-block (th * wo) stays near target."""
    th = 1
    for cand in range(1, ho + 1):
        if ho % cand == 0 and cand * wo <= max(target_rows, wo):
            th = cand
    return th


# ---------------------------------------------------------------------------
# fused 1x1-conv GEMM:  relu?( (A @ B) * scale + bias (+ residual) )
# ---------------------------------------------------------------------------
def _make_gemm_kernel(apply_relu, has_residual):
    def kernel(*refs):
        if has_residual:
            a_ref, b_ref, scale_ref, bias_ref, res_ref, o_ref = refs
        else:
            a_ref, b_ref, scale_ref, bias_ref, o_ref = refs
        acc = jnp.dot(a_ref[...], b_ref[...],
                      preferred_element_type=jnp.float32)
        y = acc * scale_ref[...] + bias_ref[...]
        if has_residual:
            y = y + res_ref[...].astype(jnp.float32)
        if apply_relu:
            y = jnp.maximum(y, 0.0)
        o_ref[...] = y.astype(o_ref.dtype)
    return kernel


def gemm_bn(a, b, scale, bias, *, relu, residual=None):
    """a:(M,K) bf16, b:(K,N) bf16, scale/bias:(1,N) f32, residual:(M,N) bf16."""
    M, K = a.shape
    _, N = b.shape

    tm = _pick_tile(M)
    if tm == M and M > 2048:            # ragged, very large M: pad once.
        tm = 256
    Mp = pl.cdiv(M, tm) * tm
    if Mp != M:
        a = jnp.pad(a, ((0, Mp - M), (0, 0)))
        if residual is not None:
            residual = jnp.pad(residual, ((0, Mp - M), (0, 0)))
    tn = _pick_tile(N, (256, 128))

    in_specs = [
        pl.BlockSpec((tm, K), lambda i, j: (i, 0)),      # K kept whole
        pl.BlockSpec((K, tn), lambda i, j: (0, j)),
        pl.BlockSpec((1, tn), lambda i, j: (0, j)),
        pl.BlockSpec((1, tn), lambda i, j: (0, j)),
    ]
    operands = [a, b, scale, bias]
    if residual is not None:
        in_specs.append(pl.BlockSpec((tm, tn), lambda i, j: (i, j)))
        operands.append(residual)

    out = pl.pallas_call(
        _make_gemm_kernel(relu, residual is not None),
        out_shape=jax.ShapeDtypeStruct((Mp, N), COMPUTE_DTYPE),
        grid_spec=pltpu.PrefetchScalarGridSpec(
            num_scalar_prefetch=0,
            grid=(Mp // tm, N // tn),
            in_specs=in_specs,
            out_specs=pl.BlockSpec((tm, tn), lambda i, j: (i, j)),
        ),
        compiler_params=pltpu.CompilerParams(
            dimension_semantics=("parallel", "parallel"),
            vmem_limit_bytes=VMEM_LIMIT_BYTES),
    )(*operands)
    return out[:M] if Mp != M else out


def conv1x1_bn(x, w, scale, bias, *, stride=1, relu, residual=None):
    """1x1 conv (+stride) + folded BN (+fused residual) (+ReLU); x: NHWC bf16."""
    if stride > 1:
        x = x[:, ::stride, ::stride, :]
    N, H, W, Cin = x.shape
    Cout = w.shape[1]
    res = residual.reshape(N * H * W, Cout) if residual is not None else None
    y = gemm_bn(x.reshape(N * H * W, Cin), w, scale, bias,
                relu=relu, residual=res)
    return y.reshape(N, H, W, Cout)


# ---------------------------------------------------------------------------
# 3x3 conv + folded BN + ReLU, taps folded inside the kernel (no HBM im2col)
# ---------------------------------------------------------------------------
def _make_conv3x3_kernel(taps, hs, th, wo, relu):
    def kernel(x_ref, w_ref, scale_ref, bias_ref, o_ref, acc_ref):
        h0 = pl.multiple_of(pl.program_id(1) * th, th)
        acc_ref[...] = jnp.zeros_like(acc_ref)
        for t, (phase, bh, bw) in enumerate(taps):
            patch = x_ref[0, pl.ds(phase * hs + h0 + bh, th),
                          pl.ds(bw, wo), :]
            patch = patch.reshape(th * wo, patch.shape[-1])
            acc_ref[...] += jnp.dot(patch, w_ref[t],
                                    preferred_element_type=jnp.float32)
        y = acc_ref[...] * scale_ref[...] + bias_ref[...]
        if relu:
            y = jnp.maximum(y, 0.0)
        o_ref[...] = y.reshape(o_ref.shape).astype(o_ref.dtype)
    return kernel


def conv3x3_bn(x, w, scale, bias, *, stride, dilation, relu=True):
    """3x3 conv (padding=dilation) + folded BN + ReLU.

    x: NHWC bf16;  w: (9, Cin, Cout) bf16, tap order kh*3+kw.
    The padded image is split into stride*stride spatial phases so that every
    conv tap becomes a contiguous slice of a VMEM-resident block; the kernel
    accumulates the 9 shifted GEMMs without ever writing an im2col tensor.
    """
    N, H, W, Cin = x.shape
    Cout = w.shape[-1]
    s, d = stride, dilation
    Ho = (H - 1) // s + 1            # kernel=3, padding=dilation
    Wo = (W - 1) // s + 1

    hp, wp = H + 2 * d, W + 2 * d
    hp_r = pl.cdiv(hp, s) * s
    wp_r = pl.cdiv(wp, s) * s
    xp = jnp.pad(x, ((0, 0), (d, hp_r - H - d), (d, wp_r - W - d), (0, 0)))
    hs, ws = hp_r // s, wp_r // s
    # phase (ph, pw) == xp[:, ph::s, pw::s, :], stacked along the row axis.
    xph = xp.reshape(N, hs, s, ws, s, Cin)
    xph = jnp.transpose(xph, (0, 2, 4, 1, 3, 5)).reshape(N, s * s * hs, ws, Cin)

    taps = []
    for kh in range(3):
        for kw in range(3):
            oh, ow = kh * d, kw * d
            taps.append(((oh % s) * s + (ow % s), oh // s, ow // s))

    th = _pick_th(Ho, Wo)
    tn = _pick_tile(Cout, (256, 128))
    n_hblk = Ho // th

    out = pl.pallas_call(
        _make_conv3x3_kernel(taps, hs, th, Wo, relu),
        out_shape=jax.ShapeDtypeStruct((N, n_hblk, th * Wo, Cout),
                                       COMPUTE_DTYPE),
        grid_spec=pltpu.PrefetchScalarGridSpec(
            num_scalar_prefetch=0,
            grid=(N, n_hblk, Cout // tn),
            in_specs=[
                # whole (phase-split, padded) image stays resident per n
                pl.BlockSpec((1, s * s * hs, ws, Cin),
                             lambda n, h, j: (n, 0, 0, 0)),
                pl.BlockSpec((9, Cin, tn), lambda n, h, j: (0, 0, j)),
                pl.BlockSpec((1, tn), lambda n, h, j: (0, j)),
                pl.BlockSpec((1, tn), lambda n, h, j: (0, j)),
            ],
            out_specs=pl.BlockSpec((1, 1, th * Wo, tn),
                                   lambda n, h, j: (n, h, 0, j)),
            scratch_shapes=[pltpu.VMEM((th * Wo, tn), jnp.float32)],
        ),
        compiler_params=pltpu.CompilerParams(
            dimension_semantics=("parallel", "parallel", "parallel"),
            vmem_limit_bytes=VMEM_LIMIT_BYTES),
    )(xph, w, scale, bias)
    return out.reshape(N, Ho, Wo, Cout)


# ---------------------------------------------------------------------------
# Bottleneck forward
# ---------------------------------------------------------------------------
def bottleneck(x, p):
    """Pallas Bottleneck forward (x: NHWC bf16). conv3+BN3+add+ReLU are fused."""
    if "ds_w" in p:
        residual = conv1x1_bn(x, p["ds_w"], p["ds_scale"], p["ds_bias"],
                              stride=p["stride"], relu=False)
    else:
        residual = x
    out = conv1x1_bn(x, p["w1"], p["scale1"], p["bias1"], relu=True)
    out = conv3x3_bn(out, p["w2"], p["scale2"], p["bias2"],
                     stride=p["stride"], dilation=p["dilation"], relu=True)
    out = conv1x1_bn(out, p["w3"], p["scale3"], p["bias3"], relu=True,
                     residual=residual)
    return out


# ---------------------------------------------------------------------------
# parameters (GEMM-layout weights, BN affine folded at build time)
# ---------------------------------------------------------------------------
def _bn_scale_bias(key, c):
    kg, kb, km, kv = jax.random.split(key, 4)
    gamma = 1.0 + 0.1 * jax.random.normal(kg, (c,), jnp.float32)
    beta = 0.1 * jax.random.normal(kb, (c,), jnp.float32)
    mean = 0.1 * jax.random.normal(km, (c,), jnp.float32)
    var = jnp.abs(1.0 + 0.1 * jax.random.normal(kv, (c,), jnp.float32))
    scale = gamma * lax.rsqrt(var + 1e-5)
    bias = beta - mean * scale
    return scale.reshape(1, c), bias.reshape(1, c)


def make_bottleneck_params(key, inplanes, planes, *, stride=1, dilation=1):
    keys = jax.random.split(key, 8)
    outplanes = planes * EXPANSION

    def conv_w(k, cout, cin, ksize):
        std = math.sqrt(2.0 / (ksize * ksize * cout))   # PyTorch ResNet init
        w = std * jax.random.normal(k, (cout, cin, ksize, ksize), jnp.float32)
        if ksize == 1:
            return jnp.transpose(w[:, :, 0, 0], (1, 0)).astype(COMPUTE_DTYPE)
        return (jnp.transpose(w, (2, 3, 1, 0))
                .reshape(ksize * ksize, cin, cout).astype(COMPUTE_DTYPE))

    s1, b1 = _bn_scale_bias(keys[3], planes)
    s2, b2 = _bn_scale_bias(keys[4], planes)
    s3, b3 = _bn_scale_bias(keys[5], outplanes)
    p = dict(w1=conv_w(keys[0], planes, inplanes, 1), scale1=s1, bias1=b1,
             w2=conv_w(keys[1], planes, planes, 3), scale2=s2, bias2=b2,
             w3=conv_w(keys[2], outplanes, planes, 1), scale3=s3, bias3=b3,
             stride=stride, dilation=dilation)
    if stride != 1 or inplanes != outplanes:
        ds_s, ds_b = _bn_scale_bias(keys[7], outplanes)
        p["ds_w"] = conv_w(keys[6], outplanes, inplanes, 1)
        p["ds_scale"], p["ds_bias"] = ds_s, ds_b
    return p


# ---------------------------------------------------------------------------
# pure-JAX reference (same bf16 dataflow) for correctness checking
# ---------------------------------------------------------------------------
def _ref_conv1x1(x, w, scale, bias, *, stride=1, relu, residual=None):
    if stride > 1:
        x = x[:, ::stride, ::stride, :]
    y = jnp.einsum('nhwc,cd->nhwd', x.astype(jnp.float32),
                   w.astype(jnp.float32))
    y = y * scale.reshape(1, 1, 1, -1) + bias.reshape(1, 1, 1, -1)
    if residual is not None:
        y = y + residual.astype(jnp.float32)
    if relu:
        y = jnp.maximum(y, 0.0)
    return y.astype(COMPUTE_DTYPE)


def _ref_conv3x3(x, w, scale, bias, *, stride, dilation):
    cin, cout = w.shape[1], w.shape[2]
    w4 = w.reshape(3, 3, cin, cout).astype(jnp.float32)      # HWIO
    y = lax.conv_general_dilated(
        x.astype(jnp.float32), w4, window_strides=(stride, stride),
        padding=[(dilation, dilation), (dilation, dilation)],
        rhs_dilation=(dilation, dilation),
        dimension_numbers=('NHWC', 'HWIO', 'NHWC'))
    y = y * scale.reshape(1, 1, 1, -1) + bias.reshape(1, 1, 1, -1)
    y = jnp.maximum(y, 0.0)
    return y.astype(COMPUTE_DTYPE)


def _ref_bottleneck(x, p):
    if "ds_w" in p:
        residual = _ref_conv1x1(x, p["ds_w"], p["ds_scale"], p["ds_bias"],
                                stride=p["stride"], relu=False)
    else:
        residual = x
    out = _ref_conv1x1(x, p["w1"], p["scale1"], p["bias1"], relu=True)
    out = _ref_conv3x3(out, p["w2"], p["scale2"], p["bias2"],
                       stride=p["stride"], dilation=p["dilation"])
    out = _ref_conv1x1(out, p["w3"], p["scale3"], p["bias3"], relu=True,
                       residual=residual)
    return out


# ---------------------------------------------------------------------------
if __name__ == "__main__":
    root = jax.random.PRNGKey(0)
    kx, ka, kb = jax.random.split(root, 3)

    # Block A: stride-2 bottleneck with a 1x1-conv downsample residual.
    params_a = make_bottleneck_params(ka, inplanes=64, planes=32,
                                      stride=2, dilation=1)
    # Block B: dilation-2 bottleneck with an identity residual.
    params_b = make_bottleneck_params(kb, inplanes=128, planes=32,
                                      stride=1, dilation=2)

    x_nchw = jax.random.normal(kx, (2, 64, 16, 16), dtype=jnp.float32)

    @jax.jit
    def forward(x):
        h = jnp.transpose(x, (0, 2, 3, 1)).astype(COMPUTE_DTYPE)   # NCHW->NHWC
        h = bottleneck(h, params_a)
        h = bottleneck(h, params_b)
        return jnp.transpose(h, (0, 3, 1, 2)).astype(jnp.float32)  # NHWC->NCHW

    y = forward(x_nchw)
    jax.block_until_ready(y)
    assert y.shape == (2, 128, 8, 8), y.shape
    assert bool(jnp.all(jnp.isfinite(y)))

    def ref_forward(x):
        h = jnp.transpose(x, (0, 2, 3, 1)).astype(COMPUTE_DTYPE)
        h = _ref_bottleneck(h, params_a)
        h = _ref_bottleneck(h, params_b)
        return jnp.transpose(h, (0, 3, 1, 2)).astype(jnp.float32)

    y_ref = ref_forward(x_nchw)
    assert bool(jnp.allclose(y, y_ref, rtol=3e-2, atol=1e-1)), \
        float(jnp.max(jnp.abs(y - y_ref)))
    print("KERNEL_OK")
</pallas_src>

<mosaic_0001>
module attributes {stable_mosaic.version = 11 : i64} {
  func.func @kernel(%arg0: i32, %arg1: i32, %arg2: memref<256x64xbf16, #tpu.memory_space<vmem>>, %arg3: memref<64x32xbf16, #tpu.memory_space<vmem>>, %arg4: memref<1x32xf32, #tpu.memory_space<vmem>>, %arg5: memref<1x32xf32, #tpu.memory_space<vmem>>, %arg6: memref<256x32xbf16, #tpu.memory_space<vmem>>) attributes {dimension_semantics = [#tpu.dimension_semantics<parallel>, #tpu.dimension_semantics<parallel>], iteration_bounds = array<i64: 2, 1>, scalar_prefetch = 0 : i64, scratch_operands = 0 : i64, tpu.core_type = #tpu.core_type<tc>, window_params = [{transform_indices = @transform_0, window_bounds = array<i64: 256, 64>}, {transform_indices = @transform_1, window_bounds = array<i64: 64, 32>}, {transform_indices = @transform_2, window_bounds = array<i64: 1, 32>}, {transform_indices = @transform_3, window_bounds = array<i64: 1, 32>}, {transform_indices = @transform_4, window_bounds = array<i64: 256, 32>}]} {
    %c0 = arith.constant 0 : index
    %c0_0 = arith.constant 0 : index
    %0 = vector.load %arg2[%c0, %c0_0] : memref<256x64xbf16, #tpu.memory_space<vmem>>, vector<256x64xbf16>
    %c0_1 = arith.constant 0 : index
    %c0_2 = arith.constant 0 : index
    %1 = vector.load %arg3[%c0_1, %c0_2] : memref<64x32xbf16, #tpu.memory_space<vmem>>, vector<64x32xbf16>
    %cst = arith.constant dense<0.000000e+00> : vector<256x32xf32>
    %2 = tpu.matmul %0, %1, %cst {dimension_numbers = #tpu.dot_dimension_numbers<[1], [0], [0], [1], [0, 0, 1, 1], [], []>} : vector<256x64xbf16>, vector<64x32xbf16>, vector<256x32xf32> -> vector<256x32xf32>
    %c0_3 = arith.constant 0 : index
    %c0_4 = arith.constant 0 : index
    %3 = vector.load %arg4[%c0_3, %c0_4] : memref<1x32xf32, #tpu.memory_space<vmem>>, vector<1x32xf32>
    %4 = vector.broadcast %3 : vector<1x32xf32> to vector<256x32xf32>
    %5 = arith.mulf %2, %4 : vector<256x32xf32>
    %c0_5 = arith.constant 0 : index
    %c0_6 = arith.constant 0 : index
    %6 = vector.load %arg5[%c0_5, %c0_6] : memref<1x32xf32, #tpu.memory_space<vmem>>, vector<1x32xf32>
    %7 = vector.broadcast %6 : vector<1x32xf32> to vector<256x32xf32>
    %8 = arith.addf %5, %7 : vector<256x32xf32>
    %cst_7 = arith.constant 0.000000e+00 : f32
    %9 = vector.broadcast %cst_7 : f32 to vector<256x32xf32>
    %10 = arith.maximumf %8, %9 : vector<256x32xf32>
    %11 = arith.truncf %10 : vector<256x32xf32> to vector<256x32xbf16>
    %c0_8 = arith.constant 0 : index
    %c0_9 = arith.constant 0 : index
    %12 = vector.load %arg6[%c0_8, %c0_9] : memref<256x32xbf16, #tpu.memory_space<vmem>>, vector<256x32xbf16>
    tpu.vector_store %arg6[%c0_8, %c0_9], %11 {strides = array<i32>} : memref<256x32xbf16, #tpu.memory_space<vmem>>, vector<256x32xbf16>,
    return
  }
  func.func @transform_0(%arg0: i32, %arg1: i32) -> (i32, i32) {
    %c0_i32 = arith.constant 0 : i32
    %c0_i32_0 = arith.constant 0 : i32
    return %arg0, %c0_i32 : i32, i32
  }
  func.func @transform_1(%arg0: i32, %arg1: i32) -> (i32, i32) {
    %c0_i32 = arith.constant 0 : i32
    %c0_i32_0 = arith.constant 0 : i32
    return %c0_i32, %arg1 : i32, i32
  }
  func.func @transform_2(%arg0: i32, %arg1: i32) -> (i32, i32) {
    %c0_i32 = arith.constant 0 : i32
    %c0_i32_0 = arith.constant 0 : i32
    return %c0_i32, %arg1 : i32, i32
  }
  func.func @transform_3(%arg0: i32, %arg1: i32) -> (i32, i32) {
    %c0_i32 = arith.constant 0 : i32
    %c0_i32_0 = arith.constant 0 : i32
    return %c0_i32, %arg1 : i32, i32
  }
  func.func @transform_4(%arg0: i32, %arg1: i32) -> (i32, i32) {
    %c0_i32 = arith.constant 0 : i32
    return %arg0, %arg1 : i32, i32
  }
}

module attributes {stable_mosaic.version = 11 : i64} {
  func.func @kernel(%arg0: i32, %arg1: i32, %arg2: i32, %arg3: memref<1x36x9x32xbf16, #tpu.memory_space<vmem>>, %arg4: memref<9x32x32xbf16, #tpu.memory_space<vmem>>, %arg5: memref<1x32xf32, #tpu.memory_space<vmem>>, %arg6: memref<1x32xf32, #tpu.memory_space<vmem>>, %arg7: memref<1x1x64x32xbf16, #tpu.memory_space<vmem>>, %arg8: memref<64x32xf32, #tpu.memory_space<vmem>>) attributes {dimension_semantics = [#tpu.dimension_semantics<parallel>, #tpu.dimension_semantics<parallel>, #tpu.dimension_semantics<parallel>], iteration_bounds = array<i64: 2, 1, 1>, scalar_prefetch = 0 : i64, scratch_operands = 1 : i64, tpu.core_type = #tpu.core_type<tc>, window_params = [{transform_indices = @transform_0, window_bounds = array<i64: 1, 36, 9, 32>}, {transform_indices = @transform_1, window_bounds = array<i64: 9, 32, 32>}, {transform_indices = @transform_2, window_bounds = array<i64: 1, 32>}, {transform_indices = @transform_3, window_bounds = array<i64: 1, 32>}, {transform_indices = @transform_4, window_bounds = array<i64: 1, 1, 64, 32>}]} {
    %c8_i32 = arith.constant 8 : i32
    %0 = arith.muli %arg1, %c8_i32 : i32
    %1 = tpu.assume_multiple %0, 8 : i32
    %cst = arith.constant 0.000000e+00 : f32
    %2 = vector.broadcast %cst : f32 to vector<64x32xf32>
    %c0 = arith.constant 0 : index
    %c0_0 = arith.constant 0 : index
    %3 = vector.load %arg8[%c0, %c0_0] : memref<64x32xf32, #tpu.memory_space<vmem>>, vector<64x32xf32>
    tpu.vector_store %arg8[%c0, %c0_0], %2 {strides = array<i32>} : memref<64x32xf32, #tpu.memory_space<vmem>>, vector<64x32xf32>,
    %c0_i32 = arith.constant 0 : i32
    %4 = arith.addi %c0_i32, %1 : i32
    %c0_i32_1 = arith.constant 0 : i32
    %5 = arith.addi %4, %c0_i32_1 : i32
    %c0_2 = arith.constant 0 : index
    %6 = arith.index_cast %5 : i32 to index
    %c0_3 = arith.constant 0 : index
    %c0_4 = arith.constant 0 : index
    %7 = vector.load %arg3[%c0_2, %6, %c0_3, %c0_4] : memref<1x36x9x32xbf16, #tpu.memory_space<vmem>>, vector<1x8x8x32xbf16>
    %8 = vector.shape_cast %7 : vector<1x8x8x32xbf16> to vector<8x8x32xbf16>
    %9 = vector.shape_cast %8 : vector<8x8x32xbf16> to vector<64x32xbf16>
    %c0_5 = arith.constant 0 : index
    %c0_6 = arith.constant 0 : index
    %10 = vector.load %arg8[%c0_5, %c0_6] : memref<64x32xf32, #tpu.memory_space<vmem>>, vector<64x32xf32>
    %c0_7 = arith.constant 0 : index
    %c0_8 = arith.constant 0 : index
    %c0_9 = arith.constant 0 : index
    %11 = vector.load %arg4[%c0_7, %c0_8, %c0_9] : memref<9x32x32xbf16, #tpu.memory_space<vmem>>, vector<1x32x32xbf16>
    %12 = vector.shape_cast %11 : vector<1x32x32xbf16> to vector<32x32xbf16>
    %cst_10 = arith.constant dense<0.000000e+00> : vector<64x32xf32>
    %13 = tpu.matmul %9, %12, %cst_10 {dimension_numbers = #tpu.dot_dimension_numbers<[1], [0], [0], [1], [0, 0, 1, 1], [], []>} : vector<64x32xbf16>, vector<32x32xbf16>, vector<64x32xf32> -> vector<64x32xf32>
    %14 = arith.addf %10, %13 : vector<64x32xf32>
    %c0_11 = arith.constant 0 : index
    %c0_12 = arith.constant 0 : index
    %15 = vector.load %arg8[%c0_11, %c0_12] : memref<64x32xf32, #tpu.memory_space<vmem>>, vector<64x32xf32>
    tpu.vector_store %arg8[%c0_11, %c0_12], %14 {strides = array<i32>} : memref<64x32xf32, #tpu.memory_space<vmem>>, vector<64x32xf32>,
    %c9_i32 = arith.constant 9 : i32
    %16 = arith.addi %c9_i32, %1 : i32
    %c0_i32_13 = arith.constant 0 : i32
    %17 = arith.addi %16, %c0_i32_13 : i32
    %c0_14 = arith.constant 0 : index
    %18 = arith.index_cast %17 : i32 to index
    %c0_15 = arith.constant 0 : index
    %c0_16 = arith.constant 0 : index
    %19 = vector.load %arg3[%c0_14, %18, %c0_15, %c0_16] : memref<1x36x9x32xbf16, #tpu.memory_space<vmem>>, vector<1x8x8x32xbf16>
    %20 = vector.shape_cast %19 : vector<1x8x8x32xbf16> to vector<8x8x32xbf16>
    %21 = vector.shape_cast %20 : vector<8x8x32xbf16> to vector<64x32xbf16>
    %c0_17 = arith.constant 0 : index
    %c0_18 = arith.constant 0 : index
    %22 = vector.load %arg8[%c0_17, %c0_18] : memref<64x32xf32, #tpu.memory_space<vmem>>, vector<64x32xf32>
    %c1 = arith.constant 1 : index
    %c0_19 = arith.constant 0 : index
    %c0_20 = arith.constant 0 : index
    %23 = vector.load %arg4[%c1, %c0_19, %c0_20] : memref<9x32x32xbf16, #tpu.memory_space<vmem>>, vector<1x32x32xbf16>
    %24 = vector.shape_cast %23 : vector<1x32x32xbf16> to vector<32x32xbf16>
    %cst_21 = arith.constant dense<0.000000e+00> : vector<64x32xf32>
    %25 = tpu.matmul %21, %24, %cst_21 {dimension_numbers = #tpu.dot_dimension_numbers<[1], [0], [0], [1], [0, 0, 1, 1], [], []>} : vector<64x32xbf16>, vector<32x32xbf16>, vector<64x32xf32> -> vector<64x32xf32>
    %26 = arith.addf %22, %25 : vector<64x32xf32>
    %c0_22 = arith.constant 0 : index
    %c0_23 = arith.constant 0 : index
    %27 = vector.load %arg8[%c0_22, %c0_23] : memref<64x32xf32, #tpu.memory_space<vmem>>, vector<64x32xf32>
    tpu.vector_store %arg8[%c0_22, %c0_23], %26 {strides = array<i32>} : memref<64x32xf32, #tpu.memory_space<vmem>>, vector<64x32xf32>,
    %c0_i32_24 = arith.constant 0 : i32
    %28 = arith.addi %c0_i32_24, %1 : i32
    %c0_i32_25 = arith.constant 0 : i32
    %29 = arith.addi %28, %c0_i32_25 : i32
    %c0_26 = arith.constant 0 : index
    %30 = arith.index_cast %29 : i32 to index
    %c1_27 = arith.constant 1 : index
    %c0_28 = arith.constant 0 : index
    %31 = vector.load %arg3[%c0_26, %30, %c1_27, %c0_28] : memref<1x36x9x32xbf16, #tpu.memory_space<vmem>>, vector<1x8x8x32xbf16>
    %32 = vector.shape_cast %31 : vector<1x8x8x32xbf16> to vector<8x8x32xbf16>
    %33 = vector.shape_cast %32 : vector<8x8x32xbf16> to vector<64x32xbf16>
    %c0_29 = arith.constant 0 : index
    %c0_30 = arith.constant 0 : index
    %34 = vector.load %arg8[%c0_29, %c0_30] : memref<64x32xf32, #tpu.memory_space<vmem>>, vector<64x32xf32>
    %c2 = arith.constant 2 : index
    %c0_31 = arith.constant 0 : index
    %c0_32 = arith.constant 0 : index
    %35 = vector.load %arg4[%c2, %c0_31, %c0_32] : memref<9x32x32xbf16, #tpu.memory_space<vmem>>, vector<1x32x32xbf16>
    %36 = vector.shape_cast %35 : vector<1x32x32xbf16> to vector<32x32xbf16>
    %cst_33 = arith.constant dense<0.000000e+00> : vector<64x32xf32>
    %37 = tpu.matmul %33, %36, %cst_33 {dimension_numbers = #tpu.dot_dimension_numbers<[1], [0], [0], [1], [0, 0, 1, 1], [], []>} : vector<64x32xbf16>, vector<32x32xbf16>, vector<64x32xf32> -> vector<64x32xf32>
    %38 = arith.addf %34, %37 : vector<64x32xf32>
    %c0_34 = arith.constant 0 : index
    %c0_35 = arith.constant 0 : index
    %39 = vector.load %arg8[%c0_34, %c0_35] : memref<64x32xf32, #tpu.memory_space<vmem>>, vector<64x32xf32>
    tpu.vector_store %arg8[%c0_34, %c0_35], %38 {strides = array<i32>} : memref<64x32xf32, #tpu.memory_space<vmem>>, vector<64x32xf32>,
    %c18_i32 = arith.constant 18 : i32
    %40 = arith.addi %c18_i32, %1 : i32
    %c0_i32_36 = arith.constant 0 : i32
    %41 = arith.addi %40, %c0_i32_36 : i32
    %c0_37 = arith.constant 0 : index
    %42 = arith.index_cast %41 : i32 to index
    %c0_38 = arith.constant 0 : index
    %c0_39 = arith.constant 0 : index
    %43 = vector.load %arg3[%c0_37, %42, %c0_38, %c0_39] : memref<1x36x9x32xbf16, #tpu.memory_space<vmem>>, vector<1x8x8x32xbf16>
    %44 = vector.shape_cast %43 : vector<1x8x8x32xbf16> to vector<8x8x32xbf16>
    %45 = vector.shape_cast %44 : vector<8x8x32xbf16> to vector<64x32xbf16>
    %c0_40 = arith.constant 0 : index
    %c0_41 = arith.constant 0 : index
    %46 = vector.load %arg8[%c0_40, %c0_41] : memref<64x32xf32, #tpu.memory_space<vmem>>, vector<64x32xf32>
    %c3 = arith.constant 3 : index
    %c0_42 = arith.constant 0 : index
    %c0_43 = arith.constant 0 : index
    %47 = vector.load %arg4[%c3, %c0_42, %c0_43] : memref<9x32x32xbf16, #tpu.memory_space<vmem>>, vector<1x32x32xbf16>
    %48 = vector.shape_cast %47 : vector<1x32x32xbf16> to vector<32x32xbf16>
    %cst_44 = arith.constant dense<0.000000e+00> : vector<64x32xf32>
    %49 = tpu.matmul %45, %48, %cst_44 {dimension_numbers = #tpu.dot_dimension_numbers<[1], [0], [0], [1], [0, 0, 1, 1], [], []>} : vector<64x32xbf16>, vector<32x32xbf16>, vector<64x32xf32> -> vector<64x32xf32>
    %50 = arith.addf %46, %49 : vector<64x32xf32>
    %c0_45 = arith.constant 0 : index
    %c0_46 = arith.constant 0 : index
    %51 = vector.load %arg8[%c0_45, %c0_46] : memref<64x32xf32, #tpu.memory_space<vmem>>, vector<64x32xf32>
    tpu.vector_store %arg8[%c0_45, %c0_46], %50 {strides = array<i32>} : memref<64x32xf32, #tpu.memory_space<vmem>>, vector<64x32xf32>,
    %c27_i32 = arith.constant 27 : i32
    %52 = arith.addi %c27_i32, %1 : i32
    %c0_i32_47 = arith.constant 0 : i32
    %53 = arith.addi %52, %c0_i32_47 : i32
    %c0_48 = arith.constant 0 : index
    %54 = arith.index_cast %53 : i32 to index
    %c0_49 = arith.constant 0 : index
    %c0_50 = arith.constant 0 : index
    %55 = vector.load %arg3[%c0_48, %54, %c0_49, %c0_50] : memref<1x36x9x32xbf16, #tpu.memory_space<vmem>>, vector<1x8x8x32xbf16>
    %56 = vector.shape_cast %55 : vector<1x8x8x32xbf16> to vector<8x8x32xbf16>
    %57 = vector.shape_cast %56 : vector<8x8x32xbf16> to vector<64x32xbf16>
    %c0_51 = arith.constant 0 : index
    %c0_52 = arith.constant 0 : index
    %58 = vector.load %arg8[%c0_51, %c0_52] : memref<64x32xf32, #tpu.memory_space<vmem>>, vector<64x32xf32>
    %c4 = arith.constant 4 : index
    %c0_53 = arith.constant 0 : index
    %c0_54 = arith.constant 0 : index
    %59 = vector.load %arg4[%c4, %c0_53, %c0_54] : memref<9x32x32xbf16, #tpu.memory_space<vmem>>, vector<1x32x32xbf16>
    %60 = vector.shape_cast %59 : vector<1x32x32xbf16> to vector<32x32xbf16>
    %cst_55 = arith.constant dense<0.000000e+00> : vector<64x32xf32>
    %61 = tpu.matmul %57, %60, %cst_55 {dimension_numbers = #tpu.dot_dimension_numbers<[1], [0], [0], [1], [0, 0, 1, 1], [], []>} : vector<64x32xbf16>, vector<32x32xbf16>, vector<64x32xf32> -> vector<64x32xf32>
    %62 = arith.addf %58, %61 : vector<64x32xf32>
    %c0_56 = arith.constant 0 : index
    %c0_57 = arith.constant 0 : index
    %63 = vector.load %arg8[%c0_56, %c0_57] : memref<64x32xf32, #tpu.memory_space<vmem>>, vector<64x32xf32>
    tpu.vector_store %arg8[%c0_56, %c0_57], %62 {strides = array<i32>} : memref<64x32xf32, #tpu.memory_space<vmem>>, vector<64x32xf32>,
    %c18_i32_58 = arith.constant 18 : i32
    %64 = arith.addi %c18_i32_58, %1 : i32
    %c0_i32_59 = arith.constant 0 : i32
    %65 = arith.addi %64, %c0_i32_59 : i32
    %c0_60 = arith.constant 0 : index
    %66 = arith.index_cast %65 : i32 to index
    %c1_61 = arith.constant 1 : index
    %c0_62 = arith.constant 0 : index
    %67 = vector.load %arg3[%c0_60, %66, %c1_61, %c0_62] : memref<1x36x9x32xbf16, #tpu.memory_space<vmem>>, vector<1x8x8x32xbf16>
    %68 = vector.shape_cast %67 : vector<1x8x8x32xbf16> to vector<8x8x32xbf16>
    %69 = vector.shape_cast %68 : vector<8x8x32xbf16> to vector<64x32xbf16>
    %c0_63 = arith.constant 0 : index
    %c0_64 = arith.constant 0 : index
    %70 = vector.load %arg8[%c0_63, %c0_64] : memref<64x32xf32, #tpu.memory_space<vmem>>, vector<64x32xf32>
    %c5 = arith.constant 5 : index
    %c0_65 = arith.constant 0 : index
    %c0_66 = arith.constant 0 : index
    %71 = vector.load %arg4[%c5, %c0_65, %c0_66] : memref<9x32x32xbf16, #tpu.memory_space<vmem>>, vector<1x32x32xbf16>
    %72 = vector.shape_cast %71 : vector<1x32x32xbf16> to vector<32x32xbf16>
    %cst_67 = arith.constant dense<0.000000e+00> : vector<64x32xf32>
    %73 = tpu.matmul %69, %72, %cst_67 {dimension_numbers = #tpu.dot_dimension_numbers<[1], [0], [0], [1], [0, 0, 1, 1], [], []>} : vector<64x32xbf16>, vector<32x32xbf16>, vector<64x32xf32> -> vector<64x32xf32>
    %74 = arith.addf %70, %73 : vector<64x32xf32>
    %c0_68 = arith.constant 0 : index
    %c0_69 = arith.constant 0 : index
    %75 = vector.load %arg8[%c0_68, %c0_69] : memref<64x32xf32, #tpu.memory_space<vmem>>, vector<64x32xf32>
    tpu.vector_store %arg8[%c0_68, %c0_69], %74 {strides = array<i32>} : memref<64x32xf32, #tpu.memory_space<vmem>>, vector<64x32xf32>,
    %c0_i32_70 = arith.constant 0 : i32
    %76 = arith.addi %c0_i32_70, %1 : i32
    %c1_i32 = arith.constant 1 : i32
    %77 = arith.addi %76, %c1_i32 : i32
    %c0_71 = arith.constant 0 : index
    %78 = arith.index_cast %77 : i32 to index
    %c0_72 = arith.constant 0 : index
    %c0_73 = arith.constant 0 : index
    %79 = vector.load %arg3[%c0_71, %78, %c0_72, %c0_73] : memref<1x36x9x32xbf16, #tpu.memory_space<vmem>>, vector<1x8x8x32xbf16>
    %80 = vector.shape_cast %79 : vector<1x8x8x32xbf16> to vector<8x8x32xbf16>
    %81 = vector.shape_cast %80 : vector<8x8x32xbf16> to vector<64x32xbf16>
    %c0_74 = arith.constant 0 : index
    %c0_75 = arith.constant 0 : index
    %82 = vector.load %arg8[%c0_74, %c0_75] : memref<64x32xf32, #tpu.memory_space<vmem>>, vector<64x32xf32>
    %c6 = arith.constant 6 : index
    %c0_76 = arith.constant 0 : index
    %c0_77 = arith.constant 0 : index
    %83 = vector.load %arg4[%c6, %c0_76, %c0_77] : memref<9x32x32xbf16, #tpu.memory_space<vmem>>, vector<1x32x32xbf16>
    %84 = vector.shape_cast %83 : vector<1x32x32xbf16> to vector<32x32xbf16>
    %cst_78 = arith.constant dense<0.000000e+00> : vector<64x32xf32>
    %85 = tpu.matmul %81, %84, %cst_78 {dimension_numbers = #tpu.dot_dimension_numbers<[1], [0], [0], [1], [0, 0, 1, 1], [], []>} : vector<64x32xbf16>, vector<32x32xbf16>, vector<64x32xf32> -> vector<64x32xf32>
    %86 = arith.addf %82, %85 : vector<64x32xf32>
    %c0_79 = arith.constant 0 : index
    %c0_80 = arith.constant 0 : index
    %87 = vector.load %arg8[%c0_79, %c0_80] : memref<64x32xf32, #tpu.memory_space<vmem>>, vector<64x32xf32>
    tpu.vector_store %arg8[%c0_79, %c0_80], %86 {strides = array<i32>} : memref<64x32xf32, #tpu.memory_space<vmem>>, vector<64x32xf32>,
    %c9_i32_81 = arith.constant 9 : i32
    %88 = arith.addi %c9_i32_81, %1 : i32
    %c1_i32_82 = arith.constant 1 : i32
    %89 = arith.addi %88, %c1_i32_82 : i32
    %c0_83 = arith.constant 0 : index
    %90 = arith.index_cast %89 : i32 to index
    %c0_84 = arith.constant 0 : index
    %c0_85 = arith.constant 0 : index
    %91 = vector.load %arg3[%c0_83, %90, %c0_84, %c0_85] : memref<1x36x9x32xbf16, #tpu.memory_space<vmem>>, vector<1x8x8x32xbf16>
    %92 = vector.shape_cast %91 : vector<1x8x8x32xbf16> to vector<8x8x32xbf16>
    %93 = vector.shape_cast %92 : vector<8x8x32xbf16> to vector<64x32xbf16>
    %c0_86 = arith.constant 0 : index
    %c0_87 = arith.constant 0 : index
    %94 = vector.load %arg8[%c0_86, %c0_87] : memref<64x32xf32, #tpu.memory_space<vmem>>, vector<64x32xf32>
    %c7 = arith.constant 7 : index
    %c0_88 = arith.constant 0 : index
    %c0_89 = arith.constant 0 : index
    %95 = vector.load %arg4[%c7, %c0_88, %c0_89] : memref<9x32x32xbf16, #tpu.memory_space<vmem>>, vector<1x32x32xbf16>
    %96 = vector.shape_cast %95 : vector<1x32x32xbf16> to vector<32x32xbf16>
    %cst_90 = arith.constant dense<0.000000e+00> : vector<64x32xf32>
    %97 = tpu.matmul %93, %96, %cst_90 {dimension_numbers = #tpu.dot_dimension_numbers<[1], [0], [0], [1], [0, 0, 1, 1], [], []>} : vector<64x32xbf16>, vector<32x32xbf16>, vector<64x32xf32> -> vector<64x32xf32>
    %98 = arith.addf %94, %97 : vector<64x32xf32>
    %c0_91 = arith.constant 0 : index
    %c0_92 = arith.constant 0 : index
    %99 = vector.load %arg8[%c0_91, %c0_92] : memref<64x32xf32, #tpu.memory_space<vmem>>, vector<64x32xf32>
    tpu.vector_store %arg8[%c0_91, %c0_92], %98 {strides = array<i32>} : memref<64x32xf32, #tpu.memory_space<vmem>>, vector<64x32xf32>,
    %c0_i32_93 = arith.constant 0 : i32
    %100 = arith.addi %c0_i32_93, %1 : i32
    %c1_i32_94 = arith.constant 1 : i32
    %101 = arith.addi %100, %c1_i32_94 : i32
    %c0_95 = arith.constant 0 : index
    %102 = arith.index_cast %101 : i32 to index
    %c1_96 = arith.constant 1 : index
    %c0_97 = arith.constant 0 : index
    %103 = vector.load %arg3[%c0_95, %102, %c1_96, %c0_97] : memref<1x36x9x32xbf16, #tpu.memory_space<vmem>>, vector<1x8x8x32xbf16>
    %104 = vector.shape_cast %103 : vector<1x8x8x32xbf16> to vector<8x8x32xbf16>
    %105 = vector.shape_cast %104 : vector<8x8x32xbf16> to vector<64x32xbf16>
    %c0_98 = arith.constant 0 : index
    %c0_99 = arith.constant 0 : index
    %106 = vector.load %arg8[%c0_98, %c0_99] : memref<64x32xf32, #tpu.memory_space<vmem>>, vector<64x32xf32>
    %c8 = arith.constant 8 : index
    %c0_100 = arith.constant 0 : index
    %c0_101 = arith.constant 0 : index
    %107 = vector.load %arg4[%c8, %c0_100, %c0_101] : memref<9x32x32xbf16, #tpu.memory_space<vmem>>, vector<1x32x32xbf16>
    %108 = vector.shape_cast %107 : vector<1x32x32xbf16> to vector<32x32xbf16>
    %cst_102 = arith.constant dense<0.000000e+00> : vector<64x32xf32>
    %109 = tpu.matmul %105, %108, %cst_102 {dimension_numbers = #tpu.dot_dimension_numbers<[1], [0], [0], [1], [0, 0, 1, 1], [], []>} : vector<64x32xbf16>, vector<32x32xbf16>, vector<64x32xf32> -> vector<64x32xf32>
    %110 = arith.addf %106, %109 : vector<64x32xf32>
    %c0_103 = arith.constant 0 : index
    %c0_104 = arith.constant 0 : index
    %111 = vector.load %arg8[%c0_103, %c0_104] : memref<64x32xf32, #tpu.memory_space<vmem>>, vector<64x32xf32>
    tpu.vector_store %arg8[%c0_103, %c0_104], %110 {strides = array<i32>} : memref<64x32xf32, #tpu.memory_space<vmem>>, vector<64x32xf32>,
    %c0_105 = arith.constant 0 : index
    %c0_106 = arith.constant 0 : index
    %112 = vector.load %arg8[%c0_105, %c0_106] : memref<64x32xf32, #tpu.memory_space<vmem>>, vector<64x32xf32>
    %c0_107 = arith.constant 0 : index
    %c0_108 = arith.constant 0 : index
    %113 = vector.load %arg5[%c0_107, %c0_108] : memref<1x32xf32, #tpu.memory_space<vmem>>, vector<1x32xf32>
    %114 = vector.broadcast %113 : vector<1x32xf32> to vector<64x32xf32>
    %115 = arith.mulf %112, %114 : vector<64x32xf32>
    %c0_109 = arith.constant 0 : index
    %c0_110 = arith.constant 0 : index
    %116 = vector.load %arg6[%c0_109, %c0_110] : memref<1x32xf32, #tpu.memory_space<vmem>>, vector<1x32xf32>
    %117 = vector.broadcast %116 : vector<1x32xf32> to vector<64x32xf32>
    %118 = arith.addf %115, %117 : vector<64x32xf32>
    %cst_111 = arith.constant 0.000000e+00 : f32
    %119 = vector.broadcast %cst_111 : f32 to vector<64x32xf32>
    %120 = arith.maximumf %118, %119 : vector<64x32xf32>
    %121 = vector.shape_cast %120 : vector<64x32xf32> to vector<1x1x64x32xf32>
    %122 = arith.truncf %121 : vector<1x1x64x32xf32> to vector<1x1x64x32xbf16>
    %c0_112 = arith.constant 0 : index
    %c0_113 = arith.constant 0 : index
    %c0_114 = arith.constant 0 : index
    %c0_115 = arith.constant 0 : index
    %123 = vector.load %arg7[%c0_112, %c0_113, %c0_114, %c0_115] : memref<1x1x64x32xbf16, #tpu.memory_space<vmem>>, vector<1x1x64x32xbf16>
    tpu.vector_store %arg7[%c0_112, %c0_113, %c0_114, %c0_115], %122 {strides = array<i32>} : memref<1x1x64x32xbf16, #tpu.memory_space<vmem>>, vector<1x1x64x32xbf16>,
    return
  }
  func.func @transform_0(%arg0: i32, %arg1: i32, %arg2: i32) -> (i32, i32, i32, i32) {
    %c0_i32 = arith.constant 0 : i32
    %c0_i32_0 = arith.constant 0 : i32
    %c0_i32_1 = arith.constant 0 : i32
    %c0_i32_2 = arith.constant 0 : i32
    return %arg0, %c0_i32, %c0_i32_0, %c0_i32_1 : i32, i32, i32, i32
  }
  func.func @transform_1(%arg0: i32, %arg1: i32, %arg2: i32) -> (i32, i32, i32) {
    %c0_i32 = arith.constant 0 : i32
    %c0_i32_0 = arith.constant 0 : i32
    %c0_i32_1 = arith.constant 0 : i32
    return %c0_i32, %c0_i32_0, %arg2 : i32, i32, i32
  }
  func.func @transform_2(%arg0: i32, %arg1: i32, %arg2: i32) -> (i32, i32) {
    %c0_i32 = arith.constant 0 : i32
    %c0_i32_0 = arith.constant 0 : i32
    return %c0_i32, %arg2 : i32, i32
  }
  func.func @transform_3(%arg0: i32, %arg1: i32, %arg2: i32) -> (i32, i32) {
    %c0_i32 = arith.constant 0 : i32
    %c0_i32_0 = arith.constant 0 : i32
    return %c0_i32, %arg2 : i32, i32
  }
  func.func @transform_4(%arg0: i32, %arg1: i32, %arg2: i32) -> (i32, i32, i32, i32) {
    %c0_i32 = arith.constant 0 : i32
    %c0_i32_0 = arith.constant 0 : i32
    return %arg0, %arg1, %c0_i32, %arg2 : i32, i32, i32, i32
  }
}

module attributes {stable_mosaic.version = 11 : i64} {
  func.func @kernel(%arg0: i32, %arg1: i32, %arg2: memref<128x32xbf16, #tpu.memory_space<vmem>>, %arg3: memref<32x128xbf16, #tpu.memory_space<vmem>>, %arg4: memref<1x128xf32, #tpu.memory_space<vmem>>, %arg5: memref<1x128xf32, #tpu.memory_space<vmem>>, %arg6: memref<128x128xbf16, #tpu.memory_space<vmem>>, %arg7: memref<128x128xbf16, #tpu.memory_space<vmem>>) attributes {dimension_semantics = [#tpu.dimension_semantics<parallel>, #tpu.dimension_semantics<parallel>], iteration_bounds = array<i64: 1, 1>, scalar_prefetch = 0 : i64, scratch_operands = 0 : i64, tpu.core_type = #tpu.core_type<tc>, window_params = [{transform_indices = @transform_0, window_bounds = array<i64: 128, 32>}, {transform_indices = @transform_1, window_bounds = array<i64: 32, 128>}, {transform_indices = @transform_2, window_bounds = array<i64: 1, 128>}, {transform_indices = @transform_3, window_bounds = array<i64: 1, 128>}, {transform_indices = @transform_4, window_bounds = array<i64: 128, 128>}, {transform_indices = @transform_5, window_bounds = array<i64: 128, 128>}]} {
    %c0 = arith.constant 0 : index
    %c0_0 = arith.constant 0 : index
    %0 = vector.load %arg2[%c0, %c0_0] : memref<128x32xbf16, #tpu.memory_space<vmem>>, vector<128x32xbf16>
    %c0_1 = arith.constant 0 : index
    %c0_2 = arith.constant 0 : index
    %1 = vector.load %arg3[%c0_1, %c0_2] : memref<32x128xbf16, #tpu.memory_space<vmem>>, vector<32x128xbf16>
    %cst = arith.constant dense<0.000000e+00> : vector<128x128xf32>
    %2 = tpu.matmul %0, %1, %cst {dimension_numbers = #tpu.dot_dimension_numbers<[1], [0], [0], [1], [0, 0, 1, 1], [], []>} : vector<128x32xbf16>, vector<32x128xbf16>, vector<128x128xf32> -> vector<128x128xf32>
    %c0_3 = arith.constant 0 : index
    %c0_4 = arith.constant 0 : index
    %3 = vector.load %arg4[%c0_3, %c0_4] : memref<1x128xf32, #tpu.memory_space<vmem>>, vector<1x128xf32>
    %4 = vector.broadcast %3 : vector<1x128xf32> to vector<128x128xf32>
    %5 = arith.mulf %2, %4 : vector<128x128xf32>
    %c0_5 = arith.constant 0 : index
    %c0_6 = arith.constant 0 : index
    %6 = vector.load %arg5[%c0_5, %c0_6] : memref<1x128xf32, #tpu.memory_space<vmem>>, vector<1x128xf32>
    %7 = vector.broadcast %6 : vector<1x128xf32> to vector<128x128xf32>
    %8 = arith.addf %5, %7 : vector<128x128xf32>
    %c0_7 = arith.constant 0 : index
    %c0_8 = arith.constant 0 : index
    %9 = vector.load %arg6[%c0_7, %c0_8] : memref<128x128xbf16, #tpu.memory_space<vmem>>, vector<128x128xbf16>
    %10 = arith.extf %9 : vector<128x128xbf16> to vector<128x128xf32>
    %11 = arith.addf %8, %10 : vector<128x128xf32>
    %cst_9 = arith.constant 0.000000e+00 : f32
    %12 = vector.broadcast %cst_9 : f32 to vector<128x128xf32>
    %13 = arith.maximumf %11, %12 : vector<128x128xf32>
    %14 = arith.truncf %13 : vector<128x128xf32> to vector<128x128xbf16>
    %c0_10 = arith.constant 0 : index
    %c0_11 = arith.constant 0 : index
    %15 = vector.load %arg7[%c0_10, %c0_11] : memref<128x128xbf16, #tpu.memory_space<vmem>>, vector<128x128xbf16>
    tpu.vector_store %arg7[%c0_10, %c0_11], %14 {strides = array<i32>} : memref<128x128xbf16, #tpu.memory_space<vmem>>, vector<128x128xbf16>,
    return
  }
  func.func @transform_0(%arg0: i32, %arg1: i32) -> (i32, i32) {
    %c0_i32 = arith.constant 0 : i32
    %c0_i32_0 = arith.constant 0 : i32
    return %arg0, %c0_i32 : i32, i32
  }
  func.func @transform_1(%arg0: i32, %arg1: i32) -> (i32, i32) {
    %c0_i32 = arith.constant 0 : i32
    %c0_i32_0 = arith.constant 0 : i32
    return %c0_i32, %arg1 : i32, i32
  }
  func.func @transform_2(%arg0: i32, %arg1: i32) -> (i32, i32) {
    %c0_i32 = arith.constant 0 : i32
    %c0_i32_0 = arith.constant 0 : i32
    return %c0_i32, %arg1 : i32, i32
  }
  func.func @transform_3(%arg0: i32, %arg1: i32) -> (i32, i32) {
    %c0_i32 = arith.constant 0 : i32
    %c0_i32_0 = arith.constant 0 : i32
    return %c0_i32, %arg1 : i32, i32
  }
  func.func @transform_4(%arg0: i32, %arg1: i32) -> (i32, i32) {
    %c0_i32 = arith.constant 0 : i32
    return %arg0, %arg1 : i32, i32
  }
  func.func @transform_5(%arg0: i32, %arg1: i32) -> (i32, i32) {
    %c0_i32 = arith.constant 0 : i32
    return %arg0, %arg1 : i32, i32
  }
}

module attributes {stable_mosaic.version = 11 : i64} {
  func.func @kernel(%arg0: i32, %arg1: i32, %arg2: memref<128x128xbf16, #tpu.memory_space<vmem>>, %arg3: memref<128x32xbf16, #tpu.memory_space<vmem>>, %arg4: memref<1x32xf32, #tpu.memory_space<vmem>>, %arg5: memref<1x32xf32, #tpu.memory_space<vmem>>, %arg6: memref<128x32xbf16, #tpu.memory_space<vmem>>) attributes {dimension_semantics = [#tpu.dimension_semantics<parallel>, #tpu.dimension_semantics<parallel>], iteration_bounds = array<i64: 1, 1>, scalar_prefetch = 0 : i64, scratch_operands = 0 : i64, tpu.core_type = #tpu.core_type<tc>, window_params = [{transform_indices = @transform_0, window_bounds = array<i64: 128, 128>}, {transform_indices = @transform_1, window_bounds = array<i64: 128, 32>}, {transform_indices = @transform_2, window_bounds = array<i64: 1, 32>}, {transform_indices = @transform_3, window_bounds = array<i64: 1, 32>}, {transform_indices = @transform_4, window_bounds = array<i64: 128, 32>}]} {
    %c0 = arith.constant 0 : index
    %c0_0 = arith.constant 0 : index
    %0 = vector.load %arg2[%c0, %c0_0] : memref<128x128xbf16, #tpu.memory_space<vmem>>, vector<128x128xbf16>
    %c0_1 = arith.constant 0 : index
    %c0_2 = arith.constant 0 : index
    %1 = vector.load %arg3[%c0_1, %c0_2] : memref<128x32xbf16, #tpu.memory_space<vmem>>, vector<128x32xbf16>
    %cst = arith.constant dense<0.000000e+00> : vector<128x32xf32>
    %2 = tpu.matmul %0, %1, %cst {dimension_numbers = #tpu.dot_dimension_numbers<[1], [0], [0], [1], [0, 0, 1, 1], [], []>} : vector<128x128xbf16>, vector<128x32xbf16>, vector<128x32xf32> -> vector<128x32xf32>
    %c0_3 = arith.constant 0 : index
    %c0_4 = arith.constant 0 : index
    %3 = vector.load %arg4[%c0_3, %c0_4] : memref<1x32xf32, #tpu.memory_space<vmem>>, vector<1x32xf32>
    %4 = vector.broadcast %3 : vector<1x32xf32> to vector<128x32xf32>
    %5 = arith.mulf %2, %4 : vector<128x32xf32>
    %c0_5 = arith.constant 0 : index
    %c0_6 = arith.constant 0 : index
    %6 = vector.load %arg5[%c0_5, %c0_6] : memref<1x32xf32, #tpu.memory_space<vmem>>, vector<1x32xf32>
    %7 = vector.broadcast %6 : vector<1x32xf32> to vector<128x32xf32>
    %8 = arith.addf %5, %7 : vector<128x32xf32>
    %cst_7 = arith.constant 0.000000e+00 : f32
    %9 = vector.broadcast %cst_7 : f32 to vector<128x32xf32>
    %10 = arith.maximumf %8, %9 : vector<128x32xf32>
    %11 = arith.truncf %10 : vector<128x32xf32> to vector<128x32xbf16>
    %c0_8 = arith.constant 0 : index
    %c0_9 = arith.constant 0 : index
    %12 = vector.load %arg6[%c0_8, %c0_9] : memref<128x32xbf16, #tpu.memory_space<vmem>>, vector<128x32xbf16>
    tpu.vector_store %arg6[%c0_8, %c0_9], %11 {strides = array<i32>} : memref<128x32xbf16, #tpu.memory_space<vmem>>, vector<128x32xbf16>,
    return
  }
  func.func @transform_0(%arg0: i32, %arg1: i32) -> (i32, i32) {
    %c0_i32 = arith.constant 0 : i32
    %c0_i32_0 = arith.constant 0 : i32
    return %arg0, %c0_i32 : i32, i32
  }
  func.func @transform_1(%arg0: i32, %arg1: i32) -> (i32, i32) {
    %c0_i32 = arith.constant 0 : i32
    %c0_i32_0 = arith.constant 0 : i32
    return %c0_i32, %arg1 : i32, i32
  }
  func.func @transform_2(%arg0: i32, %arg1: i32) -> (i32, i32) {
    %c0_i32 = arith.constant 0 : i32
    %c0_i32_0 = arith.constant 0 : i32
    return %c0_i32, %arg1 : i32, i32
  }
  func.func @transform_3(%arg0: i32, %arg1: i32) -> (i32, i32) {
    %c0_i32 = arith.constant 0 : i32
    %c0_i32_0 = arith.constant 0 : i32
    return %c0_i32, %arg1 : i32, i32
  }
  func.func @transform_4(%arg0: i32, %arg1: i32) -> (i32, i32) {
    %c0_i32 = arith.constant 0 : i32
    return %arg0, %arg1 : i32, i32
  }
}

module attributes {stable_mosaic.version = 11 : i64} {
  func.func @kernel(%arg0: i32, %arg1: i32, %arg2: memref<128x64xbf16, #tpu.memory_space<vmem>>, %arg3: memref<64x128xbf16, #tpu.memory_space<vmem>>, %arg4: memref<1x128xf32, #tpu.memory_space<vmem>>, %arg5: memref<1x128xf32, #tpu.memory_space<vmem>>, %arg6: memref<128x128xbf16, #tpu.memory_space<vmem>>) attributes {dimension_semantics = [#tpu.dimension_semantics<parallel>, #tpu.dimension_semantics<parallel>], iteration_bounds = array<i64: 1, 1>, scalar_prefetch = 0 : i64, scratch_operands = 0 : i64, tpu.core_type = #tpu.core_type<tc>, window_params = [{transform_indices = @transform_0, window_bounds = array<i64: 128, 64>}, {transform_indices = @transform_1, window_bounds = array<i64: 64, 128>}, {transform_indices = @transform_2, window_bounds = array<i64: 1, 128>}, {transform_indices = @transform_3, window_bounds = array<i64: 1, 128>}, {transform_indices = @transform_4, window_bounds = array<i64: 128, 128>}]} {
    %c0 = arith.constant 0 : index
    %c0_0 = arith.constant 0 : index
    %0 = vector.load %arg2[%c0, %c0_0] : memref<128x64xbf16, #tpu.memory_space<vmem>>, vector<128x64xbf16>
    %c0_1 = arith.constant 0 : index
    %c0_2 = arith.constant 0 : index
    %1 = vector.load %arg3[%c0_1, %c0_2] : memref<64x128xbf16, #tpu.memory_space<vmem>>, vector<64x128xbf16>
    %cst = arith.constant dense<0.000000e+00> : vector<128x128xf32>
    %2 = tpu.matmul %0, %1, %cst {dimension_numbers = #tpu.dot_dimension_numbers<[1], [0], [0], [1], [0, 0, 1, 1], [], []>} : vector<128x64xbf16>, vector<64x128xbf16>, vector<128x128xf32> -> vector<128x128xf32>
    %c0_3 = arith.constant 0 : index
    %c0_4 = arith.constant 0 : index
    %3 = vector.load %arg4[%c0_3, %c0_4] : memref<1x128xf32, #tpu.memory_space<vmem>>, vector<1x128xf32>
    %4 = vector.broadcast %3 : vector<1x128xf32> to vector<128x128xf32>
    %5 = arith.mulf %2, %4 : vector<128x128xf32>
    %c0_5 = arith.constant 0 : index
    %c0_6 = arith.constant 0 : index
    %6 = vector.load %arg5[%c0_5, %c0_6] : memref<1x128xf32, #tpu.memory_space<vmem>>, vector<1x128xf32>
    %7 = vector.broadcast %6 : vector<1x128xf32> to vector<128x128xf32>
    %8 = arith.addf %5, %7 : vector<128x128xf32>
    %9 = arith.truncf %8 : vector<128x128xf32> to vector<128x128xbf16>
    %c0_7 = arith.constant 0 : index
    %c0_8 = arith.constant 0 : index
    %10 = vector.load %arg6[%c0_7, %c0_8] : memref<128x128xbf16, #tpu.memory_space<vmem>>, vector<128x128xbf16>
    tpu.vector_store %arg6[%c0_7, %c0_8], %9 {strides = array<i32>} : memref<128x128xbf16, #tpu.memory_space<vmem>>, vector<128x128xbf16>,
    return
  }
  func.func @transform_0(%arg0: i32, %arg1: i32) -> (i32, i32) {
    %c0_i32 = arith.constant 0 : i32
    %c0_i32_0 = arith.constant 0 : i32
    return %arg0, %c0_i32 : i32, i32
  }
  func.func @transform_1(%arg0: i32, %arg1: i32) -> (i32, i32) {
    %c0_i32 = arith.constant 0 : i32
    %c0_i32_0 = arith.constant 0 : i32
    return %c0_i32, %arg1 : i32, i32
  }
  func.func @transform_2(%arg0: i32, %arg1: i32) -> (i32, i32) {
    %c0_i32 = arith.constant 0 : i32
    %c0_i32_0 = arith.constant 0 : i32
    return %c0_i32, %arg1 : i32, i32
  }
  func.func @transform_3(%arg0: i32, %arg1: i32) -> (i32, i32) {
    %c0_i32 = arith.constant 0 : i32
    %c0_i32_0 = arith.constant 0 : i32
    return %c0_i32, %arg1 : i32, i32
  }
  func.func @transform_4(%arg0: i32, %arg1: i32) -> (i32, i32) {
    %c0_i32 = arith.constant 0 : i32
    return %arg0, %arg1 : i32, i32
  }
}

module attributes {stable_mosaic.version = 11 : i64} {
  func.func @kernel(%arg0: i32, %arg1: i32, %arg2: i32, %arg3: memref<1x12x12x32xbf16, #tpu.memory_space<vmem>>, %arg4: memref<9x32x32xbf16, #tpu.memory_space<vmem>>, %arg5: memref<1x32xf32, #tpu.memory_space<vmem>>, %arg6: memref<1x32xf32, #tpu.memory_space<vmem>>, %arg7: memref<1x1x64x32xbf16, #tpu.memory_space<vmem>>, %arg8: memref<64x32xf32, #tpu.memory_space<vmem>>) attributes {dimension_semantics = [#tpu.dimension_semantics<parallel>, #tpu.dimension_semantics<parallel>, #tpu.dimension_semantics<parallel>], iteration_bounds = array<i64: 2, 1, 1>, scalar_prefetch = 0 : i64, scratch_operands = 1 : i64, tpu.core_type = #tpu.core_type<tc>, window_params = [{transform_indices = @transform_0, window_bounds = array<i64: 1, 12, 12, 32>}, {transform_indices = @transform_1, window_bounds = array<i64: 9, 32, 32>}, {transform_indices = @transform_2, window_bounds = array<i64: 1, 32>}, {transform_indices = @transform_3, window_bounds = array<i64: 1, 32>}, {transform_indices = @transform_4, window_bounds = array<i64: 1, 1, 64, 32>}]} {
    %c8_i32 = arith.constant 8 : i32
    %0 = arith.muli %arg1, %c8_i32 : i32
    %1 = tpu.assume_multiple %0, 8 : i32
    %cst = arith.constant 0.000000e+00 : f32
    %2 = vector.broadcast %cst : f32 to vector<64x32xf32>
    %c0 = arith.constant 0 : index
    %c0_0 = arith.constant 0 : index
    %3 = vector.load %arg8[%c0, %c0_0] : memref<64x32xf32, #tpu.memory_space<vmem>>, vector<64x32xf32>
    tpu.vector_store %arg8[%c0, %c0_0], %2 {strides = array<i32>} : memref<64x32xf32, #tpu.memory_space<vmem>>, vector<64x32xf32>,
    %c0_i32 = arith.constant 0 : i32
    %4 = arith.addi %c0_i32, %1 : i32
    %c0_i32_1 = arith.constant 0 : i32
    %5 = arith.addi %4, %c0_i32_1 : i32
    %c0_2 = arith.constant 0 : index
    %6 = arith.index_cast %5 : i32 to index
    %c0_3 = arith.constant 0 : index
    %c0_4 = arith.constant 0 : index
    %7 = vector.load %arg3[%c0_2, %6, %c0_3, %c0_4] : memref<1x12x12x32xbf16, #tpu.memory_space<vmem>>, vector<1x8x8x32xbf16>
    %8 = vector.shape_cast %7 : vector<1x8x8x32xbf16> to vector<8x8x32xbf16>
    %9 = vector.shape_cast %8 : vector<8x8x32xbf16> to vector<64x32xbf16>
    %c0_5 = arith.constant 0 : index
    %c0_6 = arith.constant 0 : index
    %10 = vector.load %arg8[%c0_5, %c0_6] : memref<64x32xf32, #tpu.memory_space<vmem>>, vector<64x32xf32>
    %c0_7 = arith.constant 0 : index
    %c0_8 = arith.constant 0 : index
    %c0_9 = arith.constant 0 : index
    %11 = vector.load %arg4[%c0_7, %c0_8, %c0_9] : memref<9x32x32xbf16, #tpu.memory_space<vmem>>, vector<1x32x32xbf16>
    %12 = vector.shape_cast %11 : vector<1x32x32xbf16> to vector<32x32xbf16>
    %cst_10 = arith.constant dense<0.000000e+00> : vector<64x32xf32>
    %13 = tpu.matmul %9, %12, %cst_10 {dimension_numbers = #tpu.dot_dimension_numbers<[1], [0], [0], [1], [0, 0, 1, 1], [], []>} : vector<64x32xbf16>, vector<32x32xbf16>, vector<64x32xf32> -> vector<64x32xf32>
    %14 = arith.addf %10, %13 : vector<64x32xf32>
    %c0_11 = arith.constant 0 : index
    %c0_12 = arith.constant 0 : index
    %15 = vector.load %arg8[%c0_11, %c0_12] : memref<64x32xf32, #tpu.memory_space<vmem>>, vector<64x32xf32>
    tpu.vector_store %arg8[%c0_11, %c0_12], %14 {strides = array<i32>} : memref<64x32xf32, #tpu.memory_space<vmem>>, vector<64x32xf32>,
    %c0_i32_13 = arith.constant 0 : i32
    %16 = arith.addi %c0_i32_13, %1 : i32
    %c0_i32_14 = arith.constant 0 : i32
    %17 = arith.addi %16, %c0_i32_14 : i32
    %c0_15 = arith.constant 0 : index
    %18 = arith.index_cast %17 : i32 to index
    %c2 = arith.constant 2 : index
    %c0_16 = arith.constant 0 : index
    %19 = vector.load %arg3[%c0_15, %18, %c2, %c0_16] : memref<1x12x12x32xbf16, #tpu.memory_space<vmem>>, vector<1x8x8x32xbf16>
    %20 = vector.shape_cast %19 : vector<1x8x8x32xbf16> to vector<8x8x32xbf16>
    %21 = vector.shape_cast %20 : vector<8x8x32xbf16> to vector<64x32xbf16>
    %c0_17 = arith.constant 0 : index
    %c0_18 = arith.constant 0 : index
    %22 = vector.load %arg8[%c0_17, %c0_18] : memref<64x32xf32, #tpu.memory_space<vmem>>, vector<64x32xf32>
    %c1 = arith.constant 1 : index
    %c0_19 = arith.constant 0 : index
    %c0_20 = arith.constant 0 : index
    %23 = vector.load %arg4[%c1, %c0_19, %c0_20] : memref<9x32x32xbf16, #tpu.memory_space<vmem>>, vector<1x32x32xbf16>
    %24 = vector.shape_cast %23 : vector<1x32x32xbf16> to vector<32x32xbf16>
    %cst_21 = arith.constant dense<0.000000e+00> : vector<64x32xf32>
    %25 = tpu.matmul %21, %24, %cst_21 {dimension_numbers = #tpu.dot_dimension_numbers<[1], [0], [0], [1], [0, 0, 1, 1], [], []>} : vector<64x32xbf16>, vector<32x32xbf16>, vector<64x32xf32> -> vector<64x32xf32>
    %26 = arith.addf %22, %25 : vector<64x32xf32>
    %c0_22 = arith.constant 0 : index
    %c0_23 = arith.constant 0 : index
    %27 = vector.load %arg8[%c0_22, %c0_23] : memref<64x32xf32, #tpu.memory_space<vmem>>, vector<64x32xf32>
    tpu.vector_store %arg8[%c0_22, %c0_23], %26 {strides = array<i32>} : memref<64x32xf32, #tpu.memory_space<vmem>>, vector<64x32xf32>,
    %c0_i32_24 = arith.constant 0 : i32
    %28 = arith.addi %c0_i32_24, %1 : i32
    %c0_i32_25 = arith.constant 0 : i32
    %29 = arith.addi %28, %c0_i32_25 : i32
    %c0_26 = arith.constant 0 : index
    %30 = arith.index_cast %29 : i32 to index
    %c4 = arith.constant 4 : index
    %c0_27 = arith.constant 0 : index
    %31 = vector.load %arg3[%c0_26, %30, %c4, %c0_27] : memref<1x12x12x32xbf16, #tpu.memory_space<vmem>>, vector<1x8x8x32xbf16>
    %32 = vector.shape_cast %31 : vector<1x8x8x32xbf16> to vector<8x8x32xbf16>
    %33 = vector.shape_cast %32 : vector<8x8x32xbf16> to vector<64x32xbf16>
    %c0_28 = arith.constant 0 : index
    %c0_29 = arith.constant 0 : index
    %34 = vector.load %arg8[%c0_28, %c0_29] : memref<64x32xf32, #tpu.memory_space<vmem>>, vector<64x32xf32>
    %c2_30 = arith.constant 2 : index
    %c0_31 = arith.constant 0 : index
    %c0_32 = arith.constant 0 : index
    %35 = vector.load %arg4[%c2_30, %c0_31, %c0_32] : memref<9x32x32xbf16, #tpu.memory_space<vmem>>, vector<1x32x32xbf16>
    %36 = vector.shape_cast %35 : vector<1x32x32xbf16> to vector<32x32xbf16>
    %cst_33 = arith.constant dense<0.000000e+00> : vector<64x32xf32>
    %37 = tpu.matmul %33, %36, %cst_33 {dimension_numbers = #tpu.dot_dimension_numbers<[1], [0], [0], [1], [0, 0, 1, 1], [], []>} : vector<64x32xbf16>, vector<32x32xbf16>, vector<64x32xf32> -> vector<64x32xf32>
    %38 = arith.addf %34, %37 : vector<64x32xf32>
    %c0_34 = arith.constant 0 : index
    %c0_35 = arith.constant 0 : index
    %39 = vector.load %arg8[%c0_34, %c0_35] : memref<64x32xf32, #tpu.memory_space<vmem>>, vector<64x32xf32>
    tpu.vector_store %arg8[%c0_34, %c0_35], %38 {strides = array<i32>} : memref<64x32xf32, #tpu.memory_space<vmem>>, vector<64x32xf32>,
    %c0_i32_36 = arith.constant 0 : i32
    %40 = arith.addi %c0_i32_36, %1 : i32
    %c2_i32 = arith.constant 2 : i32
    %41 = arith.addi %40, %c2_i32 : i32
    %c0_37 = arith.constant 0 : index
    %42 = arith.index_cast %41 : i32 to index
    %c0_38 = arith.constant 0 : index
    %c0_39 = arith.constant 0 : index
    %43 = vector.load %arg3[%c0_37, %42, %c0_38, %c0_39] : memref<1x12x12x32xbf16, #tpu.memory_space<vmem>>, vector<1x8x8x32xbf16>
    %44 = vector.shape_cast %43 : vector<1x8x8x32xbf16> to vector<8x8x32xbf16>
    %45 = vector.shape_cast %44 : vector<8x8x32xbf16> to vector<64x32xbf16>
    %c0_40 = arith.constant 0 : index
    %c0_41 = arith.constant 0 : index
    %46 = vector.load %arg8[%c0_40, %c0_41] : memref<64x32xf32, #tpu.memory_space<vmem>>, vector<64x32xf32>
    %c3 = arith.constant 3 : index
    %c0_42 = arith.constant 0 : index
    %c0_43 = arith.constant 0 : index
    %47 = vector.load %arg4[%c3, %c0_42, %c0_43] : memref<9x32x32xbf16, #tpu.memory_space<vmem>>, vector<1x32x32xbf16>
    %48 = vector.shape_cast %47 : vector<1x32x32xbf16> to vector<32x32xbf16>
    %cst_44 = arith.constant dense<0.000000e+00> : vector<64x32xf32>
    %49 = tpu.matmul %45, %48, %cst_44 {dimension_numbers = #tpu.dot_dimension_numbers<[1], [0], [0], [1], [0, 0, 1, 1], [], []>} : vector<64x32xbf16>, vector<32x32xbf16>, vector<64x32xf32> -> vector<64x32xf32>
    %50 = arith.addf %46, %49 : vector<64x32xf32>
    %c0_45 = arith.constant 0 : index
    %c0_46 = arith.constant 0 : index
    %51 = vector.load %arg8[%c0_45, %c0_46] : memref<64x32xf32, #tpu.memory_space<vmem>>, vector<64x32xf32>
    tpu.vector_store %arg8[%c0_45, %c0_46], %50 {strides = array<i32>} : memref<64x32xf32, #tpu.memory_space<vmem>>, vector<64x32xf32>,
    %c0_i32_47 = arith.constant 0 : i32
    %52 = arith.addi %c0_i32_47, %1 : i32
    %c2_i32_48 = arith.constant 2 : i32
    %53 = arith.addi %52, %c2_i32_48 : i32
    %c0_49 = arith.constant 0 : index
    %54 = arith.index_cast %53 : i32 to index
    %c2_50 = arith.constant 2 : index
    %c0_51 = arith.constant 0 : index
    %55 = vector.load %arg3[%c0_49, %54, %c2_50, %c0_51] : memref<1x12x12x32xbf16, #tpu.memory_space<vmem>>, vector<1x8x8x32xbf16>
    %56 = vector.shape_cast %55 : vector<1x8x8x32xbf16> to vector<8x8x32xbf16>
    %57 = vector.shape_cast %56 : vector<8x8x32xbf16> to vector<64x32xbf16>
    %c0_52 = arith.constant 0 : index
    %c0_53 = arith.constant 0 : index
    %58 = vector.load %arg8[%c0_52, %c0_53] : memref<64x32xf32, #tpu.memory_space<vmem>>, vector<64x32xf32>
    %c4_54 = arith.constant 4 : index
    %c0_55 = arith.constant 0 : index
    %c0_56 = arith.constant 0 : index
    %59 = vector.load %arg4[%c4_54, %c0_55, %c0_56] : memref<9x32x32xbf16, #tpu.memory_space<vmem>>, vector<1x32x32xbf16>
    %60 = vector.shape_cast %59 : vector<1x32x32xbf16> to vector<32x32xbf16>
    %cst_57 = arith.constant dense<0.000000e+00> : vector<64x32xf32>
    %61 = tpu.matmul %57, %60, %cst_57 {dimension_numbers = #tpu.dot_dimension_numbers<[1], [0], [0], [1], [0, 0, 1, 1], [], []>} : vector<64x32xbf16>, vector<32x32xbf16>, vector<64x32xf32> -> vector<64x32xf32>
    %62 = arith.addf %58, %61 : vector<64x32xf32>
    %c0_58 = arith.constant 0 : index
    %c0_59 = arith.constant 0 : index
    %63 = vector.load %arg8[%c0_58, %c0_59] : memref<64x32xf32, #tpu.memory_space<vmem>>, vector<64x32xf32>
    tpu.vector_store %arg8[%c0_58, %c0_59], %62 {strides = array<i32>} : memref<64x32xf32, #tpu.memory_space<vmem>>, vector<64x32xf32>,
    %c0_i32_60 = arith.constant 0 : i32
    %64 = arith.addi %c0_i32_60, %1 : i32
    %c2_i32_61 = arith.constant 2 : i32
    %65 = arith.addi %64, %c2_i32_61 : i32
    %c0_62 = arith.constant 0 : index
    %66 = arith.index_cast %65 : i32 to index
    %c4_63 = arith.constant 4 : index
    %c0_64 = arith.constant 0 : index
    %67 = vector.load %arg3[%c0_62, %66, %c4_63, %c0_64] : memref<1x12x12x32xbf16, #tpu.memory_space<vmem>>, vector<1x8x8x32xbf16>
    %68 = vector.shape_cast %67 : vector<1x8x8x32xbf16> to vector<8x8x32xbf16>
    %69 = vector.shape_cast %68 : vector<8x8x32xbf16> to vector<64x32xbf16>
    %c0_65 = arith.constant 0 : index
    %c0_66 = arith.constant 0 : index
    %70 = vector.load %arg8[%c0_65, %c0_66] : memref<64x32xf32, #tpu.memory_space<vmem>>, vector<64x32xf32>
    %c5 = arith.constant 5 : index
    %c0_67 = arith.constant 0 : index
    %c0_68 = arith.constant 0 : index
    %71 = vector.load %arg4[%c5, %c0_67, %c0_68] : memref<9x32x32xbf16, #tpu.memory_space<vmem>>, vector<1x32x32xbf16>
    %72 = vector.shape_cast %71 : vector<1x32x32xbf16> to vector<32x32xbf16>
    %cst_69 = arith.constant dense<0.000000e+00> : vector<64x32xf32>
    %73 = tpu.matmul %69, %72, %cst_69 {dimension_numbers = #tpu.dot_dimension_numbers<[1], [0], [0], [1], [0, 0, 1, 1], [], []>} : vector<64x32xbf16>, vector<32x32xbf16>, vector<64x32xf32> -> vector<64x32xf32>
    %74 = arith.addf %70, %73 : vector<64x32xf32>
    %c0_70 = arith.constant 0 : index
    %c0_71 = arith.constant 0 : index
    %75 = vector.load %arg8[%c0_70, %c0_71] : memref<64x32xf32, #tpu.memory_space<vmem>>, vector<64x32xf32>
    tpu.vector_store %arg8[%c0_70, %c0_71], %74 {strides = array<i32>} : memref<64x32xf32, #tpu.memory_space<vmem>>, vector<64x32xf32>,
    %c0_i32_72 = arith.constant 0 : i32
    %76 = arith.addi %c0_i32_72, %1 : i32
    %c4_i32 = arith.constant 4 : i32
    %77 = arith.addi %76, %c4_i32 : i32
    %c0_73 = arith.constant 0 : index
    %78 = arith.index_cast %77 : i32 to index
    %c0_74 = arith.constant 0 : index
    %c0_75 = arith.constant 0 : index
    %79 = vector.load %arg3[%c0_73, %78, %c0_74, %c0_75] : memref<1x12x12x32xbf16, #tpu.memory_space<vmem>>, vector<1x8x8x32xbf16>
    %80 = vector.shape_cast %79 : vector<1x8x8x32xbf16> to vector<8x8x32xbf16>
    %81 = vector.shape_cast %80 : vector<8x8x32xbf16> to vector<64x32xbf16>
    %c0_76 = arith.constant 0 : index
    %c0_77 = arith.constant 0 : index
    %82 = vector.load %arg8[%c0_76, %c0_77] : memref<64x32xf32, #tpu.memory_space<vmem>>, vector<64x32xf32>
    %c6 = arith.constant 6 : index
    %c0_78 = arith.constant 0 : index
    %c0_79 = arith.constant 0 : index
    %83 = vector.load %arg4[%c6, %c0_78, %c0_79] : memref<9x32x32xbf16, #tpu.memory_space<vmem>>, vector<1x32x32xbf16>
    %84 = vector.shape_cast %83 : vector<1x32x32xbf16> to vector<32x32xbf16>
    %cst_80 = arith.constant dense<0.000000e+00> : vector<64x32xf32>
    %85 = tpu.matmul %81, %84, %cst_80 {dimension_numbers = #tpu.dot_dimension_numbers<[1], [0], [0], [1], [0, 0, 1, 1], [], []>} : vector<64x32xbf16>, vector<32x32xbf16>, vector<64x32xf32> -> vector<64x32xf32>
    %86 = arith.addf %82, %85 : vector<64x32xf32>
    %c0_81 = arith.constant 0 : index
    %c0_82 = arith.constant 0 : index
    %87 = vector.load %arg8[%c0_81, %c0_82] : memref<64x32xf32, #tpu.memory_space<vmem>>, vector<64x32xf32>
    tpu.vector_store %arg8[%c0_81, %c0_82], %86 {strides = array<i32>} : memref<64x32xf32, #tpu.memory_space<vmem>>, vector<64x32xf32>,
    %c0_i32_83 = arith.constant 0 : i32
    %88 = arith.addi %c0_i32_83, %1 : i32
    %c4_i32_84 = arith.constant 4 : i32
    %89 = arith.addi %88, %c4_i32_84 : i32
    %c0_85 = arith.constant 0 : index
    %90 = arith.index_cast %89 : i32 to index
    %c2_86 = arith.constant 2 : index
    %c0_87 = arith.constant 0 : index
    %91 = vector.load %arg3[%c0_85, %90, %c2_86, %c0_87] : memref<1x12x12x32xbf16, #tpu.memory_space<vmem>>, vector<1x8x8x32xbf16>
    %92 = vector.shape_cast %91 : vector<1x8x8x32xbf16> to vector<8x8x32xbf16>
    %93 = vector.shape_cast %92 : vector<8x8x32xbf16> to vector<64x32xbf16>
    %c0_88 = arith.constant 0 : index
    %c0_89 = arith.constant 0 : index
    %94 = vector.load %arg8[%c0_88, %c0_89] : memref<64x32xf32, #tpu.memory_space<vmem>>, vector<64x32xf32>
    %c7 = arith.constant 7 : index
    %c0_90 = arith.constant 0 : index
    %c0_91 = arith.constant 0 : index
    %95 = vector.load %arg4[%c7, %c0_90, %c0_91] : memref<9x32x32xbf16, #tpu.memory_space<vmem>>, vector<1x32x32xbf16>
    %96 = vector.shape_cast %95 : vector<1x32x32xbf16> to vector<32x32xbf16>
    %cst_92 = arith.constant dense<0.000000e+00> : vector<64x32xf32>
    %97 = tpu.matmul %93, %96, %cst_92 {dimension_numbers = #tpu.dot_dimension_numbers<[1], [0], [0], [1], [0, 0, 1, 1], [], []>} : vector<64x32xbf16>, vector<32x32xbf16>, vector<64x32xf32> -> vector<64x32xf32>
    %98 = arith.addf %94, %97 : vector<64x32xf32>
    %c0_93 = arith.constant 0 : index
    %c0_94 = arith.constant 0 : index
    %99 = vector.load %arg8[%c0_93, %c0_94] : memref<64x32xf32, #tpu.memory_space<vmem>>, vector<64x32xf32>
    tpu.vector_store %arg8[%c0_93, %c0_94], %98 {strides = array<i32>} : memref<64x32xf32, #tpu.memory_space<vmem>>, vector<64x32xf32>,
    %c0_i32_95 = arith.constant 0 : i32
    %100 = arith.addi %c0_i32_95, %1 : i32
    %c4_i32_96 = arith.constant 4 : i32
    %101 = arith.addi %100, %c4_i32_96 : i32
    %c0_97 = arith.constant 0 : index
    %102 = arith.index_cast %101 : i32 to index
    %c4_98 = arith.constant 4 : index
    %c0_99 = arith.constant 0 : index
    %103 = vector.load %arg3[%c0_97, %102, %c4_98, %c0_99] : memref<1x12x12x32xbf16, #tpu.memory_space<vmem>>, vector<1x8x8x32xbf16>
    %104 = vector.shape_cast %103 : vector<1x8x8x32xbf16> to vector<8x8x32xbf16>
    %105 = vector.shape_cast %104 : vector<8x8x32xbf16> to vector<64x32xbf16>
    %c0_100 = arith.constant 0 : index
    %c0_101 = arith.constant 0 : index
    %106 = vector.load %arg8[%c0_100, %c0_101] : memref<64x32xf32, #tpu.memory_space<vmem>>, vector<64x32xf32>
    %c8 = arith.constant 8 : index
    %c0_102 = arith.constant 0 : index
    %c0_103 = arith.constant 0 : index
    %107 = vector.load %arg4[%c8, %c0_102, %c0_103] : memref<9x32x32xbf16, #tpu.memory_space<vmem>>, vector<1x32x32xbf16>
    %108 = vector.shape_cast %107 : vector<1x32x32xbf16> to vector<32x32xbf16>
    %cst_104 = arith.constant dense<0.000000e+00> : vector<64x32xf32>
    %109 = tpu.matmul %105, %108, %cst_104 {dimension_numbers = #tpu.dot_dimension_numbers<[1], [0], [0], [1], [0, 0, 1, 1], [], []>} : vector<64x32xbf16>, vector<32x32xbf16>, vector<64x32xf32> -> vector<64x32xf32>
    %110 = arith.addf %106, %109 : vector<64x32xf32>
    %c0_105 = arith.constant 0 : index
    %c0_106 = arith.constant 0 : index
    %111 = vector.load %arg8[%c0_105, %c0_106] : memref<64x32xf32, #tpu.memory_space<vmem>>, vector<64x32xf32>
    tpu.vector_store %arg8[%c0_105, %c0_106], %110 {strides = array<i32>} : memref<64x32xf32, #tpu.memory_space<vmem>>, vector<64x32xf32>,
    %c0_107 = arith.constant 0 : index
    %c0_108 = arith.constant 0 : index
    %112 = vector.load %arg8[%c0_107, %c0_108] : memref<64x32xf32, #tpu.memory_space<vmem>>, vector<64x32xf32>
    %c0_109 = arith.constant 0 : index
    %c0_110 = arith.constant 0 : index
    %113 = vector.load %arg5[%c0_109, %c0_110] : memref<1x32xf32, #tpu.memory_space<vmem>>, vector<1x32xf32>
    %114 = vector.broadcast %113 : vector<1x32xf32> to vector<64x32xf32>
    %115 = arith.mulf %112, %114 : vector<64x32xf32>
    %c0_111 = arith.constant 0 : index
    %c0_112 = arith.constant 0 : index
    %116 = vector.load %arg6[%c0_111, %c0_112] : memref<1x32xf32, #tpu.memory_space<vmem>>, vector<1x32xf32>
    %117 = vector.broadcast %116 : vector<1x32xf32> to vector<64x32xf32>
    %118 = arith.addf %115, %117 : vector<64x32xf32>
    %cst_113 = arith.constant 0.000000e+00 : f32
    %119 = vector.broadcast %cst_113 : f32 to vector<64x32xf32>
    %120 = arith.maximumf %118, %119 : vector<64x32xf32>
    %121 = vector.shape_cast %120 : vector<64x32xf32> to vector<1x1x64x32xf32>
    %122 = arith.truncf %121 : vector<1x1x64x32xf32> to vector<1x1x64x32xbf16>
    %c0_114 = arith.constant 0 : index
    %c0_115 = arith.constant 0 : index
    %c0_116 = arith.constant 0 : index
    %c0_117 = arith.constant 0 : index
    %123 = vector.load %arg7[%c0_114, %c0_115, %c0_116, %c0_117] : memref<1x1x64x32xbf16, #tpu.memory_space<vmem>>, vector<1x1x64x32xbf16>
    tpu.vector_store %arg7[%c0_114, %c0_115, %c0_116, %c0_117], %122 {strides = array<i32>} : memref<1x1x64x32xbf16, #tpu.memory_space<vmem>>, vector<1x1x64x32xbf16>,
    return
  }
  func.func @transform_0(%arg0: i32, %arg1: i32, %arg2: i32) -> (i32, i32, i32, i32) {
    %c0_i32 = arith.constant 0 : i32
    %c0_i32_0 = arith.constant 0 : i32
    %c0_i32_1 = arith.constant 0 : i32
    %c0_i32_2 = arith.constant 0 : i32
    return %arg0, %c0_i32, %c0_i32_0, %c0_i32_1 : i32, i32, i32, i32
  }
  func.func @transform_1(%arg0: i32, %arg1: i32, %arg2: i32) -> (i32, i32, i32) {
    %c0_i32 = arith.constant 0 : i32
    %c0_i32_0 = arith.constant 0 : i32
    %c0_i32_1 = arith.constant 0 : i32
    return %c0_i32, %c0_i32_0, %arg2 : i32, i32, i32
  }
  func.func @transform_2(%arg0: i32, %arg1: i32, %arg2: i32) -> (i32, i32) {
    %c0_i32 = arith.constant 0 : i32
    %c0_i32_0 = arith.constant 0 : i32
    return %c0_i32, %arg2 : i32, i32
  }
  func.func @transform_3(%arg0: i32, %arg1: i32, %arg2: i32) -> (i32, i32) {
    %c0_i32 = arith.constant 0 : i32
    %c0_i32_0 = arith.constant 0 : i32
    return %c0_i32, %arg2 : i32, i32
  }
  func.func @transform_4(%arg0: i32, %arg1: i32, %arg2: i32) -> (i32, i32, i32, i32) {
    %c0_i32 = arith.constant 0 : i32
    %c0_i32_0 = arith.constant 0 : i32
    return %arg0, %arg1, %c0_i32, %arg2 : i32, i32, i32, i32
  }
}

</mosaic_0001>

<llo_original>
// kernel: forward.8
$region0: #{forward.8}
  #allocation0 [shape = 'u32[]', space=smem, size = 0x4, offset = 0x4, fixed_abs, tag = 'smem constant byte address 0x4 - core index']
  #allocation1 [shape = 'u32[144,128]{1,0:T(1,128)}', space=vmem, size = 0x12000, scoped, tag = 'internal scratch']
  %s0 = inlined_call_operand.vmem [shape: bf16[512,64], index: 0, kind: input, shape index: {}]
  %s1 = inlined_call_operand.vmem [shape: bf16[64,32], index: 1, kind: input, shape index: {}]
  %s2 = inlined_call_operand.vmem [shape: f32[1,32], index: 2, kind: input, shape index: {}]
  %s3 = inlined_call_operand.vmem [shape: f32[1,32], index: 3, kind: input, shape index: {}]
  %s4 = inlined_call_operand.vmem [shape: bf16[512,32], index: 4, kind: output, shape index: {}]
  %s5 = sld [smem:[#allocation0]]
  $region49: #{forward.8} parent=0
    _
  %s7 = ssub.s32 1, %s5
  %s8 = scalar_select 0, %s7, %s5
  loop: start=0, step=1, limit=4
  $region2: #{forward.8} parent=0 // loop_pre_header
    _
  $region3: #{forward.8} parent=0 // loop_header
    %s10 = sphi 0, %s14
    %p11 = scmp.ge.s32.totalorder %s10, 4
    %s17 = sphi 0, %s29
    %s18 = sphi 0, %s25
    %s19 = sphi 0, %s17
    %s20 = sphi 0, %s18
    %s21 = sphi 0, %s19
    %s22 = sphi 0, %s20
    %s32 = sphi 0, %s34
    %s35 = sphi 0, %s32
    %s36 = sphi 0, %s35
    %s52 = sphi 0, %s36
    %s58 = sphi 0, %s60
    %s61 = sphi 0, %s58
    %s62 = sphi 0, %s61
    %s78 = sphi 0, %s62
    %s84 = sphi 0, %s86
    %s87 = sphi 0, %s84
    %s88 = sphi 0, %s87
    %s104 = sphi 0, %s88
    %s110 = sphi 0, %s112
    %s113 = sphi 0, %s110
    %s114 = sphi 0, %s113
    %s130 = sphi 0, %s114
    %s138 = sphi 0, %s140
    %s141 = sphi 0, %s138
    %s142 = sphi 0, %s141
    %s158 = sphi 0, %s142
  $region4: #{forward.8} parent=0 // loop_header_branch
    %13 = sbr.rel (%p11) target = $region8
  $region5: #{forward.8} parent=0 // loop_body
    %s15 = ssub.s32 %s10, 1
    %s16 = ssub.s32 %s10, 2
    %s23 = sadd.s32 1, %s18
    %p24 = scmp.ge.s32.totalorder %s23, 1
    %s25 = scalar_select %p24, 0, %s23
    %s26 = sadd.s32 1, %s17
    %s27 = scalar_select %p24, %s26, %s17
    %p28 = scmp.ge.s32.totalorder %s27, 2
    %s29 = scalar_select %p28, 0, %s27
    %s30 = ssub.s32 %s17, %s29
    %p31 = scmp.eq.s32.totalorder %s30, 0
    %s33 = sadd.s32 %s32, 1
    %s34 = scalar_select %p31, %s32, %s33
    %p37 = pneg %p31
    %p38 = scmp.eq.s32.totalorder %s10, 1
    %p39 = por %p37, %p38
    %p40 = scmp.ne.s32.totalorder %s32, %s35
    %p41 = scmp.eq.s32.totalorder %s10, 0
    %p42 = por %p40, %p41
    %p43 = scmp.ne.s32.totalorder %s32, %s35
    %p44 = scmp.eq.s32.totalorder %s15, 1
    %p45 = por %p43, %p44
    %p46 = scmp.ne.s32.totalorder %s35, %s36
    %p47 = scmp.eq.s32.totalorder %s15, 0
    %p48 = por %p46, %p47
    %p49 = scmp.ne.s32.totalorder %s35, %s36
    %p50 = scmp.eq.s32.totalorder %s16, 1
    %p51 = por %p49, %p50
    %p53 = scmp.ne.s32.totalorder %s36, %s52
    %p54 = scmp.eq.s32.totalorder %s16, 0
    %p55 = por %p53, %p54
    %s56 = ssub.s32 %s18, %s25
    %p57 = scmp.eq.s32.totalorder %s56, 0
    %s59 = sadd.s32 %s58, 1
    %s60 = scalar_select %p57, %s58, %s59
    %p63 = pneg %p57
    %p64 = scmp.eq.s32.totalorder %s10, 1
    %p65 = por %p63, %p64
    %p66 = scmp.ne.s32.totalorder %s58, %s61
    %p67 = scmp.eq.s32.totalorder %s10, 0
    %p68 = por %p66, %p67
    %p69 = scmp.ne.s32.totalorder %s58, %s61
    %p70 = scmp.eq.s32.totalorder %s15, 1
    %p71 = por %p69, %p70
    %p72 = scmp.ne.s32.totalorder %s61, %s62
    %p73 = scmp.eq.s32.totalorder %s15, 0
    %p74 = por %p72, %p73
    %p75 = scmp.ne.s32.totalorder %s61, %s62
    %p76 = scmp.eq.s32.totalorder %s16, 1
    %p77 = por %p75, %p76
    %p79 = scmp.ne.s32.totalorder %s62, %s78
    %p80 = scmp.eq.s32.totalorder %s16, 0
    %p81 = por %p79, %p80
    %s82 = ssub.s32 %s18, %s25
    %p83 = scmp.eq.s32.totalorder %s82, 0
    %s85 = sadd.s32 %s84, 1
    %s86 = scalar_select %p83, %s84, %s85
    %p89 = pneg %p83
    %p90 = scmp.eq.s32.totalorder %s10, 1
    %p91 = por %p89, %p90
    %p92 = scmp.ne.s32.totalorder %s84, %s87
    %p93 = scmp.eq.s32.totalorder %s10, 0
    %p94 = por %p92, %p93
    %p95 = scmp.ne.s32.totalorder %s84, %s87
    %p96 = scmp.eq.s32.totalorder %s15, 1
    %p97 = por %p95, %p96
    %p98 = scmp.ne.s32.totalorder %s87, %s88
    %p99 = scmp.eq.s32.totalorder %s15, 0
    %p100 = por %p98, %p99
    %p101 = scmp.ne.s32.totalorder %s87, %s88
    %p102 = scmp.eq.s32.totalorder %s16, 1
    %p103 = por %p101, %p102
    %p105 = scmp.ne.s32.totalorder %s88, %s104
    %p106 = scmp.eq.s32.totalorder %s16, 0
    %p107 = por %p105, %p106
    %s108 = ssub.s32 %s18, %s25
    %p109 = scmp.eq.s32.totalorder %s108, 0
    %s111 = sadd.s32 %s110, 1
    %s112 = scalar_select %p109, %s110, %s111
    %p115 = pneg %p109
    %p116 = scmp.eq.s32.totalorder %s10, 1
    %p117 = por %p115, %p116
    %p118 = scmp.ne.s32.totalorder %s110, %s113
    %p119 = scmp.eq.s32.totalorder %s10, 0
    %p120 = por %p118, %p119
    %p121 = scmp.ne.s32.totalorder %s110, %s113
    %p122 = scmp.eq.s32.totalorder %s15, 1
    %p123 = por %p121, %p122
    %p124 = scmp.ne.s32.totalorder %s113, %s114
    %p125 = scmp.eq.s32.totalorder %s15, 0
    %p126 = por %p124, %p125
    %p127 = scmp.ne.s32.totalorder %s113, %s114
    %p128 = scmp.eq.s32.totalorder %s16, 1
    %p129 = por %p127, %p128
    %p131 = scmp.ne.s32.totalorder %s114, %s130
    %p132 = scmp.eq.s32.totalorder %s16, 0
    %p133 = por %p131, %p132
    %s134 = ssub.s32 %s17, %s29
    %s135 = ssub.s32 %s18, %s25
    %s136 = sor.u32 %s134, %s135
    %p137 = scmp.eq.s32.totalorder %s136, 0
    %s139 = sadd.s32 %s138, 1
    %s140 = scalar_select %p137, %s138, %s139
    %p143 = pneg %p137
    %p144 = scmp.eq.s32.totalorder %s10, 1
    %p145 = por %p143, %p144
    %p146 = scmp.ne.s32.totalorder %s138, %s141
    %p147 = scmp.eq.s32.totalorder %s10, 0
    %p148 = por %p146, %p147
    %p149 = scmp.ne.s32.totalorder %s138, %s141
    %p150 = scmp.eq.s32.totalorder %s15, 1
    %p151 = por %p149, %p150
    %p152 = scmp.ne.s32.totalorder %s141, %s142
    %p153 = scmp.eq.s32.totalorder %s15, 0
    %p154 = por %p152, %p153
    %p155 = scmp.ne.s32.totalorder %s141, %s142
    %p156 = scmp.eq.s32.totalorder %s16, 1
    %p157 = por %p155, %p156
    %p159 = scmp.ne.s32.totalorder %s142, %s158
    %p160 = scmp.eq.s32.totalorder %s16, 0
    %p161 = por %p159, %p160
    %p162 = scmp.le.s32.totalorder 1, %s10
    %p163 = scmp.lt.s32.totalorder %s10, 3
    %p164 = pnand %p162, %p163
    %p165 = pneg %p164
    // Predicated region
    $region9: #{forward.8} parent=5 // pred_check
      _
    $region10: #{forward.8} parent=5 // pred_check_branch
      %167 = sbr.rel (%p164) target = $region12
    $region11: #{forward.8} parent=5 // pred_region
      %s168 = ssub.s32 %s10, 1
      // Predicated region
      $region13: #{forward.8} parent=11 // pred_check
        %p169 = pneg %p74
      $region14: #{forward.8} parent=11 // pred_check_branch
        %171 = sbr.rel (%p169) target = $region16
      $region15: #{forward.8} parent=11 // pred_region
        %p172 = scmp.lt.s32.totalorder %s20, 0
        %s173 = scalar_select %p172, %s20, 0
        %s174 = smul.addr %s173, 4
        %s175 = scalar_lea.vmem %s1, %s174
      $region16: #{forward.8} parent=11 // pred_fallthru
        _
      // Predicated region
      $region17: #{forward.8} parent=11 // pred_check
        %p176 = pneg %p100
      $region18: #{forward.8} parent=11 // pred_check_branch
        %178 = sbr.rel (%p176) target = $region20
      $region19: #{forward.8} parent=11 // pred_region
        %p179 = scmp.lt.s32.totalorder %s20, 0
        %s180 = scalar_select %p179, %s20, 0
        %s181 = scalar_lea.vmem %s2, %s180
      $region20: #{forward.8} parent=11 // pred_fallthru
        _
      // Predicated region
      $region21: #{forward.8} parent=11 // pred_check
        %p182 = pneg %p126
      $region22: #{forward.8} parent=11 // pred_check_branch
        %184 = sbr.rel (%p182) target = $region24
      $region23: #{forward.8} parent=11 // pred_region
        %p185 = scmp.lt.s32.totalorder %s20, 0
        %s186 = scalar_select %p185, %s20, 0
        %s187 = scalar_lea.vmem %s3, %s186
      $region24: #{forward.8} parent=11 // pred_fallthru
        _
    $region12: #{forward.8} parent=5 // pred_fallthru
      _
    %p188 = scmp.lt.s32.totalorder %s10, 2
    // Predicated region
    $region25: #{forward.8} parent=5 // pred_check
      %p189 = pneg %p188
    $region26: #{forward.8} parent=5 // pred_check_branch
      %191 = sbr.rel (%p189) target = $region28
    $region27: #{forward.8} parent=5 // pred_region
      // Predicated region
      $region29: #{forward.8} parent=27 // pred_check
        %p192 = pneg %p42
      $region30: #{forward.8} parent=27 // pred_check_branch
        %194 = sbr.rel (%p192) target = $region32
      $region31: #{forward.8} parent=27 // pred_region
        %s195 = smul.u32 32, %s17
        %p196 = scmp.lt.s32.totalorder %s195, 63
        %s197 = scalar_select %p196, %s195, 63
        %s198 = smul.addr %s197, 4
        %s199 = scalar_lea.vmem %s0, %s198
        %s200 = smul.u32 32, %s17
      $region32: #{forward.8} parent=27 // pred_fallthru
        _
    $region28: #{forward.8} parent=5 // pred_fallthru
      _
    %p201 = scmp.le.s32.totalorder 1, %s10
    %p202 = scmp.lt.s32.totalorder %s10, 3
    %p203 = pnand %p201, %p202
    %p204 = pneg %p203
    // Predicated region
    $region33: #{forward.8} parent=5 // pred_check
      _
    $region34: #{forward.8} parent=5 // pred_check_branch
      %206 = sbr.rel (%p203) target = $region36
    $region35: #{forward.8} parent=5 // pred_region
      %s207 = ssub.s32 %s10, 1
      %s208 = smul.u32 32, %s19
      %p209 = scmp.lt.s32.totalorder %s208, 63
      %s210 = scalar_select %p209, %s208, 63
      %s211 = smul.addr %s210, 4
      %s212 = scalar_lea.vmem %s0, %s211
      %p213 = pneg %p48
      %p214 = pneg %p45
      %p215 = scmp.lt.s32.totalorder %s20, 0
      %s216 = scalar_select %p215, %s20, 0
      %s217 = smul.addr %s216, 4
      %s218 = scalar_lea.vmem %s1, %s217
      %p219 = pneg %p74
      %p220 = pneg %p71
      %p221 = scmp.lt.s32.totalorder %s20, 0
      %s222 = scalar_select %p221, %s20, 0
      %s223 = scalar_lea.vmem %s2, %s222
      %p224 = pneg %p100
      %p225 = pneg %p97
      %p226 = scmp.lt.s32.totalorder %s20, 0
      %s227 = scalar_select %p226, %s20, 0
      %s228 = scalar_lea.vmem %s3, %s227
      %p229 = pneg %p126
      %p230 = pneg %p123
      %p231 = pneg %p154
      %p232 = pneg %p151
      %s233 = smul.u32 32, %s19
      %p234 = scmp.lt.s32.totalorder %s233, 63
      %s235 = scalar_select %p234, %s233, 63
      %p236 = scmp.lt.s32.totalorder %s20, 0
      %s237 = scalar_select %p236, %s20, 0
      %s238 = sadd.s32 %s237, %s235
      %s239 = smul.addr %s238, 4
      %s240 = scalar_lea.vmem %s4, %s239
      %s241 = smul.u32 32, %s19
      %p242 = scmp.lt.s32.totalorder %s241, 63
      %s243 = scalar_select %p242, %s241, 63
      %s244 = smul.addr %s243, 4
      %s245 = scalar_lea.vmem %s0, %s244
      %s246 = smul.u32 32, %s19
      %p247 = scmp.lt.s32.totalorder %s20, 0
      %s248 = scalar_select %p247, %s20, 0
      %s249 = smul.addr %s248, 4
      %s250 = scalar_lea.vmem %s1, %s249
      %p251 = scmp.lt.s32.totalorder %s20, 0
      %s252 = scalar_select %p251, %s20, 0
      %s253 = scalar_lea.vmem %s2, %s252
      %p254 = scmp.lt.s32.totalorder %s20, 0
      %s255 = scalar_select %p254, %s20, 0
      %s256 = scalar_lea.vmem %s3, %s255
      %s257 = smul.u32 32, %s19
      %p258 = scmp.lt.s32.totalorder %s257, 63
      %s259 = scalar_select %p258, %s257, 63
      %p260 = scmp.lt.s32.totalorder %s20, 0
      %s261 = scalar_select %p260, %s20, 0
      %s262 = sadd.s32 %s261, %s259
      %s263 = smul.addr %s262, 4
      %s264 = scalar_lea.vmem %s4, %s263
      %s265 = smul.u32 32, %s19
      %v267 = vld [vmem:[%s245] sm:$0xf]
      %v268 = vld [vmem:[%s245 + $0x4] sm:$0xf]
      %v269 = vld [vmem:[%s245 + $0x8] sm:$0xf]
      %v270 = vld [vmem:[%s245 + $0xc] sm:$0xf]
      %v271 = vld [vmem:[%s245 + $0x10] sm:$0xf]
      %v272 = vld [vmem:[%s245 + $0x14] sm:$0xf]
      %v273 = vld [vmem:[%s245 + $0x18] sm:$0xf]
      %v274 = vld [vmem:[%s245 + $0x1c] sm:$0xf]
      %v275 = vld [vmem:[%s245 + $0x20] sm:$0xf]
      %v276 = vld [vmem:[%s245 + $0x24] sm:$0xf]
      %v277 = vld [vmem:[%s245 + $0x28] sm:$0xf]
      %v278 = vld [vmem:[%s245 + $0x2c] sm:$0xf]
      %v279 = vld [vmem:[%s245 + $0x30] sm:$0xf]
      %v280 = vld [vmem:[%s245 + $0x34] sm:$0xf]
      %v281 = vld [vmem:[%s245 + $0x38] sm:$0xf]
      %v282 = vld [vmem:[%s245 + $0x3c] sm:$0xf]
      %v283 = vld [vmem:[%s245 + $0x40] sm:$0xf]
      %v284 = vld [vmem:[%s245 + $0x44] sm:$0xf]
      %v285 = vld [vmem:[%s245 + $0x48] sm:$0xf]
      %v286 = vld [vmem:[%s245 + $0x4c] sm:$0xf]
      %v287 = vld [vmem:[%s245 + $0x50] sm:$0xf]
      %v288 = vld [vmem:[%s245 + $0x54] sm:$0xf]
      %v289 = vld [vmem:[%s245 + $0x58] sm:$0xf]
      %v290 = vld [vmem:[%s245 + $0x5c] sm:$0xf]
      %v291 = vld [vmem:[%s245 + $0x60] sm:$0xf]
      %v292 = vld [vmem:[%s245 + $0x64] sm:$0xf]
      %v293 = vld [vmem:[%s245 + $0x68] sm:$0xf]
      %v294 = vld [vmem:[%s245 + $0x6c] sm:$0xf]
      %v295 = vld [vmem:[%s245 + $0x70] sm:$0xf]
      %v296 = vld [vmem:[%s245 + $0x74] sm:$0xf]
      %v297 = vld [vmem:[%s245 + $0x78] sm:$0xf]
      %v298 = vld [vmem:[%s245 + $0x7c] sm:$0xf]
      %v299 = vld [vmem:[%s250] sm:$0xf]
      %v300 = vld [vmem:[%s250 + $0x4] sm:$0xf]
      %v301 = vld [vmem:[%s250 + $0x8] sm:$0xf]
      %v302 = vld [vmem:[%s250 + $0xc] sm:$0xf]
      %v303 = vld [vmem:[%s250 + $0x10] sm:$0xf]
      %v304 = vld [vmem:[%s250 + $0x14] sm:$0xf]
      %v305 = vld [vmem:[%s250 + $0x18] sm:$0xf]
      %v306 = vld [vmem:[%s250 + $0x1c] sm:$0xf]
      %v339 = vunpack.c.l.b16 %v267
      %v340 = vunpack.c.l.b16 %v268
      %v341 = vunpack.c.l.b16 %v269
      %v342 = vunpack.c.l.b16 %v270
      %v343 = vunpack.c.l.b16 %v271
      %v344 = vunpack.c.l.b16 %v272
      %v345 = vunpack.c.l.b16 %v273
      %v346 = vunpack.c.l.b16 %v274
      %v347 = vunpack.c.l.b16 %v275
      %v348 = vunpack.c.l.b16 %v276
      %v349 = vunpack.c.l.b16 %v277
      %v350 = vunpack.c.l.b16 %v278
      %v351 = vunpack.c.l.b16 %v279
      %v352 = vunpack.c.l.b16 %v280
      %v353 = vunpack.c.l.b16 %v281
      %v354 = vunpack.c.l.b16 %v282
      %v355 = vunpack.c.l.b16 %v283
      %v356 = vunpack.c.l.b16 %v284
      %v357 = vunpack.c.l.b16 %v285
      %v358 = vunpack.c.l.b16 %v286
      %v359 = vunpack.c.l.b16 %v287
      %v360 = vunpack.c.l.b16 %v288
      %v361 = vunpack.c.l.b16 %v289
      %v362 = vunpack.c.l.b16 %v290
      %v363 = vunpack.c.l.b16 %v291
      %v364 = vunpack.c.l.b16 %v292
      %v365 = vunpack.c.l.b16 %v293
      %v366 = vunpack.c.l.b16 %v294
      %v367 = vunpack.c.l.b16 %v295
      %v368 = vunpack.c.l.b16 %v296
      %v369 = vunpack.c.l.b16 %v297
      %v370 = vunpack.c.l.b16 %v298
      %v371 = vpack.c.b16 %v340, %v339
      %v372 = vpack.c.b16 %v342, %v341
      %v373 = vpack.c.b16 %v344, %v343
      %v374 = vpack.c.b16 %v346, %v345
      %v375 = vpack.c.b16 %v348, %v347
      %v376 = vpack.c.b16 %v350, %v349
      %v377 = vpack.c.b16 %v352, %v351
      %v378 = vpack.c.b16 %v354, %v353
      %v379 = vpack.c.b16 %v356, %v355
      %v380 = vpack.c.b16 %v358, %v357
      %v381 = vpack.c.b16 %v360, %v359
      %v382 = vpack.c.b16 %v362, %v361
      %v383 = vpack.c.b16 %v364, %v363
      %v384 = vpack.c.b16 %v366, %v365
      %v385 = vpack.c.b16 %v368, %v367
      %v386 = vpack.c.b16 %v370, %v369
      %v395 = vunpack.c.l.b16 %v299
      %v396 = vunpack.c.l.b16 %v300
      %v397 = vunpack.c.l.b16 %v301
      %v398 = vunpack.c.l.b16 %v302
      %v399 = vunpack.c.l.b16 %v303
      %v400 = vunpack.c.l.b16 %v304
      %v401 = vunpack.c.l.b16 %v305
      %v402 = vunpack.c.l.b16 %v306
      %v403 = vpack.c.b16 %v396, %v395
      %v404 = vpack.c.b16 %v398, %v397
      %v405 = vpack.c.b16 %v400, %v399
      %v406 = vpack.c.b16 %v402, %v401
      %vm411 = vcmask 523264
      %v413 = vsel %vm411, %v371, 0
      %v416 = vsel %vm411, %v372, 0
      %v419 = vsel %vm411, %v373, 0
      %v422 = vsel %vm411, %v374, 0
      %v425 = vsel %vm411, %v375, 0
      %v428 = vsel %vm411, %v376, 0
      %v431 = vsel %vm411, %v377, 0
      %v434 = vsel %vm411, %v378, 0
      %v437 = vsel %vm411, %v379, 0
      %v440 = vsel %vm411, %v380, 0
      %v443 = vsel %vm411, %v381, 0
      %v446 = vsel %vm411, %v382, 0
      %v449 = vsel %vm411, %v383, 0
      %v452 = vsel %vm411, %v384, 0
      %v455 = vsel %vm411, %v385, 0
      %v458 = vsel %vm411, %v386, 0
      %460 = vmatprep.subr.bf16.mxu0 0
      %461 = vmatpush1.bf16.msra.mxu0 0
      %462 = vmatprep.subr.bf16.mxu0 0
      %463 = vmatpush1.bf16.msra.mxu0 0
      %464 = vmatprep.subr.bf16.mxu0 0
      %465 = vmatpush1.bf16.msra.mxu0 0
      %466 = vmatprep.subr.bf16.mxu0 0
      %467 = vmatpush1.bf16.msra.mxu0 0
      %468 = vmatprep.subr.bf16.mxu0 0
      %469 = vmatpush1.bf16.msra.mxu0 %v406
      %470 = vmatprep.subr.bf16.mxu0 0
      %471 = vmatpush1.bf16.msra.mxu0 %v405
      %472 = vmatprep.subr.bf16.mxu0 0
      %473 = vmatpush1.bf16.msra.mxu0 %v404
      %474 = vmatprep.subr.bf16.mxu0 0
      %475 = vmatpush1.bf16.msra.mxu0 %v403
      %476 = vmatprep.subr.bf16.mxu0 0
      %477 = vmatpush2.bf16.msra.mxu0 0
      %478 = vmatprep.subr.bf16.mxu0 0
      %479 = vmatpush2.bf16.msra.mxu0 0
      %480 = vmatprep.subr.bf16.mxu0 0
      %481 = vmatpush2.bf16.msra.mxu0 0
      %482 = vmatprep.subr.bf16.mxu0 0
      %483 = vmatpush2.bf16.msra.mxu0 0
      %484 = vmatprep.subr.bf16.mxu0 0
      %485 = vmatpush2.bf16.msra.mxu0 0
      %486 = vmatprep.subr.bf16.mxu0 0
      %487 = vmatpush2.bf16.msra.mxu0 0
      %488 = vmatprep.subr.bf16.mxu0 0
      %489 = vmatpush2.bf16.msra.mxu0 0
      %490 = vmatprep.subr.bf16.mxu0 0
      %491 = vmatpush2.bf16.msra.mxu0 0
      %492 = vmatprep.mubr.bf16.mxu0 0
      %493 = vmatmul.mubr.bf16.gmra.mxu0 %v413
      %v494 = vpop.f32.mrf.mxu0
      %v495 = vadd.f32 0.0, %v494
      %v496 = vpop.f32.mrf.mxu0
      %v497 = vpop.f32.mrf.mxu0
      %v498 = vadd.f32 0.0, %v497
      %v499 = vpop.f32.mrf.mxu0
      %500 = vmatprep.mubr.bf16.mxu0 0
      %501 = vmatmul.mubr.bf16.gmra.mxu0 %v416
      %v502 = vpop.f32.mrf.mxu0
      %v503 = vadd.f32 0.0, %v502
      %v504 = vpop.f32.mrf.mxu0
      %v505 = vpop.f32.mrf.mxu0
      %v506 = vadd.f32 0.0, %v505
      %v507 = vpop.f32.mrf.mxu0
      %508 = vmatprep.mubr.bf16.mxu0 0
      %509 = vmatmul.mubr.bf16.gmra.mxu0 %v419
      %v510 = vpop.f32.mrf.mxu0
      %v511 = vadd.f32 0.0, %v510
      %v512 = vpop.f32.mrf.mxu0
      %v513 = vpop.f32.mrf.mxu0
      %v514 = vadd.f32 0.0, %v513
      %v515 = vpop.f32.mrf.mxu0
      %516 = vmatprep.mubr.bf16.mxu0 0
      %517 = vmatmul.mubr.bf16.gmra.mxu0 %v422
      %v518 = vpop.f32.mrf.mxu0
      %v519 = vadd.f32 0.0, %v518
      %v520 = vpop.f32.mrf.mxu0
      %v521 = vpop.f32.mrf.mxu0
      %v522 = vadd.f32 0.0, %v521
      %v523 = vpop.f32.mrf.mxu0
      %524 = vmatprep.mubr.bf16.mxu0 0
      %525 = vmatmul.mubr.bf16.gmra.mxu0 %v425
      %v526 = vpop.f32.mrf.mxu0
      %v527 = vadd.f32 0.0, %v526
      %v528 = vpop.f32.mrf.mxu0
      %v529 = vpop.f32.mrf.mxu0
      %v530 = vadd.f32 0.0, %v529
      %v531 = vpop.f32.mrf.mxu0
      %532 = vmatprep.mubr.bf16.mxu0 0
      %533 = vmatmul.mubr.bf16.gmra.mxu0 %v428
      %v534 = vpop.f32.mrf.mxu0
      %v535 = vadd.f32 0.0, %v534
      %v536 = vpop.f32.mrf.mxu0
      %v537 = vpop.f32.mrf.mxu0
      %v538 = vadd.f32 0.0, %v537
      %v539 = vpop.f32.mrf.mxu0
      %540 = vmatprep.mubr.bf16.mxu0 0
      %541 = vmatmul.mubr.bf16.gmra.mxu0 %v431
      %v542 = vpop.f32.mrf.mxu0
      %v543 = vadd.f32 0.0, %v542
      %v544 = vpop.f32.mrf.mxu0
      %v545 = vpop.f32.mrf.mxu0
      %v546 = vadd.f32 0.0, %v545
      %v547 = vpop.f32.mrf.mxu0
      %548 = vmatprep.mubr.bf16.mxu0 0
      %549 = vmatmul.mubr.bf16.gmra.mxu0 %v434
      %v550 = vpop.f32.mrf.mxu0
      %v551 = vadd.f32 0.0, %v550
      %v552 = vpop.f32.mrf.mxu0
      %v553 = vpop.f32.mrf.mxu0
      %v554 = vadd.f32 0.0, %v553
      %v555 = vpop.f32.mrf.mxu0
      %556 = vmatprep.mubr.bf16.mxu0 0
      %557 = vmatmul.mubr.bf16.gmra.mxu0 %v437
      %v558 = vpop.f32.mrf.mxu0
      %v559 = vadd.f32 0.0, %v558
      %v560 = vpop.f32.mrf.mxu0
      %v561 = vpop.f32.mrf.mxu0
      %v562 = vadd.f32 0.0, %v561
      %v563 = vpop.f32.mrf.mxu0
      %564 = vmatprep.mubr.bf16.mxu0 0
      %565 = vmatmul.mubr.bf16.gmra.mxu0 %v440
      %v566 = vpop.f32.mrf.mxu0
      %v567 = vadd.f32 0.0, %v566
      %v568 = vpop.f32.mrf.mxu0
      %v569 = vpop.f32.mrf.mxu0
      %v570 = vadd.f32 0.0, %v569
      %v571 = vpop.f32.mrf.mxu0
      %572 = vmatprep.mubr.bf16.mxu0 0
      %573 = vmatmul.mubr.bf16.gmra.mxu0 %v443
      %v574 = vpop.f32.mrf.mxu0
      %v575 = vadd.f32 0.0, %v574
      %v576 = vpop.f32.mrf.mxu0
      %v577 = vpop.f32.mrf.mxu0
      %v578 = vadd.f32 0.0, %v577
      %v579 = vpop.f32.mrf.mxu0
      %580 = vmatprep.mubr.bf16.mxu0 0
      %581 = vmatmul.mubr.bf16.gmra.mxu0 %v446
      %v582 = vpop.f32.mrf.mxu0
      %v583 = vadd.f32 0.0, %v582
      %v584 = vpop.f32.mrf.mxu0
      %v585 = vpop.f32.mrf.mxu0
      %v586 = vadd.f32 0.0, %v585
      %v587 = vpop.f32.mrf.mxu0
      %588 = vmatprep.mubr.bf16.mxu0 0
      %589 = vmatmul.mubr.bf16.gmra.mxu0 %v449
      %v590 = vpop.f32.mrf.mxu0
      %v591 = vadd.f32 0.0, %v590
      %v592 = vpop.f32.mrf.mxu0
      %v593 = vpop.f32.mrf.mxu0
      %v594 = vadd.f32 0.0, %v593
      %v595 = vpop.f32.mrf.mxu0
      %596 = vmatprep.mubr.bf16.mxu0 0
      %597 = vmatmul.mubr.bf16.gmra.mxu0 %v452
      %v598 = vpop.f32.mrf.mxu0
      %v599 = vadd.f32 0.0, %v598
      %v600 = vpop.f32.mrf.mxu0
      %v601 = vpop.f32.mrf.mxu0
      %v602 = vadd.f32 0.0, %v601
      %v603 = vpop.f32.mrf.mxu0
      %604 = vmatprep.mubr.bf16.mxu0 0
      %605 = vmatmul.mubr.bf16.gmra.mxu0 %v455
      %v606 = vpop.f32.mrf.mxu0
      %v607 = vadd.f32 0.0, %v606
      %v608 = vpop.f32.mrf.mxu0
      %v609 = vpop.f32.mrf.mxu0
      %v610 = vadd.f32 0.0, %v609
      %v611 = vpop.f32.mrf.mxu0
      %612 = vmatprep.mubr.bf16.mxu0 0
      %613 = vmatmul.mubr.bf16.gmra.mxu0 %v458
      %v614 = vpop.f32.mrf.mxu0
      %v615 = vadd.f32 0.0, %v614
      %v616 = vpop.f32.mrf.mxu0
      %v617 = vpop.f32.mrf.mxu0
      %v618 = vadd.f32 0.0, %v617
      %v619 = vpop.f32.mrf.mxu0
      %620 = vdwg.mxu0
      %v621 = vld [vmem:[%s253] sm:$0x1]
      %v623 = vlaneseq
      %v624 = vshrl.u32 %v623, 7
      %v625 = vsub.s32 0, %v624
      %v626 = vrot.slane %v621, %v625
      %v628 = vmul.f32 %v495, %v626
      %v629 = vmul.f32 %v498, %v626
      %v630 = vmul.f32 %v503, %v626
      %v631 = vmul.f32 %v506, %v626
      %v632 = vmul.f32 %v511, %v626
      %v633 = vmul.f32 %v514, %v626
      %v634 = vmul.f32 %v519, %v626
      %v635 = vmul.f32 %v522, %v626
      %v636 = vmul.f32 %v527, %v626
      %v637 = vmul.f32 %v530, %v626
      %v638 = vmul.f32 %v535, %v626
      %v639 = vmul.f32 %v538, %v626
      %v640 = vmul.f32 %v543, %v626
      %v641 = vmul.f32 %v546, %v626
      %v642 = vmul.f32 %v551, %v626
      %v643 = vmul.f32 %v554, %v626
      %v644 = vmul.f32 %v559, %v626
      %v645 = vmul.f32 %v562, %v626
      %v646 = vmul.f32 %v567, %v626
      %v647 = vmul.f32 %v570, %v626
      %v648 = vmul.f32 %v575, %v626
      %v649 = vmul.f32 %v578, %v626
      %v650 = vmul.f32 %v583, %v626
      %v651 = vmul.f32 %v586, %v626
      %v652 = vmul.f32 %v591, %v626
      %v653 = vmul.f32 %v594, %v626
      %v654 = vmul.f32 %v599, %v626
      %v655 = vmul.f32 %v602, %v626
      %v656 = vmul.f32 %v607, %v626
      %v657 = vmul.f32 %v610, %v626
      %v658 = vmul.f32 %v615, %v626
      %v659 = vmul.f32 %v618, %v626
      %v660 = vld [vmem:[%s256] sm:$0x1]
      %v662 = vlaneseq
      %v663 = vshrl.u32 %v662, 7
      %v664 = vsub.s32 0, %v663
      %v665 = vrot.slane %v660, %v664
      %v667 = vadd.f32 %v628, %v665
      %v668 = vadd.f32 %v629, %v665
      %v669 = vadd.f32 %v630, %v665
      %v670 = vadd.f32 %v631, %v665
      %v671 = vadd.f32 %v632, %v665
      %v672 = vadd.f32 %v633, %v665
      %v673 = vadd.f32 %v634, %v665
      %v674 = vadd.f32 %v635, %v665
      %v675 = vadd.f32 %v636, %v665
      %v676 = vadd.f32 %v637, %v665
      %v677 = vadd.f32 %v638, %v665
      %v678 = vadd.f32 %v639, %v665
      %v679 = vadd.f32 %v640, %v665
      %v680 = vadd.f32 %v641, %v665
      %v681 = vadd.f32 %v642, %v665
      %v682 = vadd.f32 %v643, %v665
      %v683 = vadd.f32 %v644, %v665
      %v684 = vadd.f32 %v645, %v665
      %v685 = vadd.f32 %v646, %v665
      %v686 = vadd.f32 %v647, %v665
      %v687 = vadd.f32 %v648, %v665
      %v688 = vadd.f32 %v649, %v665
      %v689 = vadd.f32 %v650, %v665
      %v690 = vadd.f32 %v651, %v665
      %v691 = vadd.f32 %v652, %v665
      %v692 = vadd.f32 %v653, %v665
      %v693 = vadd.f32 %v654, %v665
      %v694 = vadd.f32 %v655, %v665
      %v695 = vadd.f32 %v656, %v665
      %v696 = vadd.f32 %v657, %v665
      %v697 = vadd.f32 %v658, %v665
      %v698 = vadd.f32 %v659, %v665
      %v699 = vmax.f32 %v667, 0.0
      %v700 = vmax.f32 %v668, 0.0
      %v701 = vmax.f32 %v669, 0.0
      %v702 = vmax.f32 %v670, 0.0
      %v703 = vmax.f32 %v671, 0.0
      %v704 = vmax.f32 %v672, 0.0
      %v705 = vmax.f32 %v673, 0.0
      %v706 = vmax.f32 %v674, 0.0
      %v707 = vmax.f32 %v675, 0.0
      %v708 = vmax.f32 %v676, 0.0
      %v709 = vmax.f32 %v677, 0.0
      %v710 = vmax.f32 %v678, 0.0
      %v711 = vmax.f32 %v679, 0.0
      %v712 = vmax.f32 %v680, 0.0
      %v713 = vmax.f32 %v681, 0.0
      %v714 = vmax.f32 %v682, 0.0
      %v715 = vmax.f32 %v683, 0.0
      %v716 = vmax.f32 %v684, 0.0
      %v717 = vmax.f32 %v685, 0.0
      %v718 = vmax.f32 %v686, 0.0
      %v719 = vmax.f32 %v687, 0.0
      %v720 = vmax.f32 %v688, 0.0
      %v721 = vmax.f32 %v689, 0.0
      %v722 = vmax.f32 %v690, 0.0
      %v723 = vmax.f32 %v691, 0.0
      %v724 = vmax.f32 %v692, 0.0
      %v725 = vmax.f32 %v693, 0.0
      %v726 = vmax.f32 %v694, 0.0
      %v727 = vmax.f32 %v695, 0.0
      %v728 = vmax.f32 %v696, 0.0
      %v729 = vmax.f32 %v697, 0.0
      %v730 = vmax.f32 %v698, 0.0
      %v731 = vpack.c.bf16 %v700, %v699
      %v732 = vpack.c.bf16 %v702, %v701
      %v733 = vpack.c.bf16 %v704, %v703
      %v734 = vpack.c.bf16 %v706, %v705
      %v735 = vpack.c.bf16 %v708, %v707
      %v736 = vpack.c.bf16 %v710, %v709
      %v737 = vpack.c.bf16 %v712, %v711
      %v738 = vpack.c.bf16 %v714, %v713
      %v739 = vpack.c.bf16 %v716, %v715
      %v740 = vpack.c.bf16 %v718, %v717
      %v741 = vpack.c.bf16 %v720, %v719
      %v742 = vpack.c.bf16 %v722, %v721
      %v743 = vpack.c.bf16 %v724, %v723
      %v744 = vpack.c.bf16 %v726, %v725
      %v745 = vpack.c.bf16 %v728, %v727
      %v746 = vpack.c.bf16 %v730, %v729
      %v763 = vunpack.c.l.b16 %v731
      %v764 = vunpack.c.h.b16 %v731
      %v765 = vunpack.c.l.b16 %v732
      %v766 = vunpack.c.h.b16 %v732
      %v767 = vunpack.c.l.b16 %v733
      %v768 = vunpack.c.h.b16 %v733
      %v769 = vunpack.c.l.b16 %v734
      %v770 = vunpack.c.h.b16 %v734
      %v771 = vunpack.c.l.b16 %v735
      %v772 = vunpack.c.h.b16 %v735
      %v773 = vunpack.c.l.b16 %v736
      %v774 = vunpack.c.h.b16 %v736
      %v775 = vunpack.c.l.b16 %v737
      %v776 = vunpack.c.h.b16 %v737
      %v777 = vunpack.c.l.b16 %v738
      %v778 = vunpack.c.h.b16 %v738
      %v779 = vunpack.c.l.b16 %v739
      %v780 = vunpack.c.h.b16 %v739
      %v781 = vunpack.c.l.b16 %v740
      %v782 = vunpack.c.h.b16 %v740
      %v783 = vunpack.c.l.b16 %v741
      %v784 = vunpack.c.h.b16 %v741
      %v785 = vunpack.c.l.b16 %v742
      %v786 = vunpack.c.h.b16 %v742
      %v787 = vunpack.c.l.b16 %v743
      %v788 = vunpack.c.h.b16 %v743
      %v789 = vunpack.c.l.b16 %v744
      %v790 = vunpack.c.h.b16 %v744
      %v791 = vunpack.c.l.b16 %v745
      %v792 = vunpack.c.h.b16 %v745
      %v793 = vunpack.c.l.b16 %v746
      %v794 = vunpack.c.h.b16 %v746
      %v795 = vpack.c.b16 %v763, %v763
      %v796 = vpack.c.b16 %v764, %v764
      %v797 = vpack.c.b16 %v765, %v765
      %v798 = vpack.c.b16 %v766, %v766
      %v799 = vpack.c.b16 %v767, %v767
      %v800 = vpack.c.b16 %v768, %v768
      %v801 = vpack.c.b16 %v769, %v769
      %v802 = vpack.c.b16 %v770, %v770
      %v803 = vpack.c.b16 %v771, %v771
      %v804 = vpack.c.b16 %v772, %v772
      %v805 = vpack.c.b16 %v773, %v773
      %v806 = vpack.c.b16 %v774, %v774
      %v807 = vpack.c.b16 %v775, %v775
      %v808 = vpack.c.b16 %v776, %v776
      %v809 = vpack.c.b16 %v777, %v777
      %v810 = vpack.c.b16 %v778, %v778
      %v811 = vpack.c.b16 %v779, %v779
      %v812 = vpack.c.b16 %v780, %v780
      %v813 = vpack.c.b16 %v781, %v781
      %v814 = vpack.c.b16 %v782, %v782
      %v815 = vpack.c.b16 %v783, %v783
      %v816 = vpack.c.b16 %v784, %v784
      %v817 = vpack.c.b16 %v785, %v785
      %v818 = vpack.c.b16 %v786, %v786
      %v819 = vpack.c.b16 %v787, %v787
      %v820 = vpack.c.b16 %v788, %v788
      %v821 = vpack.c.b16 %v789, %v789
      %v822 = vpack.c.b16 %v790, %v790
      %v823 = vpack.c.b16 %v791, %v791
      %v824 = vpack.c.b16 %v792, %v792
      %v825 = vpack.c.b16 %v793, %v793
      %v826 = vpack.c.b16 %v794, %v794
      %vm859 = vcmask 257024
      %860 = vst.msk [vmem:[%s264] sm:$0xf] %vm859, %v795
      %861 = vst.msk [vmem:[%s264 + $0x4] sm:$0xf] %vm859, %v796
      %862 = vst.msk [vmem:[%s264 + $0x8] sm:$0xf] %vm859, %v797
      %863 = vst.msk [vmem:[%s264 + $0xc] sm:$0xf] %vm859, %v798
      %864 = vst.msk [vmem:[%s264 + $0x10] sm:$0xf] %vm859, %v799
      %865 = vst.msk [vmem:[%s264 + $0x14] sm:$0xf] %vm859, %v800
      %866 = vst.msk [vmem:[%s264 + $0x18] sm:$0xf] %vm859, %v801
      %867 = vst.msk [vmem:[%s264 + $0x1c] sm:$0xf] %vm859, %v802
      %868 = vst.msk [vmem:[%s264 + $0x20] sm:$0xf] %vm859, %v803
      %869 = vst.msk [vmem:[%s264 + $0x24] sm:$0xf] %vm859, %v804
      %870 = vst.msk [vmem:[%s264 + $0x28] sm:$0xf] %vm859, %v805
      %871 = vst.msk [vmem:[%s264 + $0x2c] sm:$0xf] %vm859, %v806
      %872 = vst.msk [vmem:[%s264 + $0x30] sm:$0xf] %vm859, %v807
      %873 = vst.msk [vmem:[%s264 + $0x34] sm:$0xf] %vm859, %v808
      %874 = vst.msk [vmem:[%s264 + $0x38] sm:$0xf] %vm859, %v809
      %875 = vst.msk [vmem:[%s264 + $0x3c] sm:$0xf] %vm859, %v810
      %876 = vst.msk [vmem:[%s264 + $0x40] sm:$0xf] %vm859, %v811
      %877 = vst.msk [vmem:[%s264 + $0x44] sm:$0xf] %vm859, %v812
      %878 = vst.msk [vmem:[%s264 + $0x48] sm:$0xf] %vm859, %v813
      %879 = vst.msk [vmem:[%s264 + $0x4c] sm:$0xf] %vm859, %v814
      %880 = vst.msk [vmem:[%s264 + $0x50] sm:$0xf] %vm859, %v815
      %881 = vst.msk [vmem:[%s264 + $0x54] sm:$0xf] %vm859, %v816
      %882 = vst.msk [vmem:[%s264 + $0x58] sm:$0xf] %vm859, %v817
      %883 = vst.msk [vmem:[%s264 + $0x5c] sm:$0xf] %vm859, %v818
      %884 = vst.msk [vmem:[%s264 + $0x60] sm:$0xf] %vm859, %v819
      %885 = vst.msk [vmem:[%s264 + $0x64] sm:$0xf] %vm859, %v820
      %886 = vst.msk [vmem:[%s264 + $0x68] sm:$0xf] %vm859, %v821
      %887 = vst.msk [vmem:[%s264 + $0x6c] sm:$0xf] %vm859, %v822
      %888 = vst.msk [vmem:[%s264 + $0x70] sm:$0xf] %vm859, %v823
      %889 = vst.msk [vmem:[%s264 + $0x74] sm:$0xf] %vm859, %v824
      %890 = vst.msk [vmem:[%s264 + $0x78] sm:$0xf] %vm859, %v825
      %891 = vst.msk [vmem:[%s264 + $0x7c] sm:$0xf] %vm859, %v826
      %s892 = smul.u32 32, %s19
      %p893 = scmp.lt.s32.totalorder %s892, 63
      %s894 = scalar_select %p893, %s892, 63
      %p895 = scmp.lt.s32.totalorder %s20, 0
      %s896 = scalar_select %p895, %s20, 0
      %s897 = sadd.s32 %s896, %s894
      %s898 = smul.addr %s897, 4
      %s899 = scalar_lea.vmem %s4, %s898
      // Predicated region
      $region37: #{forward.8} parent=35 // pred_check
        %p900 = pneg %p151
      $region38: #{forward.8} parent=35 // pred_check_branch
        %902 = sbr.rel (%p900) target = $region40
      $region39: #{forward.8} parent=35 // pred_region
        %s903 = smul.u32 32, %s19
      $region40: #{forward.8} parent=35 // pred_fallthru
        _
    $region36: #{forward.8} parent=5 // pred_fallthru
      _
    %p904 = scmp.le.s32.totalorder 2, %s10
    // Predicated region
    $region41: #{forward.8} parent=5 // pred_check
      %p905 = pneg %p904
    $region42: #{forward.8} parent=5 // pred_check_branch
      %907 = sbr.rel (%p905) target = $region44
    $region43: #{forward.8} parent=5 // pred_region
      %s908 = ssub.s32 %s10, 2
      // Predicated region
      $region45: #{forward.8} parent=43 // pred_check
        %p909 = pneg %p157
      $region46: #{forward.8} parent=43 // pred_check_branch
        %911 = sbr.rel (%p909) target = $region48
      $region47: #{forward.8} parent=43 // pred_region
        %s912 = smul.u32 32, %s21
        %p913 = scmp.lt.s32.totalorder %s912, 63
        %s914 = scalar_select %p913, %s912, 63
        %p915 = scmp.lt.s32.totalorder %s22, 0
        %s916 = scalar_select %p915, %s22, 0
        %s917 = sadd.s32 %s916, %s914
        %s918 = smul.addr %s917, 4
        %s919 = scalar_lea.vmem %s4, %s918
      $region48: #{forward.8} parent=43 // pred_fallthru
        _
    $region44: #{forward.8} parent=5 // pred_fallthru
      _
  $region6: #{forward.8} parent=0 // loop_footer
    %s14 = sadd.s32 1, %s10
  $region7: #{forward.8} parent=0 // loop_footer_branch
    %9 = sbr.rel target = $region3
  $region8: #{forward.8} parent=0 // loop_exit
    _

// kernel: forward.10
$region0: #{forward.10}
  #allocation0 [shape = 'u32[]', space=smem, size = 0x4, offset = 0x4, fixed_abs, tag = 'smem constant byte address 0x4 - core index']
  #allocation1 [shape = 'u32[144,128]{1,0:T(1,128)}', space=vmem, size = 0x12000, scoped, tag = 'internal scratch']
  %s0 = inlined_call_operand.vmem [shape: bf16[128,32], index: 0, kind: input, shape index: {}]
  %s1 = inlined_call_operand.vmem [shape: bf16[32,128], index: 1, kind: input, shape index: {}]
  %s2 = inlined_call_operand.vmem [shape: f32[1,128], index: 2, kind: input, shape index: {}]
  %s3 = inlined_call_operand.vmem [shape: f32[1,128], index: 3, kind: input, shape index: {}]
  %s4 = inlined_call_operand.vmem [shape: bf16[128,128], index: 4, kind: input, shape index: {}]
  %s5 = inlined_call_operand.vmem [shape: bf16[128,128], index: 5, kind: output, shape index: {}]
  %s6 = sld [smem:[#allocation0]]
  $region30: #{forward.10} parent=0
    _
  %s8 = ssub.s32 1, %s6
  %s9 = scalar_select 0, %s8, %s6
  // Predicated region
  $region2: #{forward.10} parent=0 // pred_check
    _
  $region3: #{forward.10} parent=0 // pred_check_branch
    %11 = sbr.rel (0) target = $region5
  $region4: #{forward.10} parent=0 // pred_region
    _
  $region5: #{forward.10} parent=0 // pred_fallthru
    _
  // Predicated region
  $region6: #{forward.10} parent=0 // pred_check
    _
  $region7: #{forward.10} parent=0 // pred_check_branch
    %13 = sbr.rel (0) target = $region9
  $region8: #{forward.10} parent=0 // pred_region
    _
  $region9: #{forward.10} parent=0 // pred_fallthru
    _
  // Predicated region
  $region10: #{forward.10} parent=0 // pred_check
    _
  $region11: #{forward.10} parent=0 // pred_check_branch
    %15 = sbr.rel (0) target = $region13
  $region12: #{forward.10} parent=0 // pred_region
    _
  $region13: #{forward.10} parent=0 // pred_fallthru
    _
  // Predicated region
  $region14: #{forward.10} parent=0 // pred_check
    _
  $region15: #{forward.10} parent=0 // pred_check_branch
    %17 = sbr.rel (0) target = $region17
  $region16: #{forward.10} parent=0 // pred_region
    _
  $region17: #{forward.10} parent=0 // pred_fallthru
    _
  // Predicated region
  $region18: #{forward.10} parent=0 // pred_check
    _
  $region19: #{forward.10} parent=0 // pred_check_branch
    %19 = sbr.rel (0) target = $region21
  $region20: #{forward.10} parent=0 // pred_region
    _
  $region21: #{forward.10} parent=0 // pred_fallthru
    _
  %v21 = vld [vmem:[%s0] sm:$0xf]
  %v22 = vld [vmem:[%s0 + $0x4] sm:$0xf]
  %v23 = vld [vmem:[%s0 + $0x8] sm:$0xf]
  %v24 = vld [vmem:[%s0 + $0xc] sm:$0xf]
  %v25 = vld [vmem:[%s0 + $0x10] sm:$0xf]
  %v26 = vld [vmem:[%s0 + $0x14] sm:$0xf]
  %v27 = vld [vmem:[%s0 + $0x18] sm:$0xf]
  %v28 = vld [vmem:[%s0 + $0x1c] sm:$0xf]
  %v29 = vld [vmem:[%s0 + $0x20] sm:$0xf]
  %v30 = vld [vmem:[%s0 + $0x24] sm:$0xf]
  %v31 = vld [vmem:[%s0 + $0x28] sm:$0xf]
  %v32 = vld [vmem:[%s0 + $0x2c] sm:$0xf]
  %v33 = vld [vmem:[%s0 + $0x30] sm:$0xf]
  %v34 = vld [vmem:[%s0 + $0x34] sm:$0xf]
  %v35 = vld [vmem:[%s0 + $0x38] sm:$0xf]
  %v36 = vld [vmem:[%s0 + $0x3c] sm:$0xf]
  %v37 = vld [vmem:[%s1] sm:$0xf]
  %v38 = vld [vmem:[%s1 + $0x4] sm:$0xf]
  %v39 = vld [vmem:[%s1 + $0x8] sm:$0xf]
  %v40 = vld [vmem:[%s1 + $0xc] sm:$0xf]
  %v57 = vunpack.c.l.b16 %v21
  %v58 = vunpack.c.l.b16 %v22
  %v59 = vunpack.c.l.b16 %v23
  %v60 = vunpack.c.l.b16 %v24
  %v61 = vunpack.c.l.b16 %v25
  %v62 = vunpack.c.l.b16 %v26
  %v63 = vunpack.c.l.b16 %v27
  %v64 = vunpack.c.l.b16 %v28
  %v65 = vunpack.c.l.b16 %v29
  %v66 = vunpack.c.l.b16 %v30
  %v67 = vunpack.c.l.b16 %v31
  %v68 = vunpack.c.l.b16 %v32
  %v69 = vunpack.c.l.b16 %v33
  %v70 = vunpack.c.l.b16 %v34
  %v71 = vunpack.c.l.b16 %v35
  %v72 = vunpack.c.l.b16 %v36
  %v73 = vpack.c.b16 %v58, %v57
  %v74 = vpack.c.b16 %v60, %v59
  %v75 = vpack.c.b16 %v62, %v61
  %v76 = vpack.c.b16 %v64, %v63
  %v77 = vpack.c.b16 %v66, %v65
  %v78 = vpack.c.b16 %v68, %v67
  %v79 = vpack.c.b16 %v70, %v69
  %v80 = vpack.c.b16 %v72, %v71
  %v85 = vunpack.c.l.b16 %v37
  %v86 = vunpack.c.l.b16 %v38
  %v87 = vunpack.c.l.b16 %v39
  %v88 = vunpack.c.l.b16 %v40
  %v89 = vpack.c.b16 %v86, %v85
  %v90 = vpack.c.b16 %v88, %v87
  %vm93 = vcmask 261120
  %v95 = vsel %vm93, %v73, 0
  %v98 = vsel %vm93, %v74, 0
  %v101 = vsel %vm93, %v75, 0
  %v104 = vsel %vm93, %v76, 0
  %v107 = vsel %vm93, %v77, 0
  %v110 = vsel %vm93, %v78, 0
  %v113 = vsel %vm93, %v79, 0
  %v116 = vsel %vm93, %v80, 0
  %118 = vmatprep.subr.bf16.mxu0 0
  %119 = vmatpush1.bf16.msra.mxu0 0
  %120 = vmatprep.subr.bf16.mxu0 0
  %121 = vmatpush1.bf16.msra.mxu0 0
  %122 = vmatprep.subr.bf16.mxu0 0
  %123 = vmatpush1.bf16.msra.mxu0 0
  %124 = vmatprep.subr.bf16.mxu0 0
  %125 = vmatpush1.bf16.msra.mxu0 0
  %126 = vmatprep.subr.bf16.mxu0 0
  %127 = vmatpush1.bf16.msra.mxu0 0
  %128 = vmatprep.subr.bf16.mxu0 0
  %129 = vmatpush1.bf16.msra.mxu0 0
  %130 = vmatprep.subr.bf16.mxu0 0
  %131 = vmatpush1.bf16.msra.mxu0 %v90
  %132 = vmatprep.subr.bf16.mxu0 0
  %133 = vmatpush1.bf16.msra.mxu0 %v89
  %134 = vmatprep.subr.bf16.mxu0 0
  %135 = vmatpush2.bf16.msra.mxu0 0
  %136 = vmatprep.subr.bf16.mxu0 0
  %137 = vmatpush2.bf16.msra.mxu0 0
  %138 = vmatprep.subr.bf16.mxu0 0
  %139 = vmatpush2.bf16.msra.mxu0 0
  %140 = vmatprep.subr.bf16.mxu0 0
  %141 = vmatpush2.bf16.msra.mxu0 0
  %142 = vmatprep.subr.bf16.mxu0 0
  %143 = vmatpush2.bf16.msra.mxu0 0
  %144 = vmatprep.subr.bf16.mxu0 0
  %145 = vmatpush2.bf16.msra.mxu0 0
  %146 = vmatprep.subr.bf16.mxu0 0
  %147 = vmatpush2.bf16.msra.mxu0 0
  %148 = vmatprep.subr.bf16.mxu0 0
  %149 = vmatpush2.bf16.msra.mxu0 0
  %150 = vmatprep.mubr.bf16.mxu0 0
  %151 = vmatmul.mubr.bf16.gmra.mxu0 %v95
  %v152 = vpop.f32.mrf.mxu0
  %v153 = vadd.f32 0.0, %v152
  %v154 = vpop.f32.mrf.mxu0
  %v155 = vpop.f32.mrf.mxu0
  %v156 = vadd.f32 0.0, %v155
  %v157 = vpop.f32.mrf.mxu0
  %158 = vmatprep.mubr.bf16.mxu0 0
  %159 = vmatmul.mubr.bf16.gmra.mxu0 %v98
  %v160 = vpop.f32.mrf.mxu0
  %v161 = vadd.f32 0.0, %v160
  %v162 = vpop.f32.mrf.mxu0
  %v163 = vpop.f32.mrf.mxu0
  %v164 = vadd.f32 0.0, %v163
  %v165 = vpop.f32.mrf.mxu0
  %166 = vmatprep.mubr.bf16.mxu0 0
  %167 = vmatmul.mubr.bf16.gmra.mxu0 %v101
  %v168 = vpop.f32.mrf.mxu0
  %v169 = vadd.f32 0.0, %v168
  %v170 = vpop.f32.mrf.mxu0
  %v171 = vpop.f32.mrf.mxu0
  %v172 = vadd.f32 0.0, %v171
  %v173 = vpop.f32.mrf.mxu0
  %174 = vmatprep.mubr.bf16.mxu0 0
  %175 = vmatmul.mubr.bf16.gmra.mxu0 %v104
  %v176 = vpop.f32.mrf.mxu0
  %v177 = vadd.f32 0.0, %v176
  %v178 = vpop.f32.mrf.mxu0
  %v179 = vpop.f32.mrf.mxu0
  %v180 = vadd.f32 0.0, %v179
  %v181 = vpop.f32.mrf.mxu0
  %182 = vmatprep.mubr.bf16.mxu0 0
  %183 = vmatmul.mubr.bf16.gmra.mxu0 %v107
  %v184 = vpop.f32.mrf.mxu0
  %v185 = vadd.f32 0.0, %v184
  %v186 = vpop.f32.mrf.mxu0
  %v187 = vpop.f32.mrf.mxu0
  %v188 = vadd.f32 0.0, %v187
  %v189 = vpop.f32.mrf.mxu0
  %190 = vmatprep.mubr.bf16.mxu0 0
  %191 = vmatmul.mubr.bf16.gmra.mxu0 %v110
  %v192 = vpop.f32.mrf.mxu0
  %v193 = vadd.f32 0.0, %v192
  %v194 = vpop.f32.mrf.mxu0
  %v195 = vpop.f32.mrf.mxu0
  %v196 = vadd.f32 0.0, %v195
  %v197 = vpop.f32.mrf.mxu0
  %198 = vmatprep.mubr.bf16.mxu0 0
  %199 = vmatmul.mubr.bf16.gmra.mxu0 %v113
  %v200 = vpop.f32.mrf.mxu0
  %v201 = vadd.f32 0.0, %v200
  %v202 = vpop.f32.mrf.mxu0
  %v203 = vpop.f32.mrf.mxu0
  %v204 = vadd.f32 0.0, %v203
  %v205 = vpop.f32.mrf.mxu0
  %206 = vmatprep.mubr.bf16.mxu0 0
  %207 = vmatmul.mubr.bf16.gmra.mxu0 %v116
  %v208 = vpop.f32.mrf.mxu0
  %v209 = vadd.f32 0.0, %v208
  %v210 = vpop.f32.mrf.mxu0
  %v211 = vpop.f32.mrf.mxu0
  %v212 = vadd.f32 0.0, %v211
  %v213 = vpop.f32.mrf.mxu0
  %214 = vdwg.mxu0
  %v215 = vld [vmem:[%s2] sm:$0x1]
  %v217 = vlaneseq
  %v218 = vshrl.u32 %v217, 7
  %v219 = vsub.s32 0, %v218
  %v220 = vrot.slane %v215, %v219
  %v222 = vmul.f32 %v153, %v220
  %v223 = vmul.f32 %v156, %v220
  %v224 = vmul.f32 %v161, %v220
  %v225 = vmul.f32 %v164, %v220
  %v226 = vmul.f32 %v169, %v220
  %v227 = vmul.f32 %v172, %v220
  %v228 = vmul.f32 %v177, %v220
  %v229 = vmul.f32 %v180, %v220
  %v230 = vmul.f32 %v185, %v220
  %v231 = vmul.f32 %v188, %v220
  %v232 = vmul.f32 %v193, %v220
  %v233 = vmul.f32 %v196, %v220
  %v234 = vmul.f32 %v201, %v220
  %v235 = vmul.f32 %v204, %v220
  %v236 = vmul.f32 %v209, %v220
  %v237 = vmul.f32 %v212, %v220
  %v238 = vld [vmem:[%s3] sm:$0x1]
  %v240 = vlaneseq
  %v241 = vshrl.u32 %v240, 7
  %v242 = vsub.s32 0, %v241
  %v243 = vrot.slane %v238, %v242
  %v245 = vadd.f32 %v222, %v243
  %v246 = vadd.f32 %v223, %v243
  %v247 = vadd.f32 %v224, %v243
  %v248 = vadd.f32 %v225, %v243
  %v249 = vadd.f32 %v226, %v243
  %v250 = vadd.f32 %v227, %v243
  %v251 = vadd.f32 %v228, %v243
  %v252 = vadd.f32 %v229, %v243
  %v253 = vadd.f32 %v230, %v243
  %v254 = vadd.f32 %v231, %v243
  %v255 = vadd.f32 %v232, %v243
  %v256 = vadd.f32 %v233, %v243
  %v257 = vadd.f32 %v234, %v243
  %v258 = vadd.f32 %v235, %v243
  %v259 = vadd.f32 %v236, %v243
  %v260 = vadd.f32 %v237, %v243
  %v261 = vld [vmem:[%s4] sm:$0xf]
  %v262 = vld [vmem:[%s4 + $0x4] sm:$0xf]
  %v263 = vld [vmem:[%s4 + $0x8] sm:$0xf]
  %v264 = vld [vmem:[%s4 + $0xc] sm:$0xf]
  %v265 = vld [vmem:[%s4 + $0x10] sm:$0xf]
  %v266 = vld [vmem:[%s4 + $0x14] sm:$0xf]
  %v267 = vld [vmem:[%s4 + $0x18] sm:$0xf]
  %v268 = vld [vmem:[%s4 + $0x1c] sm:$0xf]
  %v269 = vld [vmem:[%s4 + $0x20] sm:$0xf]
  %v270 = vld [vmem:[%s4 + $0x24] sm:$0xf]
  %v271 = vld [vmem:[%s4 + $0x28] sm:$0xf]
  %v272 = vld [vmem:[%s4 + $0x2c] sm:$0xf]
  %v273 = vld [vmem:[%s4 + $0x30] sm:$0xf]
  %v274 = vld [vmem:[%s4 + $0x34] sm:$0xf]
  %v275 = vld [vmem:[%s4 + $0x38] sm:$0xf]
  %v276 = vld [vmem:[%s4 + $0x3c] sm:$0xf]
  %v277 = vunpack.c.l.bf16 %v261
  %v278 = vunpack.c.l.bf16 %v262
  %v279 = vunpack.c.l.bf16 %v263
  %v280 = vunpack.c.l.bf16 %v264
  %v281 = vunpack.c.l.bf16 %v265
  %v282 = vunpack.c.l.bf16 %v266
  %v283 = vunpack.c.l.bf16 %v267
  %v284 = vunpack.c.l.bf16 %v268
  %v285 = vunpack.c.l.bf16 %v269
  %v286 = vunpack.c.l.bf16 %v270
  %v287 = vunpack.c.l.bf16 %v271
  %v288 = vunpack.c.l.bf16 %v272
  %v289 = vunpack.c.l.bf16 %v273
  %v290 = vunpack.c.l.bf16 %v274
  %v291 = vunpack.c.l.bf16 %v275
  %v292 = vunpack.c.l.bf16 %v276
  %v293 = vadd.f32 %v245, %v277
  %v294 = vadd.f32 %v246, %v278
  %v295 = vadd.f32 %v247, %v279
  %v296 = vadd.f32 %v248, %v280
  %v297 = vadd.f32 %v249, %v281
  %v298 = vadd.f32 %v250, %v282
  %v299 = vadd.f32 %v251, %v283
  %v300 = vadd.f32 %v252, %v284
  %v301 = vadd.f32 %v253, %v285
  %v302 = vadd.f32 %v254, %v286
  %v303 = vadd.f32 %v255, %v287
  %v304 = vadd.f32 %v256, %v288
  %v305 = vadd.f32 %v257, %v289
  %v306 = vadd.f32 %v258, %v290
  %v307 = vadd.f32 %v259, %v291
  %v308 = vadd.f32 %v260, %v292
  %v309 = vmax.f32 %v293, 0.0
  %v310 = vmax.f32 %v294, 0.0
  %v311 = vmax.f32 %v295, 0.0
  %v312 = vmax.f32 %v296, 0.0
  %v313 = vmax.f32 %v297, 0.0
  %v314 = vmax.f32 %v298, 0.0
  %v315 = vmax.f32 %v299, 0.0
  %v316 = vmax.f32 %v300, 0.0
  %v317 = vmax.f32 %v301, 0.0
  %v318 = vmax.f32 %v302, 0.0
  %v319 = vmax.f32 %v303, 0.0
  %v320 = vmax.f32 %v304, 0.0
  %v321 = vmax.f32 %v305, 0.0
  %v322 = vmax.f32 %v306, 0.0
  %v323 = vmax.f32 %v307, 0.0
  %v324 = vmax.f32 %v308, 0.0
  %v325 = vpack.c.bf16 %v310, %v309
  %v326 = vpack.c.bf16 %v312, %v311
  %v327 = vpack.c.bf16 %v314, %v313
  %v328 = vpack.c.bf16 %v316, %v315
  %v329 = vpack.c.bf16 %v318, %v317
  %v330 = vpack.c.bf16 %v320, %v319
  %v331 = vpack.c.bf16 %v322, %v321
  %v332 = vpack.c.bf16 %v324, %v323
  %v341 = vunpack.c.l.b16 %v325
  %v342 = vunpack.c.h.b16 %v325
  %v343 = vunpack.c.l.b16 %v326
  %v344 = vunpack.c.h.b16 %v326
  %v345 = vunpack.c.l.b16 %v327
  %v346 = vunpack.c.h.b16 %v327
  %v347 = vunpack.c.l.b16 %v328
  %v348 = vunpack.c.h.b16 %v328
  %v349 = vunpack.c.l.b16 %v329
  %v350 = vunpack.c.h.b16 %v329
  %v351 = vunpack.c.l.b16 %v330
  %v352 = vunpack.c.h.b16 %v330
  %v353 = vunpack.c.l.b16 %v331
  %v354 = vunpack.c.h.b16 %v331
  %v355 = vunpack.c.l.b16 %v332
  %v356 = vunpack.c.h.b16 %v332
  %v357 = vpack.c.b16 %v341, %v341
  %v358 = vpack.c.b16 %v342, %v342
  %v359 = vpack.c.b16 %v343, %v343
  %v360 = vpack.c.b16 %v344, %v344
  %v361 = vpack.c.b16 %v345, %v345
  %v362 = vpack.c.b16 %v346, %v346
  %v363 = vpack.c.b16 %v347, %v347
  %v364 = vpack.c.b16 %v348, %v348
  %v365 = vpack.c.b16 %v349, %v349
  %v366 = vpack.c.b16 %v350, %v350
  %v367 = vpack.c.b16 %v351, %v351
  %v368 = vpack.c.b16 %v352, %v352
  %v369 = vpack.c.b16 %v353, %v353
  %v370 = vpack.c.b16 %v354, %v354
  %v371 = vpack.c.b16 %v355, %v355
  %v372 = vpack.c.b16 %v356, %v356
  %389 = vst [vmem:[%s5] sm:$0xf] %v357
  %390 = vst [vmem:[%s5 + $0x4] sm:$0xf] %v358
  %391 = vst [vmem:[%s5 + $0x8] sm:$0xf] %v359
  %392 = vst [vmem:[%s5 + $0xc] sm:$0xf] %v360
  %393 = vst [vmem:[%s5 + $0x10] sm:$0xf] %v361
  %394 = vst [vmem:[%s5 + $0x14] sm:$0xf] %v362
  %395 = vst [vmem:[%s5 + $0x18] sm:$0xf] %v363
  %396 = vst [vmem:[%s5 + $0x1c] sm:$0xf] %v364
  %397 = vst [vmem:[%s5 + $0x20] sm:$0xf] %v365
  %398 = vst [vmem:[%s5 + $0x24] sm:$0xf] %v366
  %399 = vst [vmem:[%s5 + $0x28] sm:$0xf] %v367
  %400 = vst [vmem:[%s5 + $0x2c] sm:$0xf] %v368
  %401 = vst [vmem:[%s5 + $0x30] sm:$0xf] %v369
  %402 = vst [vmem:[%s5 + $0x34] sm:$0xf] %v370
  %403 = vst [vmem:[%s5 + $0x38] sm:$0xf] %v371
  %404 = vst [vmem:[%s5 + $0x3c] sm:$0xf] %v372
  // Predicated region
  $region22: #{forward.10} parent=0 // pred_check
    _
  $region23: #{forward.10} parent=0 // pred_check_branch
    %406 = sbr.rel (0) target = $region25
  $region24: #{forward.10} parent=0 // pred_region
    _
  $region25: #{forward.10} parent=0 // pred_fallthru
    _
  // Predicated region
  $region26: #{forward.10} parent=0 // pred_check
    _
  $region27: #{forward.10} parent=0 // pred_check_branch
    %408 = sbr.rel (0) target = $region29
  $region28: #{forward.10} parent=0 // pred_region
    _
  $region29: #{forward.10} parent=0 // pred_fallthru
    _

// kernel: forward.11
$region0: #{forward.11}
  #allocation0 [shape = 'u32[]', space=smem, size = 0x4, offset = 0x4, fixed_abs, tag = 'smem constant byte address 0x4 - core index']
  #allocation1 [shape = 'u32[144,128]{1,0:T(1,128)}', space=vmem, size = 0x12000, scoped, tag = 'internal scratch']
  %s0 = inlined_call_operand.vmem [shape: bf16[128,128], index: 0, kind: input, shape index: {}]
  %s1 = inlined_call_operand.vmem [shape: bf16[128,32], index: 1, kind: input, shape index: {}]
  %s2 = inlined_call_operand.vmem [shape: f32[1,32], index: 2, kind: input, shape index: {}]
  %s3 = inlined_call_operand.vmem [shape: f32[1,32], index: 3, kind: input, shape index: {}]
  %s4 = inlined_call_operand.vmem [shape: bf16[128,32], index: 4, kind: output, shape index: {}]
  %s5 = sld [smem:[#allocation0]]
  $region26: #{forward.11} parent=0
    _
  %s7 = ssub.s32 1, %s5
  %s8 = scalar_select 0, %s7, %s5
  // Predicated region
  $region2: #{forward.11} parent=0 // pred_check
    _
  $region3: #{forward.11} parent=0 // pred_check_branch
    %10 = sbr.rel (0) target = $region5
  $region4: #{forward.11} parent=0 // pred_region
    _
  $region5: #{forward.11} parent=0 // pred_fallthru
    _
  // Predicated region
  $region6: #{forward.11} parent=0 // pred_check
    _
  $region7: #{forward.11} parent=0 // pred_check_branch
    %12 = sbr.rel (0) target = $region9
  $region8: #{forward.11} parent=0 // pred_region
    _
  $region9: #{forward.11} parent=0 // pred_fallthru
    _
  // Predicated region
  $region10: #{forward.11} parent=0 // pred_check
    _
  $region11: #{forward.11} parent=0 // pred_check_branch
    %14 = sbr.rel (0) target = $region13
  $region12: #{forward.11} parent=0 // pred_region
    _
  $region13: #{forward.11} parent=0 // pred_fallthru
    _
  // Predicated region
  $region14: #{forward.11} parent=0 // pred_check
    _
  $region15: #{forward.11} parent=0 // pred_check_branch
    %16 = sbr.rel (0) target = $region17
  $region16: #{forward.11} parent=0 // pred_region
    _
  $region17: #{forward.11} parent=0 // pred_fallthru
    _
  %v18 = vld [vmem:[%s0] sm:$0xf]
  %v19 = vld [vmem:[%s0 + $0x4] sm:$0xf]
  %v20 = vld [vmem:[%s0 + $0x8] sm:$0xf]
  %v21 = vld [vmem:[%s0 + $0xc] sm:$0xf]
  %v22 = vld [vmem:[%s0 + $0x10] sm:$0xf]
  %v23 = vld [vmem:[%s0 + $0x14] sm:$0xf]
  %v24 = vld [vmem:[%s0 + $0x18] sm:$0xf]
  %v25 = vld [vmem:[%s0 + $0x1c] sm:$0xf]
  %v26 = vld [vmem:[%s0 + $0x20] sm:$0xf]
  %v27 = vld [vmem:[%s0 + $0x24] sm:$0xf]
  %v28 = vld [vmem:[%s0 + $0x28] sm:$0xf]
  %v29 = vld [vmem:[%s0 + $0x2c] sm:$0xf]
  %v30 = vld [vmem:[%s0 + $0x30] sm:$0xf]
  %v31 = vld [vmem:[%s0 + $0x34] sm:$0xf]
  %v32 = vld [vmem:[%s0 + $0x38] sm:$0xf]
  %v33 = vld [vmem:[%s0 + $0x3c] sm:$0xf]
  %v34 = vld [vmem:[%s1] sm:$0xf]
  %v35 = vld [vmem:[%s1 + $0x4] sm:$0xf]
  %v36 = vld [vmem:[%s1 + $0x8] sm:$0xf]
  %v37 = vld [vmem:[%s1 + $0xc] sm:$0xf]
  %v38 = vld [vmem:[%s1 + $0x10] sm:$0xf]
  %v39 = vld [vmem:[%s1 + $0x14] sm:$0xf]
  %v40 = vld [vmem:[%s1 + $0x18] sm:$0xf]
  %v41 = vld [vmem:[%s1 + $0x1c] sm:$0xf]
  %v42 = vld [vmem:[%s1 + $0x20] sm:$0xf]
  %v43 = vld [vmem:[%s1 + $0x24] sm:$0xf]
  %v44 = vld [vmem:[%s1 + $0x28] sm:$0xf]
  %v45 = vld [vmem:[%s1 + $0x2c] sm:$0xf]
  %v46 = vld [vmem:[%s1 + $0x30] sm:$0xf]
  %v47 = vld [vmem:[%s1 + $0x34] sm:$0xf]
  %v48 = vld [vmem:[%s1 + $0x38] sm:$0xf]
  %v49 = vld [vmem:[%s1 + $0x3c] sm:$0xf]
  %v66 = vunpack.c.l.b16 %v18
  %v67 = vunpack.c.l.b16 %v19
  %v68 = vunpack.c.l.b16 %v20
  %v69 = vunpack.c.l.b16 %v21
  %v70 = vunpack.c.l.b16 %v22
  %v71 = vunpack.c.l.b16 %v23
  %v72 = vunpack.c.l.b16 %v24
  %v73 = vunpack.c.l.b16 %v25
  %v74 = vunpack.c.l.b16 %v26
  %v75 = vunpack.c.l.b16 %v27
  %v76 = vunpack.c.l.b16 %v28
  %v77 = vunpack.c.l.b16 %v29
  %v78 = vunpack.c.l.b16 %v30
  %v79 = vunpack.c.l.b16 %v31
  %v80 = vunpack.c.l.b16 %v32
  %v81 = vunpack.c.l.b16 %v33
  %v82 = vpack.c.b16 %v67, %v66
  %v83 = vpack.c.b16 %v69, %v68
  %v84 = vpack.c.b16 %v71, %v70
  %v85 = vpack.c.b16 %v73, %v72
  %v86 = vpack.c.b16 %v75, %v74
  %v87 = vpack.c.b16 %v77, %v76
  %v88 = vpack.c.b16 %v79, %v78
  %v89 = vpack.c.b16 %v81, %v80
  %v114 = vunpack.c.l.b16 %v34
  %v115 = vunpack.c.l.b16 %v35
  %v116 = vunpack.c.l.b16 %v36
  %v117 = vunpack.c.l.b16 %v37
  %v118 = vunpack.c.l.b16 %v38
  %v119 = vunpack.c.l.b16 %v39
  %v120 = vunpack.c.l.b16 %v40
  %v121 = vunpack.c.l.b16 %v41
  %v122 = vunpack.c.l.b16 %v42
  %v123 = vunpack.c.l.b16 %v43
  %v124 = vunpack.c.l.b16 %v44
  %v125 = vunpack.c.l.b16 %v45
  %v126 = vunpack.c.l.b16 %v46
  %v127 = vunpack.c.l.b16 %v47
  %v128 = vunpack.c.l.b16 %v48
  %v129 = vunpack.c.l.b16 %v49
  %v130 = vpack.c.b16 %v115, %v114
  %v131 = vpack.c.b16 %v117, %v116
  %v132 = vpack.c.b16 %v119, %v118
  %v133 = vpack.c.b16 %v121, %v120
  %v134 = vpack.c.b16 %v123, %v122
  %v135 = vpack.c.b16 %v125, %v124
  %v136 = vpack.c.b16 %v127, %v126
  %v137 = vpack.c.b16 %v129, %v128
  %146 = vmatprep.subr.bf16.mxu0 0
  %147 = vmatpush1.bf16.msra.mxu0 %v137
  %148 = vmatprep.subr.bf16.mxu0 0
  %149 = vmatpush1.bf16.msra.mxu0 %v136
  %150 = vmatprep.subr.bf16.mxu0 0
  %151 = vmatpush1.bf16.msra.mxu0 %v135
  %152 = vmatprep.subr.bf16.mxu0 0
  %153 = vmatpush1.bf16.msra.mxu0 %v134
  %154 = vmatprep.subr.bf16.mxu0 0
  %155 = vmatpush1.bf16.msra.mxu0 %v133
  %156 = vmatprep.subr.bf16.mxu0 0
  %157 = vmatpush1.bf16.msra.mxu0 %v132
  %158 = vmatprep.subr.bf16.mxu0 0
  %159 = vmatpush1.bf16.msra.mxu0 %v131
  %160 = vmatprep.subr.bf16.mxu0 0
  %161 = vmatpush1.bf16.msra.mxu0 %v130
  %162 = vmatprep.subr.bf16.mxu0 0
  %163 = vmatpush2.bf16.msra.mxu0 0
  %164 = vmatprep.subr.bf16.mxu0 0
  %165 = vmatpush2.bf16.msra.mxu0 0
  %166 = vmatprep.subr.bf16.mxu0 0
  %167 = vmatpush2.bf16.msra.mxu0 0
  %168 = vmatprep.subr.bf16.mxu0 0
  %169 = vmatpush2.bf16.msra.mxu0 0
  %170 = vmatprep.subr.bf16.mxu0 0
  %171 = vmatpush2.bf16.msra.mxu0 0
  %172 = vmatprep.subr.bf16.mxu0 0
  %173 = vmatpush2.bf16.msra.mxu0 0
  %174 = vmatprep.subr.bf16.mxu0 0
  %175 = vmatpush2.bf16.msra.mxu0 0
  %176 = vmatprep.subr.bf16.mxu0 0
  %177 = vmatpush2.bf16.msra.mxu0 0
  %178 = vmatprep.mubr.bf16.mxu0 0
  %179 = vmatmul.mubr.bf16.gmra.mxu0 %v82
  %v180 = vpop.f32.mrf.mxu0
  %v181 = vadd.f32 0.0, %v180
  %v182 = vpop.f32.mrf.mxu0
  %v183 = vpop.f32.mrf.mxu0
  %v184 = vadd.f32 0.0, %v183
  %v185 = vpop.f32.mrf.mxu0
  %186 = vmatprep.mubr.bf16.mxu0 0
  %187 = vmatmul.mubr.bf16.gmra.mxu0 %v83
  %v188 = vpop.f32.mrf.mxu0
  %v189 = vadd.f32 0.0, %v188
  %v190 = vpop.f32.mrf.mxu0
  %v191 = vpop.f32.mrf.mxu0
  %v192 = vadd.f32 0.0, %v191
  %v193 = vpop.f32.mrf.mxu0
  %194 = vmatprep.mubr.bf16.mxu0 0
  %195 = vmatmul.mubr.bf16.gmra.mxu0 %v84
  %v196 = vpop.f32.mrf.mxu0
  %v197 = vadd.f32 0.0, %v196
  %v198 = vpop.f32.mrf.mxu0
  %v199 = vpop.f32.mrf.mxu0
  %v200 = vadd.f32 0.0, %v199
  %v201 = vpop.f32.mrf.mxu0
  %202 = vmatprep.mubr.bf16.mxu0 0
  %203 = vmatmul.mubr.bf16.gmra.mxu0 %v85
  %v204 = vpop.f32.mrf.mxu0
  %v205 = vadd.f32 0.0, %v204
  %v206 = vpop.f32.mrf.mxu0
  %v207 = vpop.f32.mrf.mxu0
  %v208 = vadd.f32 0.0, %v207
  %v209 = vpop.f32.mrf.mxu0
  %210 = vmatprep.mubr.bf16.mxu0 0
  %211 = vmatmul.mubr.bf16.gmra.mxu0 %v86
  %v212 = vpop.f32.mrf.mxu0
  %v213 = vadd.f32 0.0, %v212
  %v214 = vpop.f32.mrf.mxu0
  %v215 = vpop.f32.mrf.mxu0
  %v216 = vadd.f32 0.0, %v215
  %v217 = vpop.f32.mrf.mxu0
  %218 = vmatprep.mubr.bf16.mxu0 0
  %219 = vmatmul.mubr.bf16.gmra.mxu0 %v87
  %v220 = vpop.f32.mrf.mxu0
  %v221 = vadd.f32 0.0, %v220
  %v222 = vpop.f32.mrf.mxu0
  %v223 = vpop.f32.mrf.mxu0
  %v224 = vadd.f32 0.0, %v223
  %v225 = vpop.f32.mrf.mxu0
  %226 = vmatprep.mubr.bf16.mxu0 0
  %227 = vmatmul.mubr.bf16.gmra.mxu0 %v88
  %v228 = vpop.f32.mrf.mxu0
  %v229 = vadd.f32 0.0, %v228
  %v230 = vpop.f32.mrf.mxu0
  %v231 = vpop.f32.mrf.mxu0
  %v232 = vadd.f32 0.0, %v231
  %v233 = vpop.f32.mrf.mxu0
  %234 = vmatprep.mubr.bf16.mxu0 0
  %235 = vmatmul.mubr.bf16.gmra.mxu0 %v89
  %v236 = vpop.f32.mrf.mxu0
  %v237 = vadd.f32 0.0, %v236
  %v238 = vpop.f32.mrf.mxu0
  %v239 = vpop.f32.mrf.mxu0
  %v240 = vadd.f32 0.0, %v239
  %v241 = vpop.f32.mrf.mxu0
  %242 = vdwg.mxu0
  %v243 = vld [vmem:[%s2] sm:$0x1]
  %v245 = vlaneseq
  %v246 = vshrl.u32 %v245, 7
  %v247 = vsub.s32 0, %v246
  %v248 = vrot.slane %v243, %v247
  %v250 = vmul.f32 %v181, %v248
  %v251 = vmul.f32 %v184, %v248
  %v252 = vmul.f32 %v189, %v248
  %v253 = vmul.f32 %v192, %v248
  %v254 = vmul.f32 %v197, %v248
  %v255 = vmul.f32 %v200, %v248
  %v256 = vmul.f32 %v205, %v248
  %v257 = vmul.f32 %v208, %v248
  %v258 = vmul.f32 %v213, %v248
  %v259 = vmul.f32 %v216, %v248
  %v260 = vmul.f32 %v221, %v248
  %v261 = vmul.f32 %v224, %v248
  %v262 = vmul.f32 %v229, %v248
  %v263 = vmul.f32 %v232, %v248
  %v264 = vmul.f32 %v237, %v248
  %v265 = vmul.f32 %v240, %v248
  %v266 = vld [vmem:[%s3] sm:$0x1]
  %v268 = vlaneseq
  %v269 = vshrl.u32 %v268, 7
  %v270 = vsub.s32 0, %v269
  %v271 = vrot.slane %v266, %v270
  %v273 = vadd.f32 %v250, %v271
  %v274 = vadd.f32 %v251, %v271
  %v275 = vadd.f32 %v252, %v271
  %v276 = vadd.f32 %v253, %v271
  %v277 = vadd.f32 %v254, %v271
  %v278 = vadd.f32 %v255, %v271
  %v279 = vadd.f32 %v256, %v271
  %v280 = vadd.f32 %v257, %v271
  %v281 = vadd.f32 %v258, %v271
  %v282 = vadd.f32 %v259, %v271
  %v283 = vadd.f32 %v260, %v271
  %v284 = vadd.f32 %v261, %v271
  %v285 = vadd.f32 %v262, %v271
  %v286 = vadd.f32 %v263, %v271
  %v287 = vadd.f32 %v264, %v271
  %v288 = vadd.f32 %v265, %v271
  %v289 = vmax.f32 %v273, 0.0
  %v290 = vmax.f32 %v274, 0.0
  %v291 = vmax.f32 %v275, 0.0
  %v292 = vmax.f32 %v276, 0.0
  %v293 = vmax.f32 %v277, 0.0
  %v294 = vmax.f32 %v278, 0.0
  %v295 = vmax.f32 %v279, 0.0
  %v296 = vmax.f32 %v280, 0.0
  %v297 = vmax.f32 %v281, 0.0
  %v298 = vmax.f32 %v282, 0.0
  %v299 = vmax.f32 %v283, 0.0
  %v300 = vmax.f32 %v284, 0.0
  %v301 = vmax.f32 %v285, 0.0
  %v302 = vmax.f32 %v286, 0.0
  %v303 = vmax.f32 %v287, 0.0
  %v304 = vmax.f32 %v288, 0.0
  %v305 = vpack.c.bf16 %v290, %v289
  %v306 = vpack.c.bf16 %v292, %v291
  %v307 = vpack.c.bf16 %v294, %v293
  %v308 = vpack.c.bf16 %v296, %v295
  %v309 = vpack.c.bf16 %v298, %v297
  %v310 = vpack.c.bf16 %v300, %v299
  %v311 = vpack.c.bf16 %v302, %v301
  %v312 = vpack.c.bf16 %v304, %v303
  %v321 = vunpack.c.l.b16 %v305
  %v322 = vunpack.c.h.b16 %v305
  %v323 = vunpack.c.l.b16 %v306
  %v324 = vunpack.c.h.b16 %v306
  %v325 = vunpack.c.l.b16 %v307
  %v326 = vunpack.c.h.b16 %v307
  %v327 = vunpack.c.l.b16 %v308
  %v328 = vunpack.c.h.b16 %v308
  %v329 = vunpack.c.l.b16 %v309
  %v330 = vunpack.c.h.b16 %v309
  %v331 = vunpack.c.l.b16 %v310
  %v332 = vunpack.c.h.b16 %v310
  %v333 = vunpack.c.l.b16 %v311
  %v334 = vunpack.c.h.b16 %v311
  %v335 = vunpack.c.l.b16 %v312
  %v336 = vunpack.c.h.b16 %v312
  %v337 = vpack.c.b16 %v321, %v321
  %v338 = vpack.c.b16 %v322, %v322
  %v339 = vpack.c.b16 %v323, %v323
  %v340 = vpack.c.b16 %v324, %v324
  %v341 = vpack.c.b16 %v325, %v325
  %v342 = vpack.c.b16 %v326, %v326
  %v343 = vpack.c.b16 %v327, %v327
  %v344 = vpack.c.b16 %v328, %v328
  %v345 = vpack.c.b16 %v329, %v329
  %v346 = vpack.c.b16 %v330, %v330
  %v347 = vpack.c.b16 %v331, %v331
  %v348 = vpack.c.b16 %v332, %v332
  %v349 = vpack.c.b16 %v333, %v333
  %v350 = vpack.c.b16 %v334, %v334
  %v351 = vpack.c.b16 %v335, %v335
  %v352 = vpack.c.b16 %v336, %v336
  %vm369 = vcmask 257024
  %370 = vst.msk [vmem:[%s4] sm:$0xf] %vm369, %v337
  %371 = vst.msk [vmem:[%s4 + $0x4] sm:$0xf] %vm369, %v338
  %372 = vst.msk [vmem:[%s4 + $0x8] sm:$0xf] %vm369, %v339
  %373 = vst.msk [vmem:[%s4 + $0xc] sm:$0xf] %vm369, %v340
  %374 = vst.msk [vmem:[%s4 + $0x10] sm:$0xf] %vm369, %v341
  %375 = vst.msk [vmem:[%s4 + $0x14] sm:$0xf] %vm369, %v342
  %376 = vst.msk [vmem:[%s4 + $0x18] sm:$0xf] %vm369, %v343
  %377 = vst.msk [vmem:[%s4 + $0x1c] sm:$0xf] %vm369, %v344
  %378 = vst.msk [vmem:[%s4 + $0x20] sm:$0xf] %vm369, %v345
  %379 = vst.msk [vmem:[%s4 + $0x24] sm:$0xf] %vm369, %v346
  %380 = vst.msk [vmem:[%s4 + $0x28] sm:$0xf] %vm369, %v347
  %381 = vst.msk [vmem:[%s4 + $0x2c] sm:$0xf] %vm369, %v348
  %382 = vst.msk [vmem:[%s4 + $0x30] sm:$0xf] %vm369, %v349
  %383 = vst.msk [vmem:[%s4 + $0x34] sm:$0xf] %vm369, %v350
  %384 = vst.msk [vmem:[%s4 + $0x38] sm:$0xf] %vm369, %v351
  %385 = vst.msk [vmem:[%s4 + $0x3c] sm:$0xf] %vm369, %v352
  // Predicated region
  $region18: #{forward.11} parent=0 // pred_check
    _
  $region19: #{forward.11} parent=0 // pred_check_branch
    %387 = sbr.rel (0) target = $region21
  $region20: #{forward.11} parent=0 // pred_region
    _
  $region21: #{forward.11} parent=0 // pred_fallthru
    _
  // Predicated region
  $region22: #{forward.11} parent=0 // pred_check
    _
  $region23: #{forward.11} parent=0 // pred_check_branch
    %389 = sbr.rel (0) target = $region25
  $region24: #{forward.11} parent=0 // pred_region
    _
  $region25: #{forward.11} parent=0 // pred_fallthru
    _

// kernel: forward.7
$region0: #{forward.7}
  #allocation0 [shape = 'u32[]', space=smem, size = 0x4, offset = 0x4, fixed_abs, tag = 'smem constant byte address 0x4 - core index']
  #allocation1 [shape = 'u32[144,128]{1,0:T(1,128)}', space=vmem, size = 0x12000, scoped, tag = 'internal scratch']
  %s0 = inlined_call_operand.vmem [shape: bf16[128,64], index: 0, kind: input, shape index: {}]
  %s1 = inlined_call_operand.vmem [shape: bf16[64,128], index: 1, kind: input, shape index: {}]
  %s2 = inlined_call_operand.vmem [shape: f32[1,128], index: 2, kind: input, shape index: {}]
  %s3 = inlined_call_operand.vmem [shape: f32[1,128], index: 3, kind: input, shape index: {}]
  %s4 = inlined_call_operand.vmem [shape: bf16[128,128], index: 4, kind: output, shape index: {}]
  %s5 = sld [smem:[#allocation0]]
  $region26: #{forward.7} parent=0
    _
  %s7 = ssub.s32 1, %s5
  %s8 = scalar_select 0, %s7, %s5
  // Predicated region
  $region2: #{forward.7} parent=0 // pred_check
    _
  $region3: #{forward.7} parent=0 // pred_check_branch
    %10 = sbr.rel (0) target = $region5
  $region4: #{forward.7} parent=0 // pred_region
    _
  $region5: #{forward.7} parent=0 // pred_fallthru
    _
  // Predicated region
  $region6: #{forward.7} parent=0 // pred_check
    _
  $region7: #{forward.7} parent=0 // pred_check_branch
    %12 = sbr.rel (0) target = $region9
  $region8: #{forward.7} parent=0 // pred_region
    _
  $region9: #{forward.7} parent=0 // pred_fallthru
    _
  // Predicated region
  $region10: #{forward.7} parent=0 // pred_check
    _
  $region11: #{forward.7} parent=0 // pred_check_branch
    %14 = sbr.rel (0) target = $region13
  $region12: #{forward.7} parent=0 // pred_region
    _
  $region13: #{forward.7} parent=0 // pred_fallthru
    _
  // Predicated region
  $region14: #{forward.7} parent=0 // pred_check
    _
  $region15: #{forward.7} parent=0 // pred_check_branch
    %16 = sbr.rel (0) target = $region17
  $region16: #{forward.7} parent=0 // pred_region
    _
  $region17: #{forward.7} parent=0 // pred_fallthru
    _
  %v18 = vld [vmem:[%s0] sm:$0xf]
  %v19 = vld [vmem:[%s0 + $0x4] sm:$0xf]
  %v20 = vld [vmem:[%s0 + $0x8] sm:$0xf]
  %v21 = vld [vmem:[%s0 + $0xc] sm:$0xf]
  %v22 = vld [vmem:[%s0 + $0x10] sm:$0xf]
  %v23 = vld [vmem:[%s0 + $0x14] sm:$0xf]
  %v24 = vld [vmem:[%s0 + $0x18] sm:$0xf]
  %v25 = vld [vmem:[%s0 + $0x1c] sm:$0xf]
  %v26 = vld [vmem:[%s0 + $0x20] sm:$0xf]
  %v27 = vld [vmem:[%s0 + $0x24] sm:$0xf]
  %v28 = vld [vmem:[%s0 + $0x28] sm:$0xf]
  %v29 = vld [vmem:[%s0 + $0x2c] sm:$0xf]
  %v30 = vld [vmem:[%s0 + $0x30] sm:$0xf]
  %v31 = vld [vmem:[%s0 + $0x34] sm:$0xf]
  %v32 = vld [vmem:[%s0 + $0x38] sm:$0xf]
  %v33 = vld [vmem:[%s0 + $0x3c] sm:$0xf]
  %v34 = vld [vmem:[%s1] sm:$0xf]
  %v35 = vld [vmem:[%s1 + $0x4] sm:$0xf]
  %v36 = vld [vmem:[%s1 + $0x8] sm:$0xf]
  %v37 = vld [vmem:[%s1 + $0xc] sm:$0xf]
  %v38 = vld [vmem:[%s1 + $0x10] sm:$0xf]
  %v39 = vld [vmem:[%s1 + $0x14] sm:$0xf]
  %v40 = vld [vmem:[%s1 + $0x18] sm:$0xf]
  %v41 = vld [vmem:[%s1 + $0x1c] sm:$0xf]
  %v58 = vunpack.c.l.b16 %v18
  %v59 = vunpack.c.l.b16 %v19
  %v60 = vunpack.c.l.b16 %v20
  %v61 = vunpack.c.l.b16 %v21
  %v62 = vunpack.c.l.b16 %v22
  %v63 = vunpack.c.l.b16 %v23
  %v64 = vunpack.c.l.b16 %v24
  %v65 = vunpack.c.l.b16 %v25
  %v66 = vunpack.c.l.b16 %v26
  %v67 = vunpack.c.l.b16 %v27
  %v68 = vunpack.c.l.b16 %v28
  %v69 = vunpack.c.l.b16 %v29
  %v70 = vunpack.c.l.b16 %v30
  %v71 = vunpack.c.l.b16 %v31
  %v72 = vunpack.c.l.b16 %v32
  %v73 = vunpack.c.l.b16 %v33
  %v74 = vpack.c.b16 %v59, %v58
  %v75 = vpack.c.b16 %v61, %v60
  %v76 = vpack.c.b16 %v63, %v62
  %v77 = vpack.c.b16 %v65, %v64
  %v78 = vpack.c.b16 %v67, %v66
  %v79 = vpack.c.b16 %v69, %v68
  %v80 = vpack.c.b16 %v71, %v70
  %v81 = vpack.c.b16 %v73, %v72
  %v90 = vunpack.c.l.b16 %v34
  %v91 = vunpack.c.l.b16 %v35
  %v92 = vunpack.c.l.b16 %v36
  %v93 = vunpack.c.l.b16 %v37
  %v94 = vunpack.c.l.b16 %v38
  %v95 = vunpack.c.l.b16 %v39
  %v96 = vunpack.c.l.b16 %v40
  %v97 = vunpack.c.l.b16 %v41
  %v98 = vpack.c.b16 %v91, %v90
  %v99 = vpack.c.b16 %v93, %v92
  %v100 = vpack.c.b16 %v95, %v94
  %v101 = vpack.c.b16 %v97, %v96
  %vm106 = vcmask 523264
  %v108 = vsel %vm106, %v74, 0
  %v111 = vsel %vm106, %v75, 0
  %v114 = vsel %vm106, %v76, 0
  %v117 = vsel %vm106, %v77, 0
  %v120 = vsel %vm106, %v78, 0
  %v123 = vsel %vm106, %v79, 0
  %v126 = vsel %vm106, %v80, 0
  %v129 = vsel %vm106, %v81, 0
  %131 = vmatprep.subr.bf16.mxu0 0
  %132 = vmatpush1.bf16.msra.mxu0 0
  %133 = vmatprep.subr.bf16.mxu0 0
  %134 = vmatpush1.bf16.msra.mxu0 0
  %135 = vmatprep.subr.bf16.mxu0 0
  %136 = vmatpush1.bf16.msra.mxu0 0
  %137 = vmatprep.subr.bf16.mxu0 0
  %138 = vmatpush1.bf16.msra.mxu0 0
  %139 = vmatprep.subr.bf16.mxu0 0
  %140 = vmatpush1.bf16.msra.mxu0 %v101
  %141 = vmatprep.subr.bf16.mxu0 0
  %142 = vmatpush1.bf16.msra.mxu0 %v100
  %143 = vmatprep.subr.bf16.mxu0 0
  %144 = vmatpush1.bf16.msra.mxu0 %v99
  %145 = vmatprep.subr.bf16.mxu0 0
  %146 = vmatpush1.bf16.msra.mxu0 %v98
  %147 = vmatprep.subr.bf16.mxu0 0
  %148 = vmatpush2.bf16.msra.mxu0 0
  %149 = vmatprep.subr.bf16.mxu0 0
  %150 = vmatpush2.bf16.msra.mxu0 0
  %151 = vmatprep.subr.bf16.mxu0 0
  %152 = vmatpush2.bf16.msra.mxu0 0
  %153 = vmatprep.subr.bf16.mxu0 0
  %154 = vmatpush2.bf16.msra.mxu0 0
  %155 = vmatprep.subr.bf16.mxu0 0
  %156 = vmatpush2.bf16.msra.mxu0 0
  %157 = vmatprep.subr.bf16.mxu0 0
  %158 = vmatpush2.bf16.msra.mxu0 0
  %159 = vmatprep.subr.bf16.mxu0 0
  %160 = vmatpush2.bf16.msra.mxu0 0
  %161 = vmatprep.subr.bf16.mxu0 0
  %162 = vmatpush2.bf16.msra.mxu0 0
  %163 = vmatprep.mubr.bf16.mxu0 0
  %164 = vmatmul.mubr.bf16.gmra.mxu0 %v108
  %v165 = vpop.f32.mrf.mxu0
  %v166 = vadd.f32 0.0, %v165
  %v167 = vpop.f32.mrf.mxu0
  %v168 = vpop.f32.mrf.mxu0
  %v169 = vadd.f32 0.0, %v168
  %v170 = vpop.f32.mrf.mxu0
  %171 = vmatprep.mubr.bf16.mxu0 0
  %172 = vmatmul.mubr.bf16.gmra.mxu0 %v111
  %v173 = vpop.f32.mrf.mxu0
  %v174 = vadd.f32 0.0, %v173
  %v175 = vpop.f32.mrf.mxu0
  %v176 = vpop.f32.mrf.mxu0
  %v177 = vadd.f32 0.0, %v176
  %v178 = vpop.f32.mrf.mxu0
  %179 = vmatprep.mubr.bf16.mxu0 0
  %180 = vmatmul.mubr.bf16.gmra.mxu0 %v114
  %v181 = vpop.f32.mrf.mxu0
  %v182 = vadd.f32 0.0, %v181
  %v183 = vpop.f32.mrf.mxu0
  %v184 = vpop.f32.mrf.mxu0
  %v185 = vadd.f32 0.0, %v184
  %v186 = vpop.f32.mrf.mxu0
  %187 = vmatprep.mubr.bf16.mxu0 0
  %188 = vmatmul.mubr.bf16.gmra.mxu0 %v117
  %v189 = vpop.f32.mrf.mxu0
  %v190 = vadd.f32 0.0, %v189
  %v191 = vpop.f32.mrf.mxu0
  %v192 = vpop.f32.mrf.mxu0
  %v193 = vadd.f32 0.0, %v192
  %v194 = vpop.f32.mrf.mxu0
  %195 = vmatprep.mubr.bf16.mxu0 0
  %196 = vmatmul.mubr.bf16.gmra.mxu0 %v120
  %v197 = vpop.f32.mrf.mxu0
  %v198 = vadd.f32 0.0, %v197
  %v199 = vpop.f32.mrf.mxu0
  %v200 = vpop.f32.mrf.mxu0
  %v201 = vadd.f32 0.0, %v200
  %v202 = vpop.f32.mrf.mxu0
  %203 = vmatprep.mubr.bf16.mxu0 0
  %204 = vmatmul.mubr.bf16.gmra.mxu0 %v123
  %v205 = vpop.f32.mrf.mxu0
  %v206 = vadd.f32 0.0, %v205
  %v207 = vpop.f32.mrf.mxu0
  %v208 = vpop.f32.mrf.mxu0
  %v209 = vadd.f32 0.0, %v208
  %v210 = vpop.f32.mrf.mxu0
  %211 = vmatprep.mubr.bf16.mxu0 0
  %212 = vmatmul.mubr.bf16.gmra.mxu0 %v126
  %v213 = vpop.f32.mrf.mxu0
  %v214 = vadd.f32 0.0, %v213
  %v215 = vpop.f32.mrf.mxu0
  %v216 = vpop.f32.mrf.mxu0
  %v217 = vadd.f32 0.0, %v216
  %v218 = vpop.f32.mrf.mxu0
  %219 = vmatprep.mubr.bf16.mxu0 0
  %220 = vmatmul.mubr.bf16.gmra.mxu0 %v129
  %v221 = vpop.f32.mrf.mxu0
  %v222 = vadd.f32 0.0, %v221
  %v223 = vpop.f32.mrf.mxu0
  %v224 = vpop.f32.mrf.mxu0
  %v225 = vadd.f32 0.0, %v224
  %v226 = vpop.f32.mrf.mxu0
  %227 = vdwg.mxu0
  %v228 = vld [vmem:[%s2] sm:$0x1]
  %v230 = vlaneseq
  %v231 = vshrl.u32 %v230, 7
  %v232 = vsub.s32 0, %v231
  %v233 = vrot.slane %v228, %v232
  %v235 = vmul.f32 %v166, %v233
  %v236 = vmul.f32 %v169, %v233
  %v237 = vmul.f32 %v174, %v233
  %v238 = vmul.f32 %v177, %v233
  %v239 = vmul.f32 %v182, %v233
  %v240 = vmul.f32 %v185, %v233
  %v241 = vmul.f32 %v190, %v233
  %v242 = vmul.f32 %v193, %v233
  %v243 = vmul.f32 %v198, %v233
  %v244 = vmul.f32 %v201, %v233
  %v245 = vmul.f32 %v206, %v233
  %v246 = vmul.f32 %v209, %v233
  %v247 = vmul.f32 %v214, %v233
  %v248 = vmul.f32 %v217, %v233
  %v249 = vmul.f32 %v222, %v233
  %v250 = vmul.f32 %v225, %v233
  %v251 = vld [vmem:[%s3] sm:$0x1]
  %v253 = vlaneseq
  %v254 = vshrl.u32 %v253, 7
  %v255 = vsub.s32 0, %v254
  %v256 = vrot.slane %v251, %v255
  %v258 = vadd.f32 %v235, %v256
  %v259 = vadd.f32 %v236, %v256
  %v260 = vadd.f32 %v237, %v256
  %v261 = vadd.f32 %v238, %v256
  %v262 = vadd.f32 %v239, %v256
  %v263 = vadd.f32 %v240, %v256
  %v264 = vadd.f32 %v241, %v256
  %v265 = vadd.f32 %v242, %v256
  %v266 = vadd.f32 %v243, %v256
  %v267 = vadd.f32 %v244, %v256
  %v268 = vadd.f32 %v245, %v256
  %v269 = vadd.f32 %v246, %v256
  %v270 = vadd.f32 %v247, %v256
  %v271 = vadd.f32 %v248, %v256
  %v272 = vadd.f32 %v249, %v256
  %v273 = vadd.f32 %v250, %v256
  %v274 = vpack.c.bf16 %v259, %v258
  %v275 = vpack.c.bf16 %v261, %v260
  %v276 = vpack.c.bf16 %v263, %v262
  %v277 = vpack.c.bf16 %v265, %v264
  %v278 = vpack.c.bf16 %v267, %v266
  %v279 = vpack.c.bf16 %v269, %v268
  %v280 = vpack.c.bf16 %v271, %v270
  %v281 = vpack.c.bf16 %v273, %v272
  %v290 = vunpack.c.l.b16 %v274
  %v291 = vunpack.c.h.b16 %v274
  %v292 = vunpack.c.l.b16 %v275
  %v293 = vunpack.c.h.b16 %v275
  %v294 = vunpack.c.l.b16 %v276
  %v295 = vunpack.c.h.b16 %v276
  %v296 = vunpack.c.l.b16 %v277
  %v297 = vunpack.c.h.b16 %v277
  %v298 = vunpack.c.l.b16 %v278
  %v299 = vunpack.c.h.b16 %v278
  %v300 = vunpack.c.l.b16 %v279
  %v301 = vunpack.c.h.b16 %v279
  %v302 = vunpack.c.l.b16 %v280
  %v303 = vunpack.c.h.b16 %v280
  %v304 = vunpack.c.l.b16 %v281
  %v305 = vunpack.c.h.b16 %v281
  %v306 = vpack.c.b16 %v290, %v290
  %v307 = vpack.c.b16 %v291, %v291
  %v308 = vpack.c.b16 %v292, %v292
  %v309 = vpack.c.b16 %v293, %v293
  %v310 = vpack.c.b16 %v294, %v294
  %v311 = vpack.c.b16 %v295, %v295
  %v312 = vpack.c.b16 %v296, %v296
  %v313 = vpack.c.b16 %v297, %v297
  %v314 = vpack.c.b16 %v298, %v298
  %v315 = vpack.c.b16 %v299, %v299
  %v316 = vpack.c.b16 %v300, %v300
  %v317 = vpack.c.b16 %v301, %v301
  %v318 = vpack.c.b16 %v302, %v302
  %v319 = vpack.c.b16 %v303, %v303
  %v320 = vpack.c.b16 %v304, %v304
  %v321 = vpack.c.b16 %v305, %v305
  %338 = vst [vmem:[%s4] sm:$0xf] %v306
  %339 = vst [vmem:[%s4 + $0x4] sm:$0xf] %v307
  %340 = vst [vmem:[%s4 + $0x8] sm:$0xf] %v308
  %341 = vst [vmem:[%s4 + $0xc] sm:$0xf] %v309
  %342 = vst [vmem:[%s4 + $0x10] sm:$0xf] %v310
  %343 = vst [vmem:[%s4 + $0x14] sm:$0xf] %v311
  %344 = vst [vmem:[%s4 + $0x18] sm:$0xf] %v312
  %345 = vst [vmem:[%s4 + $0x1c] sm:$0xf] %v313
  %346 = vst [vmem:[%s4 + $0x20] sm:$0xf] %v314
  %347 = vst [vmem:[%s4 + $0x24] sm:$0xf] %v315
  %348 = vst [vmem:[%s4 + $0x28] sm:$0xf] %v316
  %349 = vst [vmem:[%s4 + $0x2c] sm:$0xf] %v317
  %350 = vst [vmem:[%s4 + $0x30] sm:$0xf] %v318
  %351 = vst [vmem:[%s4 + $0x34] sm:$0xf] %v319
  %352 = vst [vmem:[%s4 + $0x38] sm:$0xf] %v320
  %353 = vst [vmem:[%s4 + $0x3c] sm:$0xf] %v321
  // Predicated region
  $region18: #{forward.7} parent=0 // pred_check
    _
  $region19: #{forward.7} parent=0 // pred_check_branch
    %355 = sbr.rel (0) target = $region21
  $region20: #{forward.7} parent=0 // pred_region
    _
  $region21: #{forward.7} parent=0 // pred_fallthru
    _
  // Predicated region
  $region22: #{forward.7} parent=0 // pred_check
    _
  $region23: #{forward.7} parent=0 // pred_check_branch
    %357 = sbr.rel (0) target = $region25
  $region24: #{forward.7} parent=0 // pred_region
    _
  $region25: #{forward.7} parent=0 // pred_fallthru
    _

// kernel: forward.9
$region0: #{forward.9}
  #allocation0 [shape = 'u32[]', space=smem, size = 0x4, offset = 0x4, fixed_abs, tag = 'smem constant byte address 0x4 - core index']
  #allocation1 [shape = 'u32[144,128]{1,0:T(1,128)}', space=vmem, size = 0x12000, scoped, tag = 'internal scratch']
  #allocation2 [shape = 'f32[64,32]{1,0:T(8,128)}', space=vmem, size = 0x8000, scoped, tag = 'scratch operand']
  %s0 = inlined_call_operand.vmem [shape: bf16[2,36,9,32], index: 0, kind: input, shape index: {}]
  %s1 = inlined_call_operand.vmem [shape: bf16[9,32,32], index: 1, kind: input, shape index: {}]
  %s2 = inlined_call_operand.vmem [shape: f32[1,32], index: 2, kind: input, shape index: {}]
  %s3 = inlined_call_operand.vmem [shape: f32[1,32], index: 3, kind: input, shape index: {}]
  %s4 = inlined_call_operand.vmem [shape: bf16[2,1,64,32], index: 4, kind: output, shape index: {}]
  %s5 = sld [smem:[#allocation0]]
  $region49: #{forward.9} parent=0
    _
  %s7 = ssub.s32 1, %s5
  %s8 = scalar_select 0, %s7, %s5
  loop: start=0, step=1, limit=4
  $region2: #{forward.9} parent=0 // loop_pre_header
    _
  $region3: #{forward.9} parent=0 // loop_header
    %s10 = sphi 0, %s14
    %p11 = scmp.ge.s32.totalorder %s10, 4
    %s17 = sphi 0, %s36
    %s18 = sphi 0, %s32
    %s19 = sphi 0, %s28
    %s20 = sphi 0, %s17
    %s21 = sphi 0, %s18
    %s22 = sphi 0, %s19
    %s23 = sphi 0, %s20
    %s24 = sphi 0, %s21
    %s25 = sphi 0, %s22
    %s39 = sphi 0, %s41
    %s42 = sphi 0, %s39
    %s43 = sphi 0, %s42
    %s59 = sphi 0, %s43
    %s65 = sphi 0, %s67
    %s68 = sphi 0, %s65
    %s69 = sphi 0, %s68
    %s85 = sphi 0, %s69
    %s91 = sphi 0, %s93
    %s94 = sphi 0, %s91
    %s95 = sphi 0, %s94
    %s111 = sphi 0, %s95
    %s117 = sphi 0, %s119
    %s120 = sphi 0, %s117
    %s121 = sphi 0, %s120
    %s137 = sphi 0, %s121
    %s147 = sphi 0, %s149
    %s150 = sphi 0, %s147
    %s151 = sphi 0, %s150
    %s167 = sphi 0, %s151
  $region4: #{forward.9} parent=0 // loop_header_branch
    %13 = sbr.rel (%p11) target = $region8
  $region5: #{forward.9} parent=0 // loop_body
    %s15 = ssub.s32 %s10, 1
    %s16 = ssub.s32 %s10, 2
    %s26 = sadd.s32 1, %s19
    %p27 = scmp.ge.s32.totalorder %s26, 1
    %s28 = scalar_select %p27, 0, %s26
    %s29 = sadd.s32 1, %s18
    %s30 = scalar_select %p27, %s29, %s18
    %p31 = scmp.ge.s32.totalorder %s30, 1
    %s32 = scalar_select %p31, 0, %s30
    %s33 = sadd.s32 1, %s17
    %s34 = scalar_select %p31, %s33, %s17
    %p35 = scmp.ge.s32.totalorder %s34, 2
    %s36 = scalar_select %p35, 0, %s34
    %s37 = ssub.s32 %s17, %s36
    %p38 = scmp.eq.s32.totalorder %s37, 0
    %s40 = sadd.s32 %s39, 1
    %s41 = scalar_select %p38, %s39, %s40
    %p44 = pneg %p38
    %p45 = scmp.eq.s32.totalorder %s10, 1
    %p46 = por %p44, %p45
    %p47 = scmp.ne.s32.totalorder %s39, %s42
    %p48 = scmp.eq.s32.totalorder %s10, 0
    %p49 = por %p47, %p48
    %p50 = scmp.ne.s32.totalorder %s39, %s42
    %p51 = scmp.eq.s32.totalorder %s15, 1
    %p52 = por %p50, %p51
    %p53 = scmp.ne.s32.totalorder %s42, %s43
    %p54 = scmp.eq.s32.totalorder %s15, 0
    %p55 = por %p53, %p54
    %p56 = scmp.ne.s32.totalorder %s42, %s43
    %p57 = scmp.eq.s32.totalorder %s16, 1
    %p58 = por %p56, %p57
    %p60 = scmp.ne.s32.totalorder %s43, %s59
    %p61 = scmp.eq.s32.totalorder %s16, 0
    %p62 = por %p60, %p61
    %s63 = ssub.s32 %s19, %s28
    %p64 = scmp.eq.s32.totalorder %s63, 0
    %s66 = sadd.s32 %s65, 1
    %s67 = scalar_select %p64, %s65, %s66
    %p70 = pneg %p64
    %p71 = scmp.eq.s32.totalorder %s10, 1
    %p72 = por %p70, %p71
    %p73 = scmp.ne.s32.totalorder %s65, %s68
    %p74 = scmp.eq.s32.totalorder %s10, 0
    %p75 = por %p73, %p74
    %p76 = scmp.ne.s32.totalorder %s65, %s68
    %p77 = scmp.eq.s32.totalorder %s15, 1
    %p78 = por %p76, %p77
    %p79 = scmp.ne.s32.totalorder %s68, %s69
    %p80 = scmp.eq.s32.totalorder %s15, 0
    %p81 = por %p79, %p80
    %p82 = scmp.ne.s32.totalorder %s68, %s69
    %p83 = scmp.eq.s32.totalorder %s16, 1
    %p84 = por %p82, %p83
    %p86 = scmp.ne.s32.totalorder %s69, %s85
    %p87 = scmp.eq.s32.totalorder %s16, 0
    %p88 = por %p86, %p87
    %s89 = ssub.s32 %s19, %s28
    %p90 = scmp.eq.s32.totalorder %s89, 0
    %s92 = sadd.s32 %s91, 1
    %s93 = scalar_select %p90, %s91, %s92
    %p96 = pneg %p90
    %p97 = scmp.eq.s32.totalorder %s10, 1
    %p98 = por %p96, %p97
    %p99 = scmp.ne.s32.totalorder %s91, %s94
    %p100 = scmp.eq.s32.totalorder %s10, 0
    %p101 = por %p99, %p100
    %p102 = scmp.ne.s32.totalorder %s91, %s94
    %p103 = scmp.eq.s32.totalorder %s15, 1
    %p104 = por %p102, %p103
    %p105 = scmp.ne.s32.totalorder %s94, %s95
    %p106 = scmp.eq.s32.totalorder %s15, 0
    %p107 = por %p105, %p106
    %p108 = scmp.ne.s32.totalorder %s94, %s95
    %p109 = scmp.eq.s32.totalorder %s16, 1
    %p110 = por %p108, %p109
    %p112 = scmp.ne.s32.totalorder %s95, %s111
    %p113 = scmp.eq.s32.totalorder %s16, 0
    %p114 = por %p112, %p113
    %s115 = ssub.s32 %s19, %s28
    %p116 = scmp.eq.s32.totalorder %s115, 0
    %s118 = sadd.s32 %s117, 1
    %s119 = scalar_select %p116, %s117, %s118
    %p122 = pneg %p116
    %p123 = scmp.eq.s32.totalorder %s10, 1
    %p124 = por %p122, %p123
    %p125 = scmp.ne.s32.totalorder %s117, %s120
    %p126 = scmp.eq.s32.totalorder %s10, 0
    %p127 = por %p125, %p126
    %p128 = scmp.ne.s32.totalorder %s117, %s120
    %p129 = scmp.eq.s32.totalorder %s15, 1
    %p130 = por %p128, %p129
    %p131 = scmp.ne.s32.totalorder %s120, %s121
    %p132 = scmp.eq.s32.totalorder %s15, 0
    %p133 = por %p131, %p132
    %p134 = scmp.ne.s32.totalorder %s120, %s121
    %p135 = scmp.eq.s32.totalorder %s16, 1
    %p136 = por %p134, %p135
    %p138 = scmp.ne.s32.totalorder %s121, %s137
    %p139 = scmp.eq.s32.totalorder %s16, 0
    %p140 = por %p138, %p139
    %s141 = ssub.s32 %s17, %s36
    %s142 = ssub.s32 %s18, %s32
    %s143 = sor.u32 %s141, %s142
    %s144 = ssub.s32 %s19, %s28
    %s145 = sor.u32 %s143, %s144
    %p146 = scmp.eq.s32.totalorder %s145, 0
    %s148 = sadd.s32 %s147, 1
    %s149 = scalar_select %p146, %s147, %s148
    %p152 = pneg %p146
    %p153 = scmp.eq.s32.totalorder %s10, 1
    %p154 = por %p152, %p153
    %p155 = scmp.ne.s32.totalorder %s147, %s150
    %p156 = scmp.eq.s32.totalorder %s10, 0
    %p157 = por %p155, %p156
    %p158 = scmp.ne.s32.totalorder %s147, %s150
    %p159 = scmp.eq.s32.totalorder %s15, 1
    %p160 = por %p158, %p159
    %p161 = scmp.ne.s32.totalorder %s150, %s151
    %p162 = scmp.eq.s32.totalorder %s15, 0
    %p163 = por %p161, %p162
    %p164 = scmp.ne.s32.totalorder %s150, %s151
    %p165 = scmp.eq.s32.totalorder %s16, 1
    %p166 = por %p164, %p165
    %p168 = scmp.ne.s32.totalorder %s151, %s167
    %p169 = scmp.eq.s32.totalorder %s16, 0
    %p170 = por %p168, %p169
    %p171 = scmp.le.s32.totalorder 1, %s10
    %p172 = scmp.lt.s32.totalorder %s10, 3
    %p173 = pnand %p171, %p172
    %p174 = pneg %p173
    // Predicated region
    $region9: #{forward.9} parent=5 // pred_check
      _
    $region10: #{forward.9} parent=5 // pred_check_branch
      %176 = sbr.rel (%p173) target = $region12
    $region11: #{forward.9} parent=5 // pred_region
      %s177 = ssub.s32 %s10, 1
      // Predicated region
      $region13: #{forward.9} parent=11 // pred_check
        %p178 = pneg %p81
      $region14: #{forward.9} parent=11 // pred_check_branch
        %180 = sbr.rel (%p178) target = $region16
      $region15: #{forward.9} parent=11 // pred_region
        %p181 = scmp.lt.s32.totalorder %s22, 0
        %s182 = scalar_select %p181, %s22, 0
        %s183 = smul.addr %s182, 4
        %s184 = scalar_lea.vmem %s1, %s183
      $region16: #{forward.9} parent=11 // pred_fallthru
        _
      // Predicated region
      $region17: #{forward.9} parent=11 // pred_check
        %p185 = pneg %p107
      $region18: #{forward.9} parent=11 // pred_check_branch
        %187 = sbr.rel (%p185) target = $region20
      $region19: #{forward.9} parent=11 // pred_region
        %p188 = scmp.lt.s32.totalorder %s22, 0
        %s189 = scalar_select %p188, %s22, 0
        %s190 = scalar_lea.vmem %s2, %s189
      $region20: #{forward.9} parent=11 // pred_fallthru
        _
      // Predicated region
      $region21: #{forward.9} parent=11 // pred_check
        %p191 = pneg %p133
      $region22: #{forward.9} parent=11 // pred_check_branch
        %193 = sbr.rel (%p191) target = $region24
      $region23: #{forward.9} parent=11 // pred_region
        %p194 = scmp.lt.s32.totalorder %s22, 0
        %s195 = scalar_select %p194, %s22, 0
        %s196 = scalar_lea.vmem %s3, %s195
      $region24: #{forward.9} parent=11 // pred_fallthru
        _
    $region12: #{forward.9} parent=5 // pred_fallthru
      _
    %p197 = scmp.lt.s32.totalorder %s10, 2
    // Predicated region
    $region25: #{forward.9} parent=5 // pred_check
      %p198 = pneg %p197
    $region26: #{forward.9} parent=5 // pred_check_branch
      %200 = sbr.rel (%p198) target = $region28
    $region27: #{forward.9} parent=5 // pred_region
      // Predicated region
      $region29: #{forward.9} parent=27 // pred_check
        %p201 = pneg %p49
      $region30: #{forward.9} parent=27 // pred_check_branch
        %203 = sbr.rel (%p201) target = $region32
      $region31: #{forward.9} parent=27 // pred_region
        %p204 = scmp.lt.s32.totalorder %s17, 1
        %s205 = scalar_select %p204, %s17, 1
        %s206 = smul.addr %s205, 72
        %s207 = smul.addr %s206, 4
        %s208 = scalar_lea.vmem %s0, %s207
      $region32: #{forward.9} parent=27 // pred_fallthru
        _
    $region28: #{forward.9} parent=5 // pred_fallthru
      _
    %p209 = scmp.le.s32.totalorder 1, %s10
    %p210 = scmp.lt.s32.totalorder %s10, 3
    %p211 = pnand %p209, %p210
    %p212 = pneg %p211
    // Predicated region
    $region33: #{forward.9} parent=5 // pred_check
      _
    $region34: #{forward.9} parent=5 // pred_check_branch
      %214 = sbr.rel (%p211) target = $region36
    $region35: #{forward.9} parent=5 // pred_region
      %s215 = ssub.s32 %s10, 1
      %p216 = scmp.lt.s32.totalorder %s20, 1
      %s217 = scalar_select %p216, %s20, 1
      %s218 = smul.addr %s217, 72
      %s219 = smul.addr %s218, 4
      %s220 = scalar_lea.vmem %s0, %s219
      %p221 = pneg %p55
      %p222 = pneg %p52
      %p223 = scmp.lt.s32.totalorder %s22, 0
      %s224 = scalar_select %p223, %s22, 0
      %s225 = smul.addr %s224, 4
      %s226 = scalar_lea.vmem %s1, %s225
      %p227 = pneg %p81
      %p228 = pneg %p78
      %p229 = scmp.lt.s32.totalorder %s22, 0
      %s230 = scalar_select %p229, %s22, 0
      %s231 = scalar_lea.vmem %s2, %s230
      %p232 = pneg %p107
      %p233 = pneg %p104
      %p234 = scmp.lt.s32.totalorder %s22, 0
      %s235 = scalar_select %p234, %s22, 0
      %s236 = scalar_lea.vmem %s3, %s235
      %p237 = pneg %p133
      %p238 = pneg %p130
      %p239 = pneg %p163
      %p240 = pneg %p160
      %p241 = scmp.lt.s32.totalorder %s20, 1
      %s242 = scalar_select %p241, %s20, 1
      %p243 = scmp.lt.s32.totalorder %s21, 0
      %s244 = scalar_select %p243, %s21, 0
      %p245 = scmp.lt.s32.totalorder %s22, 0
      %s246 = scalar_select %p245, %s22, 0
      %s247 = smul.addr %s244, 8
      %s248 = sadd.s32 %s246, %s247
      %s249 = smul.addr %s242, 8
      %s250 = sadd.s32 %s248, %s249
      %s251 = smul.addr %s250, 4
      %s252 = scalar_lea.vmem %s4, %s251
      %p253 = scmp.lt.s32.totalorder %s20, 1
      %s254 = scalar_select %p253, %s20, 1
      %s255 = smul.addr %s254, 72
      %s256 = smul.addr %s255, 4
      %s257 = scalar_lea.vmem %s0, %s256
      %p258 = scmp.lt.s32.totalorder %s22, 0
      %s259 = scalar_select %p258, %s22, 0
      %s260 = smul.addr %s259, 4
      %s261 = scalar_lea.vmem %s1, %s260
      %p262 = scmp.lt.s32.totalorder %s22, 0
      %s263 = scalar_select %p262, %s22, 0
      %s264 = scalar_lea.vmem %s2, %s263
      %p265 = scmp.lt.s32.totalorder %s22, 0
      %s266 = scalar_select %p265, %s22, 0
      %s267 = scalar_lea.vmem %s3, %s266
      %p268 = scmp.lt.s32.totalorder %s20, 1
      %s269 = scalar_select %p268, %s20, 1
      %p270 = scmp.lt.s32.totalorder %s21, 0
      %s271 = scalar_select %p270, %s21, 0
      %p272 = scmp.lt.s32.totalorder %s22, 0
      %s273 = scalar_select %p272, %s22, 0
      %s274 = smul.addr %s271, 8
      %s275 = sadd.s32 %s273, %s274
      %s276 = smul.addr %s269, 8
      %s277 = sadd.s32 %s275, %s276
      %s278 = smul.addr %s277, 4
      %s279 = scalar_lea.vmem %s4, %s278
      %s281 = smul.u32 %s21, 8
      %vm282 = vcmask 261120
      %283 = vst.msk [vmem:[#allocation2] sm:$0xff] %vm282, 0.0
      %284 = vst.msk [vmem:[#allocation2 + $0x8] sm:$0xff] %vm282, 0.0
      %285 = vst.msk [vmem:[#allocation2 + $0x10] sm:$0xff] %vm282, 0.0
      %286 = vst.msk [vmem:[#allocation2 + $0x18] sm:$0xff] %vm282, 0.0
      %287 = vst.msk [vmem:[#allocation2 + $0x20] sm:$0xff] %vm282, 0.0
      %288 = vst.msk [vmem:[#allocation2 + $0x28] sm:$0xff] %vm282, 0.0
      %289 = vst.msk [vmem:[#allocation2 + $0x30] sm:$0xff] %vm282, 0.0
      %290 = vst.msk [vmem:[#allocation2 + $0x38] sm:$0xff] %vm282, 0.0
      %s291 = smul.u32 %s281, 2
      %s292 = smul.addr %s291, 4
      %s293 = scalar_lea.vmem %s257, %s292
      %v294 = vld [vmem:[%s293] sm:$0xf]
      %v295 = vld [vmem:[%s293 + $0x8] sm:$0xf]
      %v296 = vld [vmem:[%s293 + $0x10] sm:$0xf]
      %v297 = vld [vmem:[%s293 + $0x18] sm:$0xf]
      %v298 = vld [vmem:[%s293 + $0x20] sm:$0xf]
      %v299 = vld [vmem:[%s293 + $0x28] sm:$0xf]
      %v300 = vld [vmem:[%s293 + $0x30] sm:$0xf]
      %v301 = vld [vmem:[%s293 + $0x38] sm:$0xf]
      %v302 = vld [vmem:[#allocation2] sm:$0xff]
      %v303 = vld [vmem:[#allocation2 + $0x8] sm:$0xff]
      %v304 = vld [vmem:[#allocation2 + $0x10] sm:$0xff]
      %v305 = vld [vmem:[#allocation2 + $0x18] sm:$0xff]
      %v306 = vld [vmem:[#allocation2 + $0x20] sm:$0xff]
      %v307 = vld [vmem:[#allocation2 + $0x28] sm:$0xff]
      %v308 = vld [vmem:[#allocation2 + $0x30] sm:$0xff]
      %v309 = vld [vmem:[#allocation2 + $0x38] sm:$0xff]
      %v310 = vld [vmem:[%s261] sm:$0xf]
      %v311 = vld [vmem:[%s261 + $0x4] sm:$0xf]
      %v312 = vld [vmem:[%s261 + $0x8] sm:$0xf]
      %v313 = vld [vmem:[%s261 + $0xc] sm:$0xf]
      %v322 = vunpack.c.l.b16 %v294
      %v323 = vunpack.c.l.b16 %v295
      %v324 = vunpack.c.l.b16 %v296
      %v325 = vunpack.c.l.b16 %v297
      %v326 = vunpack.c.l.b16 %v298
      %v327 = vunpack.c.l.b16 %v299
      %v328 = vunpack.c.l.b16 %v300
      %v329 = vunpack.c.l.b16 %v301
      %v330 = vpack.c.b16 %v323, %v322
      %v331 = vpack.c.b16 %v325, %v324
      %v332 = vpack.c.b16 %v327, %v326
      %v333 = vpack.c.b16 %v329, %v328
      %v338 = vunpack.c.l.b16 %v310
      %v339 = vunpack.c.l.b16 %v311
      %v340 = vunpack.c.l.b16 %v312
      %v341 = vunpack.c.l.b16 %v313
      %v342 = vpack.c.b16 %v339, %v338
      %v343 = vpack.c.b16 %v341, %v340
      %v347 = vsel %vm282, %v330, 0
      %v350 = vsel %vm282, %v331, 0
      %v353 = vsel %vm282, %v332, 0
      %v356 = vsel %vm282, %v333, 0
      %358 = vmatprep.subr.bf16.mxu0 0
      %359 = vmatpush1.bf16.msra.mxu0 0
      %360 = vmatprep.subr.bf16.mxu0 0
      %361 = vmatpush1.bf16.msra.mxu0 0
      %362 = vmatprep.subr.bf16.mxu0 0
      %363 = vmatpush1.bf16.msra.mxu0 0
      %364 = vmatprep.subr.bf16.mxu0 0
      %365 = vmatpush1.bf16.msra.mxu0 0
      %366 = vmatprep.subr.bf16.mxu0 0
      %367 = vmatpush1.bf16.msra.mxu0 0
      %368 = vmatprep.subr.bf16.mxu0 0
      %369 = vmatpush1.bf16.msra.mxu0 0
      %370 = vmatprep.subr.bf16.mxu0 0
      %371 = vmatpush1.bf16.msra.mxu0 %v343
      %372 = vmatprep.subr.bf16.mxu0 0
      %373 = vmatpush1.bf16.msra.mxu0 %v342
      %374 = vmatprep.subr.bf16.mxu0 0
      %375 = vmatpush2.bf16.msra.mxu0 0
      %376 = vmatprep.subr.bf16.mxu0 0
      %377 = vmatpush2.bf16.msra.mxu0 0
      %378 = vmatprep.subr.bf16.mxu0 0
      %379 = vmatpush2.bf16.msra.mxu0 0
      %380 = vmatprep.subr.bf16.mxu0 0
      %381 = vmatpush2.bf16.msra.mxu0 0
      %382 = vmatprep.subr.bf16.mxu0 0
      %383 = vmatpush2.bf16.msra.mxu0 0
      %384 = vmatprep.subr.bf16.mxu0 0
      %385 = vmatpush2.bf16.msra.mxu0 0
      %386 = vmatprep.subr.bf16.mxu0 0
      %387 = vmatpush2.bf16.msra.mxu0 0
      %388 = vmatprep.subr.bf16.mxu0 0
      %389 = vmatpush2.bf16.msra.mxu0 0
      %390 = vmatprep.mubr.bf16.mxu0 0
      %391 = vmatmul.mubr.bf16.gmra.mxu0 %v347
      %v392 = vpop.f32.mrf.mxu0
      %v393 = vadd.f32 0.0, %v392
      %v394 = vpop.f32.mrf.mxu0
      %v395 = vpop.f32.mrf.mxu0
      %v396 = vadd.f32 0.0, %v395
      %v397 = vpop.f32.mrf.mxu0
      %398 = vmatprep.mubr.bf16.mxu0 0
      %399 = vmatmul.mubr.bf16.gmra.mxu0 %v350
      %v400 = vpop.f32.mrf.mxu0
      %v401 = vadd.f32 0.0, %v400
      %v402 = vpop.f32.mrf.mxu0
      %v403 = vpop.f32.mrf.mxu0
      %v404 = vadd.f32 0.0, %v403
      %v405 = vpop.f32.mrf.mxu0
      %406 = vmatprep.mubr.bf16.mxu0 0
      %407 = vmatmul.mubr.bf16.gmra.mxu0 %v353
      %v408 = vpop.f32.mrf.mxu0
      %v409 = vadd.f32 0.0, %v408
      %v410 = vpop.f32.mrf.mxu0
      %v411 = vpop.f32.mrf.mxu0
      %v412 = vadd.f32 0.0, %v411
      %v413 = vpop.f32.mrf.mxu0
      %414 = vmatprep.mubr.bf16.mxu0 0
      %415 = vmatmul.mubr.bf16.gmra.mxu0 %v356
      %v416 = vpop.f32.mrf.mxu0
      %v417 = vadd.f32 0.0, %v416
      %v418 = vpop.f32.mrf.mxu0
      %v419 = vpop.f32.mrf.mxu0
      %v420 = vadd.f32 0.0, %v419
      %v421 = vpop.f32.mrf.mxu0
      %422 = vdwg.mxu0
      %v423 = vadd.f32 %v302, %v393
      %v424 = vadd.f32 %v303, %v396
      %v425 = vadd.f32 %v304, %v401
      %v426 = vadd.f32 %v305, %v404
      %v427 = vadd.f32 %v306, %v409
      %v428 = vadd.f32 %v307, %v412
      %v429 = vadd.f32 %v308, %v417
      %v430 = vadd.f32 %v309, %v420
      %431 = vst.msk [vmem:[#allocation2] sm:$0xff] %vm282, %v423
      %432 = vst.msk [vmem:[#allocation2 + $0x8] sm:$0xff] %vm282, %v424
      %433 = vst.msk [vmem:[#allocation2 + $0x10] sm:$0xff] %vm282, %v425
      %434 = vst.msk [vmem:[#allocation2 + $0x18] sm:$0xff] %vm282, %v426
      %435 = vst.msk [vmem:[#allocation2 + $0x20] sm:$0xff] %vm282, %v427
      %436 = vst.msk [vmem:[#allocation2 + $0x28] sm:$0xff] %vm282, %v428
      %437 = vst.msk [vmem:[#allocation2 + $0x30] sm:$0xff] %vm282, %v429
      %438 = vst.msk [vmem:[#allocation2 + $0x38] sm:$0xff] %vm282, %v430
      %s439 = sadd.s32 %s281, 9
      %s440 = smul.u32 %s439, 2
      %s441 = smul.addr %s440, 4
      %s442 = scalar_lea.vmem %s257, %s441
      %v443 = vld [vmem:[%s442] sm:$0xf]
      %v444 = vld [vmem:[%s442 + $0x8] sm:$0xf]
      %v445 = vld [vmem:[%s442 + $0x10] sm:$0xf]
      %v446 = vld [vmem:[%s442 + $0x18] sm:$0xf]
      %v447 = vld [vmem:[%s442 + $0x20] sm:$0xf]
      %v448 = vld [vmem:[%s442 + $0x28] sm:$0xf]
      %v449 = vld [vmem:[%s442 + $0x30] sm:$0xf]
      %v450 = vld [vmem:[%s442 + $0x38] sm:$0xf]
      %v451 = vld [vmem:[#allocation2] sm:$0xff]
      %v452 = vld [vmem:[#allocation2 + $0x8] sm:$0xff]
      %v453 = vld [vmem:[#allocation2 + $0x10] sm:$0xff]
      %v454 = vld [vmem:[#allocation2 + $0x18] sm:$0xff]
      %v455 = vld [vmem:[#allocation2 + $0x20] sm:$0xff]
      %v456 = vld [vmem:[#allocation2 + $0x28] sm:$0xff]
      %v457 = vld [vmem:[#allocation2 + $0x30] sm:$0xff]
      %v458 = vld [vmem:[#allocation2 + $0x38] sm:$0xff]
      %s459 = scalar_lea.vmem %s261, 16
      %v460 = vld [vmem:[%s459] sm:$0xf]
      %v461 = vld [vmem:[%s459 + $0x4] sm:$0xf]
      %v462 = vld [vmem:[%s459 + $0x8] sm:$0xf]
      %v463 = vld [vmem:[%s459 + $0xc] sm:$0xf]
      %v472 = vunpack.c.l.b16 %v443
      %v473 = vunpack.c.l.b16 %v444
      %v474 = vunpack.c.l.b16 %v445
      %v475 = vunpack.c.l.b16 %v446
      %v476 = vunpack.c.l.b16 %v447
      %v477 = vunpack.c.l.b16 %v448
      %v478 = vunpack.c.l.b16 %v449
      %v479 = vunpack.c.l.b16 %v450
      %v480 = vpack.c.b16 %v473, %v472
      %v481 = vpack.c.b16 %v475, %v474
      %v482 = vpack.c.b16 %v477, %v476
      %v483 = vpack.c.b16 %v479, %v478
      %v488 = vunpack.c.l.b16 %v460
      %v489 = vunpack.c.l.b16 %v461
      %v490 = vunpack.c.l.b16 %v462
      %v491 = vunpack.c.l.b16 %v463
      %v492 = vpack.c.b16 %v489, %v488
      %v493 = vpack.c.b16 %v491, %v490
      %v497 = vsel %vm282, %v480, 0
      %v500 = vsel %vm282, %v481, 0
      %v503 = vsel %vm282, %v482, 0
      %v506 = vsel %vm282, %v483, 0
      %508 = vmatprep.subr.bf16.mxu0 0
      %509 = vmatpush1.bf16.msra.mxu0 0
      %510 = vmatprep.subr.bf16.mxu0 0
      %511 = vmatpush1.bf16.msra.mxu0 0
      %512 = vmatprep.subr.bf16.mxu0 0
      %513 = vmatpush1.bf16.msra.mxu0 0
      %514 = vmatprep.subr.bf16.mxu0 0
      %515 = vmatpush1.bf16.msra.mxu0 0
      %516 = vmatprep.subr.bf16.mxu0 0
      %517 = vmatpush1.bf16.msra.mxu0 0
      %518 = vmatprep.subr.bf16.mxu0 0
      %519 = vmatpush1.bf16.msra.mxu0 0
      %520 = vmatprep.subr.bf16.mxu0 0
      %521 = vmatpush1.bf16.msra.mxu0 %v493
      %522 = vmatprep.subr.bf16.mxu0 0
      %523 = vmatpush1.bf16.msra.mxu0 %v492
      %524 = vmatprep.subr.bf16.mxu0 0
      %525 = vmatpush2.bf16.msra.mxu0 0
      %526 = vmatprep.subr.bf16.mxu0 0
      %527 = vmatpush2.bf16.msra.mxu0 0
      %528 = vmatprep.subr.bf16.mxu0 0
      %529 = vmatpush2.bf16.msra.mxu0 0
      %530 = vmatprep.subr.bf16.mxu0 0
      %531 = vmatpush2.bf16.msra.mxu0 0
      %532 = vmatprep.subr.bf16.mxu0 0
      %533 = vmatpush2.bf16.msra.mxu0 0
      %534 = vmatprep.subr.bf16.mxu0 0
      %535 = vmatpush2.bf16.msra.mxu0 0
      %536 = vmatprep.subr.bf16.mxu0 0
      %537 = vmatpush2.bf16.msra.mxu0 0
      %538 = vmatprep.subr.bf16.mxu0 0
      %539 = vmatpush2.bf16.msra.mxu0 0
      %540 = vmatprep.mubr.bf16.mxu0 0
      %541 = vmatmul.mubr.bf16.gmra.mxu0 %v497
      %v542 = vpop.f32.mrf.mxu0
      %v543 = vadd.f32 0.0, %v542
      %v544 = vpop.f32.mrf.mxu0
      %v545 = vpop.f32.mrf.mxu0
      %v546 = vadd.f32 0.0, %v545
      %v547 = vpop.f32.mrf.mxu0
      %548 = vmatprep.mubr.bf16.mxu0 0
      %549 = vmatmul.mubr.bf16.gmra.mxu0 %v500
      %v550 = vpop.f32.mrf.mxu0
      %v551 = vadd.f32 0.0, %v550
      %v552 = vpop.f32.mrf.mxu0
      %v553 = vpop.f32.mrf.mxu0
      %v554 = vadd.f32 0.0, %v553
      %v555 = vpop.f32.mrf.mxu0
      %556 = vmatprep.mubr.bf16.mxu0 0
      %557 = vmatmul.mubr.bf16.gmra.mxu0 %v503
      %v558 = vpop.f32.mrf.mxu0
      %v559 = vadd.f32 0.0, %v558
      %v560 = vpop.f32.mrf.mxu0
      %v561 = vpop.f32.mrf.mxu0
      %v562 = vadd.f32 0.0, %v561
      %v563 = vpop.f32.mrf.mxu0
      %564 = vmatprep.mubr.bf16.mxu0 0
      %565 = vmatmul.mubr.bf16.gmra.mxu0 %v506
      %v566 = vpop.f32.mrf.mxu0
      %v567 = vadd.f32 0.0, %v566
      %v568 = vpop.f32.mrf.mxu0
      %v569 = vpop.f32.mrf.mxu0
      %v570 = vadd.f32 0.0, %v569
      %v571 = vpop.f32.mrf.mxu0
      %572 = vdwg.mxu0
      %v573 = vadd.f32 %v451, %v543
      %v574 = vadd.f32 %v452, %v546
      %v575 = vadd.f32 %v453, %v551
      %v576 = vadd.f32 %v454, %v554
      %v577 = vadd.f32 %v455, %v559
      %v578 = vadd.f32 %v456, %v562
      %v579 = vadd.f32 %v457, %v567
      %v580 = vadd.f32 %v458, %v570
      %581 = vst.msk [vmem:[#allocation2] sm:$0xff] %vm282, %v573
      %582 = vst.msk [vmem:[#allocation2 + $0x8] sm:$0xff] %vm282, %v574
      %583 = vst.msk [vmem:[#allocation2 + $0x10] sm:$0xff] %vm282, %v575
      %584 = vst.msk [vmem:[#allocation2 + $0x18] sm:$0xff] %vm282, %v576
      %585 = vst.msk [vmem:[#allocation2 + $0x20] sm:$0xff] %vm282, %v577
      %586 = vst.msk [vmem:[#allocation2 + $0x28] sm:$0xff] %vm282, %v578
      %587 = vst.msk [vmem:[#allocation2 + $0x30] sm:$0xff] %vm282, %v579
      %588 = vst.msk [vmem:[#allocation2 + $0x38] sm:$0xff] %vm282, %v580
      %v589 = vld [vmem:[%s293] sm:$0xf]
      %v590 = vld [vmem:[%s293 + $0x4] sm:$0x1]
      %v591 = vld [vmem:[%s293 + $0x8] sm:$0xf]
      %v592 = vld [vmem:[%s293 + $0xc] sm:$0x1]
      %v593 = vld [vmem:[%s293 + $0x10] sm:$0xf]
      %v594 = vld [vmem:[%s293 + $0x14] sm:$0x1]
      %v595 = vld [vmem:[%s293 + $0x18] sm:$0xf]
      %v596 = vld [vmem:[%s293 + $0x1c] sm:$0x1]
      %v597 = vld [vmem:[%s293 + $0x20] sm:$0xf]
      %v598 = vld [vmem:[%s293 + $0x24] sm:$0x1]
      %v599 = vld [vmem:[%s293 + $0x28] sm:$0xf]
      %v600 = vld [vmem:[%s293 + $0x2c] sm:$0x1]
      %v601 = vld [vmem:[%s293 + $0x30] sm:$0xf]
      %v602 = vld [vmem:[%s293 + $0x34] sm:$0x1]
      %v603 = vld [vmem:[%s293 + $0x38] sm:$0xf]
      %v604 = vld [vmem:[%s293 + $0x3c] sm:$0x1]
      %vm605 = vsmask.f32 3328
      %vm606 = vsmask.f32 7440
      %vm607 = vmor %vm605, %vm606
      %v609 = vshrl.u32 %v589, 16
      %v611 = vrot.slane %v609, 4
      %v612 = vshll.u32 %v589, 16
      %v614 = vrot.slane %v612, 5
      %v615 = vor.u32 %v611, %v614
      %v616 = vrot.slane %v615, 4
      %v618 = vshll.u32 %v590, 16
      %v620 = vrot.slane %v618, 5
      %v621 = vsel %vm607, %v616, %v620
      %v623 = vshrl.u32 %v591, 16
      %v625 = vrot.slane %v623, 4
      %v626 = vshll.u32 %v591, 16
      %v628 = vrot.slane %v626, 5
      %v629 = vor.u32 %v625, %v628
      %v630 = vrot.slane %v629, 4
      %v632 = vshll.u32 %v592, 16
      %v634 = vrot.slane %v632, 5
      %v635 = vsel %vm607, %v630, %v634
      %v637 = vshrl.u32 %v593, 16
      %v639 = vrot.slane %v637, 4
      %v640 = vshll.u32 %v593, 16
      %v642 = vrot.slane %v640, 5
      %v643 = vor.u32 %v639, %v642
      %v644 = vrot.slane %v643, 4
      %v646 = vshll.u32 %v594, 16
      %v648 = vrot.slane %v646, 5
      %v649 = vsel %vm607, %v644, %v648
      %v651 = vshrl.u32 %v595, 16
      %v653 = vrot.slane %v651, 4
      %v654 = vshll.u32 %v595, 16
      %v656 = vrot.slane %v654, 5
      %v657 = vor.u32 %v653, %v656
      %v658 = vrot.slane %v657, 4
      %v660 = vshll.u32 %v596, 16
      %v662 = vrot.slane %v660, 5
      %v663 = vsel %vm607, %v658, %v662
      %v665 = vshrl.u32 %v597, 16
      %v667 = vrot.slane %v665, 4
      %v668 = vshll.u32 %v597, 16
      %v670 = vrot.slane %v668, 5
      %v671 = vor.u32 %v667, %v670
      %v672 = vrot.slane %v671, 4
      %v674 = vshll.u32 %v598, 16
      %v676 = vrot.slane %v674, 5
      %v677 = vsel %vm607, %v672, %v676
      %v679 = vshrl.u32 %v599, 16
      %v681 = vrot.slane %v679, 4
      %v682 = vshll.u32 %v599, 16
      %v684 = vrot.slane %v682, 5
      %v685 = vor.u32 %v681, %v684
      %v686 = vrot.slane %v685, 4
      %v688 = vshll.u32 %v600, 16
      %v690 = vrot.slane %v688, 5
      %v691 = vsel %vm607, %v686, %v690
      %v693 = vshrl.u32 %v601, 16
      %v695 = vrot.slane %v693, 4
      %v696 = vshll.u32 %v601, 16
      %v698 = vrot.slane %v696, 5
      %v699 = vor.u32 %v695, %v698
      %v700 = vrot.slane %v699, 4
      %v702 = vshll.u32 %v602, 16
      %v704 = vrot.slane %v702, 5
      %v705 = vsel %vm607, %v700, %v704
      %v707 = vshrl.u32 %v603, 16
      %v709 = vrot.slane %v707, 4
      %v710 = vshll.u32 %v603, 16
      %v712 = vrot.slane %v710, 5
      %v713 = vor.u32 %v709, %v712
      %v714 = vrot.slane %v713, 4
      %v716 = vshll.u32 %v604, 16
      %v718 = vrot.slane %v716, 5
      %v719 = vsel %vm607, %v714, %v718
      %v720 = vld [vmem:[#allocation2] sm:$0xff]
      %v721 = vld [vmem:[#allocation2 + $0x8] sm:$0xff]
      %v722 = vld [vmem:[#allocation2 + $0x10] sm:$0xff]
      %v723 = vld [vmem:[#allocation2 + $0x18] sm:$0xff]
      %v724 = vld [vmem:[#allocation2 + $0x20] sm:$0xff]
      %v725 = vld [vmem:[#allocation2 + $0x28] sm:$0xff]
      %v726 = vld [vmem:[#allocation2 + $0x30] sm:$0xff]
      %v727 = vld [vmem:[#allocation2 + $0x38] sm:$0xff]
      %s728 = scalar_lea.vmem %s261, 32
      %v729 = vld [vmem:[%s728] sm:$0xf]
      %v730 = vld [vmem:[%s728 + $0x4] sm:$0xf]
      %v731 = vld [vmem:[%s728 + $0x8] sm:$0xf]
      %v732 = vld [vmem:[%s728 + $0xc] sm:$0xf]
      %v733 = vunpack.c.l.b16 %v621
      %v734 = vunpack.c.l.b16 %v635
      %v735 = vunpack.c.l.b16 %v649
      %v736 = vunpack.c.l.b16 %v663
      %v737 = vunpack.c.l.b16 %v677
      %v738 = vunpack.c.l.b16 %v691
      %v739 = vunpack.c.l.b16 %v705
      %v740 = vunpack.c.l.b16 %v719
      %v741 = vpack.c.b16 %v734, %v733
      %v742 = vpack.c.b16 %v736, %v735
      %v743 = vpack.c.b16 %v738, %v737
      %v744 = vpack.c.b16 %v740, %v739
      %v749 = vunpack.c.l.b16 %v729
      %v750 = vunpack.c.l.b16 %v730
      %v751 = vunpack.c.l.b16 %v731
      %v752 = vunpack.c.l.b16 %v732
      %v753 = vpack.c.b16 %v750, %v749
      %v754 = vpack.c.b16 %v752, %v751
      %v758 = vsel %vm282, %v741, 0
      %v761 = vsel %vm282, %v742, 0
      %v764 = vsel %vm282, %v743, 0
      %v767 = vsel %vm282, %v744, 0
      %769 = vmatprep.subr.bf16.mxu0 0
      %770 = vmatpush1.bf16.msra.mxu0 0
      %771 = vmatprep.subr.bf16.mxu0 0
      %772 = vmatpush1.bf16.msra.mxu0 0
      %773 = vmatprep.subr.bf16.mxu0 0
      %774 = vmatpush1.bf16.msra.mxu0 0
      %775 = vmatprep.subr.bf16.mxu0 0
      %776 = vmatpush1.bf16.msra.mxu0 0
      %777 = vmatprep.subr.bf16.mxu0 0
      %778 = vmatpush1.bf16.msra.mxu0 0
      %779 = vmatprep.subr.bf16.mxu0 0
      %780 = vmatpush1.bf16.msra.mxu0 0
      %781 = vmatprep.subr.bf16.mxu0 0
      %782 = vmatpush1.bf16.msra.mxu0 %v754
      %783 = vmatprep.subr.bf16.mxu0 0
      %784 = vmatpush1.bf16.msra.mxu0 %v753
      %785 = vmatprep.subr.bf16.mxu0 0
      %786 = vmatpush2.bf16.msra.mxu0 0
      %787 = vmatprep.subr.bf16.mxu0 0
      %788 = vmatpush2.bf16.msra.mxu0 0
      %789 = vmatprep.subr.bf16.mxu0 0
      %790 = vmatpush2.bf16.msra.mxu0 0
      %791 = vmatprep.subr.bf16.mxu0 0
      %792 = vmatpush2.bf16.msra.mxu0 0
      %793 = vmatprep.subr.bf16.mxu0 0
      %794 = vmatpush2.bf16.msra.mxu0 0
      %795 = vmatprep.subr.bf16.mxu0 0
      %796 = vmatpush2.bf16.msra.mxu0 0
      %797 = vmatprep.subr.bf16.mxu0 0
      %798 = vmatpush2.bf16.msra.mxu0 0
      %799 = vmatprep.subr.bf16.mxu0 0
      %800 = vmatpush2.bf16.msra.mxu0 0
      %801 = vmatprep.mubr.bf16.mxu0 0
      %802 = vmatmul.mubr.bf16.gmra.mxu0 %v758
      %v803 = vpop.f32.mrf.mxu0
      %v804 = vadd.f32 0.0, %v803
      %v805 = vpop.f32.mrf.mxu0
      %v806 = vpop.f32.mrf.mxu0
      %v807 = vadd.f32 0.0, %v806
      %v808 = vpop.f32.mrf.mxu0
      %809 = vmatprep.mubr.bf16.mxu0 0
      %810 = vmatmul.mubr.bf16.gmra.mxu0 %v761
      %v811 = vpop.f32.mrf.mxu0
      %v812 = vadd.f32 0.0, %v811
      %v813 = vpop.f32.mrf.mxu0
      %v814 = vpop.f32.mrf.mxu0
      %v815 = vadd.f32 0.0, %v814
      %v816 = vpop.f32.mrf.mxu0
      %817 = vmatprep.mubr.bf16.mxu0 0
      %818 = vmatmul.mubr.bf16.gmra.mxu0 %v764
      %v819 = vpop.f32.mrf.mxu0
      %v820 = vadd.f32 0.0, %v819
      %v821 = vpop.f32.mrf.mxu0
      %v822 = vpop.f32.mrf.mxu0
      %v823 = vadd.f32 0.0, %v822
      %v824 = vpop.f32.mrf.mxu0
      %825 = vmatprep.mubr.bf16.mxu0 0
      %826 = vmatmul.mubr.bf16.gmra.mxu0 %v767
      %v827 = vpop.f32.mrf.mxu0
      %v828 = vadd.f32 0.0, %v827
      %v829 = vpop.f32.mrf.mxu0
      %v830 = vpop.f32.mrf.mxu0
      %v831 = vadd.f32 0.0, %v830
      %v832 = vpop.f32.mrf.mxu0
      %833 = vdwg.mxu0
      %v834 = vadd.f32 %v720, %v804
      %v835 = vadd.f32 %v721, %v807
      %v836 = vadd.f32 %v722, %v812
      %v837 = vadd.f32 %v723, %v815
      %v838 = vadd.f32 %v724, %v820
      %v839 = vadd.f32 %v725, %v823
      %v840 = vadd.f32 %v726, %v828
      %v841 = vadd.f32 %v727, %v831
      %842 = vst.msk [vmem:[#allocation2] sm:$0xff] %vm282, %v834
      %843 = vst.msk [vmem:[#allocation2 + $0x8] sm:$0xff] %vm282, %v835
      %844 = vst.msk [vmem:[#allocation2 + $0x10] sm:$0xff] %vm282, %v836
      %845 = vst.msk [vmem:[#allocation2 + $0x18] sm:$0xff] %vm282, %v837
      %846 = vst.msk [vmem:[#allocation2 + $0x20] sm:$0xff] %vm282, %v838
      %847 = vst.msk [vmem:[#allocation2 + $0x28] sm:$0xff] %vm282, %v839
      %848 = vst.msk [vmem:[#allocation2 + $0x30] sm:$0xff] %vm282, %v840
      %849 = vst.msk [vmem:[#allocation2 + $0x38] sm:$0xff] %vm282, %v841
      %s850 = sadd.s32 %s281, 18
      %s851 = smul.u32 %s850, 2
      %s852 = smul.addr %s851, 4
      %s853 = scalar_lea.vmem %s257, %s852
      %v854 = vld [vmem:[%s853] sm:$0xf]
      %v855 = vld [vmem:[%s853 + $0x8] sm:$0xf]
      %v856 = vld [vmem:[%s853 + $0x10] sm:$0xf]
      %v857 = vld [vmem:[%s853 + $0x18] sm:$0xf]
      %v858 = vld [vmem:[%s853 + $0x20] sm:$0xf]
      %v859 = vld [vmem:[%s853 + $0x28] sm:$0xf]
      %v860 = vld [vmem:[%s853 + $0x30] sm:$0xf]
      %v861 = vld [vmem:[%s853 + $0x38] sm:$0xf]
      %v862 = vld [vmem:[#allocation2] sm:$0xff]
      %v863 = vld [vmem:[#allocation2 + $0x8] sm:$0xff]
      %v864 = vld [vmem:[#allocation2 + $0x10] sm:$0xff]
      %v865 = vld [vmem:[#allocation2 + $0x18] sm:$0xff]
      %v866 = vld [vmem:[#allocation2 + $0x20] sm:$0xff]
      %v867 = vld [vmem:[#allocation2 + $0x28] sm:$0xff]
      %v868 = vld [vmem:[#allocation2 + $0x30] sm:$0xff]
      %v869 = vld [vmem:[#allocation2 + $0x38] sm:$0xff]
      %s870 = scalar_lea.vmem %s261, 48
      %v871 = vld [vmem:[%s870] sm:$0xf]
      %v872 = vld [vmem:[%s870 + $0x4] sm:$0xf]
      %v873 = vld [vmem:[%s870 + $0x8] sm:$0xf]
      %v874 = vld [vmem:[%s870 + $0xc] sm:$0xf]
      %v883 = vunpack.c.l.b16 %v854
      %v884 = vunpack.c.l.b16 %v855
      %v885 = vunpack.c.l.b16 %v856
      %v886 = vunpack.c.l.b16 %v857
      %v887 = vunpack.c.l.b16 %v858
      %v888 = vunpack.c.l.b16 %v859
      %v889 = vunpack.c.l.b16 %v860
      %v890 = vunpack.c.l.b16 %v861
      %v891 = vpack.c.b16 %v884, %v883
      %v892 = vpack.c.b16 %v886, %v885
      %v893 = vpack.c.b16 %v888, %v887
      %v894 = vpack.c.b16 %v890, %v889
      %v899 = vunpack.c.l.b16 %v871
      %v900 = vunpack.c.l.b16 %v872
      %v901 = vunpack.c.l.b16 %v873
      %v902 = vunpack.c.l.b16 %v874
      %v903 = vpack.c.b16 %v900, %v899
      %v904 = vpack.c.b16 %v902, %v901
      %v908 = vsel %vm282, %v891, 0
      %v911 = vsel %vm282, %v892, 0
      %v914 = vsel %vm282, %v893, 0
      %v917 = vsel %vm282, %v894, 0
      %919 = vmatprep.subr.bf16.mxu0 0
      %920 = vmatpush1.bf16.msra.mxu0 0
      %921 = vmatprep.subr.bf16.mxu0 0
      %922 = vmatpush1.bf16.msra.mxu0 0
      %923 = vmatprep.subr.bf16.mxu0 0
      %924 = vmatpush1.bf16.msra.mxu0 0
      %925 = vmatprep.subr.bf16.mxu0 0
      %926 = vmatpush1.bf16.msra.mxu0 0
      %927 = vmatprep.subr.bf16.mxu0 0
      %928 = vmatpush1.bf16.msra.mxu0 0
      %929 = vmatprep.subr.bf16.mxu0 0
      %930 = vmatpush1.bf16.msra.mxu0 0
      %931 = vmatprep.subr.bf16.mxu0 0
      %932 = vmatpush1.bf16.msra.mxu0 %v904
      %933 = vmatprep.subr.bf16.mxu0 0
      %934 = vmatpush1.bf16.msra.mxu0 %v903
      %935 = vmatprep.subr.bf16.mxu0 0
      %936 = vmatpush2.bf16.msra.mxu0 0
      %937 = vmatprep.subr.bf16.mxu0 0
      %938 = vmatpush2.bf16.msra.mxu0 0
      %939 = vmatprep.subr.bf16.mxu0 0
      %940 = vmatpush2.bf16.msra.mxu0 0
      %941 = vmatprep.subr.bf16.mxu0 0
      %942 = vmatpush2.bf16.msra.mxu0 0
      %943 = vmatprep.subr.bf16.mxu0 0
      %944 = vmatpush2.bf16.msra.mxu0 0
      %945 = vmatprep.subr.bf16.mxu0 0
      %946 = vmatpush2.bf16.msra.mxu0 0
      %947 = vmatprep.subr.bf16.mxu0 0
      %948 = vmatpush2.bf16.msra.mxu0 0
      %949 = vmatprep.subr.bf16.mxu0 0
      %950 = vmatpush2.bf16.msra.mxu0 0
      %951 = vmatprep.mubr.bf16.mxu0 0
      %952 = vmatmul.mubr.bf16.gmra.mxu0 %v908
      %v953 = vpop.f32.mrf.mxu0
      %v954 = vadd.f32 0.0, %v953
      %v955 = vpop.f32.mrf.mxu0
      %v956 = vpop.f32.mrf.mxu0
      %v957 = vadd.f32 0.0, %v956
      %v958 = vpop.f32.mrf.mxu0
      %959 = vmatprep.mubr.bf16.mxu0 0
      %960 = vmatmul.mubr.bf16.gmra.mxu0 %v911
      %v961 = vpop.f32.mrf.mxu0
      %v962 = vadd.f32 0.0, %v961
      %v963 = vpop.f32.mrf.mxu0
      %v964 = vpop.f32.mrf.mxu0
      %v965 = vadd.f32 0.0, %v964
      %v966 = vpop.f32.mrf.mxu0
      %967 = vmatprep.mubr.bf16.mxu0 0
      %968 = vmatmul.mubr.bf16.gmra.mxu0 %v914
      %v969 = vpop.f32.mrf.mxu0
      %v970 = vadd.f32 0.0, %v969
      %v971 = vpop.f32.mrf.mxu0
      %v972 = vpop.f32.mrf.mxu0
      %v973 = vadd.f32 0.0, %v972
      %v974 = vpop.f32.mrf.mxu0
      %975 = vmatprep.mubr.bf16.mxu0 0
      %976 = vmatmul.mubr.bf16.gmra.mxu0 %v917
      %v977 = vpop.f32.mrf.mxu0
      %v978 = vadd.f32 0.0, %v977
      %v979 = vpop.f32.mrf.mxu0
      %v980 = vpop.f32.mrf.mxu0
      %v981 = vadd.f32 0.0, %v980
      %v982 = vpop.f32.mrf.mxu0
      %983 = vdwg.mxu0
      %v984 = vadd.f32 %v862, %v954
      %v985 = vadd.f32 %v863, %v957
      %v986 = vadd.f32 %v864, %v962
      %v987 = vadd.f32 %v865, %v965
      %v988 = vadd.f32 %v866, %v970
      %v989 = vadd.f32 %v867, %v973
      %v990 = vadd.f32 %v868, %v978
      %v991 = vadd.f32 %v869, %v981
      %992 = vst.msk [vmem:[#allocation2] sm:$0xff] %vm282, %v984
      %993 = vst.msk [vmem:[#allocation2 + $0x8] sm:$0xff] %vm282, %v985
      %994 = vst.msk [vmem:[#allocation2 + $0x10] sm:$0xff] %vm282, %v986
      %995 = vst.msk [vmem:[#allocation2 + $0x18] sm:$0xff] %vm282, %v987
      %996 = vst.msk [vmem:[#allocation2 + $0x20] sm:$0xff] %vm282, %v988
      %997 = vst.msk [vmem:[#allocation2 + $0x28] sm:$0xff] %vm282, %v989
      %998 = vst.msk [vmem:[#allocation2 + $0x30] sm:$0xff] %vm282, %v990
      %999 = vst.msk [vmem:[#allocation2 + $0x38] sm:$0xff] %vm282, %v991
      %s1000 = sadd.s32 %s281, 27
      %s1001 = smul.u32 %s1000, 2
      %s1002 = smul.addr %s1001, 4
      %s1003 = scalar_lea.vmem %s257, %s1002
      %v1004 = vld [vmem:[%s1003] sm:$0xf]
      %v1005 = vld [vmem:[%s1003 + $0x8] sm:$0xf]
      %v1006 = vld [vmem:[%s1003 + $0x10] sm:$0xf]
      %v1007 = vld [vmem:[%s1003 + $0x18] sm:$0xf]
      %v1008 = vld [vmem:[%s1003 + $0x20] sm:$0xf]
      %v1009 = vld [vmem:[%s1003 + $0x28] sm:$0xf]
      %v1010 = vld [vmem:[%s1003 + $0x30] sm:$0xf]
      %v1011 = vld [vmem:[%s1003 + $0x38] sm:$0xf]
      %v1012 = vld [vmem:[#allocation2] sm:$0xff]
      %v1013 = vld [vmem:[#allocation2 + $0x8] sm:$0xff]
      %v1014 = vld [vmem:[#allocation2 + $0x10] sm:$0xff]
      %v1015 = vld [vmem:[#allocation2 + $0x18] sm:$0xff]
      %v1016 = vld [vmem:[#allocation2 + $0x20] sm:$0xff]
      %v1017 = vld [vmem:[#allocation2 + $0x28] sm:$0xff]
      %v1018 = vld [vmem:[#allocation2 + $0x30] sm:$0xff]
      %v1019 = vld [vmem:[#allocation2 + $0x38] sm:$0xff]
      %s1020 = scalar_lea.vmem %s261, 64
      %v1021 = vld [vmem:[%s1020] sm:$0xf]
      %v1022 = vld [vmem:[%s1020 + $0x4] sm:$0xf]
      %v1023 = vld [vmem:[%s1020 + $0x8] sm:$0xf]
      %v1024 = vld [vmem:[%s1020 + $0xc] sm:$0xf]
      %v1033 = vunpack.c.l.b16 %v1004
      %v1034 = vunpack.c.l.b16 %v1005
      %v1035 = vunpack.c.l.b16 %v1006
      %v1036 = vunpack.c.l.b16 %v1007
      %v1037 = vunpack.c.l.b16 %v1008
      %v1038 = vunpack.c.l.b16 %v1009
      %v1039 = vunpack.c.l.b16 %v1010
      %v1040 = vunpack.c.l.b16 %v1011
      %v1041 = vpack.c.b16 %v1034, %v1033
      %v1042 = vpack.c.b16 %v1036, %v1035
      %v1043 = vpack.c.b16 %v1038, %v1037
      %v1044 = vpack.c.b16 %v1040, %v1039
      %v1049 = vunpack.c.l.b16 %v1021
      %v1050 = vunpack.c.l.b16 %v1022
      %v1051 = vunpack.c.l.b16 %v1023
      %v1052 = vunpack.c.l.b16 %v1024
      %v1053 = vpack.c.b16 %v1050, %v1049
      %v1054 = vpack.c.b16 %v1052, %v1051
      %v1058 = vsel %vm282, %v1041, 0
      %v1061 = vsel %vm282, %v1042, 0
      %v1064 = vsel %vm282, %v1043, 0
      %v1067 = vsel %vm282, %v1044, 0
      %1069 = vmatprep.subr.bf16.mxu0 0
      %1070 = vmatpush1.bf16.msra.mxu0 0
      %1071 = vmatprep.subr.bf16.mxu0 0
      %1072 = vmatpush1.bf16.msra.mxu0 0
      %1073 = vmatprep.subr.bf16.mxu0 0
      %1074 = vmatpush1.bf16.msra.mxu0 0
      %1075 = vmatprep.subr.bf16.mxu0 0
      %1076 = vmatpush1.bf16.msra.mxu0 0
      %1077 = vmatprep.subr.bf16.mxu0 0
      %1078 = vmatpush1.bf16.msra.mxu0 0
      %1079 = vmatprep.subr.bf16.mxu0 0
      %1080 = vmatpush1.bf16.msra.mxu0 0
      %1081 = vmatprep.subr.bf16.mxu0 0
      %1082 = vmatpush1.bf16.msra.mxu0 %v1054
      %1083 = vmatprep.subr.bf16.mxu0 0
      %1084 = vmatpush1.bf16.msra.mxu0 %v1053
      %1085 = vmatprep.subr.bf16.mxu0 0
      %1086 = vmatpush2.bf16.msra.mxu0 0
      %1087 = vmatprep.subr.bf16.mxu0 0
      %1088 = vmatpush2.bf16.msra.mxu0 0
      %1089 = vmatprep.subr.bf16.mxu0 0
      %1090 = vmatpush2.bf16.msra.mxu0 0
      %1091 = vmatprep.subr.bf16.mxu0 0
      %1092 = vmatpush2.bf16.msra.mxu0 0
      %1093 = vmatprep.subr.bf16.mxu0 0
      %1094 = vmatpush2.bf16.msra.mxu0 0
      %1095 = vmatprep.subr.bf16.mxu0 0
      %1096 = vmatpush2.bf16.msra.mxu0 0
      %1097 = vmatprep.subr.bf16.mxu0 0
      %1098 = vmatpush2.bf16.msra.mxu0 0
      %1099 = vmatprep.subr.bf16.mxu0 0
      %1100 = vmatpush2.bf16.msra.mxu0 0
      %1101 = vmatprep.mubr.bf16.mxu0 0
      %1102 = vmatmul.mubr.bf16.gmra.mxu0 %v1058
      %v1103 = vpop.f32.mrf.mxu0
      %v1104 = vadd.f32 0.0, %v1103
      %v1105 = vpop.f32.mrf.mxu0
      %v1106 = vpop.f32.mrf.mxu0
      %v1107 = vadd.f32 0.0, %v1106
      %v1108 = vpop.f32.mrf.mxu0
      %1109 = vmatprep.mubr.bf16.mxu0 0
      %1110 = vmatmul.mubr.bf16.gmra.mxu0 %v1061
      %v1111 = vpop.f32.mrf.mxu0
      %v1112 = vadd.f32 0.0, %v1111
      %v1113 = vpop.f32.mrf.mxu0
      %v1114 = vpop.f32.mrf.mxu0
      %v1115 = vadd.f32 0.0, %v1114
      %v1116 = vpop.f32.mrf.mxu0
      %1117 = vmatprep.mubr.bf16.mxu0 0
      %1118 = vmatmul.mubr.bf16.gmra.mxu0 %v1064
      %v1119 = vpop.f32.mrf.mxu0
      %v1120 = vadd.f32 0.0, %v1119
      %v1121 = vpop.f32.mrf.mxu0
      %v1122 = vpop.f32.mrf.mxu0
      %v1123 = vadd.f32 0.0, %v1122
      %v1124 = vpop.f32.mrf.mxu0
      %1125 = vmatprep.mubr.bf16.mxu0 0
      %1126 = vmatmul.mubr.bf16.gmra.mxu0 %v1067
      %v1127 = vpop.f32.mrf.mxu0
      %v1128 = vadd.f32 0.0, %v1127
      %v1129 = vpop.f32.mrf.mxu0
      %v1130 = vpop.f32.mrf.mxu0
      %v1131 = vadd.f32 0.0, %v1130
      %v1132 = vpop.f32.mrf.mxu0
      %1133 = vdwg.mxu0
      %v1134 = vadd.f32 %v1012, %v1104
      %v1135 = vadd.f32 %v1013, %v1107
      %v1136 = vadd.f32 %v1014, %v1112
      %v1137 = vadd.f32 %v1015, %v1115
      %v1138 = vadd.f32 %v1016, %v1120
      %v1139 = vadd.f32 %v1017, %v1123
      %v1140 = vadd.f32 %v1018, %v1128
      %v1141 = vadd.f32 %v1019, %v1131
      %1142 = vst.msk [vmem:[#allocation2] sm:$0xff] %vm282, %v1134
      %1143 = vst.msk [vmem:[#allocation2 + $0x8] sm:$0xff] %vm282, %v1135
      %1144 = vst.msk [vmem:[#allocation2 + $0x10] sm:$0xff] %vm282, %v1136
      %1145 = vst.msk [vmem:[#allocation2 + $0x18] sm:$0xff] %vm282, %v1137
      %1146 = vst.msk [vmem:[#allocation2 + $0x20] sm:$0xff] %vm282, %v1138
      %1147 = vst.msk [vmem:[#allocation2 + $0x28] sm:$0xff] %vm282, %v1139
      %1148 = vst.msk [vmem:[#allocation2 + $0x30] sm:$0xff] %vm282, %v1140
      %1149 = vst.msk [vmem:[#allocation2 + $0x38] sm:$0xff] %vm282, %v1141
      %v1150 = vld [vmem:[%s853] sm:$0xf]
      %v1151 = vld [vmem:[%s853 + $0x4] sm:$0x1]
      %v1152 = vld [vmem:[%s853 + $0x8] sm:$0xf]
      %v1153 = vld [vmem:[%s853 + $0xc] sm:$0x1]
      %v1154 = vld [vmem:[%s853 + $0x10] sm:$0xf]
      %v1155 = vld [vmem:[%s853 + $0x14] sm:$0x1]
      %v1156 = vld [vmem:[%s853 + $0x18] sm:$0xf]
      %v1157 = vld [vmem:[%s853 + $0x1c] sm:$0x1]
      %v1158 = vld [vmem:[%s853 + $0x20] sm:$0xf]
      %v1159 = vld [vmem:[%s853 + $0x24] sm:$0x1]
      %v1160 = vld [vmem:[%s853 + $0x28] sm:$0xf]
      %v1161 = vld [vmem:[%s853 + $0x2c] sm:$0x1]
      %v1162 = vld [vmem:[%s853 + $0x30] sm:$0xf]
      %v1163 = vld [vmem:[%s853 + $0x34] sm:$0x1]
      %v1164 = vld [vmem:[%s853 + $0x38] sm:$0xf]
      %v1165 = vld [vmem:[%s853 + $0x3c] sm:$0x1]
      %v1167 = vshrl.u32 %v1150, 16
      %v1169 = vrot.slane %v1167, 4
      %v1170 = vshll.u32 %v1150, 16
      %v1172 = vrot.slane %v1170, 5
      %v1173 = vor.u32 %v1169, %v1172
      %v1174 = vrot.slane %v1173, 4
      %v1176 = vshll.u32 %v1151, 16
      %v1178 = vrot.slane %v1176, 5
      %v1179 = vsel %vm607, %v1174, %v1178
      %v1181 = vshrl.u32 %v1152, 16
      %v1183 = vrot.slane %v1181, 4
      %v1184 = vshll.u32 %v1152, 16
      %v1186 = vrot.slane %v1184, 5
      %v1187 = vor.u32 %v1183, %v1186
      %v1188 = vrot.slane %v1187, 4
      %v1190 = vshll.u32 %v1153, 16
      %v1192 = vrot.slane %v1190, 5
      %v1193 = vsel %vm607, %v1188, %v1192
      %v1195 = vshrl.u32 %v1154, 16
      %v1197 = vrot.slane %v1195, 4
      %v1198 = vshll.u32 %v1154, 16
      %v1200 = vrot.slane %v1198, 5
      %v1201 = vor.u32 %v1197, %v1200
      %v1202 = vrot.slane %v1201, 4
      %v1204 = vshll.u32 %v1155, 16
      %v1206 = vrot.slane %v1204, 5
      %v1207 = vsel %vm607, %v1202, %v1206
      %v1209 = vshrl.u32 %v1156, 16
      %v1211 = vrot.slane %v1209, 4
      %v1212 = vshll.u32 %v1156, 16
      %v1214 = vrot.slane %v1212, 5
      %v1215 = vor.u32 %v1211, %v1214
      %v1216 = vrot.slane %v1215, 4
      %v1218 = vshll.u32 %v1157, 16
      %v1220 = vrot.slane %v1218, 5
      %v1221 = vsel %vm607, %v1216, %v1220
      %v1223 = vshrl.u32 %v1158, 16
      %v1225 = vrot.slane %v1223, 4
      %v1226 = vshll.u32 %v1158, 16
      %v1228 = vrot.slane %v1226, 5
      %v1229 = vor.u32 %v1225, %v1228
      %v1230 = vrot.slane %v1229, 4
      %v1232 = vshll.u32 %v1159, 16
      %v1234 = vrot.slane %v1232, 5
      %v1235 = vsel %vm607, %v1230, %v1234
      %v1237 = vshrl.u32 %v1160, 16
      %v1239 = vrot.slane %v1237, 4
      %v1240 = vshll.u32 %v1160, 16
      %v1242 = vrot.slane %v1240, 5
      %v1243 = vor.u32 %v1239, %v1242
      %v1244 = vrot.slane %v1243, 4
      %v1246 = vshll.u32 %v1161, 16
      %v1248 = vrot.slane %v1246, 5
      %v1249 = vsel %vm607, %v1244, %v1248
      %v1251 = vshrl.u32 %v1162, 16
      %v1253 = vrot.slane %v1251, 4
      %v1254 = vshll.u32 %v1162, 16
      %v1256 = vrot.slane %v1254, 5
      %v1257 = vor.u32 %v1253, %v1256
      %v1258 = vrot.slane %v1257, 4
      %v1260 = vshll.u32 %v1163, 16
      %v1262 = vrot.slane %v1260, 5
      %v1263 = vsel %vm607, %v1258, %v1262
      %v1265 = vshrl.u32 %v1164, 16
      %v1267 = vrot.slane %v1265, 4
      %v1268 = vshll.u32 %v1164, 16
      %v1270 = vrot.slane %v1268, 5
      %v1271 = vor.u32 %v1267, %v1270
      %v1272 = vrot.slane %v1271, 4
      %v1274 = vshll.u32 %v1165, 16
      %v1276 = vrot.slane %v1274, 5
      %v1277 = vsel %vm607, %v1272, %v1276
      %v1278 = vld [vmem:[#allocation2] sm:$0xff]
      %v1279 = vld [vmem:[#allocation2 + $0x8] sm:$0xff]
      %v1280 = vld [vmem:[#allocation2 + $0x10] sm:$0xff]
      %v1281 = vld [vmem:[#allocation2 + $0x18] sm:$0xff]
      %v1282 = vld [vmem:[#allocation2 + $0x20] sm:$0xff]
      %v1283 = vld [vmem:[#allocation2 + $0x28] sm:$0xff]
      %v1284 = vld [vmem:[#allocation2 + $0x30] sm:$0xff]
      %v1285 = vld [vmem:[#allocation2 + $0x38] sm:$0xff]
      %s1286 = scalar_lea.vmem %s261, 80
      %v1287 = vld [vmem:[%s1286] sm:$0xf]
      %v1288 = vld [vmem:[%s1286 + $0x4] sm:$0xf]
      %v1289 = vld [vmem:[%s1286 + $0x8] sm:$0xf]
      %v1290 = vld [vmem:[%s1286 + $0xc] sm:$0xf]
      %v1291 = vunpack.c.l.b16 %v1179
      %v1292 = vunpack.c.l.b16 %v1193
      %v1293 = vunpack.c.l.b16 %v1207
      %v1294 = vunpack.c.l.b16 %v1221
      %v1295 = vunpack.c.l.b16 %v1235
      %v1296 = vunpack.c.l.b16 %v1249
      %v1297 = vunpack.c.l.b16 %v1263
      %v1298 = vunpack.c.l.b16 %v1277
      %v1299 = vpack.c.b16 %v1292, %v1291
      %v1300 = vpack.c.b16 %v1294, %v1293
      %v1301 = vpack.c.b16 %v1296, %v1295
      %v1302 = vpack.c.b16 %v1298, %v1297
      %v1307 = vunpack.c.l.b16 %v1287
      %v1308 = vunpack.c.l.b16 %v1288
      %v1309 = vunpack.c.l.b16 %v1289
      %v1310 = vunpack.c.l.b16 %v1290
      %v1311 = vpack.c.b16 %v1308, %v1307
      %v1312 = vpack.c.b16 %v1310, %v1309
      %v1316 = vsel %vm282, %v1299, 0
      %v1319 = vsel %vm282, %v1300, 0
      %v1322 = vsel %vm282, %v1301, 0
      %v1325 = vsel %vm282, %v1302, 0
      %1327 = vmatprep.subr.bf16.mxu0 0
      %1328 = vmatpush1.bf16.msra.mxu0 0
      %1329 = vmatprep.subr.bf16.mxu0 0
      %1330 = vmatpush1.bf16.msra.mxu0 0
      %1331 = vmatprep.subr.bf16.mxu0 0
      %1332 = vmatpush1.bf16.msra.mxu0 0
      %1333 = vmatprep.subr.bf16.mxu0 0
      %1334 = vmatpush1.bf16.msra.mxu0 0
      %1335 = vmatprep.subr.bf16.mxu0 0
      %1336 = vmatpush1.bf16.msra.mxu0 0
      %1337 = vmatprep.subr.bf16.mxu0 0
      %1338 = vmatpush1.bf16.msra.mxu0 0
      %1339 = vmatprep.subr.bf16.mxu0 0
      %1340 = vmatpush1.bf16.msra.mxu0 %v1312
      %1341 = vmatprep.subr.bf16.mxu0 0
      %1342 = vmatpush1.bf16.msra.mxu0 %v1311
      %1343 = vmatprep.subr.bf16.mxu0 0
      %1344 = vmatpush2.bf16.msra.mxu0 0
      %1345 = vmatprep.subr.bf16.mxu0 0
      %1346 = vmatpush2.bf16.msra.mxu0 0
      %1347 = vmatprep.subr.bf16.mxu0 0
      %1348 = vmatpush2.bf16.msra.mxu0 0
      %1349 = vmatprep.subr.bf16.mxu0 0
      %1350 = vmatpush2.bf16.msra.mxu0 0
      %1351 = vmatprep.subr.bf16.mxu0 0
      %1352 = vmatpush2.bf16.msra.mxu0 0
      %1353 = vmatprep.subr.bf16.mxu0 0
      %1354 = vmatpush2.bf16.msra.mxu0 0
      %1355 = vmatprep.subr.bf16.mxu0 0
      %1356 = vmatpush2.bf16.msra.mxu0 0
      %1357 = vmatprep.subr.bf16.mxu0 0
      %1358 = vmatpush2.bf16.msra.mxu0 0
      %1359 = vmatprep.mubr.bf16.mxu0 0
      %1360 = vmatmul.mubr.bf16.gmra.mxu0 %v1316
      %v1361 = vpop.f32.mrf.mxu0
      %v1362 = vadd.f32 0.0, %v1361
      %v1363 = vpop.f32.mrf.mxu0
      %v1364 = vpop.f32.mrf.mxu0
      %v1365 = vadd.f32 0.0, %v1364
      %v1366 = vpop.f32.mrf.mxu0
      %1367 = vmatprep.mubr.bf16.mxu0 0
      %1368 = vmatmul.mubr.bf16.gmra.mxu0 %v1319
      %v1369 = vpop.f32.mrf.mxu0
      %v1370 = vadd.f32 0.0, %v1369
      %v1371 = vpop.f32.mrf.mxu0
      %v1372 = vpop.f32.mrf.mxu0
      %v1373 = vadd.f32 0.0, %v1372
      %v1374 = vpop.f32.mrf.mxu0
      %1375 = vmatprep.mubr.bf16.mxu0 0
      %1376 = vmatmul.mubr.bf16.gmra.mxu0 %v1322
      %v1377 = vpop.f32.mrf.mxu0
      %v1378 = vadd.f32 0.0, %v1377
      %v1379 = vpop.f32.mrf.mxu0
      %v1380 = vpop.f32.mrf.mxu0
      %v1381 = vadd.f32 0.0, %v1380
      %v1382 = vpop.f32.mrf.mxu0
      %1383 = vmatprep.mubr.bf16.mxu0 0
      %1384 = vmatmul.mubr.bf16.gmra.mxu0 %v1325
      %v1385 = vpop.f32.mrf.mxu0
      %v1386 = vadd.f32 0.0, %v1385
      %v1387 = vpop.f32.mrf.mxu0
      %v1388 = vpop.f32.mrf.mxu0
      %v1389 = vadd.f32 0.0, %v1388
      %v1390 = vpop.f32.mrf.mxu0
      %1391 = vdwg.mxu0
      %v1392 = vadd.f32 %v1278, %v1362
      %v1393 = vadd.f32 %v1279, %v1365
      %v1394 = vadd.f32 %v1280, %v1370
      %v1395 = vadd.f32 %v1281, %v1373
      %v1396 = vadd.f32 %v1282, %v1378
      %v1397 = vadd.f32 %v1283, %v1381
      %v1398 = vadd.f32 %v1284, %v1386
      %v1399 = vadd.f32 %v1285, %v1389
      %1400 = vst.msk [vmem:[#allocation2] sm:$0xff] %vm282, %v1392
      %1401 = vst.msk [vmem:[#allocation2 + $0x8] sm:$0xff] %vm282, %v1393
      %1402 = vst.msk [vmem:[#allocation2 + $0x10] sm:$0xff] %vm282, %v1394
      %1403 = vst.msk [vmem:[#allocation2 + $0x18] sm:$0xff] %vm282, %v1395
      %1404 = vst.msk [vmem:[#allocation2 + $0x20] sm:$0xff] %vm282, %v1396
      %1405 = vst.msk [vmem:[#allocation2 + $0x28] sm:$0xff] %vm282, %v1397
      %1406 = vst.msk [vmem:[#allocation2 + $0x30] sm:$0xff] %vm282, %v1398
      %1407 = vst.msk [vmem:[#allocation2 + $0x38] sm:$0xff] %vm282, %v1399
      %s1408 = sadd.s32 %s281, 1
      %s1409 = smul.u32 %s1408, 2
      %s1410 = smul.addr %s1409, 4
      %s1411 = scalar_lea.vmem %s257, %s1410
      %v1412 = vld [vmem:[%s1411] sm:$0xf]
      %v1413 = vld [vmem:[%s1411 + $0x8] sm:$0xf]
      %v1414 = vld [vmem:[%s1411 + $0x10] sm:$0xf]
      %v1415 = vld [vmem:[%s1411 + $0x18] sm:$0xf]
      %v1416 = vld [vmem:[%s1411 + $0x20] sm:$0xf]
      %v1417 = vld [vmem:[%s1411 + $0x28] sm:$0xf]
      %v1418 = vld [vmem:[%s1411 + $0x30] sm:$0xf]
      %v1419 = vld [vmem:[%s1411 + $0x38] sm:$0xf]
      %v1420 = vld [vmem:[#allocation2] sm:$0xff]
      %v1421 = vld [vmem:[#allocation2 + $0x8] sm:$0xff]
      %v1422 = vld [vmem:[#allocation2 + $0x10] sm:$0xff]
      %v1423 = vld [vmem:[#allocation2 + $0x18] sm:$0xff]
      %v1424 = vld [vmem:[#allocation2 + $0x20] sm:$0xff]
      %v1425 = vld [vmem:[#allocation2 + $0x28] sm:$0xff]
      %v1426 = vld [vmem:[#allocation2 + $0x30] sm:$0xff]
      %v1427 = vld [vmem:[#allocation2 + $0x38] sm:$0xff]
      %s1428 = scalar_lea.vmem %s261, 96
      %v1429 = vld [vmem:[%s1428] sm:$0xf]
      %v1430 = vld [vmem:[%s1428 + $0x4] sm:$0xf]
      %v1431 = vld [vmem:[%s1428 + $0x8] sm:$0xf]
      %v1432 = vld [vmem:[%s1428 + $0xc] sm:$0xf]
      %v1441 = vunpack.c.l.b16 %v1412
      %v1442 = vunpack.c.l.b16 %v1413
      %v1443 = vunpack.c.l.b16 %v1414
      %v1444 = vunpack.c.l.b16 %v1415
      %v1445 = vunpack.c.l.b16 %v1416
      %v1446 = vunpack.c.l.b16 %v1417
      %v1447 = vunpack.c.l.b16 %v1418
      %v1448 = vunpack.c.l.b16 %v1419
      %v1449 = vpack.c.b16 %v1442, %v1441
      %v1450 = vpack.c.b16 %v1444, %v1443
      %v1451 = vpack.c.b16 %v1446, %v1445
      %v1452 = vpack.c.b16 %v1448, %v1447
      %v1457 = vunpack.c.l.b16 %v1429
      %v1458 = vunpack.c.l.b16 %v1430
      %v1459 = vunpack.c.l.b16 %v1431
      %v1460 = vunpack.c.l.b16 %v1432
      %v1461 = vpack.c.b16 %v1458, %v1457
      %v1462 = vpack.c.b16 %v1460, %v1459
      %v1466 = vsel %vm282, %v1449, 0
      %v1469 = vsel %vm282, %v1450, 0
      %v1472 = vsel %vm282, %v1451, 0
      %v1475 = vsel %vm282, %v1452, 0
      %1477 = vmatprep.subr.bf16.mxu0 0
      %1478 = vmatpush1.bf16.msra.mxu0 0
      %1479 = vmatprep.subr.bf16.mxu0 0
      %1480 = vmatpush1.bf16.msra.mxu0 0
      %1481 = vmatprep.subr.bf16.mxu0 0
      %1482 = vmatpush1.bf16.msra.mxu0 0
      %1483 = vmatprep.subr.bf16.mxu0 0
      %1484 = vmatpush1.bf16.msra.mxu0 0
      %1485 = vmatprep.subr.bf16.mxu0 0
      %1486 = vmatpush1.bf16.msra.mxu0 0
      %1487 = vmatprep.subr.bf16.mxu0 0
      %1488 = vmatpush1.bf16.msra.mxu0 0
      %1489 = vmatprep.subr.bf16.mxu0 0
      %1490 = vmatpush1.bf16.msra.mxu0 %v1462
      %1491 = vmatprep.subr.bf16.mxu0 0
      %1492 = vmatpush1.bf16.msra.mxu0 %v1461
      %1493 = vmatprep.subr.bf16.mxu0 0
      %1494 = vmatpush2.bf16.msra.mxu0 0
      %1495 = vmatprep.subr.bf16.mxu0 0
      %1496 = vmatpush2.bf16.msra.mxu0 0
      %1497 = vmatprep.subr.bf16.mxu0 0
      %1498 = vmatpush2.bf16.msra.mxu0 0
      %1499 = vmatprep.subr.bf16.mxu0 0
      %1500 = vmatpush2.bf16.msra.mxu0 0
      %1501 = vmatprep.subr.bf16.mxu0 0
      %1502 = vmatpush2.bf16.msra.mxu0 0
      %1503 = vmatprep.subr.bf16.mxu0 0
      %1504 = vmatpush2.bf16.msra.mxu0 0
      %1505 = vmatprep.subr.bf16.mxu0 0
      %1506 = vmatpush2.bf16.msra.mxu0 0
      %1507 = vmatprep.subr.bf16.mxu0 0
      %1508 = vmatpush2.bf16.msra.mxu0 0
      %1509 = vmatprep.mubr.bf16.mxu0 0
      %1510 = vmatmul.mubr.bf16.gmra.mxu0 %v1466
      %v1511 = vpop.f32.mrf.mxu0
      %v1512 = vadd.f32 0.0, %v1511
      %v1513 = vpop.f32.mrf.mxu0
      %v1514 = vpop.f32.mrf.mxu0
      %v1515 = vadd.f32 0.0, %v1514
      %v1516 = vpop.f32.mrf.mxu0
      %1517 = vmatprep.mubr.bf16.mxu0 0
      %1518 = vmatmul.mubr.bf16.gmra.mxu0 %v1469
      %v1519 = vpop.f32.mrf.mxu0
      %v1520 = vadd.f32 0.0, %v1519
      %v1521 = vpop.f32.mrf.mxu0
      %v1522 = vpop.f32.mrf.mxu0
      %v1523 = vadd.f32 0.0, %v1522
      %v1524 = vpop.f32.mrf.mxu0
      %1525 = vmatprep.mubr.bf16.mxu0 0
      %1526 = vmatmul.mubr.bf16.gmra.mxu0 %v1472
      %v1527 = vpop.f32.mrf.mxu0
      %v1528 = vadd.f32 0.0, %v1527
      %v1529 = vpop.f32.mrf.mxu0
      %v1530 = vpop.f32.mrf.mxu0
      %v1531 = vadd.f32 0.0, %v1530
      %v1532 = vpop.f32.mrf.mxu0
      %1533 = vmatprep.mubr.bf16.mxu0 0
      %1534 = vmatmul.mubr.bf16.gmra.mxu0 %v1475
      %v1535 = vpop.f32.mrf.mxu0
      %v1536 = vadd.f32 0.0, %v1535
      %v1537 = vpop.f32.mrf.mxu0
      %v1538 = vpop.f32.mrf.mxu0
      %v1539 = vadd.f32 0.0, %v1538
      %v1540 = vpop.f32.mrf.mxu0
      %1541 = vdwg.mxu0
      %v1542 = vadd.f32 %v1420, %v1512
      %v1543 = vadd.f32 %v1421, %v1515
      %v1544 = vadd.f32 %v1422, %v1520
      %v1545 = vadd.f32 %v1423, %v1523
      %v1546 = vadd.f32 %v1424, %v1528
      %v1547 = vadd.f32 %v1425, %v1531
      %v1548 = vadd.f32 %v1426, %v1536
      %v1549 = vadd.f32 %v1427, %v1539
      %1550 = vst.msk [vmem:[#allocation2] sm:$0xff] %vm282, %v1542
      %1551 = vst.msk [vmem:[#allocation2 + $0x8] sm:$0xff] %vm282, %v1543
      %1552 = vst.msk [vmem:[#allocation2 + $0x10] sm:$0xff] %vm282, %v1544
      %1553 = vst.msk [vmem:[#allocation2 + $0x18] sm:$0xff] %vm282, %v1545
      %1554 = vst.msk [vmem:[#allocation2 + $0x20] sm:$0xff] %vm282, %v1546
      %1555 = vst.msk [vmem:[#allocation2 + $0x28] sm:$0xff] %vm282, %v1547
      %1556 = vst.msk [vmem:[#allocation2 + $0x30] sm:$0xff] %vm282, %v1548
      %1557 = vst.msk [vmem:[#allocation2 + $0x38] sm:$0xff] %vm282, %v1549
      %s1558 = sadd.s32 %s281, 10
      %s1559 = smul.u32 %s1558, 2
      %s1560 = smul.addr %s1559, 4
      %s1561 = scalar_lea.vmem %s257, %s1560
      %v1562 = vld [vmem:[%s1561] sm:$0xf]
      %v1563 = vld [vmem:[%s1561 + $0x8] sm:$0xf]
      %v1564 = vld [vmem:[%s1561 + $0x10] sm:$0xf]
      %v1565 = vld [vmem:[%s1561 + $0x18] sm:$0xf]
      %v1566 = vld [vmem:[%s1561 + $0x20] sm:$0xf]
      %v1567 = vld [vmem:[%s1561 + $0x28] sm:$0xf]
      %v1568 = vld [vmem:[%s1561 + $0x30] sm:$0xf]
      %v1569 = vld [vmem:[%s1561 + $0x38] sm:$0xf]
      %v1570 = vld [vmem:[#allocation2] sm:$0xff]
      %v1571 = vld [vmem:[#allocation2 + $0x8] sm:$0xff]
      %v1572 = vld [vmem:[#allocation2 + $0x10] sm:$0xff]
      %v1573 = vld [vmem:[#allocation2 + $0x18] sm:$0xff]
      %v1574 = vld [vmem:[#allocation2 + $0x20] sm:$0xff]
      %v1575 = vld [vmem:[#allocation2 + $0x28] sm:$0xff]
      %v1576 = vld [vmem:[#allocation2 + $0x30] sm:$0xff]
      %v1577 = vld [vmem:[#allocation2 + $0x38] sm:$0xff]
      %s1578 = scalar_lea.vmem %s261, 112
      %v1579 = vld [vmem:[%s1578] sm:$0xf]
      %v1580 = vld [vmem:[%s1578 + $0x4] sm:$0xf]
      %v1581 = vld [vmem:[%s1578 + $0x8] sm:$0xf]
      %v1582 = vld [vmem:[%s1578 + $0xc] sm:$0xf]
      %v1591 = vunpack.c.l.b16 %v1562
      %v1592 = vunpack.c.l.b16 %v1563
      %v1593 = vunpack.c.l.b16 %v1564
      %v1594 = vunpack.c.l.b16 %v1565
      %v1595 = vunpack.c.l.b16 %v1566
      %v1596 = vunpack.c.l.b16 %v1567
      %v1597 = vunpack.c.l.b16 %v1568
      %v1598 = vunpack.c.l.b16 %v1569
      %v1599 = vpack.c.b16 %v1592, %v1591
      %v1600 = vpack.c.b16 %v1594, %v1593
      %v1601 = vpack.c.b16 %v1596, %v1595
      %v1602 = vpack.c.b16 %v1598, %v1597
      %v1607 = vunpack.c.l.b16 %v1579
      %v1608 = vunpack.c.l.b16 %v1580
      %v1609 = vunpack.c.l.b16 %v1581
      %v1610 = vunpack.c.l.b16 %v1582
      %v1611 = vpack.c.b16 %v1608, %v1607
      %v1612 = vpack.c.b16 %v1610, %v1609
      %v1616 = vsel %vm282, %v1599, 0
      %v1619 = vsel %vm282, %v1600, 0
      %v1622 = vsel %vm282, %v1601, 0
      %v1625 = vsel %vm282, %v1602, 0
      %1627 = vmatprep.subr.bf16.mxu0 0
      %1628 = vmatpush1.bf16.msra.mxu0 0
      %1629 = vmatprep.subr.bf16.mxu0 0
      %1630 = vmatpush1.bf16.msra.mxu0 0
      %1631 = vmatprep.subr.bf16.mxu0 0
      %1632 = vmatpush1.bf16.msra.mxu0 0
      %1633 = vmatprep.subr.bf16.mxu0 0
      %1634 = vmatpush1.bf16.msra.mxu0 0
      %1635 = vmatprep.subr.bf16.mxu0 0
      %1636 = vmatpush1.bf16.msra.mxu0 0
      %1637 = vmatprep.subr.bf16.mxu0 0
      %1638 = vmatpush1.bf16.msra.mxu0 0
      %1639 = vmatprep.subr.bf16.mxu0 0
      %1640 = vmatpush1.bf16.msra.mxu0 %v1612
      %1641 = vmatprep.subr.bf16.mxu0 0
      %1642 = vmatpush1.bf16.msra.mxu0 %v1611
      %1643 = vmatprep.subr.bf16.mxu0 0
      %1644 = vmatpush2.bf16.msra.mxu0 0
      %1645 = vmatprep.subr.bf16.mxu0 0
      %1646 = vmatpush2.bf16.msra.mxu0 0
      %1647 = vmatprep.subr.bf16.mxu0 0
      %1648 = vmatpush2.bf16.msra.mxu0 0
      %1649 = vmatprep.subr.bf16.mxu0 0
      %1650 = vmatpush2.bf16.msra.mxu0 0
      %1651 = vmatprep.subr.bf16.mxu0 0
      %1652 = vmatpush2.bf16.msra.mxu0 0
      %1653 = vmatprep.subr.bf16.mxu0 0
      %1654 = vmatpush2.bf16.msra.mxu0 0
      %1655 = vmatprep.subr.bf16.mxu0 0
      %1656 = vmatpush2.bf16.msra.mxu0 0
      %1657 = vmatprep.subr.bf16.mxu0 0
      %1658 = vmatpush2.bf16.msra.mxu0 0
      %1659 = vmatprep.mubr.bf16.mxu0 0
      %1660 = vmatmul.mubr.bf16.gmra.mxu0 %v1616
      %v1661 = vpop.f32.mrf.mxu0
      %v1662 = vadd.f32 0.0, %v1661
      %v1663 = vpop.f32.mrf.mxu0
      %v1664 = vpop.f32.mrf.mxu0
      %v1665 = vadd.f32 0.0, %v1664
      %v1666 = vpop.f32.mrf.mxu0
      %1667 = vmatprep.mubr.bf16.mxu0 0
      %1668 = vmatmul.mubr.bf16.gmra.mxu0 %v1619
      %v1669 = vpop.f32.mrf.mxu0
      %v1670 = vadd.f32 0.0, %v1669
      %v1671 = vpop.f32.mrf.mxu0
      %v1672 = vpop.f32.mrf.mxu0
      %v1673 = vadd.f32 0.0, %v1672
      %v1674 = vpop.f32.mrf.mxu0
      %1675 = vmatprep.mubr.bf16.mxu0 0
      %1676 = vmatmul.mubr.bf16.gmra.mxu0 %v1622
      %v1677 = vpop.f32.mrf.mxu0
      %v1678 = vadd.f32 0.0, %v1677
      %v1679 = vpop.f32.mrf.mxu0
      %v1680 = vpop.f32.mrf.mxu0
      %v1681 = vadd.f32 0.0, %v1680
      %v1682 = vpop.f32.mrf.mxu0
      %1683 = vmatprep.mubr.bf16.mxu0 0
      %1684 = vmatmul.mubr.bf16.gmra.mxu0 %v1625
      %v1685 = vpop.f32.mrf.mxu0
      %v1686 = vadd.f32 0.0, %v1685
      %v1687 = vpop.f32.mrf.mxu0
      %v1688 = vpop.f32.mrf.mxu0
      %v1689 = vadd.f32 0.0, %v1688
      %v1690 = vpop.f32.mrf.mxu0
      %1691 = vdwg.mxu0
      %v1692 = vadd.f32 %v1570, %v1662
      %v1693 = vadd.f32 %v1571, %v1665
      %v1694 = vadd.f32 %v1572, %v1670
      %v1695 = vadd.f32 %v1573, %v1673
      %v1696 = vadd.f32 %v1574, %v1678
      %v1697 = vadd.f32 %v1575, %v1681
      %v1698 = vadd.f32 %v1576, %v1686
      %v1699 = vadd.f32 %v1577, %v1689
      %1700 = vst.msk [vmem:[#allocation2] sm:$0xff] %vm282, %v1692
      %1701 = vst.msk [vmem:[#allocation2 + $0x8] sm:$0xff] %vm282, %v1693
      %1702 = vst.msk [vmem:[#allocation2 + $0x10] sm:$0xff] %vm282, %v1694
      %1703 = vst.msk [vmem:[#allocation2 + $0x18] sm:$0xff] %vm282, %v1695
      %1704 = vst.msk [vmem:[#allocation2 + $0x20] sm:$0xff] %vm282, %v1696
      %1705 = vst.msk [vmem:[#allocation2 + $0x28] sm:$0xff] %vm282, %v1697
      %1706 = vst.msk [vmem:[#allocation2 + $0x30] sm:$0xff] %vm282, %v1698
      %1707 = vst.msk [vmem:[#allocation2 + $0x38] sm:$0xff] %vm282, %v1699
      %v1708 = vld [vmem:[%s1411] sm:$0xf]
      %v1709 = vld [vmem:[%s1411 + $0x4] sm:$0x1]
      %v1710 = vld [vmem:[%s1411 + $0x8] sm:$0xf]
      %v1711 = vld [vmem:[%s1411 + $0xc] sm:$0x1]
      %v1712 = vld [vmem:[%s1411 + $0x10] sm:$0xf]
      %v1713 = vld [vmem:[%s1411 + $0x14] sm:$0x1]
      %v1714 = vld [vmem:[%s1411 + $0x18] sm:$0xf]
      %v1715 = vld [vmem:[%s1411 + $0x1c] sm:$0x1]
      %v1716 = vld [vmem:[%s1411 + $0x20] sm:$0xf]
      %v1717 = vld [vmem:[%s1411 + $0x24] sm:$0x1]
      %v1718 = vld [vmem:[%s1411 + $0x28] sm:$0xf]
      %v1719 = vld [vmem:[%s1411 + $0x2c] sm:$0x1]
      %v1720 = vld [vmem:[%s1411 + $0x30] sm:$0xf]
      %v1721 = vld [vmem:[%s1411 + $0x34] sm:$0x1]
      %v1722 = vld [vmem:[%s1411 + $0x38] sm:$0xf]
      %v1723 = vld [vmem:[%s1411 + $0x3c] sm:$0x1]
      %v1725 = vshrl.u32 %v1708, 16
      %v1727 = vrot.slane %v1725, 4
      %v1728 = vshll.u32 %v1708, 16
      %v1730 = vrot.slane %v1728, 5
      %v1731 = vor.u32 %v1727, %v1730
      %v1732 = vrot.slane %v1731, 4
      %v1734 = vshll.u32 %v1709, 16
      %v1736 = vrot.slane %v1734, 5
      %v1737 = vsel %vm607, %v1732, %v1736
      %v1739 = vshrl.u32 %v1710, 16
      %v1741 = vrot.slane %v1739, 4
      %v1742 = vshll.u32 %v1710, 16
      %v1744 = vrot.slane %v1742, 5
      %v1745 = vor.u32 %v1741, %v1744
      %v1746 = vrot.slane %v1745, 4
      %v1748 = vshll.u32 %v1711, 16
      %v1750 = vrot.slane %v1748, 5
      %v1751 = vsel %vm607, %v1746, %v1750
      %v1753 = vshrl.u32 %v1712, 16
      %v1755 = vrot.slane %v1753, 4
      %v1756 = vshll.u32 %v1712, 16
      %v1758 = vrot.slane %v1756, 5
      %v1759 = vor.u32 %v1755, %v1758
      %v1760 = vrot.slane %v1759, 4
      %v1762 = vshll.u32 %v1713, 16
      %v1764 = vrot.slane %v1762, 5
      %v1765 = vsel %vm607, %v1760, %v1764
      %v1767 = vshrl.u32 %v1714, 16
      %v1769 = vrot.slane %v1767, 4
      %v1770 = vshll.u32 %v1714, 16
      %v1772 = vrot.slane %v1770, 5
      %v1773 = vor.u32 %v1769, %v1772
      %v1774 = vrot.slane %v1773, 4
      %v1776 = vshll.u32 %v1715, 16
      %v1778 = vrot.slane %v1776, 5
      %v1779 = vsel %vm607, %v1774, %v1778
      %v1781 = vshrl.u32 %v1716, 16
      %v1783 = vrot.slane %v1781, 4
      %v1784 = vshll.u32 %v1716, 16
      %v1786 = vrot.slane %v1784, 5
      %v1787 = vor.u32 %v1783, %v1786
      %v1788 = vrot.slane %v1787, 4
      %v1790 = vshll.u32 %v1717, 16
      %v1792 = vrot.slane %v1790, 5
      %v1793 = vsel %vm607, %v1788, %v1792
      %v1795 = vshrl.u32 %v1718, 16
      %v1797 = vrot.slane %v1795, 4
      %v1798 = vshll.u32 %v1718, 16
      %v1800 = vrot.slane %v1798, 5
      %v1801 = vor.u32 %v1797, %v1800
      %v1802 = vrot.slane %v1801, 4
      %v1804 = vshll.u32 %v1719, 16
      %v1806 = vrot.slane %v1804, 5
      %v1807 = vsel %vm607, %v1802, %v1806
      %v1809 = vshrl.u32 %v1720, 16
      %v1811 = vrot.slane %v1809, 4
      %v1812 = vshll.u32 %v1720, 16
      %v1814 = vrot.slane %v1812, 5
      %v1815 = vor.u32 %v1811, %v1814
      %v1816 = vrot.slane %v1815, 4
      %v1818 = vshll.u32 %v1721, 16
      %v1820 = vrot.slane %v1818, 5
      %v1821 = vsel %vm607, %v1816, %v1820
      %v1823 = vshrl.u32 %v1722, 16
      %v1825 = vrot.slane %v1823, 4
      %v1826 = vshll.u32 %v1722, 16
      %v1828 = vrot.slane %v1826, 5
      %v1829 = vor.u32 %v1825, %v1828
      %v1830 = vrot.slane %v1829, 4
      %v1832 = vshll.u32 %v1723, 16
      %v1834 = vrot.slane %v1832, 5
      %v1835 = vsel %vm607, %v1830, %v1834
      %v1836 = vld [vmem:[#allocation2] sm:$0xff]
      %v1837 = vld [vmem:[#allocation2 + $0x8] sm:$0xff]
      %v1838 = vld [vmem:[#allocation2 + $0x10] sm:$0xff]
      %v1839 = vld [vmem:[#allocation2 + $0x18] sm:$0xff]
      %v1840 = vld [vmem:[#allocation2 + $0x20] sm:$0xff]
      %v1841 = vld [vmem:[#allocation2 + $0x28] sm:$0xff]
      %v1842 = vld [vmem:[#allocation2 + $0x30] sm:$0xff]
      %v1843 = vld [vmem:[#allocation2 + $0x38] sm:$0xff]
      %s1844 = scalar_lea.vmem %s261, 128
      %v1845 = vld [vmem:[%s1844] sm:$0xf]
      %v1846 = vld [vmem:[%s1844 + $0x4] sm:$0xf]
      %v1847 = vld [vmem:[%s1844 + $0x8] sm:$0xf]
      %v1848 = vld [vmem:[%s1844 + $0xc] sm:$0xf]
      %v1849 = vunpack.c.l.b16 %v1737
      %v1850 = vunpack.c.l.b16 %v1751
      %v1851 = vunpack.c.l.b16 %v1765
      %v1852 = vunpack.c.l.b16 %v1779
      %v1853 = vunpack.c.l.b16 %v1793
      %v1854 = vunpack.c.l.b16 %v1807
      %v1855 = vunpack.c.l.b16 %v1821
      %v1856 = vunpack.c.l.b16 %v1835
      %v1857 = vpack.c.b16 %v1850, %v1849
      %v1858 = vpack.c.b16 %v1852, %v1851
      %v1859 = vpack.c.b16 %v1854, %v1853
      %v1860 = vpack.c.b16 %v1856, %v1855
      %v1865 = vunpack.c.l.b16 %v1845
      %v1866 = vunpack.c.l.b16 %v1846
      %v1867 = vunpack.c.l.b16 %v1847
      %v1868 = vunpack.c.l.b16 %v1848
      %v1869 = vpack.c.b16 %v1866, %v1865
      %v1870 = vpack.c.b16 %v1868, %v1867
      %v1874 = vsel %vm282, %v1857, 0
      %v1877 = vsel %vm282, %v1858, 0
      %v1880 = vsel %vm282, %v1859, 0
      %v1883 = vsel %vm282, %v1860, 0
      %1885 = vmatprep.subr.bf16.mxu0 0
      %1886 = vmatpush1.bf16.msra.mxu0 0
      %1887 = vmatprep.subr.bf16.mxu0 0
      %1888 = vmatpush1.bf16.msra.mxu0 0
      %1889 = vmatprep.subr.bf16.mxu0 0
      %1890 = vmatpush1.bf16.msra.mxu0 0
      %1891 = vmatprep.subr.bf16.mxu0 0
      %1892 = vmatpush1.bf16.msra.mxu0 0
      %1893 = vmatprep.subr.bf16.mxu0 0
      %1894 = vmatpush1.bf16.msra.mxu0 0
      %1895 = vmatprep.subr.bf16.mxu0 0
      %1896 = vmatpush1.bf16.msra.mxu0 0
      %1897 = vmatprep.subr.bf16.mxu0 0
      %1898 = vmatpush1.bf16.msra.mxu0 %v1870
      %1899 = vmatprep.subr.bf16.mxu0 0
      %1900 = vmatpush1.bf16.msra.mxu0 %v1869
      %1901 = vmatprep.subr.bf16.mxu0 0
      %1902 = vmatpush2.bf16.msra.mxu0 0
      %1903 = vmatprep.subr.bf16.mxu0 0
      %1904 = vmatpush2.bf16.msra.mxu0 0
      %1905 = vmatprep.subr.bf16.mxu0 0
      %1906 = vmatpush2.bf16.msra.mxu0 0
      %1907 = vmatprep.subr.bf16.mxu0 0
      %1908 = vmatpush2.bf16.msra.mxu0 0
      %1909 = vmatprep.subr.bf16.mxu0 0
      %1910 = vmatpush2.bf16.msra.mxu0 0
      %1911 = vmatprep.subr.bf16.mxu0 0
      %1912 = vmatpush2.bf16.msra.mxu0 0
      %1913 = vmatprep.subr.bf16.mxu0 0
      %1914 = vmatpush2.bf16.msra.mxu0 0
      %1915 = vmatprep.subr.bf16.mxu0 0
      %1916 = vmatpush2.bf16.msra.mxu0 0
      %1917 = vmatprep.mubr.bf16.mxu0 0
      %1918 = vmatmul.mubr.bf16.gmra.mxu0 %v1874
      %v1919 = vpop.f32.mrf.mxu0
      %v1920 = vadd.f32 0.0, %v1919
      %v1921 = vpop.f32.mrf.mxu0
      %v1922 = vpop.f32.mrf.mxu0
      %v1923 = vadd.f32 0.0, %v1922
      %v1924 = vpop.f32.mrf.mxu0
      %1925 = vmatprep.mubr.bf16.mxu0 0
      %1926 = vmatmul.mubr.bf16.gmra.mxu0 %v1877
      %v1927 = vpop.f32.mrf.mxu0
      %v1928 = vadd.f32 0.0, %v1927
      %v1929 = vpop.f32.mrf.mxu0
      %v1930 = vpop.f32.mrf.mxu0
      %v1931 = vadd.f32 0.0, %v1930
      %v1932 = vpop.f32.mrf.mxu0
      %1933 = vmatprep.mubr.bf16.mxu0 0
      %1934 = vmatmul.mubr.bf16.gmra.mxu0 %v1880
      %v1935 = vpop.f32.mrf.mxu0
      %v1936 = vadd.f32 0.0, %v1935
      %v1937 = vpop.f32.mrf.mxu0
      %v1938 = vpop.f32.mrf.mxu0
      %v1939 = vadd.f32 0.0, %v1938
      %v1940 = vpop.f32.mrf.mxu0
      %1941 = vmatprep.mubr.bf16.mxu0 0
      %1942 = vmatmul.mubr.bf16.gmra.mxu0 %v1883
      %v1943 = vpop.f32.mrf.mxu0
      %v1944 = vadd.f32 0.0, %v1943
      %v1945 = vpop.f32.mrf.mxu0
      %v1946 = vpop.f32.mrf.mxu0
      %v1947 = vadd.f32 0.0, %v1946
      %v1948 = vpop.f32.mrf.mxu0
      %1949 = vdwg.mxu0
      %v1950 = vadd.f32 %v1836, %v1920
      %v1951 = vadd.f32 %v1837, %v1923
      %v1952 = vadd.f32 %v1838, %v1928
      %v1953 = vadd.f32 %v1839, %v1931
      %v1954 = vadd.f32 %v1840, %v1936
      %v1955 = vadd.f32 %v1841, %v1939
      %v1956 = vadd.f32 %v1842, %v1944
      %v1957 = vadd.f32 %v1843, %v1947
      %1958 = vst.msk [vmem:[#allocation2] sm:$0xff] %vm282, %v1950
      %1959 = vst.msk [vmem:[#allocation2 + $0x8] sm:$0xff] %vm282, %v1951
      %1960 = vst.msk [vmem:[#allocation2 + $0x10] sm:$0xff] %vm282, %v1952
      %1961 = vst.msk [vmem:[#allocation2 + $0x18] sm:$0xff] %vm282, %v1953
      %1962 = vst.msk [vmem:[#allocation2 + $0x20] sm:$0xff] %vm282, %v1954
      %1963 = vst.msk [vmem:[#allocation2 + $0x28] sm:$0xff] %vm282, %v1955
      %1964 = vst.msk [vmem:[#allocation2 + $0x30] sm:$0xff] %vm282, %v1956
      %1965 = vst.msk [vmem:[#allocation2 + $0x38] sm:$0xff] %vm282, %v1957
      %v1966 = vld [vmem:[#allocation2] sm:$0xff]
      %v1967 = vld [vmem:[#allocation2 + $0x8] sm:$0xff]
      %v1968 = vld [vmem:[#allocation2 + $0x10] sm:$0xff]
      %v1969 = vld [vmem:[#allocation2 + $0x18] sm:$0xff]
      %v1970 = vld [vmem:[#allocation2 + $0x20] sm:$0xff]
      %v1971 = vld [vmem:[#allocation2 + $0x28] sm:$0xff]
      %v1972 = vld [vmem:[#allocation2 + $0x30] sm:$0xff]
      %v1973 = vld [vmem:[#allocation2 + $0x38] sm:$0xff]
      %v1974 = vld [vmem:[%s264] sm:$0x1]
      %v1976 = vlaneseq
      %v1977 = vshrl.u32 %v1976, 7
      %v1978 = vsub.s32 0, %v1977
      %v1979 = vrot.slane %v1974, %v1978
      %v1981 = vmul.f32 %v1966, %v1979
      %v1982 = vmul.f32 %v1967, %v1979
      %v1983 = vmul.f32 %v1968, %v1979
      %v1984 = vmul.f32 %v1969, %v1979
      %v1985 = vmul.f32 %v1970, %v1979
      %v1986 = vmul.f32 %v1971, %v1979
      %v1987 = vmul.f32 %v1972, %v1979
      %v1988 = vmul.f32 %v1973, %v1979
      %v1989 = vld [vmem:[%s267] sm:$0x1]
      %v1991 = vlaneseq
      %v1992 = vshrl.u32 %v1991, 7
      %v1993 = vsub.s32 0, %v1992
      %v1994 = vrot.slane %v1989, %v1993
      %v1996 = vadd.f32 %v1981, %v1994
      %v1997 = vadd.f32 %v1982, %v1994
      %v1998 = vadd.f32 %v1983, %v1994
      %v1999 = vadd.f32 %v1984, %v1994
      %v2000 = vadd.f32 %v1985, %v1994
      %v2001 = vadd.f32 %v1986, %v1994
      %v2002 = vadd.f32 %v1987, %v1994
      %v2003 = vadd.f32 %v1988, %v1994
      %v2004 = vmax.f32 %v1996, 0.0
      %v2005 = vmax.f32 %v1997, 0.0
      %v2006 = vmax.f32 %v1998, 0.0
      %v2007 = vmax.f32 %v1999, 0.0
      %v2008 = vmax.f32 %v2000, 0.0
      %v2009 = vmax.f32 %v2001, 0.0
      %v2010 = vmax.f32 %v2002, 0.0
      %v2011 = vmax.f32 %v2003, 0.0
      %v2012 = vpack.c.bf16 %v2005, %v2004
      %v2013 = vpack.c.bf16 %v2007, %v2006
      %v2014 = vpack.c.bf16 %v2009, %v2008
      %v2015 = vpack.c.bf16 %v2011, %v2010
      %v2020 = vunpack.c.l.b16 %v2012
      %v2021 = vunpack.c.h.b16 %v2012
      %v2022 = vunpack.c.l.b16 %v2013
      %v2023 = vunpack.c.h.b16 %v2013
      %v2024 = vunpack.c.l.b16 %v2014
      %v2025 = vunpack.c.h.b16 %v2014
      %v2026 = vunpack.c.l.b16 %v2015
      %v2027 = vunpack.c.h.b16 %v2015
      %v2028 = vpack.c.b16 %v2020, %v2020
      %v2029 = vpack.c.b16 %v2021, %v2021
      %v2030 = vpack.c.b16 %v2022, %v2022
      %v2031 = vpack.c.b16 %v2023, %v2023
      %v2032 = vpack.c.b16 %v2024, %v2024
      %v2033 = vpack.c.b16 %v2025, %v2025
      %v2034 = vpack.c.b16 %v2026, %v2026
      %v2035 = vpack.c.b16 %v2027, %v2027
      %vm2044 = vcmask 257024
      %2045 = vst.msk [vmem:[%s279] sm:$0xf] %vm2044, %v2028
      %2046 = vst.msk [vmem:[%s279 + $0x4] sm:$0xf] %vm2044, %v2029
      %2047 = vst.msk [vmem:[%s279 + $0x8] sm:$0xf] %vm2044, %v2030
      %2048 = vst.msk [vmem:[%s279 + $0xc] sm:$0xf] %vm2044, %v2031
      %2049 = vst.msk [vmem:[%s279 + $0x10] sm:$0xf] %vm2044, %v2032
      %2050 = vst.msk [vmem:[%s279 + $0x14] sm:$0xf] %vm2044, %v2033
      %2051 = vst.msk [vmem:[%s279 + $0x18] sm:$0xf] %vm2044, %v2034
      %2052 = vst.msk [vmem:[%s279 + $0x1c] sm:$0xf] %vm2044, %v2035
      %p2053 = scmp.lt.s32.totalorder %s20, 1
      %s2054 = scalar_select %p2053, %s20, 1
      %p2055 = scmp.lt.s32.totalorder %s21, 0
      %s2056 = scalar_select %p2055, %s21, 0
      %p2057 = scmp.lt.s32.totalorder %s22, 0
      %s2058 = scalar_select %p2057, %s22, 0
      %s2059 = smul.addr %s2056, 8
      %s2060 = sadd.s32 %s2058, %s2059
      %s2061 = smul.addr %s2054, 8
      %s2062 = sadd.s32 %s2060, %s2061
      %s2063 = smul.addr %s2062, 4
      %s2064 = scalar_lea.vmem %s4, %s2063
      // Predicated region
      $region37: #{forward.9} parent=35 // pred_check
        %p2065 = pneg %p160
      $region38: #{forward.9} parent=35 // pred_check_branch
        %2067 = sbr.rel (%p2065) target = $region40
      $region39: #{forward.9} parent=35 // pred_region
        _
      $region40: #{forward.9} parent=35 // pred_fallthru
        _
    $region36: #{forward.9} parent=5 // pred_fallthru
      _
    %p2068 = scmp.le.s32.totalorder 2, %s10
    // Predicated region
    $region41: #{forward.9} parent=5 // pred_check
      %p2069 = pneg %p2068
    $region42: #{forward.9} parent=5 // pred_check_branch
      %2071 = sbr.rel (%p2069) target = $region44
    $region43: #{forward.9} parent=5 // pred_region
      %s2072 = ssub.s32 %s10, 2
      // Predicated region
      $region45: #{forward.9} parent=43 // pred_check
        %p2073 = pneg %p166
      $region46: #{forward.9} parent=43 // pred_check_branch
        %2075 = sbr.rel (%p2073) target = $region48
      $region47: #{forward.9} parent=43 // pred_region
        %p2076 = scmp.lt.s32.totalorder %s23, 1
        %s2077 = scalar_select %p2076, %s23, 1
        %p2078 = scmp.lt.s32.totalorder %s24, 0
        %s2079 = scalar_select %p2078, %s24, 0
        %p2080 = scmp.lt.s32.totalorder %s25, 0
        %s2081 = scalar_select %p2080, %s25, 0
        %s2082 = smul.addr %s2079, 8
        %s2083 = sadd.s32 %s2081, %s2082
        %s2084 = smul.addr %s2077, 8
        %s2085 = sadd.s32 %s2083, %s2084
        %s2086 = smul.addr %s2085, 4
        %s2087 = scalar_lea.vmem %s4, %s2086
      $region48: #{forward.9} parent=43 // pred_fallthru
        _
    $region44: #{forward.9} parent=5 // pred_fallthru
      _
  $region6: #{forward.9} parent=0 // loop_footer
    %s14 = sadd.s32 1, %s10
  $region7: #{forward.9} parent=0 // loop_footer_branch
    %9 = sbr.rel target = $region3
  $region8: #{forward.9} parent=0 // loop_exit
    _

// kernel: forward.12
$region0: #{forward.12}
  #allocation0 [shape = 'u32[]', space=smem, size = 0x4, offset = 0x4, fixed_abs, tag = 'smem constant byte address 0x4 - core index']
  #allocation1 [shape = 'u32[144,128]{1,0:T(1,128)}', space=vmem, size = 0x12000, scoped, tag = 'internal scratch']
  #allocation2 [shape = 'f32[64,32]{1,0:T(8,128)}', space=vmem, size = 0x8000, scoped, tag = 'scratch operand']
  %s0 = inlined_call_operand.vmem [shape: bf16[2,12,12,32], index: 0, kind: input, shape index: {}]
  %s1 = inlined_call_operand.vmem [shape: bf16[9,32,32], index: 1, kind: input, shape index: {}]
  %s2 = inlined_call_operand.vmem [shape: f32[1,32], index: 2, kind: input, shape index: {}]
  %s3 = inlined_call_operand.vmem [shape: f32[1,32], index: 3, kind: input, shape index: {}]
  %s4 = inlined_call_operand.vmem [shape: bf16[2,1,64,32], index: 4, kind: output, shape index: {}]
  %s5 = sld [smem:[#allocation0]]
  $region49: #{forward.12} parent=0
    _
  %s7 = ssub.s32 1, %s5
  %s8 = scalar_select 0, %s7, %s5
  loop: start=0, step=1, limit=4
  $region2: #{forward.12} parent=0 // loop_pre_header
    _
  $region3: #{forward.12} parent=0 // loop_header
    %s10 = sphi 0, %s14
    %p11 = scmp.ge.s32.totalorder %s10, 4
    %s17 = sphi 0, %s36
    %s18 = sphi 0, %s32
    %s19 = sphi 0, %s28
    %s20 = sphi 0, %s17
    %s21 = sphi 0, %s18
    %s22 = sphi 0, %s19
    %s23 = sphi 0, %s20
    %s24 = sphi 0, %s21
    %s25 = sphi 0, %s22
    %s39 = sphi 0, %s41
    %s42 = sphi 0, %s39
    %s43 = sphi 0, %s42
    %s59 = sphi 0, %s43
    %s65 = sphi 0, %s67
    %s68 = sphi 0, %s65
    %s69 = sphi 0, %s68
    %s85 = sphi 0, %s69
    %s91 = sphi 0, %s93
    %s94 = sphi 0, %s91
    %s95 = sphi 0, %s94
    %s111 = sphi 0, %s95
    %s117 = sphi 0, %s119
    %s120 = sphi 0, %s117
    %s121 = sphi 0, %s120
    %s137 = sphi 0, %s121
    %s147 = sphi 0, %s149
    %s150 = sphi 0, %s147
    %s151 = sphi 0, %s150
    %s167 = sphi 0, %s151
  $region4: #{forward.12} parent=0 // loop_header_branch
    %13 = sbr.rel (%p11) target = $region8
  $region5: #{forward.12} parent=0 // loop_body
    %s15 = ssub.s32 %s10, 1
    %s16 = ssub.s32 %s10, 2
    %s26 = sadd.s32 1, %s19
    %p27 = scmp.ge.s32.totalorder %s26, 1
    %s28 = scalar_select %p27, 0, %s26
    %s29 = sadd.s32 1, %s18
    %s30 = scalar_select %p27, %s29, %s18
    %p31 = scmp.ge.s32.totalorder %s30, 1
    %s32 = scalar_select %p31, 0, %s30
    %s33 = sadd.s32 1, %s17
    %s34 = scalar_select %p31, %s33, %s17
    %p35 = scmp.ge.s32.totalorder %s34, 2
    %s36 = scalar_select %p35, 0, %s34
    %s37 = ssub.s32 %s17, %s36
    %p38 = scmp.eq.s32.totalorder %s37, 0
    %s40 = sadd.s32 %s39, 1
    %s41 = scalar_select %p38, %s39, %s40
    %p44 = pneg %p38
    %p45 = scmp.eq.s32.totalorder %s10, 1
    %p46 = por %p44, %p45
    %p47 = scmp.ne.s32.totalorder %s39, %s42
    %p48 = scmp.eq.s32.totalorder %s10, 0
    %p49 = por %p47, %p48
    %p50 = scmp.ne.s32.totalorder %s39, %s42
    %p51 = scmp.eq.s32.totalorder %s15, 1
    %p52 = por %p50, %p51
    %p53 = scmp.ne.s32.totalorder %s42, %s43
    %p54 = scmp.eq.s32.totalorder %s15, 0
    %p55 = por %p53, %p54
    %p56 = scmp.ne.s32.totalorder %s42, %s43
    %p57 = scmp.eq.s32.totalorder %s16, 1
    %p58 = por %p56, %p57
    %p60 = scmp.ne.s32.totalorder %s43, %s59
    %p61 = scmp.eq.s32.totalorder %s16, 0
    %p62 = por %p60, %p61
    %s63 = ssub.s32 %s19, %s28
    %p64 = scmp.eq.s32.totalorder %s63, 0
    %s66 = sadd.s32 %s65, 1
    %s67 = scalar_select %p64, %s65, %s66
    %p70 = pneg %p64
    %p71 = scmp.eq.s32.totalorder %s10, 1
    %p72 = por %p70, %p71
    %p73 = scmp.ne.s32.totalorder %s65, %s68
    %p74 = scmp.eq.s32.totalorder %s10, 0
    %p75 = por %p73, %p74
    %p76 = scmp.ne.s32.totalorder %s65, %s68
    %p77 = scmp.eq.s32.totalorder %s15, 1
    %p78 = por %p76, %p77
    %p79 = scmp.ne.s32.totalorder %s68, %s69
    %p80 = scmp.eq.s32.totalorder %s15, 0
    %p81 = por %p79, %p80
    %p82 = scmp.ne.s32.totalorder %s68, %s69
    %p83 = scmp.eq.s32.totalorder %s16, 1
    %p84 = por %p82, %p83
    %p86 = scmp.ne.s32.totalorder %s69, %s85
    %p87 = scmp.eq.s32.totalorder %s16, 0
    %p88 = por %p86, %p87
    %s89 = ssub.s32 %s19, %s28
    %p90 = scmp.eq.s32.totalorder %s89, 0
    %s92 = sadd.s32 %s91, 1
    %s93 = scalar_select %p90, %s91, %s92
    %p96 = pneg %p90
    %p97 = scmp.eq.s32.totalorder %s10, 1
    %p98 = por %p96, %p97
    %p99 = scmp.ne.s32.totalorder %s91, %s94
    %p100 = scmp.eq.s32.totalorder %s10, 0
    %p101 = por %p99, %p100
    %p102 = scmp.ne.s32.totalorder %s91, %s94
    %p103 = scmp.eq.s32.totalorder %s15, 1
    %p104 = por %p102, %p103
    %p105 = scmp.ne.s32.totalorder %s94, %s95
    %p106 = scmp.eq.s32.totalorder %s15, 0
    %p107 = por %p105, %p106
    %p108 = scmp.ne.s32.totalorder %s94, %s95
    %p109 = scmp.eq.s32.totalorder %s16, 1
    %p110 = por %p108, %p109
    %p112 = scmp.ne.s32.totalorder %s95, %s111
    %p113 = scmp.eq.s32.totalorder %s16, 0
    %p114 = por %p112, %p113
    %s115 = ssub.s32 %s19, %s28
    %p116 = scmp.eq.s32.totalorder %s115, 0
    %s118 = sadd.s32 %s117, 1
    %s119 = scalar_select %p116, %s117, %s118
    %p122 = pneg %p116
    %p123 = scmp.eq.s32.totalorder %s10, 1
    %p124 = por %p122, %p123
    %p125 = scmp.ne.s32.totalorder %s117, %s120
    %p126 = scmp.eq.s32.totalorder %s10, 0
    %p127 = por %p125, %p126
    %p128 = scmp.ne.s32.totalorder %s117, %s120
    %p129 = scmp.eq.s32.totalorder %s15, 1
    %p130 = por %p128, %p129
    %p131 = scmp.ne.s32.totalorder %s120, %s121
    %p132 = scmp.eq.s32.totalorder %s15, 0
    %p133 = por %p131, %p132
    %p134 = scmp.ne.s32.totalorder %s120, %s121
    %p135 = scmp.eq.s32.totalorder %s16, 1
    %p136 = por %p134, %p135
    %p138 = scmp.ne.s32.totalorder %s121, %s137
    %p139 = scmp.eq.s32.totalorder %s16, 0
    %p140 = por %p138, %p139
    %s141 = ssub.s32 %s17, %s36
    %s142 = ssub.s32 %s18, %s32
    %s143 = sor.u32 %s141, %s142
    %s144 = ssub.s32 %s19, %s28
    %s145 = sor.u32 %s143, %s144
    %p146 = scmp.eq.s32.totalorder %s145, 0
    %s148 = sadd.s32 %s147, 1
    %s149 = scalar_select %p146, %s147, %s148
    %p152 = pneg %p146
    %p153 = scmp.eq.s32.totalorder %s10, 1
    %p154 = por %p152, %p153
    %p155 = scmp.ne.s32.totalorder %s147, %s150
    %p156 = scmp.eq.s32.totalorder %s10, 0
    %p157 = por %p155, %p156
    %p158 = scmp.ne.s32.totalorder %s147, %s150
    %p159 = scmp.eq.s32.totalorder %s15, 1
    %p160 = por %p158, %p159
    %p161 = scmp.ne.s32.totalorder %s150, %s151
    %p162 = scmp.eq.s32.totalorder %s15, 0
    %p163 = por %p161, %p162
    %p164 = scmp.ne.s32.totalorder %s150, %s151
    %p165 = scmp.eq.s32.totalorder %s16, 1
    %p166 = por %p164, %p165
    %p168 = scmp.ne.s32.totalorder %s151, %s167
    %p169 = scmp.eq.s32.totalorder %s16, 0
    %p170 = por %p168, %p169
    %p171 = scmp.le.s32.totalorder 1, %s10
    %p172 = scmp.lt.s32.totalorder %s10, 3
    %p173 = pnand %p171, %p172
    %p174 = pneg %p173
    // Predicated region
    $region9: #{forward.12} parent=5 // pred_check
      _
    $region10: #{forward.12} parent=5 // pred_check_branch
      %176 = sbr.rel (%p173) target = $region12
    $region11: #{forward.12} parent=5 // pred_region
      %s177 = ssub.s32 %s10, 1
      // Predicated region
      $region13: #{forward.12} parent=11 // pred_check
        %p178 = pneg %p81
      $region14: #{forward.12} parent=11 // pred_check_branch
        %180 = sbr.rel (%p178) target = $region16
      $region15: #{forward.12} parent=11 // pred_region
        %p181 = scmp.lt.s32.totalorder %s22, 0
        %s182 = scalar_select %p181, %s22, 0
        %s183 = smul.addr %s182, 4
        %s184 = scalar_lea.vmem %s1, %s183
      $region16: #{forward.12} parent=11 // pred_fallthru
        _
      // Predicated region
      $region17: #{forward.12} parent=11 // pred_check
        %p185 = pneg %p107
      $region18: #{forward.12} parent=11 // pred_check_branch
        %187 = sbr.rel (%p185) target = $region20
      $region19: #{forward.12} parent=11 // pred_region
        %p188 = scmp.lt.s32.totalorder %s22, 0
        %s189 = scalar_select %p188, %s22, 0
        %s190 = scalar_lea.vmem %s2, %s189
      $region20: #{forward.12} parent=11 // pred_fallthru
        _
      // Predicated region
      $region21: #{forward.12} parent=11 // pred_check
        %p191 = pneg %p133
      $region22: #{forward.12} parent=11 // pred_check_branch
        %193 = sbr.rel (%p191) target = $region24
      $region23: #{forward.12} parent=11 // pred_region
        %p194 = scmp.lt.s32.totalorder %s22, 0
        %s195 = scalar_select %p194, %s22, 0
        %s196 = scalar_lea.vmem %s3, %s195
      $region24: #{forward.12} parent=11 // pred_fallthru
        _
    $region12: #{forward.12} parent=5 // pred_fallthru
      _
    %p197 = scmp.lt.s32.totalorder %s10, 2
    // Predicated region
    $region25: #{forward.12} parent=5 // pred_check
      %p198 = pneg %p197
    $region26: #{forward.12} parent=5 // pred_check_branch
      %200 = sbr.rel (%p198) target = $region28
    $region27: #{forward.12} parent=5 // pred_region
      // Predicated region
      $region29: #{forward.12} parent=27 // pred_check
        %p201 = pneg %p49
      $region30: #{forward.12} parent=27 // pred_check_branch
        %203 = sbr.rel (%p201) target = $region32
      $region31: #{forward.12} parent=27 // pred_region
        %p204 = scmp.lt.s32.totalorder %s17, 1
        %s205 = scalar_select %p204, %s17, 1
        %s206 = smul.addr %s205, 24
        %s207 = smul.addr %s206, 4
        %s208 = scalar_lea.vmem %s0, %s207
      $region32: #{forward.12} parent=27 // pred_fallthru
        _
    $region28: #{forward.12} parent=5 // pred_fallthru
      _
    %p209 = scmp.le.s32.totalorder 1, %s10
    %p210 = scmp.lt.s32.totalorder %s10, 3
    %p211 = pnand %p209, %p210
    %p212 = pneg %p211
    // Predicated region
    $region33: #{forward.12} parent=5 // pred_check
      _
    $region34: #{forward.12} parent=5 // pred_check_branch
      %214 = sbr.rel (%p211) target = $region36
    $region35: #{forward.12} parent=5 // pred_region
      %s215 = ssub.s32 %s10, 1
      %p216 = scmp.lt.s32.totalorder %s20, 1
      %s217 = scalar_select %p216, %s20, 1
      %s218 = smul.addr %s217, 24
      %s219 = smul.addr %s218, 4
      %s220 = scalar_lea.vmem %s0, %s219
      %p221 = pneg %p55
      %p222 = pneg %p52
      %p223 = scmp.lt.s32.totalorder %s22, 0
      %s224 = scalar_select %p223, %s22, 0
      %s225 = smul.addr %s224, 4
      %s226 = scalar_lea.vmem %s1, %s225
      %p227 = pneg %p81
      %p228 = pneg %p78
      %p229 = scmp.lt.s32.totalorder %s22, 0
      %s230 = scalar_select %p229, %s22, 0
      %s231 = scalar_lea.vmem %s2, %s230
      %p232 = pneg %p107
      %p233 = pneg %p104
      %p234 = scmp.lt.s32.totalorder %s22, 0
      %s235 = scalar_select %p234, %s22, 0
      %s236 = scalar_lea.vmem %s3, %s235
      %p237 = pneg %p133
      %p238 = pneg %p130
      %p239 = pneg %p163
      %p240 = pneg %p160
      %p241 = scmp.lt.s32.totalorder %s20, 1
      %s242 = scalar_select %p241, %s20, 1
      %p243 = scmp.lt.s32.totalorder %s21, 0
      %s244 = scalar_select %p243, %s21, 0
      %p245 = scmp.lt.s32.totalorder %s22, 0
      %s246 = scalar_select %p245, %s22, 0
      %s247 = smul.addr %s244, 8
      %s248 = sadd.s32 %s246, %s247
      %s249 = smul.addr %s242, 8
      %s250 = sadd.s32 %s248, %s249
      %s251 = smul.addr %s250, 4
      %s252 = scalar_lea.vmem %s4, %s251
      %p253 = scmp.lt.s32.totalorder %s20, 1
      %s254 = scalar_select %p253, %s20, 1
      %s255 = smul.addr %s254, 24
      %s256 = smul.addr %s255, 4
      %s257 = scalar_lea.vmem %s0, %s256
      %p258 = scmp.lt.s32.totalorder %s22, 0
      %s259 = scalar_select %p258, %s22, 0
      %s260 = smul.addr %s259, 4
      %s261 = scalar_lea.vmem %s1, %s260
      %p262 = scmp.lt.s32.totalorder %s22, 0
      %s263 = scalar_select %p262, %s22, 0
      %s264 = scalar_lea.vmem %s2, %s263
      %p265 = scmp.lt.s32.totalorder %s22, 0
      %s266 = scalar_select %p265, %s22, 0
      %s267 = scalar_lea.vmem %s3, %s266
      %p268 = scmp.lt.s32.totalorder %s20, 1
      %s269 = scalar_select %p268, %s20, 1
      %p270 = scmp.lt.s32.totalorder %s21, 0
      %s271 = scalar_select %p270, %s21, 0
      %p272 = scmp.lt.s32.totalorder %s22, 0
      %s273 = scalar_select %p272, %s22, 0
      %s274 = smul.addr %s271, 8
      %s275 = sadd.s32 %s273, %s274
      %s276 = smul.addr %s269, 8
      %s277 = sadd.s32 %s275, %s276
      %s278 = smul.addr %s277, 4
      %s279 = scalar_lea.vmem %s4, %s278
      %s281 = smul.u32 %s21, 8
      %vm282 = vcmask 261120
      %283 = vst.msk [vmem:[#allocation2] sm:$0xff] %vm282, 0.0
      %284 = vst.msk [vmem:[#allocation2 + $0x8] sm:$0xff] %vm282, 0.0
      %285 = vst.msk [vmem:[#allocation2 + $0x10] sm:$0xff] %vm282, 0.0
      %286 = vst.msk [vmem:[#allocation2 + $0x18] sm:$0xff] %vm282, 0.0
      %287 = vst.msk [vmem:[#allocation2 + $0x20] sm:$0xff] %vm282, 0.0
      %288 = vst.msk [vmem:[#allocation2 + $0x28] sm:$0xff] %vm282, 0.0
      %289 = vst.msk [vmem:[#allocation2 + $0x30] sm:$0xff] %vm282, 0.0
      %290 = vst.msk [vmem:[#allocation2 + $0x38] sm:$0xff] %vm282, 0.0
      %s291 = smul.u32 %s281, 2
      %s292 = smul.addr %s291, 4
      %s293 = scalar_lea.vmem %s257, %s292
      %v294 = vld [vmem:[%s293] sm:$0xf]
      %v295 = vld [vmem:[%s293 + $0x8] sm:$0xf]
      %v296 = vld [vmem:[%s293 + $0x10] sm:$0xf]
      %v297 = vld [vmem:[%s293 + $0x18] sm:$0xf]
      %v298 = vld [vmem:[%s293 + $0x20] sm:$0xf]
      %v299 = vld [vmem:[%s293 + $0x28] sm:$0xf]
      %v300 = vld [vmem:[%s293 + $0x30] sm:$0xf]
      %v301 = vld [vmem:[%s293 + $0x38] sm:$0xf]
      %v302 = vld [vmem:[#allocation2] sm:$0xff]
      %v303 = vld [vmem:[#allocation2 + $0x8] sm:$0xff]
      %v304 = vld [vmem:[#allocation2 + $0x10] sm:$0xff]
      %v305 = vld [vmem:[#allocation2 + $0x18] sm:$0xff]
      %v306 = vld [vmem:[#allocation2 + $0x20] sm:$0xff]
      %v307 = vld [vmem:[#allocation2 + $0x28] sm:$0xff]
      %v308 = vld [vmem:[#allocation2 + $0x30] sm:$0xff]
      %v309 = vld [vmem:[#allocation2 + $0x38] sm:$0xff]
      %v310 = vld [vmem:[%s261] sm:$0xf]
      %v311 = vld [vmem:[%s261 + $0x4] sm:$0xf]
      %v312 = vld [vmem:[%s261 + $0x8] sm:$0xf]
      %v313 = vld [vmem:[%s261 + $0xc] sm:$0xf]
      %v322 = vunpack.c.l.b16 %v294
      %v323 = vunpack.c.l.b16 %v295
      %v324 = vunpack.c.l.b16 %v296
      %v325 = vunpack.c.l.b16 %v297
      %v326 = vunpack.c.l.b16 %v298
      %v327 = vunpack.c.l.b16 %v299
      %v328 = vunpack.c.l.b16 %v300
      %v329 = vunpack.c.l.b16 %v301
      %v330 = vpack.c.b16 %v323, %v322
      %v331 = vpack.c.b16 %v325, %v324
      %v332 = vpack.c.b16 %v327, %v326
      %v333 = vpack.c.b16 %v329, %v328
      %v338 = vunpack.c.l.b16 %v310
      %v339 = vunpack.c.l.b16 %v311
      %v340 = vunpack.c.l.b16 %v312
      %v341 = vunpack.c.l.b16 %v313
      %v342 = vpack.c.b16 %v339, %v338
      %v343 = vpack.c.b16 %v341, %v340
      %v347 = vsel %vm282, %v330, 0
      %v350 = vsel %vm282, %v331, 0
      %v353 = vsel %vm282, %v332, 0
      %v356 = vsel %vm282, %v333, 0
      %358 = vmatprep.subr.bf16.mxu0 0
      %359 = vmatpush1.bf16.msra.mxu0 0
      %360 = vmatprep.subr.bf16.mxu0 0
      %361 = vmatpush1.bf16.msra.mxu0 0
      %362 = vmatprep.subr.bf16.mxu0 0
      %363 = vmatpush1.bf16.msra.mxu0 0
      %364 = vmatprep.subr.bf16.mxu0 0
      %365 = vmatpush1.bf16.msra.mxu0 0
      %366 = vmatprep.subr.bf16.mxu0 0
      %367 = vmatpush1.bf16.msra.mxu0 0
      %368 = vmatprep.subr.bf16.mxu0 0
      %369 = vmatpush1.bf16.msra.mxu0 0
      %370 = vmatprep.subr.bf16.mxu0 0
      %371 = vmatpush1.bf16.msra.mxu0 %v343
      %372 = vmatprep.subr.bf16.mxu0 0
      %373 = vmatpush1.bf16.msra.mxu0 %v342
      %374 = vmatprep.subr.bf16.mxu0 0
      %375 = vmatpush2.bf16.msra.mxu0 0
      %376 = vmatprep.subr.bf16.mxu0 0
      %377 = vmatpush2.bf16.msra.mxu0 0
      %378 = vmatprep.subr.bf16.mxu0 0
      %379 = vmatpush2.bf16.msra.mxu0 0
      %380 = vmatprep.subr.bf16.mxu0 0
      %381 = vmatpush2.bf16.msra.mxu0 0
      %382 = vmatprep.subr.bf16.mxu0 0
      %383 = vmatpush2.bf16.msra.mxu0 0
      %384 = vmatprep.subr.bf16.mxu0 0
      %385 = vmatpush2.bf16.msra.mxu0 0
      %386 = vmatprep.subr.bf16.mxu0 0
      %387 = vmatpush2.bf16.msra.mxu0 0
      %388 = vmatprep.subr.bf16.mxu0 0
      %389 = vmatpush2.bf16.msra.mxu0 0
      %390 = vmatprep.mubr.bf16.mxu0 0
      %391 = vmatmul.mubr.bf16.gmra.mxu0 %v347
      %v392 = vpop.f32.mrf.mxu0
      %v393 = vadd.f32 0.0, %v392
      %v394 = vpop.f32.mrf.mxu0
      %v395 = vpop.f32.mrf.mxu0
      %v396 = vadd.f32 0.0, %v395
      %v397 = vpop.f32.mrf.mxu0
      %398 = vmatprep.mubr.bf16.mxu0 0
      %399 = vmatmul.mubr.bf16.gmra.mxu0 %v350
      %v400 = vpop.f32.mrf.mxu0
      %v401 = vadd.f32 0.0, %v400
      %v402 = vpop.f32.mrf.mxu0
      %v403 = vpop.f32.mrf.mxu0
      %v404 = vadd.f32 0.0, %v403
      %v405 = vpop.f32.mrf.mxu0
      %406 = vmatprep.mubr.bf16.mxu0 0
      %407 = vmatmul.mubr.bf16.gmra.mxu0 %v353
      %v408 = vpop.f32.mrf.mxu0
      %v409 = vadd.f32 0.0, %v408
      %v410 = vpop.f32.mrf.mxu0
      %v411 = vpop.f32.mrf.mxu0
      %v412 = vadd.f32 0.0, %v411
      %v413 = vpop.f32.mrf.mxu0
      %414 = vmatprep.mubr.bf16.mxu0 0
      %415 = vmatmul.mubr.bf16.gmra.mxu0 %v356
      %v416 = vpop.f32.mrf.mxu0
      %v417 = vadd.f32 0.0, %v416
      %v418 = vpop.f32.mrf.mxu0
      %v419 = vpop.f32.mrf.mxu0
      %v420 = vadd.f32 0.0, %v419
      %v421 = vpop.f32.mrf.mxu0
      %422 = vdwg.mxu0
      %v423 = vadd.f32 %v302, %v393
      %v424 = vadd.f32 %v303, %v396
      %v425 = vadd.f32 %v304, %v401
      %v426 = vadd.f32 %v305, %v404
      %v427 = vadd.f32 %v306, %v409
      %v428 = vadd.f32 %v307, %v412
      %v429 = vadd.f32 %v308, %v417
      %v430 = vadd.f32 %v309, %v420
      %431 = vst.msk [vmem:[#allocation2] sm:$0xff] %vm282, %v423
      %432 = vst.msk [vmem:[#allocation2 + $0x8] sm:$0xff] %vm282, %v424
      %433 = vst.msk [vmem:[#allocation2 + $0x10] sm:$0xff] %vm282, %v425
      %434 = vst.msk [vmem:[#allocation2 + $0x18] sm:$0xff] %vm282, %v426
      %435 = vst.msk [vmem:[#allocation2 + $0x20] sm:$0xff] %vm282, %v427
      %436 = vst.msk [vmem:[#allocation2 + $0x28] sm:$0xff] %vm282, %v428
      %437 = vst.msk [vmem:[#allocation2 + $0x30] sm:$0xff] %vm282, %v429
      %438 = vst.msk [vmem:[#allocation2 + $0x38] sm:$0xff] %vm282, %v430
      %v439 = vld [vmem:[%s293] sm:$0xe]
      %v440 = vld [vmem:[%s293 + $0x4] sm:$0x1]
      %v441 = vld [vmem:[%s293 + $0x8] sm:$0xe]
      %v442 = vld [vmem:[%s293 + $0xc] sm:$0x1]
      %v443 = vld [vmem:[%s293 + $0x10] sm:$0xe]
      %v444 = vld [vmem:[%s293 + $0x14] sm:$0x1]
      %v445 = vld [vmem:[%s293 + $0x18] sm:$0xe]
      %v446 = vld [vmem:[%s293 + $0x1c] sm:$0x1]
      %v447 = vld [vmem:[%s293 + $0x20] sm:$0xe]
      %v448 = vld [vmem:[%s293 + $0x24] sm:$0x1]
      %v449 = vld [vmem:[%s293 + $0x28] sm:$0xe]
      %v450 = vld [vmem:[%s293 + $0x2c] sm:$0x1]
      %v451 = vld [vmem:[%s293 + $0x30] sm:$0xe]
      %v452 = vld [vmem:[%s293 + $0x34] sm:$0x1]
      %v453 = vld [vmem:[%s293 + $0x38] sm:$0xe]
      %v454 = vld [vmem:[%s293 + $0x3c] sm:$0x1]
      %vm471 = vcmask 1042432
      %vm472 = vcmask 1046532
      %vm473 = vmor %vm471, %vm472
      %v474 = vrot.slane %v439, 5
      %v475 = vrot.slane %v474, 4
      %v476 = vrot.slane %v440, 5
      %v477 = vsel %vm473, %v475, %v476
      %v478 = vrot.slane %v441, 5
      %v479 = vrot.slane %v478, 4
      %v480 = vrot.slane %v442, 5
      %v481 = vsel %vm473, %v479, %v480
      %v482 = vrot.slane %v443, 5
      %v483 = vrot.slane %v482, 4
      %v484 = vrot.slane %v444, 5
      %v485 = vsel %vm473, %v483, %v484
      %v486 = vrot.slane %v445, 5
      %v487 = vrot.slane %v486, 4
      %v488 = vrot.slane %v446, 5
      %v489 = vsel %vm473, %v487, %v488
      %v490 = vrot.slane %v447, 5
      %v491 = vrot.slane %v490, 4
      %v492 = vrot.slane %v448, 5
      %v493 = vsel %vm473, %v491, %v492
      %v494 = vrot.slane %v449, 5
      %v495 = vrot.slane %v494, 4
      %v496 = vrot.slane %v450, 5
      %v497 = vsel %vm473, %v495, %v496
      %v498 = vrot.slane %v451, 5
      %v499 = vrot.slane %v498, 4
      %v500 = vrot.slane %v452, 5
      %v501 = vsel %vm473, %v499, %v500
      %v502 = vrot.slane %v453, 5
      %v503 = vrot.slane %v502, 4
      %v504 = vrot.slane %v454, 5
      %v505 = vsel %vm473, %v503, %v504
      %v506 = vld [vmem:[#allocation2] sm:$0xff]
      %v507 = vld [vmem:[#allocation2 + $0x8] sm:$0xff]
      %v508 = vld [vmem:[#allocation2 + $0x10] sm:$0xff]
      %v509 = vld [vmem:[#allocation2 + $0x18] sm:$0xff]
      %v510 = vld [vmem:[#allocation2 + $0x20] sm:$0xff]
      %v511 = vld [vmem:[#allocation2 + $0x28] sm:$0xff]
      %v512 = vld [vmem:[#allocation2 + $0x30] sm:$0xff]
      %v513 = vld [vmem:[#allocation2 + $0x38] sm:$0xff]
      %s514 = scalar_lea.vmem %s261, 16
      %v515 = vld [vmem:[%s514] sm:$0xf]
      %v516 = vld [vmem:[%s514 + $0x4] sm:$0xf]
      %v517 = vld [vmem:[%s514 + $0x8] sm:$0xf]
      %v518 = vld [vmem:[%s514 + $0xc] sm:$0xf]
      %v519 = vunpack.c.l.b16 %v477
      %v520 = vunpack.c.l.b16 %v481
      %v521 = vunpack.c.l.b16 %v485
      %v522 = vunpack.c.l.b16 %v489
      %v523 = vunpack.c.l.b16 %v493
      %v524 = vunpack.c.l.b16 %v497
      %v525 = vunpack.c.l.b16 %v501
      %v526 = vunpack.c.l.b16 %v505
      %v527 = vpack.c.b16 %v520, %v519
      %v528 = vpack.c.b16 %v522, %v521
      %v529 = vpack.c.b16 %v524, %v523
      %v530 = vpack.c.b16 %v526, %v525
      %v535 = vunpack.c.l.b16 %v515
      %v536 = vunpack.c.l.b16 %v516
      %v537 = vunpack.c.l.b16 %v517
      %v538 = vunpack.c.l.b16 %v518
      %v539 = vpack.c.b16 %v536, %v535
      %v540 = vpack.c.b16 %v538, %v537
      %v544 = vsel %vm282, %v527, 0
      %v547 = vsel %vm282, %v528, 0
      %v550 = vsel %vm282, %v529, 0
      %v553 = vsel %vm282, %v530, 0
      %555 = vmatprep.subr.bf16.mxu0 0
      %556 = vmatpush1.bf16.msra.mxu0 0
      %557 = vmatprep.subr.bf16.mxu0 0
      %558 = vmatpush1.bf16.msra.mxu0 0
      %559 = vmatprep.subr.bf16.mxu0 0
      %560 = vmatpush1.bf16.msra.mxu0 0
      %561 = vmatprep.subr.bf16.mxu0 0
      %562 = vmatpush1.bf16.msra.mxu0 0
      %563 = vmatprep.subr.bf16.mxu0 0
      %564 = vmatpush1.bf16.msra.mxu0 0
      %565 = vmatprep.subr.bf16.mxu0 0
      %566 = vmatpush1.bf16.msra.mxu0 0
      %567 = vmatprep.subr.bf16.mxu0 0
      %568 = vmatpush1.bf16.msra.mxu0 %v540
      %569 = vmatprep.subr.bf16.mxu0 0
      %570 = vmatpush1.bf16.msra.mxu0 %v539
      %571 = vmatprep.subr.bf16.mxu0 0
      %572 = vmatpush2.bf16.msra.mxu0 0
      %573 = vmatprep.subr.bf16.mxu0 0
      %574 = vmatpush2.bf16.msra.mxu0 0
      %575 = vmatprep.subr.bf16.mxu0 0
      %576 = vmatpush2.bf16.msra.mxu0 0
      %577 = vmatprep.subr.bf16.mxu0 0
      %578 = vmatpush2.bf16.msra.mxu0 0
      %579 = vmatprep.subr.bf16.mxu0 0
      %580 = vmatpush2.bf16.msra.mxu0 0
      %581 = vmatprep.subr.bf16.mxu0 0
      %582 = vmatpush2.bf16.msra.mxu0 0
      %583 = vmatprep.subr.bf16.mxu0 0
      %584 = vmatpush2.bf16.msra.mxu0 0
      %585 = vmatprep.subr.bf16.mxu0 0
      %586 = vmatpush2.bf16.msra.mxu0 0
      %587 = vmatprep.mubr.bf16.mxu0 0
      %588 = vmatmul.mubr.bf16.gmra.mxu0 %v544
      %v589 = vpop.f32.mrf.mxu0
      %v590 = vadd.f32 0.0, %v589
      %v591 = vpop.f32.mrf.mxu0
      %v592 = vpop.f32.mrf.mxu0
      %v593 = vadd.f32 0.0, %v592
      %v594 = vpop.f32.mrf.mxu0
      %595 = vmatprep.mubr.bf16.mxu0 0
      %596 = vmatmul.mubr.bf16.gmra.mxu0 %v547
      %v597 = vpop.f32.mrf.mxu0
      %v598 = vadd.f32 0.0, %v597
      %v599 = vpop.f32.mrf.mxu0
      %v600 = vpop.f32.mrf.mxu0
      %v601 = vadd.f32 0.0, %v600
      %v602 = vpop.f32.mrf.mxu0
      %603 = vmatprep.mubr.bf16.mxu0 0
      %604 = vmatmul.mubr.bf16.gmra.mxu0 %v550
      %v605 = vpop.f32.mrf.mxu0
      %v606 = vadd.f32 0.0, %v605
      %v607 = vpop.f32.mrf.mxu0
      %v608 = vpop.f32.mrf.mxu0
      %v609 = vadd.f32 0.0, %v608
      %v610 = vpop.f32.mrf.mxu0
      %611 = vmatprep.mubr.bf16.mxu0 0
      %612 = vmatmul.mubr.bf16.gmra.mxu0 %v553
      %v613 = vpop.f32.mrf.mxu0
      %v614 = vadd.f32 0.0, %v613
      %v615 = vpop.f32.mrf.mxu0
      %v616 = vpop.f32.mrf.mxu0
      %v617 = vadd.f32 0.0, %v616
      %v618 = vpop.f32.mrf.mxu0
      %619 = vdwg.mxu0
      %v620 = vadd.f32 %v506, %v590
      %v621 = vadd.f32 %v507, %v593
      %v622 = vadd.f32 %v508, %v598
      %v623 = vadd.f32 %v509, %v601
      %v624 = vadd.f32 %v510, %v606
      %v625 = vadd.f32 %v511, %v609
      %v626 = vadd.f32 %v512, %v614
      %v627 = vadd.f32 %v513, %v617
      %628 = vst.msk [vmem:[#allocation2] sm:$0xff] %vm282, %v620
      %629 = vst.msk [vmem:[#allocation2 + $0x8] sm:$0xff] %vm282, %v621
      %630 = vst.msk [vmem:[#allocation2 + $0x10] sm:$0xff] %vm282, %v622
      %631 = vst.msk [vmem:[#allocation2 + $0x18] sm:$0xff] %vm282, %v623
      %632 = vst.msk [vmem:[#allocation2 + $0x20] sm:$0xff] %vm282, %v624
      %633 = vst.msk [vmem:[#allocation2 + $0x28] sm:$0xff] %vm282, %v625
      %634 = vst.msk [vmem:[#allocation2 + $0x30] sm:$0xff] %vm282, %v626
      %635 = vst.msk [vmem:[#allocation2 + $0x38] sm:$0xff] %vm282, %v627
      %v636 = vld [vmem:[%s293] sm:$0xc]
      %v637 = vld [vmem:[%s293 + $0x4] sm:$0x3]
      %v638 = vld [vmem:[%s293 + $0x8] sm:$0xc]
      %v639 = vld [vmem:[%s293 + $0xc] sm:$0x3]
      %v640 = vld [vmem:[%s293 + $0x10] sm:$0xc]
      %v641 = vld [vmem:[%s293 + $0x14] sm:$0x3]
      %v642 = vld [vmem:[%s293 + $0x18] sm:$0xc]
      %v643 = vld [vmem:[%s293 + $0x1c] sm:$0x3]
      %v644 = vld [vmem:[%s293 + $0x20] sm:$0xc]
      %v645 = vld [vmem:[%s293 + $0x24] sm:$0x3]
      %v646 = vld [vmem:[%s293 + $0x28] sm:$0xc]
      %v647 = vld [vmem:[%s293 + $0x2c] sm:$0x3]
      %v648 = vld [vmem:[%s293 + $0x30] sm:$0xc]
      %v649 = vld [vmem:[%s293 + $0x34] sm:$0x3]
      %v650 = vld [vmem:[%s293 + $0x38] sm:$0xc]
      %v651 = vld [vmem:[%s293 + $0x3c] sm:$0x3]
      %vm668 = vcmask 1041408
      %vm669 = vcmask 1045508
      %vm670 = vmor %vm668, %vm669
      %v671 = vrot.slane %v636, 6
      %v672 = vrot.slane %v671, 4
      %v673 = vrot.slane %v637, 6
      %v674 = vsel %vm670, %v672, %v673
      %v675 = vrot.slane %v638, 6
      %v676 = vrot.slane %v675, 4
      %v677 = vrot.slane %v639, 6
      %v678 = vsel %vm670, %v676, %v677
      %v679 = vrot.slane %v640, 6
      %v680 = vrot.slane %v679, 4
      %v681 = vrot.slane %v641, 6
      %v682 = vsel %vm670, %v680, %v681
      %v683 = vrot.slane %v642, 6
      %v684 = vrot.slane %v683, 4
      %v685 = vrot.slane %v643, 6
      %v686 = vsel %vm670, %v684, %v685
      %v687 = vrot.slane %v644, 6
      %v688 = vrot.slane %v687, 4
      %v689 = vrot.slane %v645, 6
      %v690 = vsel %vm670, %v688, %v689
      %v691 = vrot.slane %v646, 6
      %v692 = vrot.slane %v691, 4
      %v693 = vrot.slane %v647, 6
      %v694 = vsel %vm670, %v692, %v693
      %v695 = vrot.slane %v648, 6
      %v696 = vrot.slane %v695, 4
      %v697 = vrot.slane %v649, 6
      %v698 = vsel %vm670, %v696, %v697
      %v699 = vrot.slane %v650, 6
      %v700 = vrot.slane %v699, 4
      %v701 = vrot.slane %v651, 6
      %v702 = vsel %vm670, %v700, %v701
      %v703 = vld [vmem:[#allocation2] sm:$0xff]
      %v704 = vld [vmem:[#allocation2 + $0x8] sm:$0xff]
      %v705 = vld [vmem:[#allocation2 + $0x10] sm:$0xff]
      %v706 = vld [vmem:[#allocation2 + $0x18] sm:$0xff]
      %v707 = vld [vmem:[#allocation2 + $0x20] sm:$0xff]
      %v708 = vld [vmem:[#allocation2 + $0x28] sm:$0xff]
      %v709 = vld [vmem:[#allocation2 + $0x30] sm:$0xff]
      %v710 = vld [vmem:[#allocation2 + $0x38] sm:$0xff]
      %s711 = scalar_lea.vmem %s261, 32
      %v712 = vld [vmem:[%s711] sm:$0xf]
      %v713 = vld [vmem:[%s711 + $0x4] sm:$0xf]
      %v714 = vld [vmem:[%s711 + $0x8] sm:$0xf]
      %v715 = vld [vmem:[%s711 + $0xc] sm:$0xf]
      %v716 = vunpack.c.l.b16 %v674
      %v717 = vunpack.c.l.b16 %v678
      %v718 = vunpack.c.l.b16 %v682
      %v719 = vunpack.c.l.b16 %v686
      %v720 = vunpack.c.l.b16 %v690
      %v721 = vunpack.c.l.b16 %v694
      %v722 = vunpack.c.l.b16 %v698
      %v723 = vunpack.c.l.b16 %v702
      %v724 = vpack.c.b16 %v717, %v716
      %v725 = vpack.c.b16 %v719, %v718
      %v726 = vpack.c.b16 %v721, %v720
      %v727 = vpack.c.b16 %v723, %v722
      %v732 = vunpack.c.l.b16 %v712
      %v733 = vunpack.c.l.b16 %v713
      %v734 = vunpack.c.l.b16 %v714
      %v735 = vunpack.c.l.b16 %v715
      %v736 = vpack.c.b16 %v733, %v732
      %v737 = vpack.c.b16 %v735, %v734
      %v741 = vsel %vm282, %v724, 0
      %v744 = vsel %vm282, %v725, 0
      %v747 = vsel %vm282, %v726, 0
      %v750 = vsel %vm282, %v727, 0
      %752 = vmatprep.subr.bf16.mxu0 0
      %753 = vmatpush1.bf16.msra.mxu0 0
      %754 = vmatprep.subr.bf16.mxu0 0
      %755 = vmatpush1.bf16.msra.mxu0 0
      %756 = vmatprep.subr.bf16.mxu0 0
      %757 = vmatpush1.bf16.msra.mxu0 0
      %758 = vmatprep.subr.bf16.mxu0 0
      %759 = vmatpush1.bf16.msra.mxu0 0
      %760 = vmatprep.subr.bf16.mxu0 0
      %761 = vmatpush1.bf16.msra.mxu0 0
      %762 = vmatprep.subr.bf16.mxu0 0
      %763 = vmatpush1.bf16.msra.mxu0 0
      %764 = vmatprep.subr.bf16.mxu0 0
      %765 = vmatpush1.bf16.msra.mxu0 %v737
      %766 = vmatprep.subr.bf16.mxu0 0
      %767 = vmatpush1.bf16.msra.mxu0 %v736
      %768 = vmatprep.subr.bf16.mxu0 0
      %769 = vmatpush2.bf16.msra.mxu0 0
      %770 = vmatprep.subr.bf16.mxu0 0
      %771 = vmatpush2.bf16.msra.mxu0 0
      %772 = vmatprep.subr.bf16.mxu0 0
      %773 = vmatpush2.bf16.msra.mxu0 0
      %774 = vmatprep.subr.bf16.mxu0 0
      %775 = vmatpush2.bf16.msra.mxu0 0
      %776 = vmatprep.subr.bf16.mxu0 0
      %777 = vmatpush2.bf16.msra.mxu0 0
      %778 = vmatprep.subr.bf16.mxu0 0
      %779 = vmatpush2.bf16.msra.mxu0 0
      %780 = vmatprep.subr.bf16.mxu0 0
      %781 = vmatpush2.bf16.msra.mxu0 0
      %782 = vmatprep.subr.bf16.mxu0 0
      %783 = vmatpush2.bf16.msra.mxu0 0
      %784 = vmatprep.mubr.bf16.mxu0 0
      %785 = vmatmul.mubr.bf16.gmra.mxu0 %v741
      %v786 = vpop.f32.mrf.mxu0
      %v787 = vadd.f32 0.0, %v786
      %v788 = vpop.f32.mrf.mxu0
      %v789 = vpop.f32.mrf.mxu0
      %v790 = vadd.f32 0.0, %v789
      %v791 = vpop.f32.mrf.mxu0
      %792 = vmatprep.mubr.bf16.mxu0 0
      %793 = vmatmul.mubr.bf16.gmra.mxu0 %v744
      %v794 = vpop.f32.mrf.mxu0
      %v795 = vadd.f32 0.0, %v794
      %v796 = vpop.f32.mrf.mxu0
      %v797 = vpop.f32.mrf.mxu0
      %v798 = vadd.f32 0.0, %v797
      %v799 = vpop.f32.mrf.mxu0
      %800 = vmatprep.mubr.bf16.mxu0 0
      %801 = vmatmul.mubr.bf16.gmra.mxu0 %v747
      %v802 = vpop.f32.mrf.mxu0
      %v803 = vadd.f32 0.0, %v802
      %v804 = vpop.f32.mrf.mxu0
      %v805 = vpop.f32.mrf.mxu0
      %v806 = vadd.f32 0.0, %v805
      %v807 = vpop.f32.mrf.mxu0
      %808 = vmatprep.mubr.bf16.mxu0 0
      %809 = vmatmul.mubr.bf16.gmra.mxu0 %v750
      %v810 = vpop.f32.mrf.mxu0
      %v811 = vadd.f32 0.0, %v810
      %v812 = vpop.f32.mrf.mxu0
      %v813 = vpop.f32.mrf.mxu0
      %v814 = vadd.f32 0.0, %v813
      %v815 = vpop.f32.mrf.mxu0
      %816 = vdwg.mxu0
      %v817 = vadd.f32 %v703, %v787
      %v818 = vadd.f32 %v704, %v790
      %v819 = vadd.f32 %v705, %v795
      %v820 = vadd.f32 %v706, %v798
      %v821 = vadd.f32 %v707, %v803
      %v822 = vadd.f32 %v708, %v806
      %v823 = vadd.f32 %v709, %v811
      %v824 = vadd.f32 %v710, %v814
      %825 = vst.msk [vmem:[#allocation2] sm:$0xff] %vm282, %v817
      %826 = vst.msk [vmem:[#allocation2 + $0x8] sm:$0xff] %vm282, %v818
      %827 = vst.msk [vmem:[#allocation2 + $0x10] sm:$0xff] %vm282, %v819
      %828 = vst.msk [vmem:[#allocation2 + $0x18] sm:$0xff] %vm282, %v820
      %829 = vst.msk [vmem:[#allocation2 + $0x20] sm:$0xff] %vm282, %v821
      %830 = vst.msk [vmem:[#allocation2 + $0x28] sm:$0xff] %vm282, %v822
      %831 = vst.msk [vmem:[#allocation2 + $0x30] sm:$0xff] %vm282, %v823
      %832 = vst.msk [vmem:[#allocation2 + $0x38] sm:$0xff] %vm282, %v824
      %s833 = sadd.s32 %s281, 2
      %s834 = smul.u32 %s833, 2
      %s835 = smul.addr %s834, 4
      %s836 = scalar_lea.vmem %s257, %s835
      %v837 = vld [vmem:[%s836] sm:$0xf]
      %v838 = vld [vmem:[%s836 + $0x8] sm:$0xf]
      %v839 = vld [vmem:[%s836 + $0x10] sm:$0xf]
      %v840 = vld [vmem:[%s836 + $0x18] sm:$0xf]
      %v841 = vld [vmem:[%s836 + $0x20] sm:$0xf]
      %v842 = vld [vmem:[%s836 + $0x28] sm:$0xf]
      %v843 = vld [vmem:[%s836 + $0x30] sm:$0xf]
      %v844 = vld [vmem:[%s836 + $0x38] sm:$0xf]
      %v845 = vld [vmem:[#allocation2] sm:$0xff]
      %v846 = vld [vmem:[#allocation2 + $0x8] sm:$0xff]
      %v847 = vld [vmem:[#allocation2 + $0x10] sm:$0xff]
      %v848 = vld [vmem:[#allocation2 + $0x18] sm:$0xff]
      %v849 = vld [vmem:[#allocation2 + $0x20] sm:$0xff]
      %v850 = vld [vmem:[#allocation2 + $0x28] sm:$0xff]
      %v851 = vld [vmem:[#allocation2 + $0x30] sm:$0xff]
      %v852 = vld [vmem:[#allocation2 + $0x38] sm:$0xff]
      %s853 = scalar_lea.vmem %s261, 48
      %v854 = vld [vmem:[%s853] sm:$0xf]
      %v855 = vld [vmem:[%s853 + $0x4] sm:$0xf]
      %v856 = vld [vmem:[%s853 + $0x8] sm:$0xf]
      %v857 = vld [vmem:[%s853 + $0xc] sm:$0xf]
      %v866 = vunpack.c.l.b16 %v837
      %v867 = vunpack.c.l.b16 %v838
      %v868 = vunpack.c.l.b16 %v839
      %v869 = vunpack.c.l.b16 %v840
      %v870 = vunpack.c.l.b16 %v841
      %v871 = vunpack.c.l.b16 %v842
      %v872 = vunpack.c.l.b16 %v843
      %v873 = vunpack.c.l.b16 %v844
      %v874 = vpack.c.b16 %v867, %v866
      %v875 = vpack.c.b16 %v869, %v868
      %v876 = vpack.c.b16 %v871, %v870
      %v877 = vpack.c.b16 %v873, %v872
      %v882 = vunpack.c.l.b16 %v854
      %v883 = vunpack.c.l.b16 %v855
      %v884 = vunpack.c.l.b16 %v856
      %v885 = vunpack.c.l.b16 %v857
      %v886 = vpack.c.b16 %v883, %v882
      %v887 = vpack.c.b16 %v885, %v884
      %v891 = vsel %vm282, %v874, 0
      %v894 = vsel %vm282, %v875, 0
      %v897 = vsel %vm282, %v876, 0
      %v900 = vsel %vm282, %v877, 0
      %902 = vmatprep.subr.bf16.mxu0 0
      %903 = vmatpush1.bf16.msra.mxu0 0
      %904 = vmatprep.subr.bf16.mxu0 0
      %905 = vmatpush1.bf16.msra.mxu0 0
      %906 = vmatprep.subr.bf16.mxu0 0
      %907 = vmatpush1.bf16.msra.mxu0 0
      %908 = vmatprep.subr.bf16.mxu0 0
      %909 = vmatpush1.bf16.msra.mxu0 0
      %910 = vmatprep.subr.bf16.mxu0 0
      %911 = vmatpush1.bf16.msra.mxu0 0
      %912 = vmatprep.subr.bf16.mxu0 0
      %913 = vmatpush1.bf16.msra.mxu0 0
      %914 = vmatprep.subr.bf16.mxu0 0
      %915 = vmatpush1.bf16.msra.mxu0 %v887
      %916 = vmatprep.subr.bf16.mxu0 0
      %917 = vmatpush1.bf16.msra.mxu0 %v886
      %918 = vmatprep.subr.bf16.mxu0 0
      %919 = vmatpush2.bf16.msra.mxu0 0
      %920 = vmatprep.subr.bf16.mxu0 0
      %921 = vmatpush2.bf16.msra.mxu0 0
      %922 = vmatprep.subr.bf16.mxu0 0
      %923 = vmatpush2.bf16.msra.mxu0 0
      %924 = vmatprep.subr.bf16.mxu0 0
      %925 = vmatpush2.bf16.msra.mxu0 0
      %926 = vmatprep.subr.bf16.mxu0 0
      %927 = vmatpush2.bf16.msra.mxu0 0
      %928 = vmatprep.subr.bf16.mxu0 0
      %929 = vmatpush2.bf16.msra.mxu0 0
      %930 = vmatprep.subr.bf16.mxu0 0
      %931 = vmatpush2.bf16.msra.mxu0 0
      %932 = vmatprep.subr.bf16.mxu0 0
      %933 = vmatpush2.bf16.msra.mxu0 0
      %934 = vmatprep.mubr.bf16.mxu0 0
      %935 = vmatmul.mubr.bf16.gmra.mxu0 %v891
      %v936 = vpop.f32.mrf.mxu0
      %v937 = vadd.f32 0.0, %v936
      %v938 = vpop.f32.mrf.mxu0
      %v939 = vpop.f32.mrf.mxu0
      %v940 = vadd.f32 0.0, %v939
      %v941 = vpop.f32.mrf.mxu0
      %942 = vmatprep.mubr.bf16.mxu0 0
      %943 = vmatmul.mubr.bf16.gmra.mxu0 %v894
      %v944 = vpop.f32.mrf.mxu0
      %v945 = vadd.f32 0.0, %v944
      %v946 = vpop.f32.mrf.mxu0
      %v947 = vpop.f32.mrf.mxu0
      %v948 = vadd.f32 0.0, %v947
      %v949 = vpop.f32.mrf.mxu0
      %950 = vmatprep.mubr.bf16.mxu0 0
      %951 = vmatmul.mubr.bf16.gmra.mxu0 %v897
      %v952 = vpop.f32.mrf.mxu0
      %v953 = vadd.f32 0.0, %v952
      %v954 = vpop.f32.mrf.mxu0
      %v955 = vpop.f32.mrf.mxu0
      %v956 = vadd.f32 0.0, %v955
      %v957 = vpop.f32.mrf.mxu0
      %958 = vmatprep.mubr.bf16.mxu0 0
      %959 = vmatmul.mubr.bf16.gmra.mxu0 %v900
      %v960 = vpop.f32.mrf.mxu0
      %v961 = vadd.f32 0.0, %v960
      %v962 = vpop.f32.mrf.mxu0
      %v963 = vpop.f32.mrf.mxu0
      %v964 = vadd.f32 0.0, %v963
      %v965 = vpop.f32.mrf.mxu0
      %966 = vdwg.mxu0
      %v967 = vadd.f32 %v845, %v937
      %v968 = vadd.f32 %v846, %v940
      %v969 = vadd.f32 %v847, %v945
      %v970 = vadd.f32 %v848, %v948
      %v971 = vadd.f32 %v849, %v953
      %v972 = vadd.f32 %v850, %v956
      %v973 = vadd.f32 %v851, %v961
      %v974 = vadd.f32 %v852, %v964
      %975 = vst.msk [vmem:[#allocation2] sm:$0xff] %vm282, %v967
      %976 = vst.msk [vmem:[#allocation2 + $0x8] sm:$0xff] %vm282, %v968
      %977 = vst.msk [vmem:[#allocation2 + $0x10] sm:$0xff] %vm282, %v969
      %978 = vst.msk [vmem:[#allocation2 + $0x18] sm:$0xff] %vm282, %v970
      %979 = vst.msk [vmem:[#allocation2 + $0x20] sm:$0xff] %vm282, %v971
      %980 = vst.msk [vmem:[#allocation2 + $0x28] sm:$0xff] %vm282, %v972
      %981 = vst.msk [vmem:[#allocation2 + $0x30] sm:$0xff] %vm282, %v973
      %982 = vst.msk [vmem:[#allocation2 + $0x38] sm:$0xff] %vm282, %v974
      %v983 = vld [vmem:[%s836] sm:$0xe]
      %v984 = vld [vmem:[%s836 + $0x4] sm:$0x1]
      %v985 = vld [vmem:[%s836 + $0x8] sm:$0xe]
      %v986 = vld [vmem:[%s836 + $0xc] sm:$0x1]
      %v987 = vld [vmem:[%s836 + $0x10] sm:$0xe]
      %v988 = vld [vmem:[%s836 + $0x14] sm:$0x1]
      %v989 = vld [vmem:[%s836 + $0x18] sm:$0xe]
      %v990 = vld [vmem:[%s836 + $0x1c] sm:$0x1]
      %v991 = vld [vmem:[%s836 + $0x20] sm:$0xe]
      %v992 = vld [vmem:[%s836 + $0x24] sm:$0x1]
      %v993 = vld [vmem:[%s836 + $0x28] sm:$0xe]
      %v994 = vld [vmem:[%s836 + $0x2c] sm:$0x1]
      %v995 = vld [vmem:[%s836 + $0x30] sm:$0xe]
      %v996 = vld [vmem:[%s836 + $0x34] sm:$0x1]
      %v997 = vld [vmem:[%s836 + $0x38] sm:$0xe]
      %v998 = vld [vmem:[%s836 + $0x3c] sm:$0x1]
      %v1015 = vrot.slane %v983, 5
      %v1016 = vrot.slane %v1015, 4
      %v1017 = vrot.slane %v984, 5
      %v1018 = vsel %vm473, %v1016, %v1017
      %v1019 = vrot.slane %v985, 5
      %v1020 = vrot.slane %v1019, 4
      %v1021 = vrot.slane %v986, 5
      %v1022 = vsel %vm473, %v1020, %v1021
      %v1023 = vrot.slane %v987, 5
      %v1024 = vrot.slane %v1023, 4
      %v1025 = vrot.slane %v988, 5
      %v1026 = vsel %vm473, %v1024, %v1025
      %v1027 = vrot.slane %v989, 5
      %v1028 = vrot.slane %v1027, 4
      %v1029 = vrot.slane %v990, 5
      %v1030 = vsel %vm473, %v1028, %v1029
      %v1031 = vrot.slane %v991, 5
      %v1032 = vrot.slane %v1031, 4
      %v1033 = vrot.slane %v992, 5
      %v1034 = vsel %vm473, %v1032, %v1033
      %v1035 = vrot.slane %v993, 5
      %v1036 = vrot.slane %v1035, 4
      %v1037 = vrot.slane %v994, 5
      %v1038 = vsel %vm473, %v1036, %v1037
      %v1039 = vrot.slane %v995, 5
      %v1040 = vrot.slane %v1039, 4
      %v1041 = vrot.slane %v996, 5
      %v1042 = vsel %vm473, %v1040, %v1041
      %v1043 = vrot.slane %v997, 5
      %v1044 = vrot.slane %v1043, 4
      %v1045 = vrot.slane %v998, 5
      %v1046 = vsel %vm473, %v1044, %v1045
      %v1047 = vld [vmem:[#allocation2] sm:$0xff]
      %v1048 = vld [vmem:[#allocation2 + $0x8] sm:$0xff]
      %v1049 = vld [vmem:[#allocation2 + $0x10] sm:$0xff]
      %v1050 = vld [vmem:[#allocation2 + $0x18] sm:$0xff]
      %v1051 = vld [vmem:[#allocation2 + $0x20] sm:$0xff]
      %v1052 = vld [vmem:[#allocation2 + $0x28] sm:$0xff]
      %v1053 = vld [vmem:[#allocation2 + $0x30] sm:$0xff]
      %v1054 = vld [vmem:[#allocation2 + $0x38] sm:$0xff]
      %s1055 = scalar_lea.vmem %s261, 64
      %v1056 = vld [vmem:[%s1055] sm:$0xf]
      %v1057 = vld [vmem:[%s1055 + $0x4] sm:$0xf]
      %v1058 = vld [vmem:[%s1055 + $0x8] sm:$0xf]
      %v1059 = vld [vmem:[%s1055 + $0xc] sm:$0xf]
      %v1060 = vunpack.c.l.b16 %v1018
      %v1061 = vunpack.c.l.b16 %v1022
      %v1062 = vunpack.c.l.b16 %v1026
      %v1063 = vunpack.c.l.b16 %v1030
      %v1064 = vunpack.c.l.b16 %v1034
      %v1065 = vunpack.c.l.b16 %v1038
      %v1066 = vunpack.c.l.b16 %v1042
      %v1067 = vunpack.c.l.b16 %v1046
      %v1068 = vpack.c.b16 %v1061, %v1060
      %v1069 = vpack.c.b16 %v1063, %v1062
      %v1070 = vpack.c.b16 %v1065, %v1064
      %v1071 = vpack.c.b16 %v1067, %v1066
      %v1076 = vunpack.c.l.b16 %v1056
      %v1077 = vunpack.c.l.b16 %v1057
      %v1078 = vunpack.c.l.b16 %v1058
      %v1079 = vunpack.c.l.b16 %v1059
      %v1080 = vpack.c.b16 %v1077, %v1076
      %v1081 = vpack.c.b16 %v1079, %v1078
      %v1085 = vsel %vm282, %v1068, 0
      %v1088 = vsel %vm282, %v1069, 0
      %v1091 = vsel %vm282, %v1070, 0
      %v1094 = vsel %vm282, %v1071, 0
      %1096 = vmatprep.subr.bf16.mxu0 0
      %1097 = vmatpush1.bf16.msra.mxu0 0
      %1098 = vmatprep.subr.bf16.mxu0 0
      %1099 = vmatpush1.bf16.msra.mxu0 0
      %1100 = vmatprep.subr.bf16.mxu0 0
      %1101 = vmatpush1.bf16.msra.mxu0 0
      %1102 = vmatprep.subr.bf16.mxu0 0
      %1103 = vmatpush1.bf16.msra.mxu0 0
      %1104 = vmatprep.subr.bf16.mxu0 0
      %1105 = vmatpush1.bf16.msra.mxu0 0
      %1106 = vmatprep.subr.bf16.mxu0 0
      %1107 = vmatpush1.bf16.msra.mxu0 0
      %1108 = vmatprep.subr.bf16.mxu0 0
      %1109 = vmatpush1.bf16.msra.mxu0 %v1081
      %1110 = vmatprep.subr.bf16.mxu0 0
      %1111 = vmatpush1.bf16.msra.mxu0 %v1080
      %1112 = vmatprep.subr.bf16.mxu0 0
      %1113 = vmatpush2.bf16.msra.mxu0 0
      %1114 = vmatprep.subr.bf16.mxu0 0
      %1115 = vmatpush2.bf16.msra.mxu0 0
      %1116 = vmatprep.subr.bf16.mxu0 0
      %1117 = vmatpush2.bf16.msra.mxu0 0
      %1118 = vmatprep.subr.bf16.mxu0 0
      %1119 = vmatpush2.bf16.msra.mxu0 0
      %1120 = vmatprep.subr.bf16.mxu0 0
      %1121 = vmatpush2.bf16.msra.mxu0 0
      %1122 = vmatprep.subr.bf16.mxu0 0
      %1123 = vmatpush2.bf16.msra.mxu0 0
      %1124 = vmatprep.subr.bf16.mxu0 0
      %1125 = vmatpush2.bf16.msra.mxu0 0
      %1126 = vmatprep.subr.bf16.mxu0 0
      %1127 = vmatpush2.bf16.msra.mxu0 0
      %1128 = vmatprep.mubr.bf16.mxu0 0
      %1129 = vmatmul.mubr.bf16.gmra.mxu0 %v1085
      %v1130 = vpop.f32.mrf.mxu0
      %v1131 = vadd.f32 0.0, %v1130
      %v1132 = vpop.f32.mrf.mxu0
      %v1133 = vpop.f32.mrf.mxu0
      %v1134 = vadd.f32 0.0, %v1133
      %v1135 = vpop.f32.mrf.mxu0
      %1136 = vmatprep.mubr.bf16.mxu0 0
      %1137 = vmatmul.mubr.bf16.gmra.mxu0 %v1088
      %v1138 = vpop.f32.mrf.mxu0
      %v1139 = vadd.f32 0.0, %v1138
      %v1140 = vpop.f32.mrf.mxu0
      %v1141 = vpop.f32.mrf.mxu0
      %v1142 = vadd.f32 0.0, %v1141
      %v1143 = vpop.f32.mrf.mxu0
      %1144 = vmatprep.mubr.bf16.mxu0 0
      %1145 = vmatmul.mubr.bf16.gmra.mxu0 %v1091
      %v1146 = vpop.f32.mrf.mxu0
      %v1147 = vadd.f32 0.0, %v1146
      %v1148 = vpop.f32.mrf.mxu0
      %v1149 = vpop.f32.mrf.mxu0
      %v1150 = vadd.f32 0.0, %v1149
      %v1151 = vpop.f32.mrf.mxu0
      %1152 = vmatprep.mubr.bf16.mxu0 0
      %1153 = vmatmul.mubr.bf16.gmra.mxu0 %v1094
      %v1154 = vpop.f32.mrf.mxu0
      %v1155 = vadd.f32 0.0, %v1154
      %v1156 = vpop.f32.mrf.mxu0
      %v1157 = vpop.f32.mrf.mxu0
      %v1158 = vadd.f32 0.0, %v1157
      %v1159 = vpop.f32.mrf.mxu0
      %1160 = vdwg.mxu0
      %v1161 = vadd.f32 %v1047, %v1131
      %v1162 = vadd.f32 %v1048, %v1134
      %v1163 = vadd.f32 %v1049, %v1139
      %v1164 = vadd.f32 %v1050, %v1142
      %v1165 = vadd.f32 %v1051, %v1147
      %v1166 = vadd.f32 %v1052, %v1150
      %v1167 = vadd.f32 %v1053, %v1155
      %v1168 = vadd.f32 %v1054, %v1158
      %1169 = vst.msk [vmem:[#allocation2] sm:$0xff] %vm282, %v1161
      %1170 = vst.msk [vmem:[#allocation2 + $0x8] sm:$0xff] %vm282, %v1162
      %1171 = vst.msk [vmem:[#allocation2 + $0x10] sm:$0xff] %vm282, %v1163
      %1172 = vst.msk [vmem:[#allocation2 + $0x18] sm:$0xff] %vm282, %v1164
      %1173 = vst.msk [vmem:[#allocation2 + $0x20] sm:$0xff] %vm282, %v1165
      %1174 = vst.msk [vmem:[#allocation2 + $0x28] sm:$0xff] %vm282, %v1166
      %1175 = vst.msk [vmem:[#allocation2 + $0x30] sm:$0xff] %vm282, %v1167
      %1176 = vst.msk [vmem:[#allocation2 + $0x38] sm:$0xff] %vm282, %v1168
      %v1177 = vld [vmem:[%s836] sm:$0xc]
      %v1178 = vld [vmem:[%s836 + $0x4] sm:$0x3]
      %v1179 = vld [vmem:[%s836 + $0x8] sm:$0xc]
      %v1180 = vld [vmem:[%s836 + $0xc] sm:$0x3]
      %v1181 = vld [vmem:[%s836 + $0x10] sm:$0xc]
      %v1182 = vld [vmem:[%s836 + $0x14] sm:$0x3]
      %v1183 = vld [vmem:[%s836 + $0x18] sm:$0xc]
      %v1184 = vld [vmem:[%s836 + $0x1c] sm:$0x3]
      %v1185 = vld [vmem:[%s836 + $0x20] sm:$0xc]
      %v1186 = vld [vmem:[%s836 + $0x24] sm:$0x3]
      %v1187 = vld [vmem:[%s836 + $0x28] sm:$0xc]
      %v1188 = vld [vmem:[%s836 + $0x2c] sm:$0x3]
      %v1189 = vld [vmem:[%s836 + $0x30] sm:$0xc]
      %v1190 = vld [vmem:[%s836 + $0x34] sm:$0x3]
      %v1191 = vld [vmem:[%s836 + $0x38] sm:$0xc]
      %v1192 = vld [vmem:[%s836 + $0x3c] sm:$0x3]
      %v1209 = vrot.slane %v1177, 6
      %v1210 = vrot.slane %v1209, 4
      %v1211 = vrot.slane %v1178, 6
      %v1212 = vsel %vm670, %v1210, %v1211
      %v1213 = vrot.slane %v1179, 6
      %v1214 = vrot.slane %v1213, 4
      %v1215 = vrot.slane %v1180, 6
      %v1216 = vsel %vm670, %v1214, %v1215
      %v1217 = vrot.slane %v1181, 6
      %v1218 = vrot.slane %v1217, 4
      %v1219 = vrot.slane %v1182, 6
      %v1220 = vsel %vm670, %v1218, %v1219
      %v1221 = vrot.slane %v1183, 6
      %v1222 = vrot.slane %v1221, 4
      %v1223 = vrot.slane %v1184, 6
      %v1224 = vsel %vm670, %v1222, %v1223
      %v1225 = vrot.slane %v1185, 6
      %v1226 = vrot.slane %v1225, 4
      %v1227 = vrot.slane %v1186, 6
      %v1228 = vsel %vm670, %v1226, %v1227
      %v1229 = vrot.slane %v1187, 6
      %v1230 = vrot.slane %v1229, 4
      %v1231 = vrot.slane %v1188, 6
      %v1232 = vsel %vm670, %v1230, %v1231
      %v1233 = vrot.slane %v1189, 6
      %v1234 = vrot.slane %v1233, 4
      %v1235 = vrot.slane %v1190, 6
      %v1236 = vsel %vm670, %v1234, %v1235
      %v1237 = vrot.slane %v1191, 6
      %v1238 = vrot.slane %v1237, 4
      %v1239 = vrot.slane %v1192, 6
      %v1240 = vsel %vm670, %v1238, %v1239
      %v1241 = vld [vmem:[#allocation2] sm:$0xff]
      %v1242 = vld [vmem:[#allocation2 + $0x8] sm:$0xff]
      %v1243 = vld [vmem:[#allocation2 + $0x10] sm:$0xff]
      %v1244 = vld [vmem:[#allocation2 + $0x18] sm:$0xff]
      %v1245 = vld [vmem:[#allocation2 + $0x20] sm:$0xff]
      %v1246 = vld [vmem:[#allocation2 + $0x28] sm:$0xff]
      %v1247 = vld [vmem:[#allocation2 + $0x30] sm:$0xff]
      %v1248 = vld [vmem:[#allocation2 + $0x38] sm:$0xff]
      %s1249 = scalar_lea.vmem %s261, 80
      %v1250 = vld [vmem:[%s1249] sm:$0xf]
      %v1251 = vld [vmem:[%s1249 + $0x4] sm:$0xf]
      %v1252 = vld [vmem:[%s1249 + $0x8] sm:$0xf]
      %v1253 = vld [vmem:[%s1249 + $0xc] sm:$0xf]
      %v1254 = vunpack.c.l.b16 %v1212
      %v1255 = vunpack.c.l.b16 %v1216
      %v1256 = vunpack.c.l.b16 %v1220
      %v1257 = vunpack.c.l.b16 %v1224
      %v1258 = vunpack.c.l.b16 %v1228
      %v1259 = vunpack.c.l.b16 %v1232
      %v1260 = vunpack.c.l.b16 %v1236
      %v1261 = vunpack.c.l.b16 %v1240
      %v1262 = vpack.c.b16 %v1255, %v1254
      %v1263 = vpack.c.b16 %v1257, %v1256
      %v1264 = vpack.c.b16 %v1259, %v1258
      %v1265 = vpack.c.b16 %v1261, %v1260
      %v1270 = vunpack.c.l.b16 %v1250
      %v1271 = vunpack.c.l.b16 %v1251
      %v1272 = vunpack.c.l.b16 %v1252
      %v1273 = vunpack.c.l.b16 %v1253
      %v1274 = vpack.c.b16 %v1271, %v1270
      %v1275 = vpack.c.b16 %v1273, %v1272
      %v1279 = vsel %vm282, %v1262, 0
      %v1282 = vsel %vm282, %v1263, 0
      %v1285 = vsel %vm282, %v1264, 0
      %v1288 = vsel %vm282, %v1265, 0
      %1290 = vmatprep.subr.bf16.mxu0 0
      %1291 = vmatpush1.bf16.msra.mxu0 0
      %1292 = vmatprep.subr.bf16.mxu0 0
      %1293 = vmatpush1.bf16.msra.mxu0 0
      %1294 = vmatprep.subr.bf16.mxu0 0
      %1295 = vmatpush1.bf16.msra.mxu0 0
      %1296 = vmatprep.subr.bf16.mxu0 0
      %1297 = vmatpush1.bf16.msra.mxu0 0
      %1298 = vmatprep.subr.bf16.mxu0 0
      %1299 = vmatpush1.bf16.msra.mxu0 0
      %1300 = vmatprep.subr.bf16.mxu0 0
      %1301 = vmatpush1.bf16.msra.mxu0 0
      %1302 = vmatprep.subr.bf16.mxu0 0
      %1303 = vmatpush1.bf16.msra.mxu0 %v1275
      %1304 = vmatprep.subr.bf16.mxu0 0
      %1305 = vmatpush1.bf16.msra.mxu0 %v1274
      %1306 = vmatprep.subr.bf16.mxu0 0
      %1307 = vmatpush2.bf16.msra.mxu0 0
      %1308 = vmatprep.subr.bf16.mxu0 0
      %1309 = vmatpush2.bf16.msra.mxu0 0
      %1310 = vmatprep.subr.bf16.mxu0 0
      %1311 = vmatpush2.bf16.msra.mxu0 0
      %1312 = vmatprep.subr.bf16.mxu0 0
      %1313 = vmatpush2.bf16.msra.mxu0 0
      %1314 = vmatprep.subr.bf16.mxu0 0
      %1315 = vmatpush2.bf16.msra.mxu0 0
      %1316 = vmatprep.subr.bf16.mxu0 0
      %1317 = vmatpush2.bf16.msra.mxu0 0
      %1318 = vmatprep.subr.bf16.mxu0 0
      %1319 = vmatpush2.bf16.msra.mxu0 0
      %1320 = vmatprep.subr.bf16.mxu0 0
      %1321 = vmatpush2.bf16.msra.mxu0 0
      %1322 = vmatprep.mubr.bf16.mxu0 0
      %1323 = vmatmul.mubr.bf16.gmra.mxu0 %v1279
      %v1324 = vpop.f32.mrf.mxu0
      %v1325 = vadd.f32 0.0, %v1324
      %v1326 = vpop.f32.mrf.mxu0
      %v1327 = vpop.f32.mrf.mxu0
      %v1328 = vadd.f32 0.0, %v1327
      %v1329 = vpop.f32.mrf.mxu0
      %1330 = vmatprep.mubr.bf16.mxu0 0
      %1331 = vmatmul.mubr.bf16.gmra.mxu0 %v1282
      %v1332 = vpop.f32.mrf.mxu0
      %v1333 = vadd.f32 0.0, %v1332
      %v1334 = vpop.f32.mrf.mxu0
      %v1335 = vpop.f32.mrf.mxu0
      %v1336 = vadd.f32 0.0, %v1335
      %v1337 = vpop.f32.mrf.mxu0
      %1338 = vmatprep.mubr.bf16.mxu0 0
      %1339 = vmatmul.mubr.bf16.gmra.mxu0 %v1285
      %v1340 = vpop.f32.mrf.mxu0
      %v1341 = vadd.f32 0.0, %v1340
      %v1342 = vpop.f32.mrf.mxu0
      %v1343 = vpop.f32.mrf.mxu0
      %v1344 = vadd.f32 0.0, %v1343
      %v1345 = vpop.f32.mrf.mxu0
      %1346 = vmatprep.mubr.bf16.mxu0 0
      %1347 = vmatmul.mubr.bf16.gmra.mxu0 %v1288
      %v1348 = vpop.f32.mrf.mxu0
      %v1349 = vadd.f32 0.0, %v1348
      %v1350 = vpop.f32.mrf.mxu0
      %v1351 = vpop.f32.mrf.mxu0
      %v1352 = vadd.f32 0.0, %v1351
      %v1353 = vpop.f32.mrf.mxu0
      %1354 = vdwg.mxu0
      %v1355 = vadd.f32 %v1241, %v1325
      %v1356 = vadd.f32 %v1242, %v1328
      %v1357 = vadd.f32 %v1243, %v1333
      %v1358 = vadd.f32 %v1244, %v1336
      %v1359 = vadd.f32 %v1245, %v1341
      %v1360 = vadd.f32 %v1246, %v1344
      %v1361 = vadd.f32 %v1247, %v1349
      %v1362 = vadd.f32 %v1248, %v1352
      %1363 = vst.msk [vmem:[#allocation2] sm:$0xff] %vm282, %v1355
      %1364 = vst.msk [vmem:[#allocation2 + $0x8] sm:$0xff] %vm282, %v1356
      %1365 = vst.msk [vmem:[#allocation2 + $0x10] sm:$0xff] %vm282, %v1357
      %1366 = vst.msk [vmem:[#allocation2 + $0x18] sm:$0xff] %vm282, %v1358
      %1367 = vst.msk [vmem:[#allocation2 + $0x20] sm:$0xff] %vm282, %v1359
      %1368 = vst.msk [vmem:[#allocation2 + $0x28] sm:$0xff] %vm282, %v1360
      %1369 = vst.msk [vmem:[#allocation2 + $0x30] sm:$0xff] %vm282, %v1361
      %1370 = vst.msk [vmem:[#allocation2 + $0x38] sm:$0xff] %vm282, %v1362
      %s1371 = sadd.s32 %s281, 4
      %s1372 = smul.u32 %s1371, 2
      %s1373 = smul.addr %s1372, 4
      %s1374 = scalar_lea.vmem %s257, %s1373
      %v1375 = vld [vmem:[%s1374] sm:$0xf]
      %v1376 = vld [vmem:[%s1374 + $0x8] sm:$0xf]
      %v1377 = vld [vmem:[%s1374 + $0x10] sm:$0xf]
      %v1378 = vld [vmem:[%s1374 + $0x18] sm:$0xf]
      %v1379 = vld [vmem:[%s1374 + $0x20] sm:$0xf]
      %v1380 = vld [vmem:[%s1374 + $0x28] sm:$0xf]
      %v1381 = vld [vmem:[%s1374 + $0x30] sm:$0xf]
      %v1382 = vld [vmem:[%s1374 + $0x38] sm:$0xf]
      %v1383 = vld [vmem:[#allocation2] sm:$0xff]
      %v1384 = vld [vmem:[#allocation2 + $0x8] sm:$0xff]
      %v1385 = vld [vmem:[#allocation2 + $0x10] sm:$0xff]
      %v1386 = vld [vmem:[#allocation2 + $0x18] sm:$0xff]
      %v1387 = vld [vmem:[#allocation2 + $0x20] sm:$0xff]
      %v1388 = vld [vmem:[#allocation2 + $0x28] sm:$0xff]
      %v1389 = vld [vmem:[#allocation2 + $0x30] sm:$0xff]
      %v1390 = vld [vmem:[#allocation2 + $0x38] sm:$0xff]
      %s1391 = scalar_lea.vmem %s261, 96
      %v1392 = vld [vmem:[%s1391] sm:$0xf]
      %v1393 = vld [vmem:[%s1391 + $0x4] sm:$0xf]
      %v1394 = vld [vmem:[%s1391 + $0x8] sm:$0xf]
      %v1395 = vld [vmem:[%s1391 + $0xc] sm:$0xf]
      %v1404 = vunpack.c.l.b16 %v1375
      %v1405 = vunpack.c.l.b16 %v1376
      %v1406 = vunpack.c.l.b16 %v1377
      %v1407 = vunpack.c.l.b16 %v1378
      %v1408 = vunpack.c.l.b16 %v1379
      %v1409 = vunpack.c.l.b16 %v1380
      %v1410 = vunpack.c.l.b16 %v1381
      %v1411 = vunpack.c.l.b16 %v1382
      %v1412 = vpack.c.b16 %v1405, %v1404
      %v1413 = vpack.c.b16 %v1407, %v1406
      %v1414 = vpack.c.b16 %v1409, %v1408
      %v1415 = vpack.c.b16 %v1411, %v1410
      %v1420 = vunpack.c.l.b16 %v1392
      %v1421 = vunpack.c.l.b16 %v1393
      %v1422 = vunpack.c.l.b16 %v1394
      %v1423 = vunpack.c.l.b16 %v1395
      %v1424 = vpack.c.b16 %v1421, %v1420
      %v1425 = vpack.c.b16 %v1423, %v1422
      %v1429 = vsel %vm282, %v1412, 0
      %v1432 = vsel %vm282, %v1413, 0
      %v1435 = vsel %vm282, %v1414, 0
      %v1438 = vsel %vm282, %v1415, 0
      %1440 = vmatprep.subr.bf16.mxu0 0
      %1441 = vmatpush1.bf16.msra.mxu0 0
      %1442 = vmatprep.subr.bf16.mxu0 0
      %1443 = vmatpush1.bf16.msra.mxu0 0
      %1444 = vmatprep.subr.bf16.mxu0 0
      %1445 = vmatpush1.bf16.msra.mxu0 0
      %1446 = vmatprep.subr.bf16.mxu0 0
      %1447 = vmatpush1.bf16.msra.mxu0 0
      %1448 = vmatprep.subr.bf16.mxu0 0
      %1449 = vmatpush1.bf16.msra.mxu0 0
      %1450 = vmatprep.subr.bf16.mxu0 0
      %1451 = vmatpush1.bf16.msra.mxu0 0
      %1452 = vmatprep.subr.bf16.mxu0 0
      %1453 = vmatpush1.bf16.msra.mxu0 %v1425
      %1454 = vmatprep.subr.bf16.mxu0 0
      %1455 = vmatpush1.bf16.msra.mxu0 %v1424
      %1456 = vmatprep.subr.bf16.mxu0 0
      %1457 = vmatpush2.bf16.msra.mxu0 0
      %1458 = vmatprep.subr.bf16.mxu0 0
      %1459 = vmatpush2.bf16.msra.mxu0 0
      %1460 = vmatprep.subr.bf16.mxu0 0
      %1461 = vmatpush2.bf16.msra.mxu0 0
      %1462 = vmatprep.subr.bf16.mxu0 0
      %1463 = vmatpush2.bf16.msra.mxu0 0
      %1464 = vmatprep.subr.bf16.mxu0 0
      %1465 = vmatpush2.bf16.msra.mxu0 0
      %1466 = vmatprep.subr.bf16.mxu0 0
      %1467 = vmatpush2.bf16.msra.mxu0 0
      %1468 = vmatprep.subr.bf16.mxu0 0
      %1469 = vmatpush2.bf16.msra.mxu0 0
      %1470 = vmatprep.subr.bf16.mxu0 0
      %1471 = vmatpush2.bf16.msra.mxu0 0
      %1472 = vmatprep.mubr.bf16.mxu0 0
      %1473 = vmatmul.mubr.bf16.gmra.mxu0 %v1429
      %v1474 = vpop.f32.mrf.mxu0
      %v1475 = vadd.f32 0.0, %v1474
      %v1476 = vpop.f32.mrf.mxu0
      %v1477 = vpop.f32.mrf.mxu0
      %v1478 = vadd.f32 0.0, %v1477
      %v1479 = vpop.f32.mrf.mxu0
      %1480 = vmatprep.mubr.bf16.mxu0 0
      %1481 = vmatmul.mubr.bf16.gmra.mxu0 %v1432
      %v1482 = vpop.f32.mrf.mxu0
      %v1483 = vadd.f32 0.0, %v1482
      %v1484 = vpop.f32.mrf.mxu0
      %v1485 = vpop.f32.mrf.mxu0
      %v1486 = vadd.f32 0.0, %v1485
      %v1487 = vpop.f32.mrf.mxu0
      %1488 = vmatprep.mubr.bf16.mxu0 0
      %1489 = vmatmul.mubr.bf16.gmra.mxu0 %v1435
      %v1490 = vpop.f32.mrf.mxu0
      %v1491 = vadd.f32 0.0, %v1490
      %v1492 = vpop.f32.mrf.mxu0
      %v1493 = vpop.f32.mrf.mxu0
      %v1494 = vadd.f32 0.0, %v1493
      %v1495 = vpop.f32.mrf.mxu0
      %1496 = vmatprep.mubr.bf16.mxu0 0
      %1497 = vmatmul.mubr.bf16.gmra.mxu0 %v1438
      %v1498 = vpop.f32.mrf.mxu0
      %v1499 = vadd.f32 0.0, %v1498
      %v1500 = vpop.f32.mrf.mxu0
      %v1501 = vpop.f32.mrf.mxu0
      %v1502 = vadd.f32 0.0, %v1501
      %v1503 = vpop.f32.mrf.mxu0
      %1504 = vdwg.mxu0
      %v1505 = vadd.f32 %v1383, %v1475
      %v1506 = vadd.f32 %v1384, %v1478
      %v1507 = vadd.f32 %v1385, %v1483
      %v1508 = vadd.f32 %v1386, %v1486
      %v1509 = vadd.f32 %v1387, %v1491
      %v1510 = vadd.f32 %v1388, %v1494
      %v1511 = vadd.f32 %v1389, %v1499
      %v1512 = vadd.f32 %v1390, %v1502
      %1513 = vst.msk [vmem:[#allocation2] sm:$0xff] %vm282, %v1505
      %1514 = vst.msk [vmem:[#allocation2 + $0x8] sm:$0xff] %vm282, %v1506
      %1515 = vst.msk [vmem:[#allocation2 + $0x10] sm:$0xff] %vm282, %v1507
      %1516 = vst.msk [vmem:[#allocation2 + $0x18] sm:$0xff] %vm282, %v1508
      %1517 = vst.msk [vmem:[#allocation2 + $0x20] sm:$0xff] %vm282, %v1509
      %1518 = vst.msk [vmem:[#allocation2 + $0x28] sm:$0xff] %vm282, %v1510
      %1519 = vst.msk [vmem:[#allocation2 + $0x30] sm:$0xff] %vm282, %v1511
      %1520 = vst.msk [vmem:[#allocation2 + $0x38] sm:$0xff] %vm282, %v1512
      %v1521 = vld [vmem:[%s1374] sm:$0xe]
      %v1522 = vld [vmem:[%s1374 + $0x4] sm:$0x1]
      %v1523 = vld [vmem:[%s1374 + $0x8] sm:$0xe]
      %v1524 = vld [vmem:[%s1374 + $0xc] sm:$0x1]
      %v1525 = vld [vmem:[%s1374 + $0x10] sm:$0xe]
      %v1526 = vld [vmem:[%s1374 + $0x14] sm:$0x1]
      %v1527 = vld [vmem:[%s1374 + $0x18] sm:$0xe]
      %v1528 = vld [vmem:[%s1374 + $0x1c] sm:$0x1]
      %v1529 = vld [vmem:[%s1374 + $0x20] sm:$0xe]
      %v1530 = vld [vmem:[%s1374 + $0x24] sm:$0x1]
      %v1531 = vld [vmem:[%s1374 + $0x28] sm:$0xe]
      %v1532 = vld [vmem:[%s1374 + $0x2c] sm:$0x1]
      %v1533 = vld [vmem:[%s1374 + $0x30] sm:$0xe]
      %v1534 = vld [vmem:[%s1374 + $0x34] sm:$0x1]
      %v1535 = vld [vmem:[%s1374 + $0x38] sm:$0xe]
      %v1536 = vld [vmem:[%s1374 + $0x3c] sm:$0x1]
      %v1553 = vrot.slane %v1521, 5
      %v1554 = vrot.slane %v1553, 4
      %v1555 = vrot.slane %v1522, 5
      %v1556 = vsel %vm473, %v1554, %v1555
      %v1557 = vrot.slane %v1523, 5
      %v1558 = vrot.slane %v1557, 4
      %v1559 = vrot.slane %v1524, 5
      %v1560 = vsel %vm473, %v1558, %v1559
      %v1561 = vrot.slane %v1525, 5
      %v1562 = vrot.slane %v1561, 4
      %v1563 = vrot.slane %v1526, 5
      %v1564 = vsel %vm473, %v1562, %v1563
      %v1565 = vrot.slane %v1527, 5
      %v1566 = vrot.slane %v1565, 4
      %v1567 = vrot.slane %v1528, 5
      %v1568 = vsel %vm473, %v1566, %v1567
      %v1569 = vrot.slane %v1529, 5
      %v1570 = vrot.slane %v1569, 4
      %v1571 = vrot.slane %v1530, 5
      %v1572 = vsel %vm473, %v1570, %v1571
      %v1573 = vrot.slane %v1531, 5
      %v1574 = vrot.slane %v1573, 4
      %v1575 = vrot.slane %v1532, 5
      %v1576 = vsel %vm473, %v1574, %v1575
      %v1577 = vrot.slane %v1533, 5
      %v1578 = vrot.slane %v1577, 4
      %v1579 = vrot.slane %v1534, 5
      %v1580 = vsel %vm473, %v1578, %v1579
      %v1581 = vrot.slane %v1535, 5
      %v1582 = vrot.slane %v1581, 4
      %v1583 = vrot.slane %v1536, 5
      %v1584 = vsel %vm473, %v1582, %v1583
      %v1585 = vld [vmem:[#allocation2] sm:$0xff]
      %v1586 = vld [vmem:[#allocation2 + $0x8] sm:$0xff]
      %v1587 = vld [vmem:[#allocation2 + $0x10] sm:$0xff]
      %v1588 = vld [vmem:[#allocation2 + $0x18] sm:$0xff]
      %v1589 = vld [vmem:[#allocation2 + $0x20] sm:$0xff]
      %v1590 = vld [vmem:[#allocation2 + $0x28] sm:$0xff]
      %v1591 = vld [vmem:[#allocation2 + $0x30] sm:$0xff]
      %v1592 = vld [vmem:[#allocation2 + $0x38] sm:$0xff]
      %s1593 = scalar_lea.vmem %s261, 112
      %v1594 = vld [vmem:[%s1593] sm:$0xf]
      %v1595 = vld [vmem:[%s1593 + $0x4] sm:$0xf]
      %v1596 = vld [vmem:[%s1593 + $0x8] sm:$0xf]
      %v1597 = vld [vmem:[%s1593 + $0xc] sm:$0xf]
      %v1598 = vunpack.c.l.b16 %v1556
      %v1599 = vunpack.c.l.b16 %v1560
      %v1600 = vunpack.c.l.b16 %v1564
      %v1601 = vunpack.c.l.b16 %v1568
      %v1602 = vunpack.c.l.b16 %v1572
      %v1603 = vunpack.c.l.b16 %v1576
      %v1604 = vunpack.c.l.b16 %v1580
      %v1605 = vunpack.c.l.b16 %v1584
      %v1606 = vpack.c.b16 %v1599, %v1598
      %v1607 = vpack.c.b16 %v1601, %v1600
      %v1608 = vpack.c.b16 %v1603, %v1602
      %v1609 = vpack.c.b16 %v1605, %v1604
      %v1614 = vunpack.c.l.b16 %v1594
      %v1615 = vunpack.c.l.b16 %v1595
      %v1616 = vunpack.c.l.b16 %v1596
      %v1617 = vunpack.c.l.b16 %v1597
      %v1618 = vpack.c.b16 %v1615, %v1614
      %v1619 = vpack.c.b16 %v1617, %v1616
      %v1623 = vsel %vm282, %v1606, 0
      %v1626 = vsel %vm282, %v1607, 0
      %v1629 = vsel %vm282, %v1608, 0
      %v1632 = vsel %vm282, %v1609, 0
      %1634 = vmatprep.subr.bf16.mxu0 0
      %1635 = vmatpush1.bf16.msra.mxu0 0
      %1636 = vmatprep.subr.bf16.mxu0 0
      %1637 = vmatpush1.bf16.msra.mxu0 0
      %1638 = vmatprep.subr.bf16.mxu0 0
      %1639 = vmatpush1.bf16.msra.mxu0 0
      %1640 = vmatprep.subr.bf16.mxu0 0
      %1641 = vmatpush1.bf16.msra.mxu0 0
      %1642 = vmatprep.subr.bf16.mxu0 0
      %1643 = vmatpush1.bf16.msra.mxu0 0
      %1644 = vmatprep.subr.bf16.mxu0 0
      %1645 = vmatpush1.bf16.msra.mxu0 0
      %1646 = vmatprep.subr.bf16.mxu0 0
      %1647 = vmatpush1.bf16.msra.mxu0 %v1619
      %1648 = vmatprep.subr.bf16.mxu0 0
      %1649 = vmatpush1.bf16.msra.mxu0 %v1618
      %1650 = vmatprep.subr.bf16.mxu0 0
      %1651 = vmatpush2.bf16.msra.mxu0 0
      %1652 = vmatprep.subr.bf16.mxu0 0
      %1653 = vmatpush2.bf16.msra.mxu0 0
      %1654 = vmatprep.subr.bf16.mxu0 0
      %1655 = vmatpush2.bf16.msra.mxu0 0
      %1656 = vmatprep.subr.bf16.mxu0 0
      %1657 = vmatpush2.bf16.msra.mxu0 0
      %1658 = vmatprep.subr.bf16.mxu0 0
      %1659 = vmatpush2.bf16.msra.mxu0 0
      %1660 = vmatprep.subr.bf16.mxu0 0
      %1661 = vmatpush2.bf16.msra.mxu0 0
      %1662 = vmatprep.subr.bf16.mxu0 0
      %1663 = vmatpush2.bf16.msra.mxu0 0
      %1664 = vmatprep.subr.bf16.mxu0 0
      %1665 = vmatpush2.bf16.msra.mxu0 0
      %1666 = vmatprep.mubr.bf16.mxu0 0
      %1667 = vmatmul.mubr.bf16.gmra.mxu0 %v1623
      %v1668 = vpop.f32.mrf.mxu0
      %v1669 = vadd.f32 0.0, %v1668
      %v1670 = vpop.f32.mrf.mxu0
      %v1671 = vpop.f32.mrf.mxu0
      %v1672 = vadd.f32 0.0, %v1671
      %v1673 = vpop.f32.mrf.mxu0
      %1674 = vmatprep.mubr.bf16.mxu0 0
      %1675 = vmatmul.mubr.bf16.gmra.mxu0 %v1626
      %v1676 = vpop.f32.mrf.mxu0
      %v1677 = vadd.f32 0.0, %v1676
      %v1678 = vpop.f32.mrf.mxu0
      %v1679 = vpop.f32.mrf.mxu0
      %v1680 = vadd.f32 0.0, %v1679
      %v1681 = vpop.f32.mrf.mxu0
      %1682 = vmatprep.mubr.bf16.mxu0 0
      %1683 = vmatmul.mubr.bf16.gmra.mxu0 %v1629
      %v1684 = vpop.f32.mrf.mxu0
      %v1685 = vadd.f32 0.0, %v1684
      %v1686 = vpop.f32.mrf.mxu0
      %v1687 = vpop.f32.mrf.mxu0
      %v1688 = vadd.f32 0.0, %v1687
      %v1689 = vpop.f32.mrf.mxu0
      %1690 = vmatprep.mubr.bf16.mxu0 0
      %1691 = vmatmul.mubr.bf16.gmra.mxu0 %v1632
      %v1692 = vpop.f32.mrf.mxu0
      %v1693 = vadd.f32 0.0, %v1692
      %v1694 = vpop.f32.mrf.mxu0
      %v1695 = vpop.f32.mrf.mxu0
      %v1696 = vadd.f32 0.0, %v1695
      %v1697 = vpop.f32.mrf.mxu0
      %1698 = vdwg.mxu0
      %v1699 = vadd.f32 %v1585, %v1669
      %v1700 = vadd.f32 %v1586, %v1672
      %v1701 = vadd.f32 %v1587, %v1677
      %v1702 = vadd.f32 %v1588, %v1680
      %v1703 = vadd.f32 %v1589, %v1685
      %v1704 = vadd.f32 %v1590, %v1688
      %v1705 = vadd.f32 %v1591, %v1693
      %v1706 = vadd.f32 %v1592, %v1696
      %1707 = vst.msk [vmem:[#allocation2] sm:$0xff] %vm282, %v1699
      %1708 = vst.msk [vmem:[#allocation2 + $0x8] sm:$0xff] %vm282, %v1700
      %1709 = vst.msk [vmem:[#allocation2 + $0x10] sm:$0xff] %vm282, %v1701
      %1710 = vst.msk [vmem:[#allocation2 + $0x18] sm:$0xff] %vm282, %v1702
      %1711 = vst.msk [vmem:[#allocation2 + $0x20] sm:$0xff] %vm282, %v1703
      %1712 = vst.msk [vmem:[#allocation2 + $0x28] sm:$0xff] %vm282, %v1704
      %1713 = vst.msk [vmem:[#allocation2 + $0x30] sm:$0xff] %vm282, %v1705
      %1714 = vst.msk [vmem:[#allocation2 + $0x38] sm:$0xff] %vm282, %v1706
      %v1715 = vld [vmem:[%s1374] sm:$0xc]
      %v1716 = vld [vmem:[%s1374 + $0x4] sm:$0x3]
      %v1717 = vld [vmem:[%s1374 + $0x8] sm:$0xc]
      %v1718 = vld [vmem:[%s1374 + $0xc] sm:$0x3]
      %v1719 = vld [vmem:[%s1374 + $0x10] sm:$0xc]
      %v1720 = vld [vmem:[%s1374 + $0x14] sm:$0x3]
      %v1721 = vld [vmem:[%s1374 + $0x18] sm:$0xc]
      %v1722 = vld [vmem:[%s1374 + $0x1c] sm:$0x3]
      %v1723 = vld [vmem:[%s1374 + $0x20] sm:$0xc]
      %v1724 = vld [vmem:[%s1374 + $0x24] sm:$0x3]
      %v1725 = vld [vmem:[%s1374 + $0x28] sm:$0xc]
      %v1726 = vld [vmem:[%s1374 + $0x2c] sm:$0x3]
      %v1727 = vld [vmem:[%s1374 + $0x30] sm:$0xc]
      %v1728 = vld [vmem:[%s1374 + $0x34] sm:$0x3]
      %v1729 = vld [vmem:[%s1374 + $0x38] sm:$0xc]
      %v1730 = vld [vmem:[%s1374 + $0x3c] sm:$0x3]
      %v1747 = vrot.slane %v1715, 6
      %v1748 = vrot.slane %v1747, 4
      %v1749 = vrot.slane %v1716, 6
      %v1750 = vsel %vm670, %v1748, %v1749
      %v1751 = vrot.slane %v1717, 6
      %v1752 = vrot.slane %v1751, 4
      %v1753 = vrot.slane %v1718, 6
      %v1754 = vsel %vm670, %v1752, %v1753
      %v1755 = vrot.slane %v1719, 6
      %v1756 = vrot.slane %v1755, 4
      %v1757 = vrot.slane %v1720, 6
      %v1758 = vsel %vm670, %v1756, %v1757
      %v1759 = vrot.slane %v1721, 6
      %v1760 = vrot.slane %v1759, 4
      %v1761 = vrot.slane %v1722, 6
      %v1762 = vsel %vm670, %v1760, %v1761
      %v1763 = vrot.slane %v1723, 6
      %v1764 = vrot.slane %v1763, 4
      %v1765 = vrot.slane %v1724, 6
      %v1766 = vsel %vm670, %v1764, %v1765
      %v1767 = vrot.slane %v1725, 6
      %v1768 = vrot.slane %v1767, 4
      %v1769 = vrot.slane %v1726, 6
      %v1770 = vsel %vm670, %v1768, %v1769
      %v1771 = vrot.slane %v1727, 6
      %v1772 = vrot.slane %v1771, 4
      %v1773 = vrot.slane %v1728, 6
      %v1774 = vsel %vm670, %v1772, %v1773
      %v1775 = vrot.slane %v1729, 6
      %v1776 = vrot.slane %v1775, 4
      %v1777 = vrot.slane %v1730, 6
      %v1778 = vsel %vm670, %v1776, %v1777
      %v1779 = vld [vmem:[#allocation2] sm:$0xff]
      %v1780 = vld [vmem:[#allocation2 + $0x8] sm:$0xff]
      %v1781 = vld [vmem:[#allocation2 + $0x10] sm:$0xff]
      %v1782 = vld [vmem:[#allocation2 + $0x18] sm:$0xff]
      %v1783 = vld [vmem:[#allocation2 + $0x20] sm:$0xff]
      %v1784 = vld [vmem:[#allocation2 + $0x28] sm:$0xff]
      %v1785 = vld [vmem:[#allocation2 + $0x30] sm:$0xff]
      %v1786 = vld [vmem:[#allocation2 + $0x38] sm:$0xff]
      %s1787 = scalar_lea.vmem %s261, 128
      %v1788 = vld [vmem:[%s1787] sm:$0xf]
      %v1789 = vld [vmem:[%s1787 + $0x4] sm:$0xf]
      %v1790 = vld [vmem:[%s1787 + $0x8] sm:$0xf]
      %v1791 = vld [vmem:[%s1787 + $0xc] sm:$0xf]
      %v1792 = vunpack.c.l.b16 %v1750
      %v1793 = vunpack.c.l.b16 %v1754
      %v1794 = vunpack.c.l.b16 %v1758
      %v1795 = vunpack.c.l.b16 %v1762
      %v1796 = vunpack.c.l.b16 %v1766
      %v1797 = vunpack.c.l.b16 %v1770
      %v1798 = vunpack.c.l.b16 %v1774
      %v1799 = vunpack.c.l.b16 %v1778
      %v1800 = vpack.c.b16 %v1793, %v1792
      %v1801 = vpack.c.b16 %v1795, %v1794
      %v1802 = vpack.c.b16 %v1797, %v1796
      %v1803 = vpack.c.b16 %v1799, %v1798
      %v1808 = vunpack.c.l.b16 %v1788
      %v1809 = vunpack.c.l.b16 %v1789
      %v1810 = vunpack.c.l.b16 %v1790
      %v1811 = vunpack.c.l.b16 %v1791
      %v1812 = vpack.c.b16 %v1809, %v1808
      %v1813 = vpack.c.b16 %v1811, %v1810
      %v1817 = vsel %vm282, %v1800, 0
      %v1820 = vsel %vm282, %v1801, 0
      %v1823 = vsel %vm282, %v1802, 0
      %v1826 = vsel %vm282, %v1803, 0
      %1828 = vmatprep.subr.bf16.mxu0 0
      %1829 = vmatpush1.bf16.msra.mxu0 0
      %1830 = vmatprep.subr.bf16.mxu0 0
      %1831 = vmatpush1.bf16.msra.mxu0 0
      %1832 = vmatprep.subr.bf16.mxu0 0
      %1833 = vmatpush1.bf16.msra.mxu0 0
      %1834 = vmatprep.subr.bf16.mxu0 0
      %1835 = vmatpush1.bf16.msra.mxu0 0
      %1836 = vmatprep.subr.bf16.mxu0 0
      %1837 = vmatpush1.bf16.msra.mxu0 0
      %1838 = vmatprep.subr.bf16.mxu0 0
      %1839 = vmatpush1.bf16.msra.mxu0 0
      %1840 = vmatprep.subr.bf16.mxu0 0
      %1841 = vmatpush1.bf16.msra.mxu0 %v1813
      %1842 = vmatprep.subr.bf16.mxu0 0
      %1843 = vmatpush1.bf16.msra.mxu0 %v1812
      %1844 = vmatprep.subr.bf16.mxu0 0
      %1845 = vmatpush2.bf16.msra.mxu0 0
      %1846 = vmatprep.subr.bf16.mxu0 0
      %1847 = vmatpush2.bf16.msra.mxu0 0
      %1848 = vmatprep.subr.bf16.mxu0 0
      %1849 = vmatpush2.bf16.msra.mxu0 0
      %1850 = vmatprep.subr.bf16.mxu0 0
      %1851 = vmatpush2.bf16.msra.mxu0 0
      %1852 = vmatprep.subr.bf16.mxu0 0
      %1853 = vmatpush2.bf16.msra.mxu0 0
      %1854 = vmatprep.subr.bf16.mxu0 0
      %1855 = vmatpush2.bf16.msra.mxu0 0
      %1856 = vmatprep.subr.bf16.mxu0 0
      %1857 = vmatpush2.bf16.msra.mxu0 0
      %1858 = vmatprep.subr.bf16.mxu0 0
      %1859 = vmatpush2.bf16.msra.mxu0 0
      %1860 = vmatprep.mubr.bf16.mxu0 0
      %1861 = vmatmul.mubr.bf16.gmra.mxu0 %v1817
      %v1862 = vpop.f32.mrf.mxu0
      %v1863 = vadd.f32 0.0, %v1862
      %v1864 = vpop.f32.mrf.mxu0
      %v1865 = vpop.f32.mrf.mxu0
      %v1866 = vadd.f32 0.0, %v1865
      %v1867 = vpop.f32.mrf.mxu0
      %1868 = vmatprep.mubr.bf16.mxu0 0
      %1869 = vmatmul.mubr.bf16.gmra.mxu0 %v1820
      %v1870 = vpop.f32.mrf.mxu0
      %v1871 = vadd.f32 0.0, %v1870
      %v1872 = vpop.f32.mrf.mxu0
      %v1873 = vpop.f32.mrf.mxu0
      %v1874 = vadd.f32 0.0, %v1873
      %v1875 = vpop.f32.mrf.mxu0
      %1876 = vmatprep.mubr.bf16.mxu0 0
      %1877 = vmatmul.mubr.bf16.gmra.mxu0 %v1823
      %v1878 = vpop.f32.mrf.mxu0
      %v1879 = vadd.f32 0.0, %v1878
      %v1880 = vpop.f32.mrf.mxu0
      %v1881 = vpop.f32.mrf.mxu0
      %v1882 = vadd.f32 0.0, %v1881
      %v1883 = vpop.f32.mrf.mxu0
      %1884 = vmatprep.mubr.bf16.mxu0 0
      %1885 = vmatmul.mubr.bf16.gmra.mxu0 %v1826
      %v1886 = vpop.f32.mrf.mxu0
      %v1887 = vadd.f32 0.0, %v1886
      %v1888 = vpop.f32.mrf.mxu0
      %v1889 = vpop.f32.mrf.mxu0
      %v1890 = vadd.f32 0.0, %v1889
      %v1891 = vpop.f32.mrf.mxu0
      %1892 = vdwg.mxu0
      %v1893 = vadd.f32 %v1779, %v1863
      %v1894 = vadd.f32 %v1780, %v1866
      %v1895 = vadd.f32 %v1781, %v1871
      %v1896 = vadd.f32 %v1782, %v1874
      %v1897 = vadd.f32 %v1783, %v1879
      %v1898 = vadd.f32 %v1784, %v1882
      %v1899 = vadd.f32 %v1785, %v1887
      %v1900 = vadd.f32 %v1786, %v1890
      %1901 = vst.msk [vmem:[#allocation2] sm:$0xff] %vm282, %v1893
      %1902 = vst.msk [vmem:[#allocation2 + $0x8] sm:$0xff] %vm282, %v1894
      %1903 = vst.msk [vmem:[#allocation2 + $0x10] sm:$0xff] %vm282, %v1895
      %1904 = vst.msk [vmem:[#allocation2 + $0x18] sm:$0xff] %vm282, %v1896
      %1905 = vst.msk [vmem:[#allocation2 + $0x20] sm:$0xff] %vm282, %v1897
      %1906 = vst.msk [vmem:[#allocation2 + $0x28] sm:$0xff] %vm282, %v1898
      %1907 = vst.msk [vmem:[#allocation2 + $0x30] sm:$0xff] %vm282, %v1899
      %1908 = vst.msk [vmem:[#allocation2 + $0x38] sm:$0xff] %vm282, %v1900
      %v1909 = vld [vmem:[#allocation2] sm:$0xff]
      %v1910 = vld [vmem:[#allocation2 + $0x8] sm:$0xff]
      %v1911 = vld [vmem:[#allocation2 + $0x10] sm:$0xff]
      %v1912 = vld [vmem:[#allocation2 + $0x18] sm:$0xff]
      %v1913 = vld [vmem:[#allocation2 + $0x20] sm:$0xff]
      %v1914 = vld [vmem:[#allocation2 + $0x28] sm:$0xff]
      %v1915 = vld [vmem:[#allocation2 + $0x30] sm:$0xff]
      %v1916 = vld [vmem:[#allocation2 + $0x38] sm:$0xff]
      %v1917 = vld [vmem:[%s264] sm:$0x1]
      %v1919 = vlaneseq
      %v1920 = vshrl.u32 %v1919, 7
      %v1921 = vsub.s32 0, %v1920
      %v1922 = vrot.slane %v1917, %v1921
      %v1924 = vmul.f32 %v1909, %v1922
      %v1925 = vmul.f32 %v1910, %v1922
      %v1926 = vmul.f32 %v1911, %v1922
      %v1927 = vmul.f32 %v1912, %v1922
      %v1928 = vmul.f32 %v1913, %v1922
      %v1929 = vmul.f32 %v1914, %v1922
      %v1930 = vmul.f32 %v1915, %v1922
      %v1931 = vmul.f32 %v1916, %v1922
      %v1932 = vld [vmem:[%s267] sm:$0x1]
      %v1934 = vlaneseq
      %v1935 = vshrl.u32 %v1934, 7
      %v1936 = vsub.s32 0, %v1935
      %v1937 = vrot.slane %v1932, %v1936
      %v1939 = vadd.f32 %v1924, %v1937
      %v1940 = vadd.f32 %v1925, %v1937
      %v1941 = vadd.f32 %v1926, %v1937
      %v1942 = vadd.f32 %v1927, %v1937
      %v1943 = vadd.f32 %v1928, %v1937
      %v1944 = vadd.f32 %v1929, %v1937
      %v1945 = vadd.f32 %v1930, %v1937
      %v1946 = vadd.f32 %v1931, %v1937
      %v1947 = vmax.f32 %v1939, 0.0
      %v1948 = vmax.f32 %v1940, 0.0
      %v1949 = vmax.f32 %v1941, 0.0
      %v1950 = vmax.f32 %v1942, 0.0
      %v1951 = vmax.f32 %v1943, 0.0
      %v1952 = vmax.f32 %v1944, 0.0
      %v1953 = vmax.f32 %v1945, 0.0
      %v1954 = vmax.f32 %v1946, 0.0
      %v1955 = vpack.c.bf16 %v1948, %v1947
      %v1956 = vpack.c.bf16 %v1950, %v1949
      %v1957 = vpack.c.bf16 %v1952, %v1951
      %v1958 = vpack.c.bf16 %v1954, %v1953
      %v1963 = vunpack.c.l.b16 %v1955
      %v1964 = vunpack.c.h.b16 %v1955
      %v1965 = vunpack.c.l.b16 %v1956
      %v1966 = vunpack.c.h.b16 %v1956
      %v1967 = vunpack.c.l.b16 %v1957
      %v1968 = vunpack.c.h.b16 %v1957
      %v1969 = vunpack.c.l.b16 %v1958
      %v1970 = vunpack.c.h.b16 %v1958
      %v1971 = vpack.c.b16 %v1963, %v1963
      %v1972 = vpack.c.b16 %v1964, %v1964
      %v1973 = vpack.c.b16 %v1965, %v1965
      %v1974 = vpack.c.b16 %v1966, %v1966
      %v1975 = vpack.c.b16 %v1967, %v1967
      %v1976 = vpack.c.b16 %v1968, %v1968
      %v1977 = vpack.c.b16 %v1969, %v1969
      %v1978 = vpack.c.b16 %v1970, %v1970
      %vm1987 = vcmask 257024
      %1988 = vst.msk [vmem:[%s279] sm:$0xf] %vm1987, %v1971
      %1989 = vst.msk [vmem:[%s279 + $0x4] sm:$0xf] %vm1987, %v1972
      %1990 = vst.msk [vmem:[%s279 + $0x8] sm:$0xf] %vm1987, %v1973
      %1991 = vst.msk [vmem:[%s279 + $0xc] sm:$0xf] %vm1987, %v1974
      %1992 = vst.msk [vmem:[%s279 + $0x10] sm:$0xf] %vm1987, %v1975
      %1993 = vst.msk [vmem:[%s279 + $0x14] sm:$0xf] %vm1987, %v1976
      %1994 = vst.msk [vmem:[%s279 + $0x18] sm:$0xf] %vm1987, %v1977
      %1995 = vst.msk [vmem:[%s279 + $0x1c] sm:$0xf] %vm1987, %v1978
      %p1996 = scmp.lt.s32.totalorder %s20, 1
      %s1997 = scalar_select %p1996, %s20, 1
      %p1998 = scmp.lt.s32.totalorder %s21, 0
      %s1999 = scalar_select %p1998, %s21, 0
      %p2000 = scmp.lt.s32.totalorder %s22, 0
      %s2001 = scalar_select %p2000, %s22, 0
      %s2002 = smul.addr %s1999, 8
      %s2003 = sadd.s32 %s2001, %s2002
      %s2004 = smul.addr %s1997, 8
      %s2005 = sadd.s32 %s2003, %s2004
      %s2006 = smul.addr %s2005, 4
      %s2007 = scalar_lea.vmem %s4, %s2006
      // Predicated region
      $region37: #{forward.12} parent=35 // pred_check
        %p2008 = pneg %p160
      $region38: #{forward.12} parent=35 // pred_check_branch
        %2010 = sbr.rel (%p2008) target = $region40
      $region39: #{forward.12} parent=35 // pred_region
        _
      $region40: #{forward.12} parent=35 // pred_fallthru
        _
    $region36: #{forward.12} parent=5 // pred_fallthru
      _
    %p2011 = scmp.le.s32.totalorder 2, %s10
    // Predicated region
    $region41: #{forward.12} parent=5 // pred_check
      %p2012 = pneg %p2011
    $region42: #{forward.12} parent=5 // pred_check_branch
      %2014 = sbr.rel (%p2012) target = $region44
    $region43: #{forward.12} parent=5 // pred_region
      %s2015 = ssub.s32 %s10, 2
      // Predicated region
      $region45: #{forward.12} parent=43 // pred_check
        %p2016 = pneg %p166
      $region46: #{forward.12} parent=43 // pred_check_branch
        %2018 = sbr.rel (%p2016) target = $region48
      $region47: #{forward.12} parent=43 // pred_region
        %p2019 = scmp.lt.s32.totalorder %s23, 1
        %s2020 = scalar_select %p2019, %s23, 1
        %p2021 = scmp.lt.s32.totalorder %s24, 0
        %s2022 = scalar_select %p2021, %s24, 0
        %p2023 = scmp.lt.s32.totalorder %s25, 0
        %s2024 = scalar_select %p2023, %s25, 0
        %s2025 = smul.addr %s2022, 8
        %s2026 = sadd.s32 %s2024, %s2025
        %s2027 = smul.addr %s2020, 8
        %s2028 = sadd.s32 %s2026, %s2027
        %s2029 = smul.addr %s2028, 4
        %s2030 = scalar_lea.vmem %s4, %s2029
      $region48: #{forward.12} parent=43 // pred_fallthru
        _
    $region44: #{forward.12} parent=5 // pred_fallthru
      _
  $region6: #{forward.12} parent=0 // loop_footer
    %s14 = sadd.s32 1, %s10
  $region7: #{forward.12} parent=0 // loop_footer_branch
    %9 = sbr.rel target = $region3
  $region8: #{forward.12} parent=0 // loop_exit
    _

</llo_original>
